<compile_context>
chip_gen: v7x
topology: tpu7x:2x2x1
jax: 0.10.0
libtpu: 0.0.40
codegen_flags: <defaults>
</compile_context>

<pallas_src>
import functools

import jax
import jax.numpy as jnp
from jax import lax
from jax.experimental import pallas as pl
from jax.experimental.pallas import tpu as pltpu


def attention_kernel(x_ref, wqkv_ref, wout_ref, bout_ref, o_ref, *,
                     heads, dim_head):
    """One grid step == `bb` batch elements. Everything fits in VMEM at N=256."""
    hidden = heads * dim_head
    bb, _, n = x_ref.shape

    wqkv_t = wqkv_ref[...]            # (C, 3*hidden); q columns pre-scaled
    wout = wout_ref[...]              # (C, hidden)
    bout = bout_ref[...]              # (C, 1)

    # Ones row used to fuse the softmax row-sum into the attn@v matmul.
    # Hoisted out of the batch loop (broadcast_in_dim is not CSE'd by JAX).
    ones_row = jnp.ones((heads, 1, n), dtype=jnp.bfloat16)

    for bi in range(bb):              # static unroll over the small batch block
        x = x_ref[bi]                 # (C, N), lane-dense in N

        # 1x1 conv (no bias) == channel matmul; N stays on the lane axis.
        qkv = lax.dot_general(
            wqkv_t, x,
            dimension_numbers=(((0,), (0,)), ((), ())),
            preferred_element_type=jnp.float32)                    # (3*hidden, N)

        # Head-major splits along the sublane axis (multiples of 8 -> free).
        q = qkv[0 * hidden:1 * hidden].reshape(heads, dim_head, n)  # (h, d, N)
        k = qkv[1 * hidden:2 * hidden].reshape(heads, dim_head, n)  # (h, d, N)
        v = qkv[2 * hidden:3 * hidden].reshape(heads, dim_head, n)  # (h, d, N)

        # sim[h, i, j] = sum_d q[h, d, i] * k[h, d, j]  (batched over heads)
        sim = lax.dot_general(
            q, k,
            dimension_numbers=(((1,), (1,)), ((0,), (0,))),
            preferred_element_type=jnp.float32)                     # (h, N, N)

        m = jnp.max(sim, axis=-1, keepdims=True)                    # (h, N, 1)
        # bf16 p halves the (h, N, N) traffic and feeds the MXU at bf16 rate;
        # accumulation stays f32 via preferred_element_type.
        p = jnp.exp(sim - m).astype(jnp.bfloat16)                   # (h, N, N)

        # Fused row-sum: extra ones row in v makes the same dot_general emit
        # l[h, i] = sum_j p[h, i, j] as output row `dim_head`.
        vl = jnp.concatenate([v.astype(jnp.bfloat16), ones_row], axis=1)  # (h, d+1, N)

        # out_full[h, d, i] = sum_j vl[h, d, j] * p[h, i, j]  -> channel-major.
        out_full = lax.dot_general(
            vl, p,
            dimension_numbers=(((2,), (2,)), ((0,), (0,))),
            preferred_element_type=jnp.float32)                     # (h, d+1, N)

        l = out_full[:, dim_head, :]                                # (h, N)
        inv_l = pl.reciprocal(l, approx=True)                       # EUP slot

        # Deferred softmax normalization + 'b h (x y) d -> b (h d) x y'
        # head-major channel merge (free reshape: dim_head multiple of 8).
        out_hidden = (out_full[:, :dim_head, :] * inv_l[:, None, :]
                      ).reshape(hidden, n)                          # (hidden, N)

        # 1x1 conv with bias.
        y = jnp.dot(wout, out_hidden,
                    preferred_element_type=jnp.float32) + bout      # (C, N)
        o_ref[bi] = y.astype(o_ref.dtype)


def _tensorcores_per_chip() -> int:
    """v7x has 2 TensorCores per chip; v5e/v6e have 1. Best-effort query."""
    try:
        kind = jax.devices()[0].device_kind.lower()
    except Exception:
        return 1
    return 2 if "v7" in kind else 1


def attention_forward(x_nchw, w_qkv, w_out, b_out, *, heads, dim_head):
    b, c, h, w = x_nchw.shape
    n = h * w
    hidden = heads * dim_head
    scale = float(dim_head) ** -0.5

    # Channels-first, spatially flattened (B, C, N); N sits on the lane axis.
    x_flat = x_nchw.reshape(b, c, n)

    # Fold the softmax scale into the q rows of the tiny, call-invariant qkv
    # weight, then pass it transposed as (C, 3*hidden) so the kernel keeps its
    # wide dim on lanes (no 4->128 lane padding in VMEM).
    w_qkv_t = w_qkv.at[:hidden].multiply(scale).T                   # (C, 3*hidden)

    # Batch blocking: merge the whole (tiny) batch into one grid step on
    # single-TC chips (amortizes per-step overhead); keep one element per step
    # on 2-TC v7x so both TensorCores get work via the "parallel" axis.
    n_tc = _tensorcores_per_chip()
    if n_tc > 1 and b > 1:
        bb = 1
    else:
        bb = min(b, 4)
    while b % bb:
        bb -= 1
    grid = (b // bb,)

    kernel = functools.partial(attention_kernel, heads=heads, dim_head=dim_head)

    flops = b * (
        2 * (3 * hidden) * c * n                 # qkv projection
        + 2 * heads * dim_head * n * n           # q^T k
        + 2 * heads * (dim_head + 1) * n * n     # attn @ v (+ fused row-sum)
        + 2 * c * hidden * n)                    # output projection
    cost = pl.CostEstimate(
        flops=flops,
        transcendentals=b * heads * n * n,       # exp
        bytes_accessed=4 * (2 * b * c * n + w_qkv.size + w_out.size + b_out.size))

    out_flat = pl.pallas_call(
        kernel,
        out_shape=jax.ShapeDtypeStruct((b, c, n), x_flat.dtype),
        grid_spec=pltpu.PrefetchScalarGridSpec(
            num_scalar_prefetch=0,
            grid=grid,
            in_specs=[
                pl.BlockSpec((bb, c, n), lambda i: (i, 0, 0)),        # x (B,C,N)
                pl.BlockSpec((c, 3 * hidden), lambda i: (0, 0)),      # w_qkv^T (scaled)
                pl.BlockSpec((c, hidden), lambda i: (0, 0)),          # w_out
                pl.BlockSpec((c, 1), lambda i: (0, 0)),               # b_out
            ],
            out_specs=pl.BlockSpec((bb, c, n), lambda i: (i, 0, 0)),
        ),
        compiler_params=pltpu.CompilerParams(
            dimension_semantics=("parallel",)),
        cost_estimate=cost,
    )(x_flat, w_qkv_t, w_out, b_out.reshape(c, 1))

    return out_flat.reshape(b, c, h, w)


def reference_forward(x, w_qkv, w_out, b_out, *, heads, dim_head):
    """Pure-JAX reference mirroring the PyTorch forward exactly."""
    b, c, h, w = x.shape
    n = h * w
    hidden = heads * dim_head
    scale = float(dim_head) ** -0.5

    x_flat = x.reshape(b, c, n)                                     # (b, c, n)
    qkv = jnp.einsum('oc,bcn->bon', w_qkv, x_flat)                  # (b, 3*hidden, n)
    q, k, v = jnp.split(qkv, 3, axis=1)
    q = q.reshape(b, heads, dim_head, n) * scale
    k = k.reshape(b, heads, dim_head, n)
    v = v.reshape(b, heads, dim_head, n)

    sim = jnp.einsum('bhdi,bhdj->bhij', q, k)
    sim = sim - jnp.max(sim, axis=-1, keepdims=True)
    attn = jax.nn.softmax(sim, axis=-1)
    out = jnp.einsum('bhij,bhdj->bhid', attn, v)                    # (b, h, n, d)
    out = jnp.transpose(out, (0, 1, 3, 2)).reshape(b, hidden, n)    # (b, (h d), n)
    y = jnp.einsum('oc,bcn->bon', w_out, out) + b_out[None, :, None]
    return y.reshape(b, c, h, w)


if __name__ == "__main__":
    # Module hyper-params (defaults from the PyTorch module).
    dim = 4
    heads = 4
    dim_head = 32
    hidden = heads * dim_head

    B, H, W = 2, 16, 16

    key = jax.random.PRNGKey(0)
    k_x, k_qkv, k_out, k_b = jax.random.split(key, 4)

    x = jax.random.normal(k_x, (B, dim, H, W), dtype=jnp.float32)
    # to_qkv: Conv2d(dim, hidden*3, 1, bias=False)  -> weight (3*hidden, dim)
    w_qkv = jax.random.normal(k_qkv, (3 * hidden, dim), dtype=jnp.float32) * 0.1
    # to_out: Conv2d(hidden, dim, 1)                -> weight (dim, hidden), bias (dim,)
    w_out = jax.random.normal(k_out, (dim, hidden), dtype=jnp.float32) * 0.1
    b_out = jax.random.normal(k_b, (dim,), dtype=jnp.float32) * 0.1

    y = attention_forward(x, w_qkv, w_out, b_out, heads=heads, dim_head=dim_head)
    y = jax.block_until_ready(y)

    y_ref = reference_forward(x, w_qkv, w_out, b_out, heads=heads, dim_head=dim_head)
    assert y.shape == (B, dim, H, W)
    # Tolerance covers the bf16 cast of p/v inside the attn@v matmul (f32
    # accumulation) and the EUP approximate reciprocal used for the deferred
    # softmax normalization; everything else is exact f32 with f32 MXU acc.
    assert jnp.allclose(y, y_ref, atol=1e-2, rtol=1e-2), "mismatch vs JAX reference"

    print("KERNEL_OK")
</pallas_src>

<mosaic_0001>
module attributes {stable_mosaic.version = 11 : i64} {
  func.func @attention_kernel(%arg0: i32, %arg1: memref<2x4x256xf32, #tpu.memory_space<vmem>>, %arg2: memref<4x384xf32, #tpu.memory_space<vmem>>, %arg3: memref<4x128xf32, #tpu.memory_space<vmem>>, %arg4: memref<4x1xf32, #tpu.memory_space<vmem>>, %arg5: memref<2x4x256xf32, #tpu.memory_space<vmem>>) attributes {dimension_semantics = [#tpu.dimension_semantics<parallel>], iteration_bounds = array<i64: 1>, scalar_prefetch = 0 : i64, scratch_operands = 0 : i64, tpu.core_type = #tpu.core_type<tc>, window_params = [{transform_indices = @transform_0, window_bounds = array<i64: 2, 4, 256>}, {pipeline_mode = #tpu.pipeline_mode<synchronous>, transform_indices = @transform_1, window_bounds = array<i64: 4, 384>}, {pipeline_mode = #tpu.pipeline_mode<synchronous>, transform_indices = @transform_2, window_bounds = array<i64: 4, 128>}, {pipeline_mode = #tpu.pipeline_mode<synchronous>, transform_indices = @transform_3, window_bounds = array<i64: 4, 1>}, {transform_indices = @transform_4, window_bounds = array<i64: 2, 4, 256>}]} {
    %c0 = arith.constant 0 : index
    %c0_0 = arith.constant 0 : index
    %0 = vector.load %arg2[%c0, %c0_0] : memref<4x384xf32, #tpu.memory_space<vmem>>, vector<4x384xf32>
    %c0_1 = arith.constant 0 : index
    %c0_2 = arith.constant 0 : index
    %1 = vector.load %arg3[%c0_1, %c0_2] : memref<4x128xf32, #tpu.memory_space<vmem>>, vector<4x128xf32>
    %c0_3 = arith.constant 0 : index
    %c0_4 = arith.constant 0 : index
    %2 = vector.load %arg4[%c0_3, %c0_4] : memref<4x1xf32, #tpu.memory_space<vmem>>, vector<4x1xf32>
    %cst = arith.constant 1.000000e+00 : bf16
    %3 = vector.broadcast %cst : bf16 to vector<4x1x256xbf16>
    %c0_5 = arith.constant 0 : index
    %c0_6 = arith.constant 0 : index
    %c0_7 = arith.constant 0 : index
    %4 = vector.load %arg1[%c0_5, %c0_6, %c0_7] : memref<2x4x256xf32, #tpu.memory_space<vmem>>, vector<1x4x256xf32>
    %5 = vector.shape_cast %4 : vector<1x4x256xf32> to vector<4x256xf32>
    %cst_8 = arith.constant dense<0.000000e+00> : vector<384x256xf32>
    %6 = tpu.matmul %0, %5, %cst_8 {dimension_numbers = #tpu.dot_dimension_numbers<[0], [0], [1], [1], [0, 1, 1, 1], [], []>} : vector<4x384xf32>, vector<4x256xf32>, vector<384x256xf32> -> vector<384x256xf32>
    %7 = vector.extract_strided_slice %6 {offsets = [0, 0], sizes = [128, 256], strides = [1, 1]} : vector<384x256xf32> to vector<128x256xf32>
    %8 = vector.shape_cast %7 : vector<128x256xf32> to vector<4x32x256xf32>
    %9 = vector.extract_strided_slice %6 {offsets = [128, 0], sizes = [128, 256], strides = [1, 1]} : vector<384x256xf32> to vector<128x256xf32>
    %10 = vector.shape_cast %9 : vector<128x256xf32> to vector<4x32x256xf32>
    %11 = vector.extract_strided_slice %6 {offsets = [256, 0], sizes = [128, 256], strides = [1, 1]} : vector<384x256xf32> to vector<128x256xf32>
    %12 = vector.shape_cast %11 : vector<128x256xf32> to vector<4x32x256xf32>
    %cst_9 = arith.constant dense<0.000000e+00> : vector<4x256x256xf32>
    %13 = tpu.matmul %8, %10, %cst_9 {dimension_numbers = #tpu.dot_dimension_numbers<[1], [1], [2], [2], [0, 0, 0, 2, 1, 2], [0], [0]>} : vector<4x32x256xf32>, vector<4x32x256xf32>, vector<4x256x256xf32> -> vector<4x256x256xf32>
    %cst_10 = arith.constant dense<0xFF800000> : vector<4x256xf32>
    %14 = vector.multi_reduction <maximumf>, %13, %cst_10 [2] : vector<4x256x256xf32> to vector<4x256xf32>
    %15 = vector.shape_cast %14 : vector<4x256xf32> to vector<4x256x1xf32>
    %16 = vector.broadcast %15 : vector<4x256x1xf32> to vector<4x256x256xf32>
    %17 = arith.subf %13, %16 : vector<4x256x256xf32>
    %18 = math.exp %17 : vector<4x256x256xf32>
    %19 = arith.truncf %18 : vector<4x256x256xf32> to vector<4x256x256xbf16>
    %20 = arith.truncf %12 : vector<4x32x256xf32> to vector<4x32x256xbf16>
    %21 = tpu.concatenate %20, %3 in 1 : vector<4x32x256xbf16>, vector<4x1x256xbf16> -> vector<4x33x256xbf16>
    %cst_11 = arith.constant dense<0.000000e+00> : vector<4x33x256xf32>
    %22 = tpu.matmul %21, %19, %cst_11 {dimension_numbers = #tpu.dot_dimension_numbers<[2], [2], [1], [1], [0, 0, 0, 1, 1, 1], [0], [0]>} : vector<4x33x256xbf16>, vector<4x256x256xbf16>, vector<4x33x256xf32> -> vector<4x33x256xf32>
    %23 = vector.extract_strided_slice %22 {offsets = [0, 32, 0], sizes = [4, 1, 256], strides = [1, 1, 1]} : vector<4x33x256xf32> to vector<4x1x256xf32>
    %24 = vector.shape_cast %23 : vector<4x1x256xf32> to vector<4x256xf32>
    %25 = tpu.reciprocal %24 {approx = true} : vector<4x256xf32> -> vector<4x256xf32>
    %26 = vector.extract_strided_slice %22 {offsets = [0, 0, 0], sizes = [4, 32, 256], strides = [1, 1, 1]} : vector<4x33x256xf32> to vector<4x32x256xf32>
    %27 = vector.shape_cast %25 : vector<4x256xf32> to vector<4x1x256xf32>
    %28 = vector.broadcast %27 : vector<4x1x256xf32> to vector<4x32x256xf32>
    %29 = arith.mulf %26, %28 : vector<4x32x256xf32>
    %30 = vector.shape_cast %29 : vector<4x32x256xf32> to vector<128x256xf32>
    %cst_12 = arith.constant dense<0.000000e+00> : vector<4x256xf32>
    %31 = tpu.matmul %1, %30, %cst_12 {dimension_numbers = #tpu.dot_dimension_numbers<[1], [0], [0], [1], [0, 0, 1, 1], [], []>} : vector<4x128xf32>, vector<128x256xf32>, vector<4x256xf32> -> vector<4x256xf32>
    %32 = vector.broadcast %2 : vector<4x1xf32> to vector<4x256xf32>
    %33 = arith.addf %31, %32 : vector<4x256xf32>
    %c0_13 = arith.constant 0 : index
    %c0_14 = arith.constant 0 : index
    %c0_15 = arith.constant 0 : index
    %34 = vector.load %arg5[%c0_13, %c0_14, %c0_15] : memref<2x4x256xf32, #tpu.memory_space<vmem>>, vector<1x4x256xf32>
    %35 = vector.shape_cast %34 : vector<1x4x256xf32> to vector<4x256xf32>
    %36 = vector.shape_cast %33 : vector<4x256xf32> to vector<1x4x256xf32>
    tpu.vector_store %arg5[%c0_13, %c0_14, %c0_15], %36 {strides = array<i32>} : memref<2x4x256xf32, #tpu.memory_space<vmem>>, vector<1x4x256xf32>,
    %c1 = arith.constant 1 : index
    %c0_16 = arith.constant 0 : index
    %c0_17 = arith.constant 0 : index
    %37 = vector.load %arg1[%c1, %c0_16, %c0_17] : memref<2x4x256xf32, #tpu.memory_space<vmem>>, vector<1x4x256xf32>
    %38 = vector.shape_cast %37 : vector<1x4x256xf32> to vector<4x256xf32>
    %cst_18 = arith.constant dense<0.000000e+00> : vector<384x256xf32>
    %39 = tpu.matmul %0, %38, %cst_18 {dimension_numbers = #tpu.dot_dimension_numbers<[0], [0], [1], [1], [0, 1, 1, 1], [], []>} : vector<4x384xf32>, vector<4x256xf32>, vector<384x256xf32> -> vector<384x256xf32>
    %40 = vector.extract_strided_slice %39 {offsets = [0, 0], sizes = [128, 256], strides = [1, 1]} : vector<384x256xf32> to vector<128x256xf32>
    %41 = vector.shape_cast %40 : vector<128x256xf32> to vector<4x32x256xf32>
    %42 = vector.extract_strided_slice %39 {offsets = [128, 0], sizes = [128, 256], strides = [1, 1]} : vector<384x256xf32> to vector<128x256xf32>
    %43 = vector.shape_cast %42 : vector<128x256xf32> to vector<4x32x256xf32>
    %44 = vector.extract_strided_slice %39 {offsets = [256, 0], sizes = [128, 256], strides = [1, 1]} : vector<384x256xf32> to vector<128x256xf32>
    %45 = vector.shape_cast %44 : vector<128x256xf32> to vector<4x32x256xf32>
    %cst_19 = arith.constant dense<0.000000e+00> : vector<4x256x256xf32>
    %46 = tpu.matmul %41, %43, %cst_19 {dimension_numbers = #tpu.dot_dimension_numbers<[1], [1], [2], [2], [0, 0, 0, 2, 1, 2], [0], [0]>} : vector<4x32x256xf32>, vector<4x32x256xf32>, vector<4x256x256xf32> -> vector<4x256x256xf32>
    %cst_20 = arith.constant dense<0xFF800000> : vector<4x256xf32>
    %47 = vector.multi_reduction <maximumf>, %46, %cst_20 [2] : vector<4x256x256xf32> to vector<4x256xf32>
    %48 = vector.shape_cast %47 : vector<4x256xf32> to vector<4x256x1xf32>
    %49 = vector.broadcast %48 : vector<4x256x1xf32> to vector<4x256x256xf32>
    %50 = arith.subf %46, %49 : vector<4x256x256xf32>
    %51 = math.exp %50 : vector<4x256x256xf32>
    %52 = arith.truncf %51 : vector<4x256x256xf32> to vector<4x256x256xbf16>
    %53 = arith.truncf %45 : vector<4x32x256xf32> to vector<4x32x256xbf16>
    %54 = tpu.concatenate %53, %3 in 1 : vector<4x32x256xbf16>, vector<4x1x256xbf16> -> vector<4x33x256xbf16>
    %cst_21 = arith.constant dense<0.000000e+00> : vector<4x33x256xf32>
    %55 = tpu.matmul %54, %52, %cst_21 {dimension_numbers = #tpu.dot_dimension_numbers<[2], [2], [1], [1], [0, 0, 0, 1, 1, 1], [0], [0]>} : vector<4x33x256xbf16>, vector<4x256x256xbf16>, vector<4x33x256xf32> -> vector<4x33x256xf32>
    %56 = vector.extract_strided_slice %55 {offsets = [0, 32, 0], sizes = [4, 1, 256], strides = [1, 1, 1]} : vector<4x33x256xf32> to vector<4x1x256xf32>
    %57 = vector.shape_cast %56 : vector<4x1x256xf32> to vector<4x256xf32>
    %58 = tpu.reciprocal %57 {approx = true} : vector<4x256xf32> -> vector<4x256xf32>
    %59 = vector.extract_strided_slice %55 {offsets = [0, 0, 0], sizes = [4, 32, 256], strides = [1, 1, 1]} : vector<4x33x256xf32> to vector<4x32x256xf32>
    %60 = vector.shape_cast %58 : vector<4x256xf32> to vector<4x1x256xf32>
    %61 = vector.broadcast %60 : vector<4x1x256xf32> to vector<4x32x256xf32>
    %62 = arith.mulf %59, %61 : vector<4x32x256xf32>
    %63 = vector.shape_cast %62 : vector<4x32x256xf32> to vector<128x256xf32>
    %cst_22 = arith.constant dense<0.000000e+00> : vector<4x256xf32>
    %64 = tpu.matmul %1, %63, %cst_22 {dimension_numbers = #tpu.dot_dimension_numbers<[1], [0], [0], [1], [0, 0, 1, 1], [], []>} : vector<4x128xf32>, vector<128x256xf32>, vector<4x256xf32> -> vector<4x256xf32>
    %65 = vector.broadcast %2 : vector<4x1xf32> to vector<4x256xf32>
    %66 = arith.addf %64, %65 : vector<4x256xf32>
    %c1_23 = arith.constant 1 : index
    %c0_24 = arith.constant 0 : index
    %c0_25 = arith.constant 0 : index
    %67 = vector.load %arg5[%c1_23, %c0_24, %c0_25] : memref<2x4x256xf32, #tpu.memory_space<vmem>>, vector<1x4x256xf32>
    %68 = vector.shape_cast %67 : vector<1x4x256xf32> to vector<4x256xf32>
    %69 = vector.shape_cast %66 : vector<4x256xf32> to vector<1x4x256xf32>
    tpu.vector_store %arg5[%c1_23, %c0_24, %c0_25], %69 {strides = array<i32>} : memref<2x4x256xf32, #tpu.memory_space<vmem>>, vector<1x4x256xf32>,
    return
  }
  func.func @transform_0(%arg0: i32) -> (i32, i32, i32) {
    %c0_i32 = arith.constant 0 : i32
    %c0_i32_0 = arith.constant 0 : i32
    %c0_i32_1 = arith.constant 0 : i32
    return %arg0, %c0_i32, %c0_i32_0 : i32, i32, i32
  }
  func.func @transform_1(%arg0: i32) -> (i32, i32) {
    %c0_i32 = arith.constant 0 : i32
    %c0_i32_0 = arith.constant 0 : i32
    %c0_i32_1 = arith.constant 0 : i32
    return %c0_i32, %c0_i32_0 : i32, i32
  }
  func.func @transform_2(%arg0: i32) -> (i32, i32) {
    %c0_i32 = arith.constant 0 : i32
    %c0_i32_0 = arith.constant 0 : i32
    %c0_i32_1 = arith.constant 0 : i32
    return %c0_i32, %c0_i32_0 : i32, i32
  }
  func.func @transform_3(%arg0: i32) -> (i32, i32) {
    %c0_i32 = arith.constant 0 : i32
    %c0_i32_0 = arith.constant 0 : i32
    %c0_i32_1 = arith.constant 0 : i32
    return %c0_i32, %c0_i32_0 : i32, i32
  }
  func.func @transform_4(%arg0: i32) -> (i32, i32, i32) {
    %c0_i32 = arith.constant 0 : i32
    %c0_i32_0 = arith.constant 0 : i32
    %c0_i32_1 = arith.constant 0 : i32
    return %arg0, %c0_i32, %c0_i32_0 : i32, i32, i32
  }
}

</mosaic_0001>

<llo_original>
// kernel: tpu_custom_call.1
$region0: #{tpu_custom_call.1}
  #allocation0 [shape = 'u32[]', space=smem, size = 0x4, offset = 0x4, fixed_abs, tag = 'smem constant byte address 0x4 - core index']
  #allocation1 [shape = 'u32[144,128]{1,0:T(1,128)}', space=vmem, size = 0x12000, scoped, tag = 'internal scratch']
  %s0 = inlined_call_operand.hbm [shape: f32[2,4,256], index: 0, kind: input, shape index: {}]
  %s1 = inlined_call_operand.hbm [shape: f32[4,384], index: 1, kind: input, shape index: {}]
  %s2 = inlined_call_operand.vmem [shape: f32[4,128], index: 2, kind: input, shape index: {}]
  %s3 = inlined_call_operand.vmem [shape: f32[4,1], index: 3, kind: input, shape index: {}]
  %s4 = inlined_call_operand.hbm [shape: f32[2,4,256], index: 4, kind: output, shape index: {}]
  %s5 = sld [smem:[#allocation0]]
  $region34: #{tpu_custom_call.1} parent=0
    _
  %s7 = ssub.s32 1, %s5
  %s8 = scalar_select 0, %s7, %s5
  $region1: #{tpu_custom_call.1} parent=0
    #allocation2 [shape = 'u8[8192]{0}', space=vmem, size = 0x2000, scoped, tag = 'input window, operand 0, single buffered']
    #allocation3 [shape = 's32[1]{0}', space=sflag, size = 0x4, scoped, tag = 'scoped memory for tpu_custom_call.1']
    #allocation4 [shape = 's32[1]{0}', space=sflag, size = 0x4, scoped, tag = 'scoped memory for tpu_custom_call.1']
    #allocation5 [shape = 'u8[6144]{0}', space=vmem, size = 0x1800, scoped, tag = 'input window, operand 1, single buffered']
    #allocation6 [shape = 's32[1]{0}', space=sflag, size = 0x4, scoped, tag = 'scoped memory for tpu_custom_call.1']
    #allocation7 [shape = 'u8[8192]{0}', space=vmem, size = 0x2000, scoped, tag = 'output window, operand 0, single buffered']
    %9 = vsyncpa [#allocation3], 0
    %10 = vsyncpa [#allocation6], 0
    %11 = vsyncpa [#allocation4], 0
    // Predicated region
    $region2: #{tpu_custom_call.1} parent=1 // pred_check
      _
    $region3: #{tpu_custom_call.1} parent=1 // pred_check_branch
      %13 = sbr.rel (0) target = $region5
    $region4: #{tpu_custom_call.1} parent=1 // pred_region
      %s15 = ssub.s32 256, 256
      %16 = vsyncadd [#allocation3], %s15
      %s17 = sshll.u32 [#allocation2], 4
      %s18 = int_to_ptr.vmem [resolvable:$true] %s17
      %23 = dma.hbm_to_vmem [thread:$0]  %s0, 256, %s18, [#allocation3], 128, 128, 8
    $region5: #{tpu_custom_call.1} parent=1 // pred_fallthru
      _
    // Predicated region
    $region6: #{tpu_custom_call.1} parent=1 // pred_check
      _
    $region7: #{tpu_custom_call.1} parent=1 // pred_check_branch
      %25 = sbr.rel (0) target = $region9
    $region8: #{tpu_custom_call.1} parent=1 // pred_region
      %s27 = ssub.s32 192, 192
      %28 = vsyncadd [#allocation6], %s27
      %s30 = sshll.u32 [#allocation5], 4
      %s31 = int_to_ptr.vmem [resolvable:$true] %s30
      %33 = dma.hbm_to_vmem [thread:$0]  %s1, 192, %s31, [#allocation6]
    $region9: #{tpu_custom_call.1} parent=1 // pred_fallthru
      _
    // Predicated region
    $region10: #{tpu_custom_call.1} parent=1 // pred_check
      _
    $region11: #{tpu_custom_call.1} parent=1 // pred_check_branch
      %35 = sbr.rel (0) target = $region13
    $region12: #{tpu_custom_call.1} parent=1 // pred_region
      _
    $region13: #{tpu_custom_call.1} parent=1 // pred_fallthru
      _
    // Predicated region
    $region14: #{tpu_custom_call.1} parent=1 // pred_check
      _
    $region15: #{tpu_custom_call.1} parent=1 // pred_check_branch
      %37 = sbr.rel (0) target = $region17
    $region16: #{tpu_custom_call.1} parent=1 // pred_region
      _
    $region17: #{tpu_custom_call.1} parent=1 // pred_fallthru
      _
    // Predicated region
    $region18: #{tpu_custom_call.1} parent=1 // pred_check
      _
    $region19: #{tpu_custom_call.1} parent=1 // pred_check_branch
      %39 = sbr.rel (0) target = $region21
    $region20: #{tpu_custom_call.1} parent=1 // pred_region
      %40 = dma.done [#allocation3], 256
    $region21: #{tpu_custom_call.1} parent=1 // pred_fallthru
      _
    // Predicated region
    $region22: #{tpu_custom_call.1} parent=1 // pred_check
      _
    $region23: #{tpu_custom_call.1} parent=1 // pred_check_branch
      %42 = sbr.rel (0) target = $region25
    $region24: #{tpu_custom_call.1} parent=1 // pred_region
      %43 = dma.done [#allocation6], 192
    $region25: #{tpu_custom_call.1} parent=1 // pred_fallthru
      _
    %v45 = vld [vmem:[#allocation5] sm:$0xff]
    %v46 = vld [vmem:[#allocation5 + $0x8] sm:$0xf]
    %v47 = vld [vmem:[%s2] sm:$0xf]
    %v48 = vld [vmem:[%s3] sm:$0xf]
    %v49 = vld [vmem:[#allocation2] sm:$0xff]
    %v51 = vcombine.high %v45, %v45
    %53 = vxpose.xlu0.b32.start [1/16] %v45, 128
    %54 = vxpose.xlu0.b32.cont [2/16] 0.0, 128
    %55 = vxpose.xlu0.b32.cont [3/16] 0.0, 128
    %56 = vxpose.xlu0.b32.cont [4/16] 0.0, 128
    %57 = vxpose.xlu0.b32.cont [5/16] 0.0, 128
    %58 = vxpose.xlu0.b32.cont [6/16] 0.0, 128
    %59 = vxpose.xlu0.b32.cont [7/16] 0.0, 128
    %60 = vxpose.xlu0.b32.cont [8/16] 0.0, 128
    %61 = vxpose.xlu0.b32.cont [9/16] 0.0, 128
    %62 = vxpose.xlu0.b32.cont [10/16] 0.0, 128
    %63 = vxpose.xlu0.b32.cont [11/16] 0.0, 128
    %64 = vxpose.xlu0.b32.cont [12/16] 0.0, 128
    %65 = vxpose.xlu0.b32.cont [13/16] 0.0, 128
    %66 = vxpose.xlu0.b32.cont [14/16] 0.0, 128
    %67 = vxpose.xlu0.b32.cont [15/16] 0.0, 128
    %68 = vxpose.xlu0.b32.end [16/16] 0.0, 128
    %v69 = vpop.trf.xlu0
    %v70 = vpop.trf.xlu0
    %v71 = vpop.trf.xlu0
    %v72 = vpop.trf.xlu0
    %v73 = vpop.trf.xlu0
    %v74 = vpop.trf.xlu0
    %v75 = vpop.trf.xlu0
    %v76 = vpop.trf.xlu0
    %v77 = vpop.trf.xlu0
    %v78 = vpop.trf.xlu0
    %v79 = vpop.trf.xlu0
    %v80 = vpop.trf.xlu0
    %v81 = vpop.trf.xlu0
    %v82 = vpop.trf.xlu0
    %v83 = vpop.trf.xlu0
    %v84 = vpop.trf.xlu0
    %85 = vxpose.xlu0.b32.start [1/16] %v51, 128
    %86 = vxpose.xlu0.b32.cont [2/16] 0.0, 128
    %87 = vxpose.xlu0.b32.cont [3/16] 0.0, 128
    %88 = vxpose.xlu0.b32.cont [4/16] 0.0, 128
    %89 = vxpose.xlu0.b32.cont [5/16] 0.0, 128
    %90 = vxpose.xlu0.b32.cont [6/16] 0.0, 128
    %91 = vxpose.xlu0.b32.cont [7/16] 0.0, 128
    %92 = vxpose.xlu0.b32.cont [8/16] 0.0, 128
    %93 = vxpose.xlu0.b32.cont [9/16] 0.0, 128
    %94 = vxpose.xlu0.b32.cont [10/16] 0.0, 128
    %95 = vxpose.xlu0.b32.cont [11/16] 0.0, 128
    %96 = vxpose.xlu0.b32.cont [12/16] 0.0, 128
    %97 = vxpose.xlu0.b32.cont [13/16] 0.0, 128
    %98 = vxpose.xlu0.b32.cont [14/16] 0.0, 128
    %99 = vxpose.xlu0.b32.cont [15/16] 0.0, 128
    %100 = vxpose.xlu0.b32.end [16/16] 0.0, 128
    %v101 = vpop.trf.xlu0
    %v102 = vpop.trf.xlu0
    %v103 = vpop.trf.xlu0
    %v104 = vpop.trf.xlu0
    %v105 = vpop.trf.xlu0
    %v106 = vpop.trf.xlu0
    %v107 = vpop.trf.xlu0
    %v108 = vpop.trf.xlu0
    %v109 = vpop.trf.xlu0
    %v110 = vpop.trf.xlu0
    %v111 = vpop.trf.xlu0
    %v112 = vpop.trf.xlu0
    %v113 = vpop.trf.xlu0
    %v114 = vpop.trf.xlu0
    %v115 = vpop.trf.xlu0
    %v116 = vpop.trf.xlu0
    %117 = vxpose.xlu0.b32.start [1/16] %v46, 128
    %118 = vxpose.xlu0.b32.cont [2/16] 0.0, 128
    %119 = vxpose.xlu0.b32.cont [3/16] 0.0, 128
    %120 = vxpose.xlu0.b32.cont [4/16] 0.0, 128
    %121 = vxpose.xlu0.b32.cont [5/16] 0.0, 128
    %122 = vxpose.xlu0.b32.cont [6/16] 0.0, 128
    %123 = vxpose.xlu0.b32.cont [7/16] 0.0, 128
    %124 = vxpose.xlu0.b32.cont [8/16] 0.0, 128
    %125 = vxpose.xlu0.b32.cont [9/16] 0.0, 128
    %126 = vxpose.xlu0.b32.cont [10/16] 0.0, 128
    %127 = vxpose.xlu0.b32.cont [11/16] 0.0, 128
    %128 = vxpose.xlu0.b32.cont [12/16] 0.0, 128
    %129 = vxpose.xlu0.b32.cont [13/16] 0.0, 128
    %130 = vxpose.xlu0.b32.cont [14/16] 0.0, 128
    %131 = vxpose.xlu0.b32.cont [15/16] 0.0, 128
    %132 = vxpose.xlu0.b32.end [16/16] 0.0, 128
    %v133 = vpop.trf.xlu0
    %v134 = vpop.trf.xlu0
    %v135 = vpop.trf.xlu0
    %v136 = vpop.trf.xlu0
    %v137 = vpop.trf.xlu0
    %v138 = vpop.trf.xlu0
    %v139 = vpop.trf.xlu0
    %v140 = vpop.trf.xlu0
    %v141 = vpop.trf.xlu0
    %v142 = vpop.trf.xlu0
    %v143 = vpop.trf.xlu0
    %v144 = vpop.trf.xlu0
    %v145 = vpop.trf.xlu0
    %v146 = vpop.trf.xlu0
    %v147 = vpop.trf.xlu0
    %v148 = vpop.trf.xlu0
    %v150 = vcombine.high %v49, %v49
    %vm151 = vcmask 31744
    %v153 = vsel %vm151, %v69, 0
    %v156 = vsel %vm151, %v70, 0
    %v159 = vsel %vm151, %v71, 0
    %v162 = vsel %vm151, %v72, 0
    %v165 = vsel %vm151, %v73, 0
    %v168 = vsel %vm151, %v74, 0
    %v171 = vsel %vm151, %v75, 0
    %v174 = vsel %vm151, %v76, 0
    %v177 = vsel %vm151, %v77, 0
    %v180 = vsel %vm151, %v78, 0
    %v183 = vsel %vm151, %v79, 0
    %v186 = vsel %vm151, %v80, 0
    %v189 = vsel %vm151, %v81, 0
    %v192 = vsel %vm151, %v82, 0
    %v195 = vsel %vm151, %v83, 0
    %v198 = vsel %vm151, %v84, 0
    %v201 = vsel %vm151, %v101, 0
    %v204 = vsel %vm151, %v102, 0
    %v207 = vsel %vm151, %v103, 0
    %v210 = vsel %vm151, %v104, 0
    %v213 = vsel %vm151, %v105, 0
    %v216 = vsel %vm151, %v106, 0
    %v219 = vsel %vm151, %v107, 0
    %v222 = vsel %vm151, %v108, 0
    %v225 = vsel %vm151, %v109, 0
    %v228 = vsel %vm151, %v110, 0
    %v231 = vsel %vm151, %v111, 0
    %v234 = vsel %vm151, %v112, 0
    %v237 = vsel %vm151, %v113, 0
    %v240 = vsel %vm151, %v114, 0
    %v243 = vsel %vm151, %v115, 0
    %v246 = vsel %vm151, %v116, 0
    %v249 = vsel %vm151, %v133, 0
    %v252 = vsel %vm151, %v134, 0
    %v255 = vsel %vm151, %v135, 0
    %v258 = vsel %vm151, %v136, 0
    %v261 = vsel %vm151, %v137, 0
    %v264 = vsel %vm151, %v138, 0
    %v267 = vsel %vm151, %v139, 0
    %v270 = vsel %vm151, %v140, 0
    %v273 = vsel %vm151, %v141, 0
    %v276 = vsel %vm151, %v142, 0
    %v279 = vsel %vm151, %v143, 0
    %v282 = vsel %vm151, %v144, 0
    %v285 = vsel %vm151, %v145, 0
    %v288 = vsel %vm151, %v146, 0
    %v291 = vsel %vm151, %v147, 0
    %v294 = vsel %vm151, %v148, 0
    %vm296 = vcmask 1043456
    %v297 = vsel %vm296, %v49, 0
    %v299 = vsel %vm296, %v150, 0
    %301 = vmatprep.subr.mxu0 %v299
    %302 = vmatpush1.msra.mxu0 %v297
    %303 = vmatprep.subr.mxu0 0.0
    %304 = vmatpush1.msra.mxu0 0.0
    %305 = vmatprep.subr.mxu0 0.0
    %306 = vmatpush1.msra.mxu0 0.0
    %307 = vmatprep.subr.mxu0 0.0
    %308 = vmatpush1.msra.mxu0 0.0
    %309 = vmatprep.subr.mxu0 0.0
    %310 = vmatpush1.msra.mxu0 0.0
    %311 = vmatprep.subr.mxu0 0.0
    %312 = vmatpush1.msra.mxu0 0.0
    %313 = vmatprep.subr.mxu0 0.0
    %314 = vmatpush1.msra.mxu0 0.0
    %315 = vmatprep.subr.mxu0 0.0
    %316 = vmatpush1.msra.mxu0 0.0
    %317 = vmatprep.subr.mxu0 0.0
    %318 = vmatpush1.msra.mxu0 0.0
    %319 = vmatprep.subr.mxu0 0.0
    %320 = vmatpush1.msra.mxu0 0.0
    %321 = vmatprep.subr.mxu0 0.0
    %322 = vmatpush1.msra.mxu0 0.0
    %323 = vmatprep.subr.mxu0 0.0
    %324 = vmatpush1.msra.mxu0 0.0
    %325 = vmatprep.subr.mxu0 0.0
    %326 = vmatpush1.msra.mxu0 0.0
    %327 = vmatprep.subr.mxu0 0.0
    %328 = vmatpush1.msra.mxu0 0.0
    %329 = vmatprep.subr.mxu0 0.0
    %330 = vmatpush1.msra.mxu0 0.0
    %331 = vmatprep.subr.mxu0 0.0
    %332 = vmatpush1.msra.mxu0 0.0
    %333 = vmatprep.subr.mxu0 0.0
    %334 = vmatpush1.msra.mxu0 0.0
    %335 = vmatprep.subr.mxu0 0.0
    %336 = vmatpush1.msra.mxu0 0.0
    %337 = vmatprep.subr.mxu0 0.0
    %338 = vmatpush1.msra.mxu0 0.0
    %339 = vmatprep.subr.mxu0 0.0
    %340 = vmatpush1.msra.mxu0 0.0
    %341 = vmatprep.subr.mxu0 0.0
    %342 = vmatpush1.msra.mxu0 0.0
    %343 = vmatprep.subr.mxu0 0.0
    %344 = vmatpush1.msra.mxu0 0.0
    %345 = vmatprep.subr.mxu0 0.0
    %346 = vmatpush1.msra.mxu0 0.0
    %347 = vmatprep.subr.mxu0 0.0
    %348 = vmatpush1.msra.mxu0 0.0
    %349 = vmatprep.subr.mxu0 0.0
    %350 = vmatpush1.msra.mxu0 0.0
    %351 = vmatprep.subr.mxu0 0.0
    %352 = vmatpush1.msra.mxu0 0.0
    %353 = vmatprep.subr.mxu0 0.0
    %354 = vmatpush1.msra.mxu0 0.0
    %355 = vmatprep.subr.mxu0 0.0
    %356 = vmatpush1.msra.mxu0 0.0
    %357 = vmatprep.subr.mxu0 0.0
    %358 = vmatpush1.msra.mxu0 0.0
    %359 = vmatprep.subr.mxu0 0.0
    %360 = vmatpush1.msra.mxu0 0.0
    %361 = vmatprep.subr.mxu0 0.0
    %362 = vmatpush1.msra.mxu0 0.0
    %363 = vmatprep.subr.mxu0 0.0
    %364 = vmatpush1.msra.mxu0 0.0
    %365 = vmatprep.mubr.f32.mxu0 0.0
    %366 = vmatmul.mubr.f32.gmra.mrb[0].mxu0 %v153
    %v367 = vpop.f32.mrb[0].mxu0
    %v368 = vadd.f32 0.0, %v367
    %v369 = vpop.f32.mrb[0].mxu0
    %v370 = vadd.f32 0.0, %v369
    %371 = vmatprep.mubr.f32.mxu0 0.0
    %372 = vmatmul.mubr.f32.gmra.mrb[0].mxu0 %v156
    %v373 = vpop.f32.mrb[0].mxu0
    %v374 = vadd.f32 0.0, %v373
    %v375 = vpop.f32.mrb[0].mxu0
    %v376 = vadd.f32 0.0, %v375
    %377 = vmatprep.mubr.f32.mxu0 0.0
    %378 = vmatmul.mubr.f32.gmra.mrb[0].mxu0 %v159
    %v379 = vpop.f32.mrb[0].mxu0
    %v380 = vadd.f32 0.0, %v379
    %v381 = vpop.f32.mrb[0].mxu0
    %v382 = vadd.f32 0.0, %v381
    %383 = vmatprep.mubr.f32.mxu0 0.0
    %384 = vmatmul.mubr.f32.gmra.mrb[0].mxu0 %v162
    %v385 = vpop.f32.mrb[0].mxu0
    %v386 = vadd.f32 0.0, %v385
    %v387 = vpop.f32.mrb[0].mxu0
    %v388 = vadd.f32 0.0, %v387
    %389 = vmatprep.mubr.f32.mxu0 0.0
    %390 = vmatmul.mubr.f32.gmra.mrb[0].mxu0 %v165
    %v391 = vpop.f32.mrb[0].mxu0
    %v392 = vadd.f32 0.0, %v391
    %v393 = vpop.f32.mrb[0].mxu0
    %v394 = vadd.f32 0.0, %v393
    %395 = vmatprep.mubr.f32.mxu0 0.0
    %396 = vmatmul.mubr.f32.gmra.mrb[0].mxu0 %v168
    %v397 = vpop.f32.mrb[0].mxu0
    %v398 = vadd.f32 0.0, %v397
    %v399 = vpop.f32.mrb[0].mxu0
    %v400 = vadd.f32 0.0, %v399
    %401 = vmatprep.mubr.f32.mxu0 0.0
    %402 = vmatmul.mubr.f32.gmra.mrb[0].mxu0 %v171
    %v403 = vpop.f32.mrb[0].mxu0
    %v404 = vadd.f32 0.0, %v403
    %v405 = vpop.f32.mrb[0].mxu0
    %v406 = vadd.f32 0.0, %v405
    %407 = vmatprep.mubr.f32.mxu0 0.0
    %408 = vmatmul.mubr.f32.gmra.mrb[0].mxu0 %v174
    %v409 = vpop.f32.mrb[0].mxu0
    %v410 = vadd.f32 0.0, %v409
    %v411 = vpop.f32.mrb[0].mxu0
    %v412 = vadd.f32 0.0, %v411
    %413 = vmatprep.mubr.f32.mxu0 0.0
    %414 = vmatmul.mubr.f32.gmra.mrb[0].mxu0 %v177
    %v415 = vpop.f32.mrb[0].mxu0
    %v416 = vadd.f32 0.0, %v415
    %v417 = vpop.f32.mrb[0].mxu0
    %v418 = vadd.f32 0.0, %v417
    %419 = vmatprep.mubr.f32.mxu0 0.0
    %420 = vmatmul.mubr.f32.gmra.mrb[0].mxu0 %v180
    %v421 = vpop.f32.mrb[0].mxu0
    %v422 = vadd.f32 0.0, %v421
    %v423 = vpop.f32.mrb[0].mxu0
    %v424 = vadd.f32 0.0, %v423
    %425 = vmatprep.mubr.f32.mxu0 0.0
    %426 = vmatmul.mubr.f32.gmra.mrb[0].mxu0 %v183
    %v427 = vpop.f32.mrb[0].mxu0
    %v428 = vadd.f32 0.0, %v427
    %v429 = vpop.f32.mrb[0].mxu0
    %v430 = vadd.f32 0.0, %v429
    %431 = vmatprep.mubr.f32.mxu0 0.0
    %432 = vmatmul.mubr.f32.gmra.mrb[0].mxu0 %v186
    %v433 = vpop.f32.mrb[0].mxu0
    %v434 = vadd.f32 0.0, %v433
    %v435 = vpop.f32.mrb[0].mxu0
    %v436 = vadd.f32 0.0, %v435
    %437 = vmatprep.mubr.f32.mxu0 0.0
    %438 = vmatmul.mubr.f32.gmra.mrb[0].mxu0 %v189
    %v439 = vpop.f32.mrb[0].mxu0
    %v440 = vadd.f32 0.0, %v439
    %v441 = vpop.f32.mrb[0].mxu0
    %v442 = vadd.f32 0.0, %v441
    %443 = vmatprep.mubr.f32.mxu0 0.0
    %444 = vmatmul.mubr.f32.gmra.mrb[0].mxu0 %v192
    %v445 = vpop.f32.mrb[0].mxu0
    %v446 = vadd.f32 0.0, %v445
    %v447 = vpop.f32.mrb[0].mxu0
    %v448 = vadd.f32 0.0, %v447
    %449 = vmatprep.mubr.f32.mxu0 0.0
    %450 = vmatmul.mubr.f32.gmra.mrb[0].mxu0 %v195
    %v451 = vpop.f32.mrb[0].mxu0
    %v452 = vadd.f32 0.0, %v451
    %v453 = vpop.f32.mrb[0].mxu0
    %v454 = vadd.f32 0.0, %v453
    %455 = vmatprep.mubr.f32.mxu0 0.0
    %456 = vmatmul.mubr.f32.gmra.mrb[0].mxu0 %v198
    %v457 = vpop.f32.mrb[0].mxu0
    %v458 = vadd.f32 0.0, %v457
    %v459 = vpop.f32.mrb[0].mxu0
    %v460 = vadd.f32 0.0, %v459
    %461 = vmatprep.mubr.f32.mxu0 0.0
    %462 = vmatmul.mubr.f32.gmra.mrb[0].mxu0 %v201
    %v463 = vpop.f32.mrb[0].mxu0
    %v464 = vadd.f32 0.0, %v463
    %v465 = vpop.f32.mrb[0].mxu0
    %v466 = vadd.f32 0.0, %v465
    %467 = vmatprep.mubr.f32.mxu0 0.0
    %468 = vmatmul.mubr.f32.gmra.mrb[0].mxu0 %v204
    %v469 = vpop.f32.mrb[0].mxu0
    %v470 = vadd.f32 0.0, %v469
    %v471 = vpop.f32.mrb[0].mxu0
    %v472 = vadd.f32 0.0, %v471
    %473 = vmatprep.mubr.f32.mxu0 0.0
    %474 = vmatmul.mubr.f32.gmra.mrb[0].mxu0 %v207
    %v475 = vpop.f32.mrb[0].mxu0
    %v476 = vadd.f32 0.0, %v475
    %v477 = vpop.f32.mrb[0].mxu0
    %v478 = vadd.f32 0.0, %v477
    %479 = vmatprep.mubr.f32.mxu0 0.0
    %480 = vmatmul.mubr.f32.gmra.mrb[0].mxu0 %v210
    %v481 = vpop.f32.mrb[0].mxu0
    %v482 = vadd.f32 0.0, %v481
    %v483 = vpop.f32.mrb[0].mxu0
    %v484 = vadd.f32 0.0, %v483
    %485 = vmatprep.mubr.f32.mxu0 0.0
    %486 = vmatmul.mubr.f32.gmra.mrb[0].mxu0 %v213
    %v487 = vpop.f32.mrb[0].mxu0
    %v488 = vadd.f32 0.0, %v487
    %v489 = vpop.f32.mrb[0].mxu0
    %v490 = vadd.f32 0.0, %v489
    %491 = vmatprep.mubr.f32.mxu0 0.0
    %492 = vmatmul.mubr.f32.gmra.mrb[0].mxu0 %v216
    %v493 = vpop.f32.mrb[0].mxu0
    %v494 = vadd.f32 0.0, %v493
    %v495 = vpop.f32.mrb[0].mxu0
    %v496 = vadd.f32 0.0, %v495
    %497 = vmatprep.mubr.f32.mxu0 0.0
    %498 = vmatmul.mubr.f32.gmra.mrb[0].mxu0 %v219
    %v499 = vpop.f32.mrb[0].mxu0
    %v500 = vadd.f32 0.0, %v499
    %v501 = vpop.f32.mrb[0].mxu0
    %v502 = vadd.f32 0.0, %v501
    %503 = vmatprep.mubr.f32.mxu0 0.0
    %504 = vmatmul.mubr.f32.gmra.mrb[0].mxu0 %v222
    %v505 = vpop.f32.mrb[0].mxu0
    %v506 = vadd.f32 0.0, %v505
    %v507 = vpop.f32.mrb[0].mxu0
    %v508 = vadd.f32 0.0, %v507
    %509 = vmatprep.mubr.f32.mxu0 0.0
    %510 = vmatmul.mubr.f32.gmra.mrb[0].mxu0 %v225
    %v511 = vpop.f32.mrb[0].mxu0
    %v512 = vadd.f32 0.0, %v511
    %v513 = vpop.f32.mrb[0].mxu0
    %v514 = vadd.f32 0.0, %v513
    %515 = vmatprep.mubr.f32.mxu0 0.0
    %516 = vmatmul.mubr.f32.gmra.mrb[0].mxu0 %v228
    %v517 = vpop.f32.mrb[0].mxu0
    %v518 = vadd.f32 0.0, %v517
    %v519 = vpop.f32.mrb[0].mxu0
    %v520 = vadd.f32 0.0, %v519
    %521 = vmatprep.mubr.f32.mxu0 0.0
    %522 = vmatmul.mubr.f32.gmra.mrb[0].mxu0 %v231
    %v523 = vpop.f32.mrb[0].mxu0
    %v524 = vadd.f32 0.0, %v523
    %v525 = vpop.f32.mrb[0].mxu0
    %v526 = vadd.f32 0.0, %v525
    %527 = vmatprep.mubr.f32.mxu0 0.0
    %528 = vmatmul.mubr.f32.gmra.mrb[0].mxu0 %v234
    %v529 = vpop.f32.mrb[0].mxu0
    %v530 = vadd.f32 0.0, %v529
    %v531 = vpop.f32.mrb[0].mxu0
    %v532 = vadd.f32 0.0, %v531
    %533 = vmatprep.mubr.f32.mxu0 0.0
    %534 = vmatmul.mubr.f32.gmra.mrb[0].mxu0 %v237
    %v535 = vpop.f32.mrb[0].mxu0
    %v536 = vadd.f32 0.0, %v535
    %v537 = vpop.f32.mrb[0].mxu0
    %v538 = vadd.f32 0.0, %v537
    %539 = vmatprep.mubr.f32.mxu0 0.0
    %540 = vmatmul.mubr.f32.gmra.mrb[0].mxu0 %v240
    %v541 = vpop.f32.mrb[0].mxu0
    %v542 = vadd.f32 0.0, %v541
    %v543 = vpop.f32.mrb[0].mxu0
    %v544 = vadd.f32 0.0, %v543
    %545 = vmatprep.mubr.f32.mxu0 0.0
    %546 = vmatmul.mubr.f32.gmra.mrb[0].mxu0 %v243
    %v547 = vpop.f32.mrb[0].mxu0
    %v548 = vadd.f32 0.0, %v547
    %v549 = vpop.f32.mrb[0].mxu0
    %v550 = vadd.f32 0.0, %v549
    %551 = vmatprep.mubr.f32.mxu0 0.0
    %552 = vmatmul.mubr.f32.gmra.mrb[0].mxu0 %v246
    %v553 = vpop.f32.mrb[0].mxu0
    %v554 = vadd.f32 0.0, %v553
    %v555 = vpop.f32.mrb[0].mxu0
    %v556 = vadd.f32 0.0, %v555
    %557 = vmatprep.mubr.f32.mxu0 0.0
    %558 = vmatmul.mubr.f32.gmra.mrb[0].mxu0 %v249
    %v559 = vpop.f32.mrb[0].mxu0
    %v560 = vadd.f32 0.0, %v559
    %v561 = vpop.f32.mrb[0].mxu0
    %v562 = vadd.f32 0.0, %v561
    %563 = vmatprep.mubr.f32.mxu0 0.0
    %564 = vmatmul.mubr.f32.gmra.mrb[0].mxu0 %v252
    %v565 = vpop.f32.mrb[0].mxu0
    %v566 = vadd.f32 0.0, %v565
    %v567 = vpop.f32.mrb[0].mxu0
    %v568 = vadd.f32 0.0, %v567
    %569 = vmatprep.mubr.f32.mxu0 0.0
    %570 = vmatmul.mubr.f32.gmra.mrb[0].mxu0 %v255
    %v571 = vpop.f32.mrb[0].mxu0
    %v572 = vadd.f32 0.0, %v571
    %v573 = vpop.f32.mrb[0].mxu0
    %v574 = vadd.f32 0.0, %v573
    %575 = vmatprep.mubr.f32.mxu0 0.0
    %576 = vmatmul.mubr.f32.gmra.mrb[0].mxu0 %v258
    %v577 = vpop.f32.mrb[0].mxu0
    %v578 = vadd.f32 0.0, %v577
    %v579 = vpop.f32.mrb[0].mxu0
    %v580 = vadd.f32 0.0, %v579
    %581 = vmatprep.mubr.f32.mxu0 0.0
    %582 = vmatmul.mubr.f32.gmra.mrb[0].mxu0 %v261
    %v583 = vpop.f32.mrb[0].mxu0
    %v584 = vadd.f32 0.0, %v583
    %v585 = vpop.f32.mrb[0].mxu0
    %v586 = vadd.f32 0.0, %v585
    %587 = vmatprep.mubr.f32.mxu0 0.0
    %588 = vmatmul.mubr.f32.gmra.mrb[0].mxu0 %v264
    %v589 = vpop.f32.mrb[0].mxu0
    %v590 = vadd.f32 0.0, %v589
    %v591 = vpop.f32.mrb[0].mxu0
    %v592 = vadd.f32 0.0, %v591
    %593 = vmatprep.mubr.f32.mxu0 0.0
    %594 = vmatmul.mubr.f32.gmra.mrb[0].mxu0 %v267
    %v595 = vpop.f32.mrb[0].mxu0
    %v596 = vadd.f32 0.0, %v595
    %v597 = vpop.f32.mrb[0].mxu0
    %v598 = vadd.f32 0.0, %v597
    %599 = vmatprep.mubr.f32.mxu0 0.0
    %600 = vmatmul.mubr.f32.gmra.mrb[0].mxu0 %v270
    %v601 = vpop.f32.mrb[0].mxu0
    %v602 = vadd.f32 0.0, %v601
    %v603 = vpop.f32.mrb[0].mxu0
    %v604 = vadd.f32 0.0, %v603
    %605 = vmatprep.mubr.f32.mxu0 0.0
    %606 = vmatmul.mubr.f32.gmra.mrb[0].mxu0 %v273
    %v607 = vpop.f32.mrb[0].mxu0
    %v608 = vadd.f32 0.0, %v607
    %v609 = vpop.f32.mrb[0].mxu0
    %v610 = vadd.f32 0.0, %v609
    %611 = vmatprep.mubr.f32.mxu0 0.0
    %612 = vmatmul.mubr.f32.gmra.mrb[0].mxu0 %v276
    %v613 = vpop.f32.mrb[0].mxu0
    %v614 = vadd.f32 0.0, %v613
    %v615 = vpop.f32.mrb[0].mxu0
    %v616 = vadd.f32 0.0, %v615
    %617 = vmatprep.mubr.f32.mxu0 0.0
    %618 = vmatmul.mubr.f32.gmra.mrb[0].mxu0 %v279
    %v619 = vpop.f32.mrb[0].mxu0
    %v620 = vadd.f32 0.0, %v619
    %v621 = vpop.f32.mrb[0].mxu0
    %v622 = vadd.f32 0.0, %v621
    %623 = vmatprep.mubr.f32.mxu0 0.0
    %624 = vmatmul.mubr.f32.gmra.mrb[0].mxu0 %v282
    %v625 = vpop.f32.mrb[0].mxu0
    %v626 = vadd.f32 0.0, %v625
    %v627 = vpop.f32.mrb[0].mxu0
    %v628 = vadd.f32 0.0, %v627
    %629 = vmatprep.mubr.f32.mxu0 0.0
    %630 = vmatmul.mubr.f32.gmra.mrb[0].mxu0 %v285
    %v631 = vpop.f32.mrb[0].mxu0
    %v632 = vadd.f32 0.0, %v631
    %v633 = vpop.f32.mrb[0].mxu0
    %v634 = vadd.f32 0.0, %v633
    %635 = vmatprep.mubr.f32.mxu0 0.0
    %636 = vmatmul.mubr.f32.gmra.mrb[0].mxu0 %v288
    %v637 = vpop.f32.mrb[0].mxu0
    %v638 = vadd.f32 0.0, %v637
    %v639 = vpop.f32.mrb[0].mxu0
    %v640 = vadd.f32 0.0, %v639
    %641 = vmatprep.mubr.f32.mxu0 0.0
    %642 = vmatmul.mubr.f32.gmra.mrb[0].mxu0 %v291
    %v643 = vpop.f32.mrb[0].mxu0
    %v644 = vadd.f32 0.0, %v643
    %v645 = vpop.f32.mrb[0].mxu0
    %v646 = vadd.f32 0.0, %v645
    %647 = vmatprep.mubr.f32.mxu0 0.0
    %648 = vmatmul.mubr.f32.gmra.mrb[0].mxu0 %v294
    %v649 = vpop.f32.mrb[0].mxu0
    %v650 = vadd.f32 0.0, %v649
    %v651 = vpop.f32.mrb[0].mxu0
    %v652 = vadd.f32 0.0, %v651
    %653 = vdwg.mxu0
    %654 = vxpose.xlu0.b32.start [1/16] %v368, 128
    %655 = vxpose.xlu0.b32.cont [2/16] %v374, 128
    %656 = vxpose.xlu0.b32.cont [3/16] %v380, 128
    %657 = vxpose.xlu0.b32.cont [4/16] %v386, 128
    %658 = vxpose.xlu0.b32.cont [5/16] 0.0, 128
    %659 = vxpose.xlu0.b32.cont [6/16] 0.0, 128
    %660 = vxpose.xlu0.b32.cont [7/16] 0.0, 128
    %661 = vxpose.xlu0.b32.cont [8/16] 0.0, 128
    %662 = vxpose.xlu0.b32.cont [9/16] 0.0, 128
    %663 = vxpose.xlu0.b32.cont [10/16] 0.0, 128
    %664 = vxpose.xlu0.b32.cont [11/16] 0.0, 128
    %665 = vxpose.xlu0.b32.cont [12/16] 0.0, 128
    %666 = vxpose.xlu0.b32.cont [13/16] 0.0, 128
    %667 = vxpose.xlu0.b32.cont [14/16] 0.0, 128
    %668 = vxpose.xlu0.b32.cont [15/16] 0.0, 128
    %669 = vxpose.xlu0.b32.end [16/16] 0.0, 128
    %v670 = vpop.trf.xlu0
    %v671 = vpop.trf.xlu0
    %v672 = vpop.trf.xlu0
    %v673 = vpop.trf.xlu0
    %v674 = vpop.trf.xlu0
    %v675 = vpop.trf.xlu0
    %v676 = vpop.trf.xlu0
    %v677 = vpop.trf.xlu0
    %v678 = vpop.trf.xlu0
    %v679 = vpop.trf.xlu0
    %v680 = vpop.trf.xlu0
    %v681 = vpop.trf.xlu0
    %v682 = vpop.trf.xlu0
    %v683 = vpop.trf.xlu0
    %v684 = vpop.trf.xlu0
    %v685 = vpop.trf.xlu0
    %686 = vxpose.xlu0.b32.start [1/16] %v370, 128
    %687 = vxpose.xlu0.b32.cont [2/16] %v376, 128
    %688 = vxpose.xlu0.b32.cont [3/16] %v382, 128
    %689 = vxpose.xlu0.b32.cont [4/16] %v388, 128
    %690 = vxpose.xlu0.b32.cont [5/16] 0.0, 128
    %691 = vxpose.xlu0.b32.cont [6/16] 0.0, 128
    %692 = vxpose.xlu0.b32.cont [7/16] 0.0, 128
    %693 = vxpose.xlu0.b32.cont [8/16] 0.0, 128
    %694 = vxpose.xlu0.b32.cont [9/16] 0.0, 128
    %695 = vxpose.xlu0.b32.cont [10/16] 0.0, 128
    %696 = vxpose.xlu0.b32.cont [11/16] 0.0, 128
    %697 = vxpose.xlu0.b32.cont [12/16] 0.0, 128
    %698 = vxpose.xlu0.b32.cont [13/16] 0.0, 128
    %699 = vxpose.xlu0.b32.cont [14/16] 0.0, 128
    %700 = vxpose.xlu0.b32.cont [15/16] 0.0, 128
    %701 = vxpose.xlu0.b32.end [16/16] 0.0, 128
    %v702 = vpop.trf.xlu0
    %v703 = vpop.trf.xlu0
    %v704 = vpop.trf.xlu0
    %v705 = vpop.trf.xlu0
    %v706 = vpop.trf.xlu0
    %v707 = vpop.trf.xlu0
    %v708 = vpop.trf.xlu0
    %v709 = vpop.trf.xlu0
    %v710 = vpop.trf.xlu0
    %v711 = vpop.trf.xlu0
    %v712 = vpop.trf.xlu0
    %v713 = vpop.trf.xlu0
    %v714 = vpop.trf.xlu0
    %v715 = vpop.trf.xlu0
    %v716 = vpop.trf.xlu0
    %v717 = vpop.trf.xlu0
    %vm718 = vcmask 261120
    %v720 = vsel %vm718, %v670, 0
    %v723 = vsel %vm718, %v671, 0
    %v726 = vsel %vm718, %v672, 0
    %v729 = vsel %vm718, %v673, 0
    %v732 = vsel %vm718, %v674, 0
    %v735 = vsel %vm718, %v675, 0
    %v738 = vsel %vm718, %v676, 0
    %v741 = vsel %vm718, %v677, 0
    %v744 = vsel %vm718, %v678, 0
    %v747 = vsel %vm718, %v679, 0
    %v750 = vsel %vm718, %v680, 0
    %v753 = vsel %vm718, %v681, 0
    %v756 = vsel %vm718, %v682, 0
    %v759 = vsel %vm718, %v683, 0
    %v762 = vsel %vm718, %v684, 0
    %v765 = vsel %vm718, %v685, 0
    %v768 = vsel %vm718, %v702, 0
    %v771 = vsel %vm718, %v703, 0
    %v774 = vsel %vm718, %v704, 0
    %v777 = vsel %vm718, %v705, 0
    %v780 = vsel %vm718, %v706, 0
    %v783 = vsel %vm718, %v707, 0
    %v786 = vsel %vm718, %v708, 0
    %v789 = vsel %vm718, %v709, 0
    %v792 = vsel %vm718, %v710, 0
    %v795 = vsel %vm718, %v711, 0
    %v798 = vsel %vm718, %v712, 0
    %v801 = vsel %vm718, %v713, 0
    %v804 = vsel %vm718, %v714, 0
    %v807 = vsel %vm718, %v715, 0
    %v810 = vsel %vm718, %v716, 0
    %v813 = vsel %vm718, %v717, 0
    %815 = vmatprep.subr.mxu0 %v466
    %816 = vmatpush1.msra.mxu0 %v464
    %817 = vmatprep.subr.mxu0 %v472
    %818 = vmatpush1.msra.mxu0 %v470
    %819 = vmatprep.subr.mxu0 %v478
    %820 = vmatpush1.msra.mxu0 %v476
    %821 = vmatprep.subr.mxu0 %v484
    %822 = vmatpush1.msra.mxu0 %v482
    %823 = vmatprep.subr.mxu0 0.0
    %824 = vmatpush1.msra.mxu0 0.0
    %825 = vmatprep.subr.mxu0 0.0
    %826 = vmatpush1.msra.mxu0 0.0
    %827 = vmatprep.subr.mxu0 0.0
    %828 = vmatpush1.msra.mxu0 0.0
    %829 = vmatprep.subr.mxu0 0.0
    %830 = vmatpush1.msra.mxu0 0.0
    %831 = vmatprep.subr.mxu0 0.0
    %832 = vmatpush1.msra.mxu0 0.0
    %833 = vmatprep.subr.mxu0 0.0
    %834 = vmatpush1.msra.mxu0 0.0
    %835 = vmatprep.subr.mxu0 0.0
    %836 = vmatpush1.msra.mxu0 0.0
    %837 = vmatprep.subr.mxu0 0.0
    %838 = vmatpush1.msra.mxu0 0.0
    %839 = vmatprep.subr.mxu0 0.0
    %840 = vmatpush1.msra.mxu0 0.0
    %841 = vmatprep.subr.mxu0 0.0
    %842 = vmatpush1.msra.mxu0 0.0
    %843 = vmatprep.subr.mxu0 0.0
    %844 = vmatpush1.msra.mxu0 0.0
    %845 = vmatprep.subr.mxu0 0.0
    %846 = vmatpush1.msra.mxu0 0.0
    %847 = vmatprep.subr.mxu0 0.0
    %848 = vmatpush1.msra.mxu0 0.0
    %849 = vmatprep.subr.mxu0 0.0
    %850 = vmatpush1.msra.mxu0 0.0
    %851 = vmatprep.subr.mxu0 0.0
    %852 = vmatpush1.msra.mxu0 0.0
    %853 = vmatprep.subr.mxu0 0.0
    %854 = vmatpush1.msra.mxu0 0.0
    %855 = vmatprep.subr.mxu0 0.0
    %856 = vmatpush1.msra.mxu0 0.0
    %857 = vmatprep.subr.mxu0 0.0
    %858 = vmatpush1.msra.mxu0 0.0
    %859 = vmatprep.subr.mxu0 0.0
    %860 = vmatpush1.msra.mxu0 0.0
    %861 = vmatprep.subr.mxu0 0.0
    %862 = vmatpush1.msra.mxu0 0.0
    %863 = vmatprep.subr.mxu0 0.0
    %864 = vmatpush1.msra.mxu0 0.0
    %865 = vmatprep.subr.mxu0 0.0
    %866 = vmatpush1.msra.mxu0 0.0
    %867 = vmatprep.subr.mxu0 0.0
    %868 = vmatpush1.msra.mxu0 0.0
    %869 = vmatprep.subr.mxu0 0.0
    %870 = vmatpush1.msra.mxu0 0.0
    %871 = vmatprep.subr.mxu0 0.0
    %872 = vmatpush1.msra.mxu0 0.0
    %873 = vmatprep.subr.mxu0 0.0
    %874 = vmatpush1.msra.mxu0 0.0
    %875 = vmatprep.subr.mxu0 0.0
    %876 = vmatpush1.msra.mxu0 0.0
    %877 = vmatprep.subr.mxu0 0.0
    %878 = vmatpush1.msra.mxu0 0.0
    %879 = vmatprep.mubr.f32.mxu0 0.0
    %880 = vmatmul.mubr.f32.gmra.mrb[0].mxu0 %v720
    %v881 = vpop.f32.mrb[0].mxu0
    %v882 = vadd.f32 0.0, %v881
    %v883 = vpop.f32.mrb[0].mxu0
    %v884 = vadd.f32 0.0, %v883
    %885 = vmatprep.mubr.f32.mxu0 0.0
    %886 = vmatmul.mubr.f32.gmra.mrb[0].mxu0 %v723
    %v887 = vpop.f32.mrb[0].mxu0
    %v888 = vadd.f32 0.0, %v887
    %v889 = vpop.f32.mrb[0].mxu0
    %v890 = vadd.f32 0.0, %v889
    %891 = vmatprep.mubr.f32.mxu0 0.0
    %892 = vmatmul.mubr.f32.gmra.mrb[0].mxu0 %v726
    %v893 = vpop.f32.mrb[0].mxu0
    %v894 = vadd.f32 0.0, %v893
    %v895 = vpop.f32.mrb[0].mxu0
    %v896 = vadd.f32 0.0, %v895
    %897 = vmatprep.mubr.f32.mxu0 0.0
    %898 = vmatmul.mubr.f32.gmra.mrb[0].mxu0 %v729
    %v899 = vpop.f32.mrb[0].mxu0
    %v900 = vadd.f32 0.0, %v899
    %v901 = vpop.f32.mrb[0].mxu0
    %v902 = vadd.f32 0.0, %v901
    %903 = vmatprep.mubr.f32.mxu0 0.0
    %904 = vmatmul.mubr.f32.gmra.mrb[0].mxu0 %v732
    %v905 = vpop.f32.mrb[0].mxu0
    %v906 = vadd.f32 0.0, %v905
    %v907 = vpop.f32.mrb[0].mxu0
    %v908 = vadd.f32 0.0, %v907
    %909 = vmatprep.mubr.f32.mxu0 0.0
    %910 = vmatmul.mubr.f32.gmra.mrb[0].mxu0 %v735
    %v911 = vpop.f32.mrb[0].mxu0
    %v912 = vadd.f32 0.0, %v911
    %v913 = vpop.f32.mrb[0].mxu0
    %v914 = vadd.f32 0.0, %v913
    %915 = vmatprep.mubr.f32.mxu0 0.0
    %916 = vmatmul.mubr.f32.gmra.mrb[0].mxu0 %v738
    %v917 = vpop.f32.mrb[0].mxu0
    %v918 = vadd.f32 0.0, %v917
    %v919 = vpop.f32.mrb[0].mxu0
    %v920 = vadd.f32 0.0, %v919
    %921 = vmatprep.mubr.f32.mxu0 0.0
    %922 = vmatmul.mubr.f32.gmra.mrb[0].mxu0 %v741
    %v923 = vpop.f32.mrb[0].mxu0
    %v924 = vadd.f32 0.0, %v923
    %v925 = vpop.f32.mrb[0].mxu0
    %v926 = vadd.f32 0.0, %v925
    %927 = vmatprep.mubr.f32.mxu0 0.0
    %928 = vmatmul.mubr.f32.gmra.mrb[0].mxu0 %v744
    %v929 = vpop.f32.mrb[0].mxu0
    %v930 = vadd.f32 0.0, %v929
    %v931 = vpop.f32.mrb[0].mxu0
    %v932 = vadd.f32 0.0, %v931
    %933 = vmatprep.mubr.f32.mxu0 0.0
    %934 = vmatmul.mubr.f32.gmra.mrb[0].mxu0 %v747
    %v935 = vpop.f32.mrb[0].mxu0
    %v936 = vadd.f32 0.0, %v935
    %v937 = vpop.f32.mrb[0].mxu0
    %v938 = vadd.f32 0.0, %v937
    %939 = vmatprep.mubr.f32.mxu0 0.0
    %940 = vmatmul.mubr.f32.gmra.mrb[0].mxu0 %v750
    %v941 = vpop.f32.mrb[0].mxu0
    %v942 = vadd.f32 0.0, %v941
    %v943 = vpop.f32.mrb[0].mxu0
    %v944 = vadd.f32 0.0, %v943
    %945 = vmatprep.mubr.f32.mxu0 0.0
    %946 = vmatmul.mubr.f32.gmra.mrb[0].mxu0 %v753
    %v947 = vpop.f32.mrb[0].mxu0
    %v948 = vadd.f32 0.0, %v947
    %v949 = vpop.f32.mrb[0].mxu0
    %v950 = vadd.f32 0.0, %v949
    %951 = vmatprep.mubr.f32.mxu0 0.0
    %952 = vmatmul.mubr.f32.gmra.mrb[0].mxu0 %v756
    %v953 = vpop.f32.mrb[0].mxu0
    %v954 = vadd.f32 0.0, %v953
    %v955 = vpop.f32.mrb[0].mxu0
    %v956 = vadd.f32 0.0, %v955
    %957 = vmatprep.mubr.f32.mxu0 0.0
    %958 = vmatmul.mubr.f32.gmra.mrb[0].mxu0 %v759
    %v959 = vpop.f32.mrb[0].mxu0
    %v960 = vadd.f32 0.0, %v959
    %v961 = vpop.f32.mrb[0].mxu0
    %v962 = vadd.f32 0.0, %v961
    %963 = vmatprep.mubr.f32.mxu0 0.0
    %964 = vmatmul.mubr.f32.gmra.mrb[0].mxu0 %v762
    %v965 = vpop.f32.mrb[0].mxu0
    %v966 = vadd.f32 0.0, %v965
    %v967 = vpop.f32.mrb[0].mxu0
    %v968 = vadd.f32 0.0, %v967
    %969 = vmatprep.mubr.f32.mxu0 0.0
    %970 = vmatmul.mubr.f32.gmra.mrb[0].mxu0 %v765
    %v971 = vpop.f32.mrb[0].mxu0
    %v972 = vadd.f32 0.0, %v971
    %v973 = vpop.f32.mrb[0].mxu0
    %v974 = vadd.f32 0.0, %v973
    %975 = vmatprep.mubr.f32.mxu0 0.0
    %976 = vmatmul.mubr.f32.gmra.mrb[0].mxu0 %v768
    %v977 = vpop.f32.mrb[0].mxu0
    %v978 = vadd.f32 0.0, %v977
    %v979 = vpop.f32.mrb[0].mxu0
    %v980 = vadd.f32 0.0, %v979
    %981 = vmatprep.mubr.f32.mxu0 0.0
    %982 = vmatmul.mubr.f32.gmra.mrb[0].mxu0 %v771
    %v983 = vpop.f32.mrb[0].mxu0
    %v984 = vadd.f32 0.0, %v983
    %v985 = vpop.f32.mrb[0].mxu0
    %v986 = vadd.f32 0.0, %v985
    %987 = vmatprep.mubr.f32.mxu0 0.0
    %988 = vmatmul.mubr.f32.gmra.mrb[0].mxu0 %v774
    %v989 = vpop.f32.mrb[0].mxu0
    %v990 = vadd.f32 0.0, %v989
    %v991 = vpop.f32.mrb[0].mxu0
    %v992 = vadd.f32 0.0, %v991
    %993 = vmatprep.mubr.f32.mxu0 0.0
    %994 = vmatmul.mubr.f32.gmra.mrb[0].mxu0 %v777
    %v995 = vpop.f32.mrb[0].mxu0
    %v996 = vadd.f32 0.0, %v995
    %v997 = vpop.f32.mrb[0].mxu0
    %v998 = vadd.f32 0.0, %v997
    %999 = vmatprep.mubr.f32.mxu0 0.0
    %1000 = vmatmul.mubr.f32.gmra.mrb[0].mxu0 %v780
    %v1001 = vpop.f32.mrb[0].mxu0
    %v1002 = vadd.f32 0.0, %v1001
    %v1003 = vpop.f32.mrb[0].mxu0
    %v1004 = vadd.f32 0.0, %v1003
    %1005 = vmatprep.mubr.f32.mxu0 0.0
    %1006 = vmatmul.mubr.f32.gmra.mrb[0].mxu0 %v783
    %v1007 = vpop.f32.mrb[0].mxu0
    %v1008 = vadd.f32 0.0, %v1007
    %v1009 = vpop.f32.mrb[0].mxu0
    %v1010 = vadd.f32 0.0, %v1009
    %1011 = vmatprep.mubr.f32.mxu0 0.0
    %1012 = vmatmul.mubr.f32.gmra.mrb[0].mxu0 %v786
    %v1013 = vpop.f32.mrb[0].mxu0
    %v1014 = vadd.f32 0.0, %v1013
    %v1015 = vpop.f32.mrb[0].mxu0
    %v1016 = vadd.f32 0.0, %v1015
    %1017 = vmatprep.mubr.f32.mxu0 0.0
    %1018 = vmatmul.mubr.f32.gmra.mrb[0].mxu0 %v789
    %v1019 = vpop.f32.mrb[0].mxu0
    %v1020 = vadd.f32 0.0, %v1019
    %v1021 = vpop.f32.mrb[0].mxu0
    %v1022 = vadd.f32 0.0, %v1021
    %1023 = vmatprep.mubr.f32.mxu0 0.0
    %1024 = vmatmul.mubr.f32.gmra.mrb[0].mxu0 %v792
    %v1025 = vpop.f32.mrb[0].mxu0
    %v1026 = vadd.f32 0.0, %v1025
    %v1027 = vpop.f32.mrb[0].mxu0
    %v1028 = vadd.f32 0.0, %v1027
    %1029 = vmatprep.mubr.f32.mxu0 0.0
    %1030 = vmatmul.mubr.f32.gmra.mrb[0].mxu0 %v795
    %v1031 = vpop.f32.mrb[0].mxu0
    %v1032 = vadd.f32 0.0, %v1031
    %v1033 = vpop.f32.mrb[0].mxu0
    %v1034 = vadd.f32 0.0, %v1033
    %1035 = vmatprep.mubr.f32.mxu0 0.0
    %1036 = vmatmul.mubr.f32.gmra.mrb[0].mxu0 %v798
    %v1037 = vpop.f32.mrb[0].mxu0
    %v1038 = vadd.f32 0.0, %v1037
    %v1039 = vpop.f32.mrb[0].mxu0
    %v1040 = vadd.f32 0.0, %v1039
    %1041 = vmatprep.mubr.f32.mxu0 0.0
    %1042 = vmatmul.mubr.f32.gmra.mrb[0].mxu0 %v801
    %v1043 = vpop.f32.mrb[0].mxu0
    %v1044 = vadd.f32 0.0, %v1043
    %v1045 = vpop.f32.mrb[0].mxu0
    %v1046 = vadd.f32 0.0, %v1045
    %1047 = vmatprep.mubr.f32.mxu0 0.0
    %1048 = vmatmul.mubr.f32.gmra.mrb[0].mxu0 %v804
    %v1049 = vpop.f32.mrb[0].mxu0
    %v1050 = vadd.f32 0.0, %v1049
    %v1051 = vpop.f32.mrb[0].mxu0
    %v1052 = vadd.f32 0.0, %v1051
    %1053 = vmatprep.mubr.f32.mxu0 0.0
    %1054 = vmatmul.mubr.f32.gmra.mrb[0].mxu0 %v807
    %v1055 = vpop.f32.mrb[0].mxu0
    %v1056 = vadd.f32 0.0, %v1055
    %v1057 = vpop.f32.mrb[0].mxu0
    %v1058 = vadd.f32 0.0, %v1057
    %1059 = vmatprep.mubr.f32.mxu0 0.0
    %1060 = vmatmul.mubr.f32.gmra.mrb[0].mxu0 %v810
    %v1061 = vpop.f32.mrb[0].mxu0
    %v1062 = vadd.f32 0.0, %v1061
    %v1063 = vpop.f32.mrb[0].mxu0
    %v1064 = vadd.f32 0.0, %v1063
    %1065 = vmatprep.mubr.f32.mxu0 0.0
    %1066 = vmatmul.mubr.f32.gmra.mrb[0].mxu0 %v813
    %v1067 = vpop.f32.mrb[0].mxu0
    %v1068 = vadd.f32 0.0, %v1067
    %v1069 = vpop.f32.mrb[0].mxu0
    %v1070 = vadd.f32 0.0, %v1069
    %1071 = vdwg.mxu0
    %1072 = vxpose.xlu0.b32.start [1/16] %v392, 128
    %1073 = vxpose.xlu0.b32.cont [2/16] %v398, 128
    %1074 = vxpose.xlu0.b32.cont [3/16] %v404, 128
    %1075 = vxpose.xlu0.b32.cont [4/16] %v410, 128
    %1076 = vxpose.xlu0.b32.cont [5/16] 0.0, 128
    %1077 = vxpose.xlu0.b32.cont [6/16] 0.0, 128
    %1078 = vxpose.xlu0.b32.cont [7/16] 0.0, 128
    %1079 = vxpose.xlu0.b32.cont [8/16] 0.0, 128
    %1080 = vxpose.xlu0.b32.cont [9/16] 0.0, 128
    %1081 = vxpose.xlu0.b32.cont [10/16] 0.0, 128
    %1082 = vxpose.xlu0.b32.cont [11/16] 0.0, 128
    %1083 = vxpose.xlu0.b32.cont [12/16] 0.0, 128
    %1084 = vxpose.xlu0.b32.cont [13/16] 0.0, 128
    %1085 = vxpose.xlu0.b32.cont [14/16] 0.0, 128
    %1086 = vxpose.xlu0.b32.cont [15/16] 0.0, 128
    %1087 = vxpose.xlu0.b32.end [16/16] 0.0, 128
    %v1088 = vpop.trf.xlu0
    %v1089 = vpop.trf.xlu0
    %v1090 = vpop.trf.xlu0
    %v1091 = vpop.trf.xlu0
    %v1092 = vpop.trf.xlu0
    %v1093 = vpop.trf.xlu0
    %v1094 = vpop.trf.xlu0
    %v1095 = vpop.trf.xlu0
    %v1096 = vpop.trf.xlu0
    %v1097 = vpop.trf.xlu0
    %v1098 = vpop.trf.xlu0
    %v1099 = vpop.trf.xlu0
    %v1100 = vpop.trf.xlu0
    %v1101 = vpop.trf.xlu0
    %v1102 = vpop.trf.xlu0
    %v1103 = vpop.trf.xlu0
    %1104 = vxpose.xlu0.b32.start [1/16] %v394, 128
    %1105 = vxpose.xlu0.b32.cont [2/16] %v400, 128
    %1106 = vxpose.xlu0.b32.cont [3/16] %v406, 128
    %1107 = vxpose.xlu0.b32.cont [4/16] %v412, 128
    %1108 = vxpose.xlu0.b32.cont [5/16] 0.0, 128
    %1109 = vxpose.xlu0.b32.cont [6/16] 0.0, 128
    %1110 = vxpose.xlu0.b32.cont [7/16] 0.0, 128
    %1111 = vxpose.xlu0.b32.cont [8/16] 0.0, 128
    %1112 = vxpose.xlu0.b32.cont [9/16] 0.0, 128
    %1113 = vxpose.xlu0.b32.cont [10/16] 0.0, 128
    %1114 = vxpose.xlu0.b32.cont [11/16] 0.0, 128
    %1115 = vxpose.xlu0.b32.cont [12/16] 0.0, 128
    %1116 = vxpose.xlu0.b32.cont [13/16] 0.0, 128
    %1117 = vxpose.xlu0.b32.cont [14/16] 0.0, 128
    %1118 = vxpose.xlu0.b32.cont [15/16] 0.0, 128
    %1119 = vxpose.xlu0.b32.end [16/16] 0.0, 128
    %v1120 = vpop.trf.xlu0
    %v1121 = vpop.trf.xlu0
    %v1122 = vpop.trf.xlu0
    %v1123 = vpop.trf.xlu0
    %v1124 = vpop.trf.xlu0
    %v1125 = vpop.trf.xlu0
    %v1126 = vpop.trf.xlu0
    %v1127 = vpop.trf.xlu0
    %v1128 = vpop.trf.xlu0
    %v1129 = vpop.trf.xlu0
    %v1130 = vpop.trf.xlu0
    %v1131 = vpop.trf.xlu0
    %v1132 = vpop.trf.xlu0
    %v1133 = vpop.trf.xlu0
    %v1134 = vpop.trf.xlu0
    %v1135 = vpop.trf.xlu0
    %v1137 = vsel %vm718, %v1088, 0
    %v1140 = vsel %vm718, %v1089, 0
    %v1143 = vsel %vm718, %v1090, 0
    %v1146 = vsel %vm718, %v1091, 0
    %v1149 = vsel %vm718, %v1092, 0
    %v1152 = vsel %vm718, %v1093, 0
    %v1155 = vsel %vm718, %v1094, 0
    %v1158 = vsel %vm718, %v1095, 0
    %v1161 = vsel %vm718, %v1096, 0
    %v1164 = vsel %vm718, %v1097, 0
    %v1167 = vsel %vm718, %v1098, 0
    %v1170 = vsel %vm718, %v1099, 0
    %v1173 = vsel %vm718, %v1100, 0
    %v1176 = vsel %vm718, %v1101, 0
    %v1179 = vsel %vm718, %v1102, 0
    %v1182 = vsel %vm718, %v1103, 0
    %v1185 = vsel %vm718, %v1120, 0
    %v1188 = vsel %vm718, %v1121, 0
    %v1191 = vsel %vm718, %v1122, 0
    %v1194 = vsel %vm718, %v1123, 0
    %v1197 = vsel %vm718, %v1124, 0
    %v1200 = vsel %vm718, %v1125, 0
    %v1203 = vsel %vm718, %v1126, 0
    %v1206 = vsel %vm718, %v1127, 0
    %v1209 = vsel %vm718, %v1128, 0
    %v1212 = vsel %vm718, %v1129, 0
    %v1215 = vsel %vm718, %v1130, 0
    %v1218 = vsel %vm718, %v1131, 0
    %v1221 = vsel %vm718, %v1132, 0
    %v1224 = vsel %vm718, %v1133, 0
    %v1227 = vsel %vm718, %v1134, 0
    %v1230 = vsel %vm718, %v1135, 0
    %1232 = vmatprep.subr.mxu0 %v490
    %1233 = vmatpush1.msra.mxu0 %v488
    %1234 = vmatprep.subr.mxu0 %v496
    %1235 = vmatpush1.msra.mxu0 %v494
    %1236 = vmatprep.subr.mxu0 %v502
    %1237 = vmatpush1.msra.mxu0 %v500
    %1238 = vmatprep.subr.mxu0 %v508
    %1239 = vmatpush1.msra.mxu0 %v506
    %1240 = vmatprep.subr.mxu0 0.0
    %1241 = vmatpush1.msra.mxu0 0.0
    %1242 = vmatprep.subr.mxu0 0.0
    %1243 = vmatpush1.msra.mxu0 0.0
    %1244 = vmatprep.subr.mxu0 0.0
    %1245 = vmatpush1.msra.mxu0 0.0
    %1246 = vmatprep.subr.mxu0 0.0
    %1247 = vmatpush1.msra.mxu0 0.0
    %1248 = vmatprep.subr.mxu0 0.0
    %1249 = vmatpush1.msra.mxu0 0.0
    %1250 = vmatprep.subr.mxu0 0.0
    %1251 = vmatpush1.msra.mxu0 0.0
    %1252 = vmatprep.subr.mxu0 0.0
    %1253 = vmatpush1.msra.mxu0 0.0
    %1254 = vmatprep.subr.mxu0 0.0
    %1255 = vmatpush1.msra.mxu0 0.0
    %1256 = vmatprep.subr.mxu0 0.0
    %1257 = vmatpush1.msra.mxu0 0.0
    %1258 = vmatprep.subr.mxu0 0.0
    %1259 = vmatpush1.msra.mxu0 0.0
    %1260 = vmatprep.subr.mxu0 0.0
    %1261 = vmatpush1.msra.mxu0 0.0
    %1262 = vmatprep.subr.mxu0 0.0
    %1263 = vmatpush1.msra.mxu0 0.0
    %1264 = vmatprep.subr.mxu0 0.0
    %1265 = vmatpush1.msra.mxu0 0.0
    %1266 = vmatprep.subr.mxu0 0.0
    %1267 = vmatpush1.msra.mxu0 0.0
    %1268 = vmatprep.subr.mxu0 0.0
    %1269 = vmatpush1.msra.mxu0 0.0
    %1270 = vmatprep.subr.mxu0 0.0
    %1271 = vmatpush1.msra.mxu0 0.0
    %1272 = vmatprep.subr.mxu0 0.0
    %1273 = vmatpush1.msra.mxu0 0.0
    %1274 = vmatprep.subr.mxu0 0.0
    %1275 = vmatpush1.msra.mxu0 0.0
    %1276 = vmatprep.subr.mxu0 0.0
    %1277 = vmatpush1.msra.mxu0 0.0
    %1278 = vmatprep.subr.mxu0 0.0
    %1279 = vmatpush1.msra.mxu0 0.0
    %1280 = vmatprep.subr.mxu0 0.0
    %1281 = vmatpush1.msra.mxu0 0.0
    %1282 = vmatprep.subr.mxu0 0.0
    %1283 = vmatpush1.msra.mxu0 0.0
    %1284 = vmatprep.subr.mxu0 0.0
    %1285 = vmatpush1.msra.mxu0 0.0
    %1286 = vmatprep.subr.mxu0 0.0
    %1287 = vmatpush1.msra.mxu0 0.0
    %1288 = vmatprep.subr.mxu0 0.0
    %1289 = vmatpush1.msra.mxu0 0.0
    %1290 = vmatprep.subr.mxu0 0.0
    %1291 = vmatpush1.msra.mxu0 0.0
    %1292 = vmatprep.subr.mxu0 0.0
    %1293 = vmatpush1.msra.mxu0 0.0
    %1294 = vmatprep.subr.mxu0 0.0
    %1295 = vmatpush1.msra.mxu0 0.0
    %1296 = vmatprep.mubr.f32.mxu0 0.0
    %1297 = vmatmul.mubr.f32.gmra.mrb[0].mxu0 %v1137
    %v1298 = vpop.f32.mrb[0].mxu0
    %v1299 = vadd.f32 0.0, %v1298
    %v1300 = vpop.f32.mrb[0].mxu0
    %v1301 = vadd.f32 0.0, %v1300
    %1302 = vmatprep.mubr.f32.mxu0 0.0
    %1303 = vmatmul.mubr.f32.gmra.mrb[0].mxu0 %v1140
    %v1304 = vpop.f32.mrb[0].mxu0
    %v1305 = vadd.f32 0.0, %v1304
    %v1306 = vpop.f32.mrb[0].mxu0
    %v1307 = vadd.f32 0.0, %v1306
    %1308 = vmatprep.mubr.f32.mxu0 0.0
    %1309 = vmatmul.mubr.f32.gmra.mrb[0].mxu0 %v1143
    %v1310 = vpop.f32.mrb[0].mxu0
    %v1311 = vadd.f32 0.0, %v1310
    %v1312 = vpop.f32.mrb[0].mxu0
    %v1313 = vadd.f32 0.0, %v1312
    %1314 = vmatprep.mubr.f32.mxu0 0.0
    %1315 = vmatmul.mubr.f32.gmra.mrb[0].mxu0 %v1146
    %v1316 = vpop.f32.mrb[0].mxu0
    %v1317 = vadd.f32 0.0, %v1316
    %v1318 = vpop.f32.mrb[0].mxu0
    %v1319 = vadd.f32 0.0, %v1318
    %1320 = vmatprep.mubr.f32.mxu0 0.0
    %1321 = vmatmul.mubr.f32.gmra.mrb[0].mxu0 %v1149
    %v1322 = vpop.f32.mrb[0].mxu0
    %v1323 = vadd.f32 0.0, %v1322
    %v1324 = vpop.f32.mrb[0].mxu0
    %v1325 = vadd.f32 0.0, %v1324
    %1326 = vmatprep.mubr.f32.mxu0 0.0
    %1327 = vmatmul.mubr.f32.gmra.mrb[0].mxu0 %v1152
    %v1328 = vpop.f32.mrb[0].mxu0
    %v1329 = vadd.f32 0.0, %v1328
    %v1330 = vpop.f32.mrb[0].mxu0
    %v1331 = vadd.f32 0.0, %v1330
    %1332 = vmatprep.mubr.f32.mxu0 0.0
    %1333 = vmatmul.mubr.f32.gmra.mrb[0].mxu0 %v1155
    %v1334 = vpop.f32.mrb[0].mxu0
    %v1335 = vadd.f32 0.0, %v1334
    %v1336 = vpop.f32.mrb[0].mxu0
    %v1337 = vadd.f32 0.0, %v1336
    %1338 = vmatprep.mubr.f32.mxu0 0.0
    %1339 = vmatmul.mubr.f32.gmra.mrb[0].mxu0 %v1158
    %v1340 = vpop.f32.mrb[0].mxu0
    %v1341 = vadd.f32 0.0, %v1340
    %v1342 = vpop.f32.mrb[0].mxu0
    %v1343 = vadd.f32 0.0, %v1342
    %1344 = vmatprep.mubr.f32.mxu0 0.0
    %1345 = vmatmul.mubr.f32.gmra.mrb[0].mxu0 %v1161
    %v1346 = vpop.f32.mrb[0].mxu0
    %v1347 = vadd.f32 0.0, %v1346
    %v1348 = vpop.f32.mrb[0].mxu0
    %v1349 = vadd.f32 0.0, %v1348
    %1350 = vmatprep.mubr.f32.mxu0 0.0
    %1351 = vmatmul.mubr.f32.gmra.mrb[0].mxu0 %v1164
    %v1352 = vpop.f32.mrb[0].mxu0
    %v1353 = vadd.f32 0.0, %v1352
    %v1354 = vpop.f32.mrb[0].mxu0
    %v1355 = vadd.f32 0.0, %v1354
    %1356 = vmatprep.mubr.f32.mxu0 0.0
    %1357 = vmatmul.mubr.f32.gmra.mrb[0].mxu0 %v1167
    %v1358 = vpop.f32.mrb[0].mxu0
    %v1359 = vadd.f32 0.0, %v1358
    %v1360 = vpop.f32.mrb[0].mxu0
    %v1361 = vadd.f32 0.0, %v1360
    %1362 = vmatprep.mubr.f32.mxu0 0.0
    %1363 = vmatmul.mubr.f32.gmra.mrb[0].mxu0 %v1170
    %v1364 = vpop.f32.mrb[0].mxu0
    %v1365 = vadd.f32 0.0, %v1364
    %v1366 = vpop.f32.mrb[0].mxu0
    %v1367 = vadd.f32 0.0, %v1366
    %1368 = vmatprep.mubr.f32.mxu0 0.0
    %1369 = vmatmul.mubr.f32.gmra.mrb[0].mxu0 %v1173
    %v1370 = vpop.f32.mrb[0].mxu0
    %v1371 = vadd.f32 0.0, %v1370
    %v1372 = vpop.f32.mrb[0].mxu0
    %v1373 = vadd.f32 0.0, %v1372
    %1374 = vmatprep.mubr.f32.mxu0 0.0
    %1375 = vmatmul.mubr.f32.gmra.mrb[0].mxu0 %v1176
    %v1376 = vpop.f32.mrb[0].mxu0
    %v1377 = vadd.f32 0.0, %v1376
    %v1378 = vpop.f32.mrb[0].mxu0
    %v1379 = vadd.f32 0.0, %v1378
    %1380 = vmatprep.mubr.f32.mxu0 0.0
    %1381 = vmatmul.mubr.f32.gmra.mrb[0].mxu0 %v1179
    %v1382 = vpop.f32.mrb[0].mxu0
    %v1383 = vadd.f32 0.0, %v1382
    %v1384 = vpop.f32.mrb[0].mxu0
    %v1385 = vadd.f32 0.0, %v1384
    %1386 = vmatprep.mubr.f32.mxu0 0.0
    %1387 = vmatmul.mubr.f32.gmra.mrb[0].mxu0 %v1182
    %v1388 = vpop.f32.mrb[0].mxu0
    %v1389 = vadd.f32 0.0, %v1388
    %v1390 = vpop.f32.mrb[0].mxu0
    %v1391 = vadd.f32 0.0, %v1390
    %1392 = vmatprep.mubr.f32.mxu0 0.0
    %1393 = vmatmul.mubr.f32.gmra.mrb[0].mxu0 %v1185
    %v1394 = vpop.f32.mrb[0].mxu0
    %v1395 = vadd.f32 0.0, %v1394
    %v1396 = vpop.f32.mrb[0].mxu0
    %v1397 = vadd.f32 0.0, %v1396
    %1398 = vmatprep.mubr.f32.mxu0 0.0
    %1399 = vmatmul.mubr.f32.gmra.mrb[0].mxu0 %v1188
    %v1400 = vpop.f32.mrb[0].mxu0
    %v1401 = vadd.f32 0.0, %v1400
    %v1402 = vpop.f32.mrb[0].mxu0
    %v1403 = vadd.f32 0.0, %v1402
    %1404 = vmatprep.mubr.f32.mxu0 0.0
    %1405 = vmatmul.mubr.f32.gmra.mrb[0].mxu0 %v1191
    %v1406 = vpop.f32.mrb[0].mxu0
    %v1407 = vadd.f32 0.0, %v1406
    %v1408 = vpop.f32.mrb[0].mxu0
    %v1409 = vadd.f32 0.0, %v1408
    %1410 = vmatprep.mubr.f32.mxu0 0.0
    %1411 = vmatmul.mubr.f32.gmra.mrb[0].mxu0 %v1194
    %v1412 = vpop.f32.mrb[0].mxu0
    %v1413 = vadd.f32 0.0, %v1412
    %v1414 = vpop.f32.mrb[0].mxu0
    %v1415 = vadd.f32 0.0, %v1414
    %1416 = vmatprep.mubr.f32.mxu0 0.0
    %1417 = vmatmul.mubr.f32.gmra.mrb[0].mxu0 %v1197
    %v1418 = vpop.f32.mrb[0].mxu0
    %v1419 = vadd.f32 0.0, %v1418
    %v1420 = vpop.f32.mrb[0].mxu0
    %v1421 = vadd.f32 0.0, %v1420
    %1422 = vmatprep.mubr.f32.mxu0 0.0
    %1423 = vmatmul.mubr.f32.gmra.mrb[0].mxu0 %v1200
    %v1424 = vpop.f32.mrb[0].mxu0
    %v1425 = vadd.f32 0.0, %v1424
    %v1426 = vpop.f32.mrb[0].mxu0
    %v1427 = vadd.f32 0.0, %v1426
    %1428 = vmatprep.mubr.f32.mxu0 0.0
    %1429 = vmatmul.mubr.f32.gmra.mrb[0].mxu0 %v1203
    %v1430 = vpop.f32.mrb[0].mxu0
    %v1431 = vadd.f32 0.0, %v1430
    %v1432 = vpop.f32.mrb[0].mxu0
    %v1433 = vadd.f32 0.0, %v1432
    %1434 = vmatprep.mubr.f32.mxu0 0.0
    %1435 = vmatmul.mubr.f32.gmra.mrb[0].mxu0 %v1206
    %v1436 = vpop.f32.mrb[0].mxu0
    %v1437 = vadd.f32 0.0, %v1436
    %v1438 = vpop.f32.mrb[0].mxu0
    %v1439 = vadd.f32 0.0, %v1438
    %1440 = vmatprep.mubr.f32.mxu0 0.0
    %1441 = vmatmul.mubr.f32.gmra.mrb[0].mxu0 %v1209
    %v1442 = vpop.f32.mrb[0].mxu0
    %v1443 = vadd.f32 0.0, %v1442
    %v1444 = vpop.f32.mrb[0].mxu0
    %v1445 = vadd.f32 0.0, %v1444
    %1446 = vmatprep.mubr.f32.mxu0 0.0
    %1447 = vmatmul.mubr.f32.gmra.mrb[0].mxu0 %v1212
    %v1448 = vpop.f32.mrb[0].mxu0
    %v1449 = vadd.f32 0.0, %v1448
    %v1450 = vpop.f32.mrb[0].mxu0
    %v1451 = vadd.f32 0.0, %v1450
    %1452 = vmatprep.mubr.f32.mxu0 0.0
    %1453 = vmatmul.mubr.f32.gmra.mrb[0].mxu0 %v1215
    %v1454 = vpop.f32.mrb[0].mxu0
    %v1455 = vadd.f32 0.0, %v1454
    %v1456 = vpop.f32.mrb[0].mxu0
    %v1457 = vadd.f32 0.0, %v1456
    %1458 = vmatprep.mubr.f32.mxu0 0.0
    %1459 = vmatmul.mubr.f32.gmra.mrb[0].mxu0 %v1218
    %v1460 = vpop.f32.mrb[0].mxu0
    %v1461 = vadd.f32 0.0, %v1460
    %v1462 = vpop.f32.mrb[0].mxu0
    %v1463 = vadd.f32 0.0, %v1462
    %1464 = vmatprep.mubr.f32.mxu0 0.0
    %1465 = vmatmul.mubr.f32.gmra.mrb[0].mxu0 %v1221
    %v1466 = vpop.f32.mrb[0].mxu0
    %v1467 = vadd.f32 0.0, %v1466
    %v1468 = vpop.f32.mrb[0].mxu0
    %v1469 = vadd.f32 0.0, %v1468
    %1470 = vmatprep.mubr.f32.mxu0 0.0
    %1471 = vmatmul.mubr.f32.gmra.mrb[0].mxu0 %v1224
    %v1472 = vpop.f32.mrb[0].mxu0
    %v1473 = vadd.f32 0.0, %v1472
    %v1474 = vpop.f32.mrb[0].mxu0
    %v1475 = vadd.f32 0.0, %v1474
    %1476 = vmatprep.mubr.f32.mxu0 0.0
    %1477 = vmatmul.mubr.f32.gmra.mrb[0].mxu0 %v1227
    %v1478 = vpop.f32.mrb[0].mxu0
    %v1479 = vadd.f32 0.0, %v1478
    %v1480 = vpop.f32.mrb[0].mxu0
    %v1481 = vadd.f32 0.0, %v1480
    %1482 = vmatprep.mubr.f32.mxu0 0.0
    %1483 = vmatmul.mubr.f32.gmra.mrb[0].mxu0 %v1230
    %v1484 = vpop.f32.mrb[0].mxu0
    %v1485 = vadd.f32 0.0, %v1484
    %v1486 = vpop.f32.mrb[0].mxu0
    %v1487 = vadd.f32 0.0, %v1486
    %1488 = vdwg.mxu0
    %1489 = vxpose.xlu0.b32.start [1/16] %v416, 128
    %1490 = vxpose.xlu0.b32.cont [2/16] %v422, 128
    %1491 = vxpose.xlu0.b32.cont [3/16] %v428, 128
    %1492 = vxpose.xlu0.b32.cont [4/16] %v434, 128
    %1493 = vxpose.xlu0.b32.cont [5/16] 0.0, 128
    %1494 = vxpose.xlu0.b32.cont [6/16] 0.0, 128
    %1495 = vxpose.xlu0.b32.cont [7/16] 0.0, 128
    %1496 = vxpose.xlu0.b32.cont [8/16] 0.0, 128
    %1497 = vxpose.xlu0.b32.cont [9/16] 0.0, 128
    %1498 = vxpose.xlu0.b32.cont [10/16] 0.0, 128
    %1499 = vxpose.xlu0.b32.cont [11/16] 0.0, 128
    %1500 = vxpose.xlu0.b32.cont [12/16] 0.0, 128
    %1501 = vxpose.xlu0.b32.cont [13/16] 0.0, 128
    %1502 = vxpose.xlu0.b32.cont [14/16] 0.0, 128
    %1503 = vxpose.xlu0.b32.cont [15/16] 0.0, 128
    %1504 = vxpose.xlu0.b32.end [16/16] 0.0, 128
    %v1505 = vpop.trf.xlu0
    %v1506 = vpop.trf.xlu0
    %v1507 = vpop.trf.xlu0
    %v1508 = vpop.trf.xlu0
    %v1509 = vpop.trf.xlu0
    %v1510 = vpop.trf.xlu0
    %v1511 = vpop.trf.xlu0
    %v1512 = vpop.trf.xlu0
    %v1513 = vpop.trf.xlu0
    %v1514 = vpop.trf.xlu0
    %v1515 = vpop.trf.xlu0
    %v1516 = vpop.trf.xlu0
    %v1517 = vpop.trf.xlu0
    %v1518 = vpop.trf.xlu0
    %v1519 = vpop.trf.xlu0
    %v1520 = vpop.trf.xlu0
    %1521 = vxpose.xlu0.b32.start [1/16] %v418, 128
    %1522 = vxpose.xlu0.b32.cont [2/16] %v424, 128
    %1523 = vxpose.xlu0.b32.cont [3/16] %v430, 128
    %1524 = vxpose.xlu0.b32.cont [4/16] %v436, 128
    %1525 = vxpose.xlu0.b32.cont [5/16] 0.0, 128
    %1526 = vxpose.xlu0.b32.cont [6/16] 0.0, 128
    %1527 = vxpose.xlu0.b32.cont [7/16] 0.0, 128
    %1528 = vxpose.xlu0.b32.cont [8/16] 0.0, 128
    %1529 = vxpose.xlu0.b32.cont [9/16] 0.0, 128
    %1530 = vxpose.xlu0.b32.cont [10/16] 0.0, 128
    %1531 = vxpose.xlu0.b32.cont [11/16] 0.0, 128
    %1532 = vxpose.xlu0.b32.cont [12/16] 0.0, 128
    %1533 = vxpose.xlu0.b32.cont [13/16] 0.0, 128
    %1534 = vxpose.xlu0.b32.cont [14/16] 0.0, 128
    %1535 = vxpose.xlu0.b32.cont [15/16] 0.0, 128
    %1536 = vxpose.xlu0.b32.end [16/16] 0.0, 128
    %v1537 = vpop.trf.xlu0
    %v1538 = vpop.trf.xlu0
    %v1539 = vpop.trf.xlu0
    %v1540 = vpop.trf.xlu0
    %v1541 = vpop.trf.xlu0
    %v1542 = vpop.trf.xlu0
    %v1543 = vpop.trf.xlu0
    %v1544 = vpop.trf.xlu0
    %v1545 = vpop.trf.xlu0
    %v1546 = vpop.trf.xlu0
    %v1547 = vpop.trf.xlu0
    %v1548 = vpop.trf.xlu0
    %v1549 = vpop.trf.xlu0
    %v1550 = vpop.trf.xlu0
    %v1551 = vpop.trf.xlu0
    %v1552 = vpop.trf.xlu0
    %v1554 = vsel %vm718, %v1505, 0
    %v1557 = vsel %vm718, %v1506, 0
    %v1560 = vsel %vm718, %v1507, 0
    %v1563 = vsel %vm718, %v1508, 0
    %v1566 = vsel %vm718, %v1509, 0
    %v1569 = vsel %vm718, %v1510, 0
    %v1572 = vsel %vm718, %v1511, 0
    %v1575 = vsel %vm718, %v1512, 0
    %v1578 = vsel %vm718, %v1513, 0
    %v1581 = vsel %vm718, %v1514, 0
    %v1584 = vsel %vm718, %v1515, 0
    %v1587 = vsel %vm718, %v1516, 0
    %v1590 = vsel %vm718, %v1517, 0
    %v1593 = vsel %vm718, %v1518, 0
    %v1596 = vsel %vm718, %v1519, 0
    %v1599 = vsel %vm718, %v1520, 0
    %v1602 = vsel %vm718, %v1537, 0
    %v1605 = vsel %vm718, %v1538, 0
    %v1608 = vsel %vm718, %v1539, 0
    %v1611 = vsel %vm718, %v1540, 0
    %v1614 = vsel %vm718, %v1541, 0
    %v1617 = vsel %vm718, %v1542, 0
    %v1620 = vsel %vm718, %v1543, 0
    %v1623 = vsel %vm718, %v1544, 0
    %v1626 = vsel %vm718, %v1545, 0
    %v1629 = vsel %vm718, %v1546, 0
    %v1632 = vsel %vm718, %v1547, 0
    %v1635 = vsel %vm718, %v1548, 0
    %v1638 = vsel %vm718, %v1549, 0
    %v1641 = vsel %vm718, %v1550, 0
    %v1644 = vsel %vm718, %v1551, 0
    %v1647 = vsel %vm718, %v1552, 0
    %1649 = vmatprep.subr.mxu0 %v514
    %1650 = vmatpush1.msra.mxu0 %v512
    %1651 = vmatprep.subr.mxu0 %v520
    %1652 = vmatpush1.msra.mxu0 %v518
    %1653 = vmatprep.subr.mxu0 %v526
    %1654 = vmatpush1.msra.mxu0 %v524
    %1655 = vmatprep.subr.mxu0 %v532
    %1656 = vmatpush1.msra.mxu0 %v530
    %1657 = vmatprep.subr.mxu0 0.0
    %1658 = vmatpush1.msra.mxu0 0.0
    %1659 = vmatprep.subr.mxu0 0.0
    %1660 = vmatpush1.msra.mxu0 0.0
    %1661 = vmatprep.subr.mxu0 0.0
    %1662 = vmatpush1.msra.mxu0 0.0
    %1663 = vmatprep.subr.mxu0 0.0
    %1664 = vmatpush1.msra.mxu0 0.0
    %1665 = vmatprep.subr.mxu0 0.0
    %1666 = vmatpush1.msra.mxu0 0.0
    %1667 = vmatprep.subr.mxu0 0.0
    %1668 = vmatpush1.msra.mxu0 0.0
    %1669 = vmatprep.subr.mxu0 0.0
    %1670 = vmatpush1.msra.mxu0 0.0
    %1671 = vmatprep.subr.mxu0 0.0
    %1672 = vmatpush1.msra.mxu0 0.0
    %1673 = vmatprep.subr.mxu0 0.0
    %1674 = vmatpush1.msra.mxu0 0.0
    %1675 = vmatprep.subr.mxu0 0.0
    %1676 = vmatpush1.msra.mxu0 0.0
    %1677 = vmatprep.subr.mxu0 0.0
    %1678 = vmatpush1.msra.mxu0 0.0
    %1679 = vmatprep.subr.mxu0 0.0
    %1680 = vmatpush1.msra.mxu0 0.0
    %1681 = vmatprep.subr.mxu0 0.0
    %1682 = vmatpush1.msra.mxu0 0.0
    %1683 = vmatprep.subr.mxu0 0.0
    %1684 = vmatpush1.msra.mxu0 0.0
    %1685 = vmatprep.subr.mxu0 0.0
    %1686 = vmatpush1.msra.mxu0 0.0
    %1687 = vmatprep.subr.mxu0 0.0
    %1688 = vmatpush1.msra.mxu0 0.0
    %1689 = vmatprep.subr.mxu0 0.0
    %1690 = vmatpush1.msra.mxu0 0.0
    %1691 = vmatprep.subr.mxu0 0.0
    %1692 = vmatpush1.msra.mxu0 0.0
    %1693 = vmatprep.subr.mxu0 0.0
    %1694 = vmatpush1.msra.mxu0 0.0
    %1695 = vmatprep.subr.mxu0 0.0
    %1696 = vmatpush1.msra.mxu0 0.0
    %1697 = vmatprep.subr.mxu0 0.0
    %1698 = vmatpush1.msra.mxu0 0.0
    %1699 = vmatprep.subr.mxu0 0.0
    %1700 = vmatpush1.msra.mxu0 0.0
    %1701 = vmatprep.subr.mxu0 0.0
    %1702 = vmatpush1.msra.mxu0 0.0
    %1703 = vmatprep.subr.mxu0 0.0
    %1704 = vmatpush1.msra.mxu0 0.0
    %1705 = vmatprep.subr.mxu0 0.0
    %1706 = vmatpush1.msra.mxu0 0.0
    %1707 = vmatprep.subr.mxu0 0.0
    %1708 = vmatpush1.msra.mxu0 0.0
    %1709 = vmatprep.subr.mxu0 0.0
    %1710 = vmatpush1.msra.mxu0 0.0
    %1711 = vmatprep.subr.mxu0 0.0
    %1712 = vmatpush1.msra.mxu0 0.0
    %1713 = vmatprep.mubr.f32.mxu0 0.0
    %1714 = vmatmul.mubr.f32.gmra.mrb[0].mxu0 %v1554
    %v1715 = vpop.f32.mrb[0].mxu0
    %v1716 = vadd.f32 0.0, %v1715
    %v1717 = vpop.f32.mrb[0].mxu0
    %v1718 = vadd.f32 0.0, %v1717
    %1719 = vmatprep.mubr.f32.mxu0 0.0
    %1720 = vmatmul.mubr.f32.gmra.mrb[0].mxu0 %v1557
    %v1721 = vpop.f32.mrb[0].mxu0
    %v1722 = vadd.f32 0.0, %v1721
    %v1723 = vpop.f32.mrb[0].mxu0
    %v1724 = vadd.f32 0.0, %v1723
    %1725 = vmatprep.mubr.f32.mxu0 0.0
    %1726 = vmatmul.mubr.f32.gmra.mrb[0].mxu0 %v1560
    %v1727 = vpop.f32.mrb[0].mxu0
    %v1728 = vadd.f32 0.0, %v1727
    %v1729 = vpop.f32.mrb[0].mxu0
    %v1730 = vadd.f32 0.0, %v1729
    %1731 = vmatprep.mubr.f32.mxu0 0.0
    %1732 = vmatmul.mubr.f32.gmra.mrb[0].mxu0 %v1563
    %v1733 = vpop.f32.mrb[0].mxu0
    %v1734 = vadd.f32 0.0, %v1733
    %v1735 = vpop.f32.mrb[0].mxu0
    %v1736 = vadd.f32 0.0, %v1735
    %1737 = vmatprep.mubr.f32.mxu0 0.0
    %1738 = vmatmul.mubr.f32.gmra.mrb[0].mxu0 %v1566
    %v1739 = vpop.f32.mrb[0].mxu0
    %v1740 = vadd.f32 0.0, %v1739
    %v1741 = vpop.f32.mrb[0].mxu0
    %v1742 = vadd.f32 0.0, %v1741
    %1743 = vmatprep.mubr.f32.mxu0 0.0
    %1744 = vmatmul.mubr.f32.gmra.mrb[0].mxu0 %v1569
    %v1745 = vpop.f32.mrb[0].mxu0
    %v1746 = vadd.f32 0.0, %v1745
    %v1747 = vpop.f32.mrb[0].mxu0
    %v1748 = vadd.f32 0.0, %v1747
    %1749 = vmatprep.mubr.f32.mxu0 0.0
    %1750 = vmatmul.mubr.f32.gmra.mrb[0].mxu0 %v1572
    %v1751 = vpop.f32.mrb[0].mxu0
    %v1752 = vadd.f32 0.0, %v1751
    %v1753 = vpop.f32.mrb[0].mxu0
    %v1754 = vadd.f32 0.0, %v1753
    %1755 = vmatprep.mubr.f32.mxu0 0.0
    %1756 = vmatmul.mubr.f32.gmra.mrb[0].mxu0 %v1575
    %v1757 = vpop.f32.mrb[0].mxu0
    %v1758 = vadd.f32 0.0, %v1757
    %v1759 = vpop.f32.mrb[0].mxu0
    %v1760 = vadd.f32 0.0, %v1759
    %1761 = vmatprep.mubr.f32.mxu0 0.0
    %1762 = vmatmul.mubr.f32.gmra.mrb[0].mxu0 %v1578
    %v1763 = vpop.f32.mrb[0].mxu0
    %v1764 = vadd.f32 0.0, %v1763
    %v1765 = vpop.f32.mrb[0].mxu0
    %v1766 = vadd.f32 0.0, %v1765
    %1767 = vmatprep.mubr.f32.mxu0 0.0
    %1768 = vmatmul.mubr.f32.gmra.mrb[0].mxu0 %v1581
    %v1769 = vpop.f32.mrb[0].mxu0
    %v1770 = vadd.f32 0.0, %v1769
    %v1771 = vpop.f32.mrb[0].mxu0
    %v1772 = vadd.f32 0.0, %v1771
    %1773 = vmatprep.mubr.f32.mxu0 0.0
    %1774 = vmatmul.mubr.f32.gmra.mrb[0].mxu0 %v1584
    %v1775 = vpop.f32.mrb[0].mxu0
    %v1776 = vadd.f32 0.0, %v1775
    %v1777 = vpop.f32.mrb[0].mxu0
    %v1778 = vadd.f32 0.0, %v1777
    %1779 = vmatprep.mubr.f32.mxu0 0.0
    %1780 = vmatmul.mubr.f32.gmra.mrb[0].mxu0 %v1587
    %v1781 = vpop.f32.mrb[0].mxu0
    %v1782 = vadd.f32 0.0, %v1781
    %v1783 = vpop.f32.mrb[0].mxu0
    %v1784 = vadd.f32 0.0, %v1783
    %1785 = vmatprep.mubr.f32.mxu0 0.0
    %1786 = vmatmul.mubr.f32.gmra.mrb[0].mxu0 %v1590
    %v1787 = vpop.f32.mrb[0].mxu0
    %v1788 = vadd.f32 0.0, %v1787
    %v1789 = vpop.f32.mrb[0].mxu0
    %v1790 = vadd.f32 0.0, %v1789
    %1791 = vmatprep.mubr.f32.mxu0 0.0
    %1792 = vmatmul.mubr.f32.gmra.mrb[0].mxu0 %v1593
    %v1793 = vpop.f32.mrb[0].mxu0
    %v1794 = vadd.f32 0.0, %v1793
    %v1795 = vpop.f32.mrb[0].mxu0
    %v1796 = vadd.f32 0.0, %v1795
    %1797 = vmatprep.mubr.f32.mxu0 0.0
    %1798 = vmatmul.mubr.f32.gmra.mrb[0].mxu0 %v1596
    %v1799 = vpop.f32.mrb[0].mxu0
    %v1800 = vadd.f32 0.0, %v1799
    %v1801 = vpop.f32.mrb[0].mxu0
    %v1802 = vadd.f32 0.0, %v1801
    %1803 = vmatprep.mubr.f32.mxu0 0.0
    %1804 = vmatmul.mubr.f32.gmra.mrb[0].mxu0 %v1599
    %v1805 = vpop.f32.mrb[0].mxu0
    %v1806 = vadd.f32 0.0, %v1805
    %v1807 = vpop.f32.mrb[0].mxu0
    %v1808 = vadd.f32 0.0, %v1807
    %1809 = vmatprep.mubr.f32.mxu0 0.0
    %1810 = vmatmul.mubr.f32.gmra.mrb[0].mxu0 %v1602
    %v1811 = vpop.f32.mrb[0].mxu0
    %v1812 = vadd.f32 0.0, %v1811
    %v1813 = vpop.f32.mrb[0].mxu0
    %v1814 = vadd.f32 0.0, %v1813
    %1815 = vmatprep.mubr.f32.mxu0 0.0
    %1816 = vmatmul.mubr.f32.gmra.mrb[0].mxu0 %v1605
    %v1817 = vpop.f32.mrb[0].mxu0
    %v1818 = vadd.f32 0.0, %v1817
    %v1819 = vpop.f32.mrb[0].mxu0
    %v1820 = vadd.f32 0.0, %v1819
    %1821 = vmatprep.mubr.f32.mxu0 0.0
    %1822 = vmatmul.mubr.f32.gmra.mrb[0].mxu0 %v1608
    %v1823 = vpop.f32.mrb[0].mxu0
    %v1824 = vadd.f32 0.0, %v1823
    %v1825 = vpop.f32.mrb[0].mxu0
    %v1826 = vadd.f32 0.0, %v1825
    %1827 = vmatprep.mubr.f32.mxu0 0.0
    %1828 = vmatmul.mubr.f32.gmra.mrb[0].mxu0 %v1611
    %v1829 = vpop.f32.mrb[0].mxu0
    %v1830 = vadd.f32 0.0, %v1829
    %v1831 = vpop.f32.mrb[0].mxu0
    %v1832 = vadd.f32 0.0, %v1831
    %1833 = vmatprep.mubr.f32.mxu0 0.0
    %1834 = vmatmul.mubr.f32.gmra.mrb[0].mxu0 %v1614
    %v1835 = vpop.f32.mrb[0].mxu0
    %v1836 = vadd.f32 0.0, %v1835
    %v1837 = vpop.f32.mrb[0].mxu0
    %v1838 = vadd.f32 0.0, %v1837
    %1839 = vmatprep.mubr.f32.mxu0 0.0
    %1840 = vmatmul.mubr.f32.gmra.mrb[0].mxu0 %v1617
    %v1841 = vpop.f32.mrb[0].mxu0
    %v1842 = vadd.f32 0.0, %v1841
    %v1843 = vpop.f32.mrb[0].mxu0
    %v1844 = vadd.f32 0.0, %v1843
    %1845 = vmatprep.mubr.f32.mxu0 0.0
    %1846 = vmatmul.mubr.f32.gmra.mrb[0].mxu0 %v1620
    %v1847 = vpop.f32.mrb[0].mxu0
    %v1848 = vadd.f32 0.0, %v1847
    %v1849 = vpop.f32.mrb[0].mxu0
    %v1850 = vadd.f32 0.0, %v1849
    %1851 = vmatprep.mubr.f32.mxu0 0.0
    %1852 = vmatmul.mubr.f32.gmra.mrb[0].mxu0 %v1623
    %v1853 = vpop.f32.mrb[0].mxu0
    %v1854 = vadd.f32 0.0, %v1853
    %v1855 = vpop.f32.mrb[0].mxu0
    %v1856 = vadd.f32 0.0, %v1855
    %1857 = vmatprep.mubr.f32.mxu0 0.0
    %1858 = vmatmul.mubr.f32.gmra.mrb[0].mxu0 %v1626
    %v1859 = vpop.f32.mrb[0].mxu0
    %v1860 = vadd.f32 0.0, %v1859
    %v1861 = vpop.f32.mrb[0].mxu0
    %v1862 = vadd.f32 0.0, %v1861
    %1863 = vmatprep.mubr.f32.mxu0 0.0
    %1864 = vmatmul.mubr.f32.gmra.mrb[0].mxu0 %v1629
    %v1865 = vpop.f32.mrb[0].mxu0
    %v1866 = vadd.f32 0.0, %v1865
    %v1867 = vpop.f32.mrb[0].mxu0
    %v1868 = vadd.f32 0.0, %v1867
    %1869 = vmatprep.mubr.f32.mxu0 0.0
    %1870 = vmatmul.mubr.f32.gmra.mrb[0].mxu0 %v1632
    %v1871 = vpop.f32.mrb[0].mxu0
    %v1872 = vadd.f32 0.0, %v1871
    %v1873 = vpop.f32.mrb[0].mxu0
    %v1874 = vadd.f32 0.0, %v1873
    %1875 = vmatprep.mubr.f32.mxu0 0.0
    %1876 = vmatmul.mubr.f32.gmra.mrb[0].mxu0 %v1635
    %v1877 = vpop.f32.mrb[0].mxu0
    %v1878 = vadd.f32 0.0, %v1877
    %v1879 = vpop.f32.mrb[0].mxu0
    %v1880 = vadd.f32 0.0, %v1879
    %1881 = vmatprep.mubr.f32.mxu0 0.0
    %1882 = vmatmul.mubr.f32.gmra.mrb[0].mxu0 %v1638
    %v1883 = vpop.f32.mrb[0].mxu0
    %v1884 = vadd.f32 0.0, %v1883
    %v1885 = vpop.f32.mrb[0].mxu0
    %v1886 = vadd.f32 0.0, %v1885
    %1887 = vmatprep.mubr.f32.mxu0 0.0
    %1888 = vmatmul.mubr.f32.gmra.mrb[0].mxu0 %v1641
    %v1889 = vpop.f32.mrb[0].mxu0
    %v1890 = vadd.f32 0.0, %v1889
    %v1891 = vpop.f32.mrb[0].mxu0
    %v1892 = vadd.f32 0.0, %v1891
    %1893 = vmatprep.mubr.f32.mxu0 0.0
    %1894 = vmatmul.mubr.f32.gmra.mrb[0].mxu0 %v1644
    %v1895 = vpop.f32.mrb[0].mxu0
    %v1896 = vadd.f32 0.0, %v1895
    %v1897 = vpop.f32.mrb[0].mxu0
    %v1898 = vadd.f32 0.0, %v1897
    %1899 = vmatprep.mubr.f32.mxu0 0.0
    %1900 = vmatmul.mubr.f32.gmra.mrb[0].mxu0 %v1647
    %v1901 = vpop.f32.mrb[0].mxu0
    %v1902 = vadd.f32 0.0, %v1901
    %v1903 = vpop.f32.mrb[0].mxu0
    %v1904 = vadd.f32 0.0, %v1903
    %1905 = vdwg.mxu0
    %1906 = vxpose.xlu0.b32.start [1/16] %v440, 128
    %1907 = vxpose.xlu0.b32.cont [2/16] %v446, 128
    %1908 = vxpose.xlu0.b32.cont [3/16] %v452, 128
    %1909 = vxpose.xlu0.b32.cont [4/16] %v458, 128
    %1910 = vxpose.xlu0.b32.cont [5/16] 0.0, 128
    %1911 = vxpose.xlu0.b32.cont [6/16] 0.0, 128
    %1912 = vxpose.xlu0.b32.cont [7/16] 0.0, 128
    %1913 = vxpose.xlu0.b32.cont [8/16] 0.0, 128
    %1914 = vxpose.xlu0.b32.cont [9/16] 0.0, 128
    %1915 = vxpose.xlu0.b32.cont [10/16] 0.0, 128
    %1916 = vxpose.xlu0.b32.cont [11/16] 0.0, 128
    %1917 = vxpose.xlu0.b32.cont [12/16] 0.0, 128
    %1918 = vxpose.xlu0.b32.cont [13/16] 0.0, 128
    %1919 = vxpose.xlu0.b32.cont [14/16] 0.0, 128
    %1920 = vxpose.xlu0.b32.cont [15/16] 0.0, 128
    %1921 = vxpose.xlu0.b32.end [16/16] 0.0, 128
    %v1922 = vpop.trf.xlu0
    %v1923 = vpop.trf.xlu0
    %v1924 = vpop.trf.xlu0
    %v1925 = vpop.trf.xlu0
    %v1926 = vpop.trf.xlu0
    %v1927 = vpop.trf.xlu0
    %v1928 = vpop.trf.xlu0
    %v1929 = vpop.trf.xlu0
    %v1930 = vpop.trf.xlu0
    %v1931 = vpop.trf.xlu0
    %v1932 = vpop.trf.xlu0
    %v1933 = vpop.trf.xlu0
    %v1934 = vpop.trf.xlu0
    %v1935 = vpop.trf.xlu0
    %v1936 = vpop.trf.xlu0
    %v1937 = vpop.trf.xlu0
    %1938 = vxpose.xlu0.b32.start [1/16] %v442, 128
    %1939 = vxpose.xlu0.b32.cont [2/16] %v448, 128
    %1940 = vxpose.xlu0.b32.cont [3/16] %v454, 128
    %1941 = vxpose.xlu0.b32.cont [4/16] %v460, 128
    %1942 = vxpose.xlu0.b32.cont [5/16] 0.0, 128
    %1943 = vxpose.xlu0.b32.cont [6/16] 0.0, 128
    %1944 = vxpose.xlu0.b32.cont [7/16] 0.0, 128
    %1945 = vxpose.xlu0.b32.cont [8/16] 0.0, 128
    %1946 = vxpose.xlu0.b32.cont [9/16] 0.0, 128
    %1947 = vxpose.xlu0.b32.cont [10/16] 0.0, 128
    %1948 = vxpose.xlu0.b32.cont [11/16] 0.0, 128
    %1949 = vxpose.xlu0.b32.cont [12/16] 0.0, 128
    %1950 = vxpose.xlu0.b32.cont [13/16] 0.0, 128
    %1951 = vxpose.xlu0.b32.cont [14/16] 0.0, 128
    %1952 = vxpose.xlu0.b32.cont [15/16] 0.0, 128
    %1953 = vxpose.xlu0.b32.end [16/16] 0.0, 128
    %v1954 = vpop.trf.xlu0
    %v1955 = vpop.trf.xlu0
    %v1956 = vpop.trf.xlu0
    %v1957 = vpop.trf.xlu0
    %v1958 = vpop.trf.xlu0
    %v1959 = vpop.trf.xlu0
    %v1960 = vpop.trf.xlu0
    %v1961 = vpop.trf.xlu0
    %v1962 = vpop.trf.xlu0
    %v1963 = vpop.trf.xlu0
    %v1964 = vpop.trf.xlu0
    %v1965 = vpop.trf.xlu0
    %v1966 = vpop.trf.xlu0
    %v1967 = vpop.trf.xlu0
    %v1968 = vpop.trf.xlu0
    %v1969 = vpop.trf.xlu0
    %v1971 = vsel %vm718, %v1922, 0
    %v1974 = vsel %vm718, %v1923, 0
    %v1977 = vsel %vm718, %v1924, 0
    %v1980 = vsel %vm718, %v1925, 0
    %v1983 = vsel %vm718, %v1926, 0
    %v1986 = vsel %vm718, %v1927, 0
    %v1989 = vsel %vm718, %v1928, 0
    %v1992 = vsel %vm718, %v1929, 0
    %v1995 = vsel %vm718, %v1930, 0
    %v1998 = vsel %vm718, %v1931, 0
    %v2001 = vsel %vm718, %v1932, 0
    %v2004 = vsel %vm718, %v1933, 0
    %v2007 = vsel %vm718, %v1934, 0
    %v2010 = vsel %vm718, %v1935, 0
    %v2013 = vsel %vm718, %v1936, 0
    %v2016 = vsel %vm718, %v1937, 0
    %v2019 = vsel %vm718, %v1954, 0
    %v2022 = vsel %vm718, %v1955, 0
    %v2025 = vsel %vm718, %v1956, 0
    %v2028 = vsel %vm718, %v1957, 0
    %v2031 = vsel %vm718, %v1958, 0
    %v2034 = vsel %vm718, %v1959, 0
    %v2037 = vsel %vm718, %v1960, 0
    %v2040 = vsel %vm718, %v1961, 0
    %v2043 = vsel %vm718, %v1962, 0
    %v2046 = vsel %vm718, %v1963, 0
    %v2049 = vsel %vm718, %v1964, 0
    %v2052 = vsel %vm718, %v1965, 0
    %v2055 = vsel %vm718, %v1966, 0
    %v2058 = vsel %vm718, %v1967, 0
    %v2061 = vsel %vm718, %v1968, 0
    %v2064 = vsel %vm718, %v1969, 0
    %2066 = vmatprep.subr.mxu0 %v538
    %2067 = vmatpush1.msra.mxu0 %v536
    %2068 = vmatprep.subr.mxu0 %v544
    %2069 = vmatpush1.msra.mxu0 %v542
    %2070 = vmatprep.subr.mxu0 %v550
    %2071 = vmatpush1.msra.mxu0 %v548
    %2072 = vmatprep.subr.mxu0 %v556
    %2073 = vmatpush1.msra.mxu0 %v554
    %2074 = vmatprep.subr.mxu0 0.0
    %2075 = vmatpush1.msra.mxu0 0.0
    %2076 = vmatprep.subr.mxu0 0.0
    %2077 = vmatpush1.msra.mxu0 0.0
    %2078 = vmatprep.subr.mxu0 0.0
    %2079 = vmatpush1.msra.mxu0 0.0
    %2080 = vmatprep.subr.mxu0 0.0
    %2081 = vmatpush1.msra.mxu0 0.0
    %2082 = vmatprep.subr.mxu0 0.0
    %2083 = vmatpush1.msra.mxu0 0.0
    %2084 = vmatprep.subr.mxu0 0.0
    %2085 = vmatpush1.msra.mxu0 0.0
    %2086 = vmatprep.subr.mxu0 0.0
    %2087 = vmatpush1.msra.mxu0 0.0
    %2088 = vmatprep.subr.mxu0 0.0
    %2089 = vmatpush1.msra.mxu0 0.0
    %2090 = vmatprep.subr.mxu0 0.0
    %2091 = vmatpush1.msra.mxu0 0.0
    %2092 = vmatprep.subr.mxu0 0.0
    %2093 = vmatpush1.msra.mxu0 0.0
    %2094 = vmatprep.subr.mxu0 0.0
    %2095 = vmatpush1.msra.mxu0 0.0
    %2096 = vmatprep.subr.mxu0 0.0
    %2097 = vmatpush1.msra.mxu0 0.0
    %2098 = vmatprep.subr.mxu0 0.0
    %2099 = vmatpush1.msra.mxu0 0.0
    %2100 = vmatprep.subr.mxu0 0.0
    %2101 = vmatpush1.msra.mxu0 0.0
    %2102 = vmatprep.subr.mxu0 0.0
    %2103 = vmatpush1.msra.mxu0 0.0
    %2104 = vmatprep.subr.mxu0 0.0
    %2105 = vmatpush1.msra.mxu0 0.0
    %2106 = vmatprep.subr.mxu0 0.0
    %2107 = vmatpush1.msra.mxu0 0.0
    %2108 = vmatprep.subr.mxu0 0.0
    %2109 = vmatpush1.msra.mxu0 0.0
    %2110 = vmatprep.subr.mxu0 0.0
    %2111 = vmatpush1.msra.mxu0 0.0
    %2112 = vmatprep.subr.mxu0 0.0
    %2113 = vmatpush1.msra.mxu0 0.0
    %2114 = vmatprep.subr.mxu0 0.0
    %2115 = vmatpush1.msra.mxu0 0.0
    %2116 = vmatprep.subr.mxu0 0.0
    %2117 = vmatpush1.msra.mxu0 0.0
    %2118 = vmatprep.subr.mxu0 0.0
    %2119 = vmatpush1.msra.mxu0 0.0
    %2120 = vmatprep.subr.mxu0 0.0
    %2121 = vmatpush1.msra.mxu0 0.0
    %2122 = vmatprep.subr.mxu0 0.0
    %2123 = vmatpush1.msra.mxu0 0.0
    %2124 = vmatprep.subr.mxu0 0.0
    %2125 = vmatpush1.msra.mxu0 0.0
    %2126 = vmatprep.subr.mxu0 0.0
    %2127 = vmatpush1.msra.mxu0 0.0
    %2128 = vmatprep.subr.mxu0 0.0
    %2129 = vmatpush1.msra.mxu0 0.0
    %2130 = vmatprep.mubr.f32.mxu0 0.0
    %2131 = vmatmul.mubr.f32.gmra.mrb[0].mxu0 %v1971
    %v2132 = vpop.f32.mrb[0].mxu0
    %v2133 = vadd.f32 0.0, %v2132
    %v2134 = vpop.f32.mrb[0].mxu0
    %v2135 = vadd.f32 0.0, %v2134
    %2136 = vmatprep.mubr.f32.mxu0 0.0
    %2137 = vmatmul.mubr.f32.gmra.mrb[0].mxu0 %v1974
    %v2138 = vpop.f32.mrb[0].mxu0
    %v2139 = vadd.f32 0.0, %v2138
    %v2140 = vpop.f32.mrb[0].mxu0
    %v2141 = vadd.f32 0.0, %v2140
    %2142 = vmatprep.mubr.f32.mxu0 0.0
    %2143 = vmatmul.mubr.f32.gmra.mrb[0].mxu0 %v1977
    %v2144 = vpop.f32.mrb[0].mxu0
    %v2145 = vadd.f32 0.0, %v2144
    %v2146 = vpop.f32.mrb[0].mxu0
    %v2147 = vadd.f32 0.0, %v2146
    %2148 = vmatprep.mubr.f32.mxu0 0.0
    %2149 = vmatmul.mubr.f32.gmra.mrb[0].mxu0 %v1980
    %v2150 = vpop.f32.mrb[0].mxu0
    %v2151 = vadd.f32 0.0, %v2150
    %v2152 = vpop.f32.mrb[0].mxu0
    %v2153 = vadd.f32 0.0, %v2152
    %2154 = vmatprep.mubr.f32.mxu0 0.0
    %2155 = vmatmul.mubr.f32.gmra.mrb[0].mxu0 %v1983
    %v2156 = vpop.f32.mrb[0].mxu0
    %v2157 = vadd.f32 0.0, %v2156
    %v2158 = vpop.f32.mrb[0].mxu0
    %v2159 = vadd.f32 0.0, %v2158
    %2160 = vmatprep.mubr.f32.mxu0 0.0
    %2161 = vmatmul.mubr.f32.gmra.mrb[0].mxu0 %v1986
    %v2162 = vpop.f32.mrb[0].mxu0
    %v2163 = vadd.f32 0.0, %v2162
    %v2164 = vpop.f32.mrb[0].mxu0
    %v2165 = vadd.f32 0.0, %v2164
    %2166 = vmatprep.mubr.f32.mxu0 0.0
    %2167 = vmatmul.mubr.f32.gmra.mrb[0].mxu0 %v1989
    %v2168 = vpop.f32.mrb[0].mxu0
    %v2169 = vadd.f32 0.0, %v2168
    %v2170 = vpop.f32.mrb[0].mxu0
    %v2171 = vadd.f32 0.0, %v2170
    %2172 = vmatprep.mubr.f32.mxu0 0.0
    %2173 = vmatmul.mubr.f32.gmra.mrb[0].mxu0 %v1992
    %v2174 = vpop.f32.mrb[0].mxu0
    %v2175 = vadd.f32 0.0, %v2174
    %v2176 = vpop.f32.mrb[0].mxu0
    %v2177 = vadd.f32 0.0, %v2176
    %2178 = vmatprep.mubr.f32.mxu0 0.0
    %2179 = vmatmul.mubr.f32.gmra.mrb[0].mxu0 %v1995
    %v2180 = vpop.f32.mrb[0].mxu0
    %v2181 = vadd.f32 0.0, %v2180
    %v2182 = vpop.f32.mrb[0].mxu0
    %v2183 = vadd.f32 0.0, %v2182
    %2184 = vmatprep.mubr.f32.mxu0 0.0
    %2185 = vmatmul.mubr.f32.gmra.mrb[0].mxu0 %v1998
    %v2186 = vpop.f32.mrb[0].mxu0
    %v2187 = vadd.f32 0.0, %v2186
    %v2188 = vpop.f32.mrb[0].mxu0
    %v2189 = vadd.f32 0.0, %v2188
    %2190 = vmatprep.mubr.f32.mxu0 0.0
    %2191 = vmatmul.mubr.f32.gmra.mrb[0].mxu0 %v2001
    %v2192 = vpop.f32.mrb[0].mxu0
    %v2193 = vadd.f32 0.0, %v2192
    %v2194 = vpop.f32.mrb[0].mxu0
    %v2195 = vadd.f32 0.0, %v2194
    %2196 = vmatprep.mubr.f32.mxu0 0.0
    %2197 = vmatmul.mubr.f32.gmra.mrb[0].mxu0 %v2004
    %v2198 = vpop.f32.mrb[0].mxu0
    %v2199 = vadd.f32 0.0, %v2198
    %v2200 = vpop.f32.mrb[0].mxu0
    %v2201 = vadd.f32 0.0, %v2200
    %2202 = vmatprep.mubr.f32.mxu0 0.0
    %2203 = vmatmul.mubr.f32.gmra.mrb[0].mxu0 %v2007
    %v2204 = vpop.f32.mrb[0].mxu0
    %v2205 = vadd.f32 0.0, %v2204
    %v2206 = vpop.f32.mrb[0].mxu0
    %v2207 = vadd.f32 0.0, %v2206
    %2208 = vmatprep.mubr.f32.mxu0 0.0
    %2209 = vmatmul.mubr.f32.gmra.mrb[0].mxu0 %v2010
    %v2210 = vpop.f32.mrb[0].mxu0
    %v2211 = vadd.f32 0.0, %v2210
    %v2212 = vpop.f32.mrb[0].mxu0
    %v2213 = vadd.f32 0.0, %v2212
    %2214 = vmatprep.mubr.f32.mxu0 0.0
    %2215 = vmatmul.mubr.f32.gmra.mrb[0].mxu0 %v2013
    %v2216 = vpop.f32.mrb[0].mxu0
    %v2217 = vadd.f32 0.0, %v2216
    %v2218 = vpop.f32.mrb[0].mxu0
    %v2219 = vadd.f32 0.0, %v2218
    %2220 = vmatprep.mubr.f32.mxu0 0.0
    %2221 = vmatmul.mubr.f32.gmra.mrb[0].mxu0 %v2016
    %v2222 = vpop.f32.mrb[0].mxu0
    %v2223 = vadd.f32 0.0, %v2222
    %v2224 = vpop.f32.mrb[0].mxu0
    %v2225 = vadd.f32 0.0, %v2224
    %2226 = vmatprep.mubr.f32.mxu0 0.0
    %2227 = vmatmul.mubr.f32.gmra.mrb[0].mxu0 %v2019
    %v2228 = vpop.f32.mrb[0].mxu0
    %v2229 = vadd.f32 0.0, %v2228
    %v2230 = vpop.f32.mrb[0].mxu0
    %v2231 = vadd.f32 0.0, %v2230
    %2232 = vmatprep.mubr.f32.mxu0 0.0
    %2233 = vmatmul.mubr.f32.gmra.mrb[0].mxu0 %v2022
    %v2234 = vpop.f32.mrb[0].mxu0
    %v2235 = vadd.f32 0.0, %v2234
    %v2236 = vpop.f32.mrb[0].mxu0
    %v2237 = vadd.f32 0.0, %v2236
    %2238 = vmatprep.mubr.f32.mxu0 0.0
    %2239 = vmatmul.mubr.f32.gmra.mrb[0].mxu0 %v2025
    %v2240 = vpop.f32.mrb[0].mxu0
    %v2241 = vadd.f32 0.0, %v2240
    %v2242 = vpop.f32.mrb[0].mxu0
    %v2243 = vadd.f32 0.0, %v2242
    %2244 = vmatprep.mubr.f32.mxu0 0.0
    %2245 = vmatmul.mubr.f32.gmra.mrb[0].mxu0 %v2028
    %v2246 = vpop.f32.mrb[0].mxu0
    %v2247 = vadd.f32 0.0, %v2246
    %v2248 = vpop.f32.mrb[0].mxu0
    %v2249 = vadd.f32 0.0, %v2248
    %2250 = vmatprep.mubr.f32.mxu0 0.0
    %2251 = vmatmul.mubr.f32.gmra.mrb[0].mxu0 %v2031
    %v2252 = vpop.f32.mrb[0].mxu0
    %v2253 = vadd.f32 0.0, %v2252
    %v2254 = vpop.f32.mrb[0].mxu0
    %v2255 = vadd.f32 0.0, %v2254
    %2256 = vmatprep.mubr.f32.mxu0 0.0
    %2257 = vmatmul.mubr.f32.gmra.mrb[0].mxu0 %v2034
    %v2258 = vpop.f32.mrb[0].mxu0
    %v2259 = vadd.f32 0.0, %v2258
    %v2260 = vpop.f32.mrb[0].mxu0
    %v2261 = vadd.f32 0.0, %v2260
    %2262 = vmatprep.mubr.f32.mxu0 0.0
    %2263 = vmatmul.mubr.f32.gmra.mrb[0].mxu0 %v2037
    %v2264 = vpop.f32.mrb[0].mxu0
    %v2265 = vadd.f32 0.0, %v2264
    %v2266 = vpop.f32.mrb[0].mxu0
    %v2267 = vadd.f32 0.0, %v2266
    %2268 = vmatprep.mubr.f32.mxu0 0.0
    %2269 = vmatmul.mubr.f32.gmra.mrb[0].mxu0 %v2040
    %v2270 = vpop.f32.mrb[0].mxu0
    %v2271 = vadd.f32 0.0, %v2270
    %v2272 = vpop.f32.mrb[0].mxu0
    %v2273 = vadd.f32 0.0, %v2272
    %2274 = vmatprep.mubr.f32.mxu0 0.0
    %2275 = vmatmul.mubr.f32.gmra.mrb[0].mxu0 %v2043
    %v2276 = vpop.f32.mrb[0].mxu0
    %v2277 = vadd.f32 0.0, %v2276
    %v2278 = vpop.f32.mrb[0].mxu0
    %v2279 = vadd.f32 0.0, %v2278
    %2280 = vmatprep.mubr.f32.mxu0 0.0
    %2281 = vmatmul.mubr.f32.gmra.mrb[0].mxu0 %v2046
    %v2282 = vpop.f32.mrb[0].mxu0
    %v2283 = vadd.f32 0.0, %v2282
    %v2284 = vpop.f32.mrb[0].mxu0
    %v2285 = vadd.f32 0.0, %v2284
    %2286 = vmatprep.mubr.f32.mxu0 0.0
    %2287 = vmatmul.mubr.f32.gmra.mrb[0].mxu0 %v2049
    %v2288 = vpop.f32.mrb[0].mxu0
    %v2289 = vadd.f32 0.0, %v2288
    %v2290 = vpop.f32.mrb[0].mxu0
    %v2291 = vadd.f32 0.0, %v2290
    %2292 = vmatprep.mubr.f32.mxu0 0.0
    %2293 = vmatmul.mubr.f32.gmra.mrb[0].mxu0 %v2052
    %v2294 = vpop.f32.mrb[0].mxu0
    %v2295 = vadd.f32 0.0, %v2294
    %v2296 = vpop.f32.mrb[0].mxu0
    %v2297 = vadd.f32 0.0, %v2296
    %2298 = vmatprep.mubr.f32.mxu0 0.0
    %2299 = vmatmul.mubr.f32.gmra.mrb[0].mxu0 %v2055
    %v2300 = vpop.f32.mrb[0].mxu0
    %v2301 = vadd.f32 0.0, %v2300
    %v2302 = vpop.f32.mrb[0].mxu0
    %v2303 = vadd.f32 0.0, %v2302
    %2304 = vmatprep.mubr.f32.mxu0 0.0
    %2305 = vmatmul.mubr.f32.gmra.mrb[0].mxu0 %v2058
    %v2306 = vpop.f32.mrb[0].mxu0
    %v2307 = vadd.f32 0.0, %v2306
    %v2308 = vpop.f32.mrb[0].mxu0
    %v2309 = vadd.f32 0.0, %v2308
    %2310 = vmatprep.mubr.f32.mxu0 0.0
    %2311 = vmatmul.mubr.f32.gmra.mrb[0].mxu0 %v2061
    %v2312 = vpop.f32.mrb[0].mxu0
    %v2313 = vadd.f32 0.0, %v2312
    %v2314 = vpop.f32.mrb[0].mxu0
    %v2315 = vadd.f32 0.0, %v2314
    %2316 = vmatprep.mubr.f32.mxu0 0.0
    %2317 = vmatmul.mubr.f32.gmra.mrb[0].mxu0 %v2064
    %v2318 = vpop.f32.mrb[0].mxu0
    %v2319 = vadd.f32 0.0, %v2318
    %v2320 = vpop.f32.mrb[0].mxu0
    %v2321 = vadd.f32 0.0, %v2320
    %2322 = vdwg.mxu0
    %v2323 = vmax.f32 %v882, %v884
    %2324 = vmax.xlane.f32.xlu0 %v2323
    %v2325 = vpop.xlane.xlu0 %2324
    %v2326 = vmax.f32 %v888, %v890
    %2327 = vmax.xlane.f32.xlu0 %v2326
    %v2328 = vpop.xlane.xlu0 %2327
    %v2329 = vmax.f32 %v894, %v896
    %2330 = vmax.xlane.f32.xlu0 %v2329
    %v2331 = vpop.xlane.xlu0 %2330
    %v2332 = vmax.f32 %v900, %v902
    %2333 = vmax.xlane.f32.xlu0 %v2332
    %v2334 = vpop.xlane.xlu0 %2333
    %v2335 = vmax.f32 %v906, %v908
    %2336 = vmax.xlane.f32.xlu0 %v2335
    %v2337 = vpop.xlane.xlu0 %2336
    %v2338 = vmax.f32 %v912, %v914
    %2339 = vmax.xlane.f32.xlu0 %v2338
    %v2340 = vpop.xlane.xlu0 %2339
    %v2341 = vmax.f32 %v918, %v920
    %2342 = vmax.xlane.f32.xlu0 %v2341
    %v2343 = vpop.xlane.xlu0 %2342
    %v2344 = vmax.f32 %v924, %v926
    %2345 = vmax.xlane.f32.xlu0 %v2344
    %v2346 = vpop.xlane.xlu0 %2345
    %v2347 = vmax.f32 %v930, %v932
    %2348 = vmax.xlane.f32.xlu0 %v2347
    %v2349 = vpop.xlane.xlu0 %2348
    %v2350 = vmax.f32 %v936, %v938
    %2351 = vmax.xlane.f32.xlu0 %v2350
    %v2352 = vpop.xlane.xlu0 %2351
    %v2353 = vmax.f32 %v942, %v944
    %2354 = vmax.xlane.f32.xlu0 %v2353
    %v2355 = vpop.xlane.xlu0 %2354
    %v2356 = vmax.f32 %v948, %v950
    %2357 = vmax.xlane.f32.xlu0 %v2356
    %v2358 = vpop.xlane.xlu0 %2357
    %v2359 = vmax.f32 %v954, %v956
    %2360 = vmax.xlane.f32.xlu0 %v2359
    %v2361 = vpop.xlane.xlu0 %2360
    %v2362 = vmax.f32 %v960, %v962
    %2363 = vmax.xlane.f32.xlu0 %v2362
    %v2364 = vpop.xlane.xlu0 %2363
    %v2365 = vmax.f32 %v966, %v968
    %2366 = vmax.xlane.f32.xlu0 %v2365
    %v2367 = vpop.xlane.xlu0 %2366
    %v2368 = vmax.f32 %v972, %v974
    %2369 = vmax.xlane.f32.xlu0 %v2368
    %v2370 = vpop.xlane.xlu0 %2369
    %v2371 = vmax.f32 %v978, %v980
    %2372 = vmax.xlane.f32.xlu0 %v2371
    %v2373 = vpop.xlane.xlu0 %2372
    %v2374 = vmax.f32 %v984, %v986
    %2375 = vmax.xlane.f32.xlu0 %v2374
    %v2376 = vpop.xlane.xlu0 %2375
    %v2377 = vmax.f32 %v990, %v992
    %2378 = vmax.xlane.f32.xlu0 %v2377
    %v2379 = vpop.xlane.xlu0 %2378
    %v2380 = vmax.f32 %v996, %v998
    %2381 = vmax.xlane.f32.xlu0 %v2380
    %v2382 = vpop.xlane.xlu0 %2381
    %v2383 = vmax.f32 %v1002, %v1004
    %2384 = vmax.xlane.f32.xlu0 %v2383
    %v2385 = vpop.xlane.xlu0 %2384
    %v2386 = vmax.f32 %v1008, %v1010
    %2387 = vmax.xlane.f32.xlu0 %v2386
    %v2388 = vpop.xlane.xlu0 %2387
    %v2389 = vmax.f32 %v1014, %v1016
    %2390 = vmax.xlane.f32.xlu0 %v2389
    %v2391 = vpop.xlane.xlu0 %2390
    %v2392 = vmax.f32 %v1020, %v1022
    %2393 = vmax.xlane.f32.xlu0 %v2392
    %v2394 = vpop.xlane.xlu0 %2393
    %v2395 = vmax.f32 %v1026, %v1028
    %2396 = vmax.xlane.f32.xlu0 %v2395
    %v2397 = vpop.xlane.xlu0 %2396
    %v2398 = vmax.f32 %v1032, %v1034
    %2399 = vmax.xlane.f32.xlu0 %v2398
    %v2400 = vpop.xlane.xlu0 %2399
    %v2401 = vmax.f32 %v1038, %v1040
    %2402 = vmax.xlane.f32.xlu0 %v2401
    %v2403 = vpop.xlane.xlu0 %2402
    %v2404 = vmax.f32 %v1044, %v1046
    %2405 = vmax.xlane.f32.xlu0 %v2404
    %v2406 = vpop.xlane.xlu0 %2405
    %v2407 = vmax.f32 %v1050, %v1052
    %2408 = vmax.xlane.f32.xlu0 %v2407
    %v2409 = vpop.xlane.xlu0 %2408
    %v2410 = vmax.f32 %v1056, %v1058
    %2411 = vmax.xlane.f32.xlu0 %v2410
    %v2412 = vpop.xlane.xlu0 %2411
    %v2413 = vmax.f32 %v1062, %v1064
    %2414 = vmax.xlane.f32.xlu0 %v2413
    %v2415 = vpop.xlane.xlu0 %2414
    %v2416 = vmax.f32 %v1068, %v1070
    %2417 = vmax.xlane.f32.xlu0 %v2416
    %v2418 = vpop.xlane.xlu0 %2417
    %v2419 = vmax.f32 %v1299, %v1301
    %2420 = vmax.xlane.f32.xlu0 %v2419
    %v2421 = vpop.xlane.xlu0 %2420
    %v2422 = vmax.f32 %v1305, %v1307
    %2423 = vmax.xlane.f32.xlu0 %v2422
    %v2424 = vpop.xlane.xlu0 %2423
    %v2425 = vmax.f32 %v1311, %v1313
    %2426 = vmax.xlane.f32.xlu0 %v2425
    %v2427 = vpop.xlane.xlu0 %2426
    %v2428 = vmax.f32 %v1317, %v1319
    %2429 = vmax.xlane.f32.xlu0 %v2428
    %v2430 = vpop.xlane.xlu0 %2429
    %v2431 = vmax.f32 %v1323, %v1325
    %2432 = vmax.xlane.f32.xlu0 %v2431
    %v2433 = vpop.xlane.xlu0 %2432
    %v2434 = vmax.f32 %v1329, %v1331
    %2435 = vmax.xlane.f32.xlu0 %v2434
    %v2436 = vpop.xlane.xlu0 %2435
    %v2437 = vmax.f32 %v1335, %v1337
    %2438 = vmax.xlane.f32.xlu0 %v2437
    %v2439 = vpop.xlane.xlu0 %2438
    %v2440 = vmax.f32 %v1341, %v1343
    %2441 = vmax.xlane.f32.xlu0 %v2440
    %v2442 = vpop.xlane.xlu0 %2441
    %v2443 = vmax.f32 %v1347, %v1349
    %2444 = vmax.xlane.f32.xlu0 %v2443
    %v2445 = vpop.xlane.xlu0 %2444
    %v2446 = vmax.f32 %v1353, %v1355
    %2447 = vmax.xlane.f32.xlu0 %v2446
    %v2448 = vpop.xlane.xlu0 %2447
    %v2449 = vmax.f32 %v1359, %v1361
    %2450 = vmax.xlane.f32.xlu0 %v2449
    %v2451 = vpop.xlane.xlu0 %2450
    %v2452 = vmax.f32 %v1365, %v1367
    %2453 = vmax.xlane.f32.xlu0 %v2452
    %v2454 = vpop.xlane.xlu0 %2453
    %v2455 = vmax.f32 %v1371, %v1373
    %2456 = vmax.xlane.f32.xlu0 %v2455
    %v2457 = vpop.xlane.xlu0 %2456
    %v2458 = vmax.f32 %v1377, %v1379
    %2459 = vmax.xlane.f32.xlu0 %v2458
    %v2460 = vpop.xlane.xlu0 %2459
    %v2461 = vmax.f32 %v1383, %v1385
    %2462 = vmax.xlane.f32.xlu0 %v2461
    %v2463 = vpop.xlane.xlu0 %2462
    %v2464 = vmax.f32 %v1389, %v1391
    %2465 = vmax.xlane.f32.xlu0 %v2464
    %v2466 = vpop.xlane.xlu0 %2465
    %v2467 = vmax.f32 %v1395, %v1397
    %2468 = vmax.xlane.f32.xlu0 %v2467
    %v2469 = vpop.xlane.xlu0 %2468
    %v2470 = vmax.f32 %v1401, %v1403
    %2471 = vmax.xlane.f32.xlu0 %v2470
    %v2472 = vpop.xlane.xlu0 %2471
    %v2473 = vmax.f32 %v1407, %v1409
    %2474 = vmax.xlane.f32.xlu0 %v2473
    %v2475 = vpop.xlane.xlu0 %2474
    %v2476 = vmax.f32 %v1413, %v1415
    %2477 = vmax.xlane.f32.xlu0 %v2476
    %v2478 = vpop.xlane.xlu0 %2477
    %v2479 = vmax.f32 %v1419, %v1421
    %2480 = vmax.xlane.f32.xlu0 %v2479
    %v2481 = vpop.xlane.xlu0 %2480
    %v2482 = vmax.f32 %v1425, %v1427
    %2483 = vmax.xlane.f32.xlu0 %v2482
    %v2484 = vpop.xlane.xlu0 %2483
    %v2485 = vmax.f32 %v1431, %v1433
    %2486 = vmax.xlane.f32.xlu0 %v2485
    %v2487 = vpop.xlane.xlu0 %2486
    %v2488 = vmax.f32 %v1437, %v1439
    %2489 = vmax.xlane.f32.xlu0 %v2488
    %v2490 = vpop.xlane.xlu0 %2489
    %v2491 = vmax.f32 %v1443, %v1445
    %2492 = vmax.xlane.f32.xlu0 %v2491
    %v2493 = vpop.xlane.xlu0 %2492
    %v2494 = vmax.f32 %v1449, %v1451
    %2495 = vmax.xlane.f32.xlu0 %v2494
    %v2496 = vpop.xlane.xlu0 %2495
    %v2497 = vmax.f32 %v1455, %v1457
    %2498 = vmax.xlane.f32.xlu0 %v2497
    %v2499 = vpop.xlane.xlu0 %2498
    %v2500 = vmax.f32 %v1461, %v1463
    %2501 = vmax.xlane.f32.xlu0 %v2500
    %v2502 = vpop.xlane.xlu0 %2501
    %v2503 = vmax.f32 %v1467, %v1469
    %2504 = vmax.xlane.f32.xlu0 %v2503
    %v2505 = vpop.xlane.xlu0 %2504
    %v2506 = vmax.f32 %v1473, %v1475
    %2507 = vmax.xlane.f32.xlu0 %v2506
    %v2508 = vpop.xlane.xlu0 %2507
    %v2509 = vmax.f32 %v1479, %v1481
    %2510 = vmax.xlane.f32.xlu0 %v2509
    %v2511 = vpop.xlane.xlu0 %2510
    %v2512 = vmax.f32 %v1485, %v1487
    %2513 = vmax.xlane.f32.xlu0 %v2512
    %v2514 = vpop.xlane.xlu0 %2513
    %v2515 = vmax.f32 %v1716, %v1718
    %2516 = vmax.xlane.f32.xlu0 %v2515
    %v2517 = vpop.xlane.xlu0 %2516
    %v2518 = vmax.f32 %v1722, %v1724
    %2519 = vmax.xlane.f32.xlu0 %v2518
    %v2520 = vpop.xlane.xlu0 %2519
    %v2521 = vmax.f32 %v1728, %v1730
    %2522 = vmax.xlane.f32.xlu0 %v2521
    %v2523 = vpop.xlane.xlu0 %2522
    %v2524 = vmax.f32 %v1734, %v1736
    %2525 = vmax.xlane.f32.xlu0 %v2524
    %v2526 = vpop.xlane.xlu0 %2525
    %v2527 = vmax.f32 %v1740, %v1742
    %2528 = vmax.xlane.f32.xlu0 %v2527
    %v2529 = vpop.xlane.xlu0 %2528
    %v2530 = vmax.f32 %v1746, %v1748
    %2531 = vmax.xlane.f32.xlu0 %v2530
    %v2532 = vpop.xlane.xlu0 %2531
    %v2533 = vmax.f32 %v1752, %v1754
    %2534 = vmax.xlane.f32.xlu0 %v2533
    %v2535 = vpop.xlane.xlu0 %2534
    %v2536 = vmax.f32 %v1758, %v1760
    %2537 = vmax.xlane.f32.xlu0 %v2536
    %v2538 = vpop.xlane.xlu0 %2537
    %v2539 = vmax.f32 %v1764, %v1766
    %2540 = vmax.xlane.f32.xlu0 %v2539
    %v2541 = vpop.xlane.xlu0 %2540
    %v2542 = vmax.f32 %v1770, %v1772
    %2543 = vmax.xlane.f32.xlu0 %v2542
    %v2544 = vpop.xlane.xlu0 %2543
    %v2545 = vmax.f32 %v1776, %v1778
    %2546 = vmax.xlane.f32.xlu0 %v2545
    %v2547 = vpop.xlane.xlu0 %2546
    %v2548 = vmax.f32 %v1782, %v1784
    %2549 = vmax.xlane.f32.xlu0 %v2548
    %v2550 = vpop.xlane.xlu0 %2549
    %v2551 = vmax.f32 %v1788, %v1790
    %2552 = vmax.xlane.f32.xlu0 %v2551
    %v2553 = vpop.xlane.xlu0 %2552
    %v2554 = vmax.f32 %v1794, %v1796
    %2555 = vmax.xlane.f32.xlu0 %v2554
    %v2556 = vpop.xlane.xlu0 %2555
    %v2557 = vmax.f32 %v1800, %v1802
    %2558 = vmax.xlane.f32.xlu0 %v2557
    %v2559 = vpop.xlane.xlu0 %2558
    %v2560 = vmax.f32 %v1806, %v1808
    %2561 = vmax.xlane.f32.xlu0 %v2560
    %v2562 = vpop.xlane.xlu0 %2561
    %v2563 = vmax.f32 %v1812, %v1814
    %2564 = vmax.xlane.f32.xlu0 %v2563
    %v2565 = vpop.xlane.xlu0 %2564
    %v2566 = vmax.f32 %v1818, %v1820
    %2567 = vmax.xlane.f32.xlu0 %v2566
    %v2568 = vpop.xlane.xlu0 %2567
    %v2569 = vmax.f32 %v1824, %v1826
    %2570 = vmax.xlane.f32.xlu0 %v2569
    %v2571 = vpop.xlane.xlu0 %2570
    %v2572 = vmax.f32 %v1830, %v1832
    %2573 = vmax.xlane.f32.xlu0 %v2572
    %v2574 = vpop.xlane.xlu0 %2573
    %v2575 = vmax.f32 %v1836, %v1838
    %2576 = vmax.xlane.f32.xlu0 %v2575
    %v2577 = vpop.xlane.xlu0 %2576
    %v2578 = vmax.f32 %v1842, %v1844
    %2579 = vmax.xlane.f32.xlu0 %v2578
    %v2580 = vpop.xlane.xlu0 %2579
    %v2581 = vmax.f32 %v1848, %v1850
    %2582 = vmax.xlane.f32.xlu0 %v2581
    %v2583 = vpop.xlane.xlu0 %2582
    %v2584 = vmax.f32 %v1854, %v1856
    %2585 = vmax.xlane.f32.xlu0 %v2584
    %v2586 = vpop.xlane.xlu0 %2585
    %v2587 = vmax.f32 %v1860, %v1862
    %2588 = vmax.xlane.f32.xlu0 %v2587
    %v2589 = vpop.xlane.xlu0 %2588
    %v2590 = vmax.f32 %v1866, %v1868
    %2591 = vmax.xlane.f32.xlu0 %v2590
    %v2592 = vpop.xlane.xlu0 %2591
    %v2593 = vmax.f32 %v1872, %v1874
    %2594 = vmax.xlane.f32.xlu0 %v2593
    %v2595 = vpop.xlane.xlu0 %2594
    %v2596 = vmax.f32 %v1878, %v1880
    %2597 = vmax.xlane.f32.xlu0 %v2596
    %v2598 = vpop.xlane.xlu0 %2597
    %v2599 = vmax.f32 %v1884, %v1886
    %2600 = vmax.xlane.f32.xlu0 %v2599
    %v2601 = vpop.xlane.xlu0 %2600
    %v2602 = vmax.f32 %v1890, %v1892
    %2603 = vmax.xlane.f32.xlu0 %v2602
    %v2604 = vpop.xlane.xlu0 %2603
    %v2605 = vmax.f32 %v1896, %v1898
    %2606 = vmax.xlane.f32.xlu0 %v2605
    %v2607 = vpop.xlane.xlu0 %2606
    %v2608 = vmax.f32 %v1902, %v1904
    %2609 = vmax.xlane.f32.xlu0 %v2608
    %v2610 = vpop.xlane.xlu0 %2609
    %v2611 = vmax.f32 %v2133, %v2135
    %2612 = vmax.xlane.f32.xlu0 %v2611
    %v2613 = vpop.xlane.xlu0 %2612
    %v2614 = vmax.f32 %v2139, %v2141
    %2615 = vmax.xlane.f32.xlu0 %v2614
    %v2616 = vpop.xlane.xlu0 %2615
    %v2617 = vmax.f32 %v2145, %v2147
    %2618 = vmax.xlane.f32.xlu0 %v2617
    %v2619 = vpop.xlane.xlu0 %2618
    %v2620 = vmax.f32 %v2151, %v2153
    %2621 = vmax.xlane.f32.xlu0 %v2620
    %v2622 = vpop.xlane.xlu0 %2621
    %v2623 = vmax.f32 %v2157, %v2159
    %2624 = vmax.xlane.f32.xlu0 %v2623
    %v2625 = vpop.xlane.xlu0 %2624
    %v2626 = vmax.f32 %v2163, %v2165
    %2627 = vmax.xlane.f32.xlu0 %v2626
    %v2628 = vpop.xlane.xlu0 %2627
    %v2629 = vmax.f32 %v2169, %v2171
    %2630 = vmax.xlane.f32.xlu0 %v2629
    %v2631 = vpop.xlane.xlu0 %2630
    %v2632 = vmax.f32 %v2175, %v2177
    %2633 = vmax.xlane.f32.xlu0 %v2632
    %v2634 = vpop.xlane.xlu0 %2633
    %v2635 = vmax.f32 %v2181, %v2183
    %2636 = vmax.xlane.f32.xlu0 %v2635
    %v2637 = vpop.xlane.xlu0 %2636
    %v2638 = vmax.f32 %v2187, %v2189
    %2639 = vmax.xlane.f32.xlu0 %v2638
    %v2640 = vpop.xlane.xlu0 %2639
    %v2641 = vmax.f32 %v2193, %v2195
    %2642 = vmax.xlane.f32.xlu0 %v2641
    %v2643 = vpop.xlane.xlu0 %2642
    %v2644 = vmax.f32 %v2199, %v2201
    %2645 = vmax.xlane.f32.xlu0 %v2644
    %v2646 = vpop.xlane.xlu0 %2645
    %v2647 = vmax.f32 %v2205, %v2207
    %2648 = vmax.xlane.f32.xlu0 %v2647
    %v2649 = vpop.xlane.xlu0 %2648
    %v2650 = vmax.f32 %v2211, %v2213
    %2651 = vmax.xlane.f32.xlu0 %v2650
    %v2652 = vpop.xlane.xlu0 %2651
    %v2653 = vmax.f32 %v2217, %v2219
    %2654 = vmax.xlane.f32.xlu0 %v2653
    %v2655 = vpop.xlane.xlu0 %2654
    %v2656 = vmax.f32 %v2223, %v2225
    %2657 = vmax.xlane.f32.xlu0 %v2656
    %v2658 = vpop.xlane.xlu0 %2657
    %v2659 = vmax.f32 %v2229, %v2231
    %2660 = vmax.xlane.f32.xlu0 %v2659
    %v2661 = vpop.xlane.xlu0 %2660
    %v2662 = vmax.f32 %v2235, %v2237
    %2663 = vmax.xlane.f32.xlu0 %v2662
    %v2664 = vpop.xlane.xlu0 %2663
    %v2665 = vmax.f32 %v2241, %v2243
    %2666 = vmax.xlane.f32.xlu0 %v2665
    %v2667 = vpop.xlane.xlu0 %2666
    %v2668 = vmax.f32 %v2247, %v2249
    %2669 = vmax.xlane.f32.xlu0 %v2668
    %v2670 = vpop.xlane.xlu0 %2669
    %v2671 = vmax.f32 %v2253, %v2255
    %2672 = vmax.xlane.f32.xlu0 %v2671
    %v2673 = vpop.xlane.xlu0 %2672
    %v2674 = vmax.f32 %v2259, %v2261
    %2675 = vmax.xlane.f32.xlu0 %v2674
    %v2676 = vpop.xlane.xlu0 %2675
    %v2677 = vmax.f32 %v2265, %v2267
    %2678 = vmax.xlane.f32.xlu0 %v2677
    %v2679 = vpop.xlane.xlu0 %2678
    %v2680 = vmax.f32 %v2271, %v2273
    %2681 = vmax.xlane.f32.xlu0 %v2680
    %v2682 = vpop.xlane.xlu0 %2681
    %v2683 = vmax.f32 %v2277, %v2279
    %2684 = vmax.xlane.f32.xlu0 %v2683
    %v2685 = vpop.xlane.xlu0 %2684
    %v2686 = vmax.f32 %v2283, %v2285
    %2687 = vmax.xlane.f32.xlu0 %v2686
    %v2688 = vpop.xlane.xlu0 %2687
    %v2689 = vmax.f32 %v2289, %v2291
    %2690 = vmax.xlane.f32.xlu0 %v2689
    %v2691 = vpop.xlane.xlu0 %2690
    %v2692 = vmax.f32 %v2295, %v2297
    %2693 = vmax.xlane.f32.xlu0 %v2692
    %v2694 = vpop.xlane.xlu0 %2693
    %v2695 = vmax.f32 %v2301, %v2303
    %2696 = vmax.xlane.f32.xlu0 %v2695
    %v2697 = vpop.xlane.xlu0 %2696
    %v2698 = vmax.f32 %v2307, %v2309
    %2699 = vmax.xlane.f32.xlu0 %v2698
    %v2700 = vpop.xlane.xlu0 %2699
    %v2701 = vmax.f32 %v2313, %v2315
    %2702 = vmax.xlane.f32.xlu0 %v2701
    %v2703 = vpop.xlane.xlu0 %2702
    %v2704 = vmax.f32 %v2319, %v2321
    %2705 = vmax.xlane.f32.xlu0 %v2704
    %v2706 = vpop.xlane.xlu0 %2705
    %v2707 = vsub.f32 %v882, %v2325
    %v2708 = vsub.f32 %v884, %v2325
    %v2709 = vsub.f32 %v888, %v2328
    %v2710 = vsub.f32 %v890, %v2328
    %v2711 = vsub.f32 %v894, %v2331
    %v2712 = vsub.f32 %v896, %v2331
    %v2713 = vsub.f32 %v900, %v2334
    %v2714 = vsub.f32 %v902, %v2334
    %v2715 = vsub.f32 %v906, %v2337
    %v2716 = vsub.f32 %v908, %v2337
    %v2717 = vsub.f32 %v912, %v2340
    %v2718 = vsub.f32 %v914, %v2340
    %v2719 = vsub.f32 %v918, %v2343
    %v2720 = vsub.f32 %v920, %v2343
    %v2721 = vsub.f32 %v924, %v2346
    %v2722 = vsub.f32 %v926, %v2346
    %v2723 = vsub.f32 %v930, %v2349
    %v2724 = vsub.f32 %v932, %v2349
    %v2725 = vsub.f32 %v936, %v2352
    %v2726 = vsub.f32 %v938, %v2352
    %v2727 = vsub.f32 %v942, %v2355
    %v2728 = vsub.f32 %v944, %v2355
    %v2729 = vsub.f32 %v948, %v2358
    %v2730 = vsub.f32 %v950, %v2358
    %v2731 = vsub.f32 %v954, %v2361
    %v2732 = vsub.f32 %v956, %v2361
    %v2733 = vsub.f32 %v960, %v2364
    %v2734 = vsub.f32 %v962, %v2364
    %v2735 = vsub.f32 %v966, %v2367
    %v2736 = vsub.f32 %v968, %v2367
    %v2737 = vsub.f32 %v972, %v2370
    %v2738 = vsub.f32 %v974, %v2370
    %v2739 = vsub.f32 %v978, %v2373
    %v2740 = vsub.f32 %v980, %v2373
    %v2741 = vsub.f32 %v984, %v2376
    %v2742 = vsub.f32 %v986, %v2376
    %v2743 = vsub.f32 %v990, %v2379
    %v2744 = vsub.f32 %v992, %v2379
    %v2745 = vsub.f32 %v996, %v2382
    %v2746 = vsub.f32 %v998, %v2382
    %v2747 = vsub.f32 %v1002, %v2385
    %v2748 = vsub.f32 %v1004, %v2385
    %v2749 = vsub.f32 %v1008, %v2388
    %v2750 = vsub.f32 %v1010, %v2388
    %v2751 = vsub.f32 %v1014, %v2391
    %v2752 = vsub.f32 %v1016, %v2391
    %v2753 = vsub.f32 %v1020, %v2394
    %v2754 = vsub.f32 %v1022, %v2394
    %v2755 = vsub.f32 %v1026, %v2397
    %v2756 = vsub.f32 %v1028, %v2397
    %v2757 = vsub.f32 %v1032, %v2400
    %v2758 = vsub.f32 %v1034, %v2400
    %v2759 = vsub.f32 %v1038, %v2403
    %v2760 = vsub.f32 %v1040, %v2403
    %v2761 = vsub.f32 %v1044, %v2406
    %v2762 = vsub.f32 %v1046, %v2406
    %v2763 = vsub.f32 %v1050, %v2409
    %v2764 = vsub.f32 %v1052, %v2409
    %v2765 = vsub.f32 %v1056, %v2412
    %v2766 = vsub.f32 %v1058, %v2412
    %v2767 = vsub.f32 %v1062, %v2415
    %v2768 = vsub.f32 %v1064, %v2415
    %v2769 = vsub.f32 %v1068, %v2418
    %v2770 = vsub.f32 %v1070, %v2418
    %v2771 = vsub.f32 %v1299, %v2421
    %v2772 = vsub.f32 %v1301, %v2421
    %v2773 = vsub.f32 %v1305, %v2424
    %v2774 = vsub.f32 %v1307, %v2424
    %v2775 = vsub.f32 %v1311, %v2427
    %v2776 = vsub.f32 %v1313, %v2427
    %v2777 = vsub.f32 %v1317, %v2430
    %v2778 = vsub.f32 %v1319, %v2430
    %v2779 = vsub.f32 %v1323, %v2433
    %v2780 = vsub.f32 %v1325, %v2433
    %v2781 = vsub.f32 %v1329, %v2436
    %v2782 = vsub.f32 %v1331, %v2436
    %v2783 = vsub.f32 %v1335, %v2439
    %v2784 = vsub.f32 %v1337, %v2439
    %v2785 = vsub.f32 %v1341, %v2442
    %v2786 = vsub.f32 %v1343, %v2442
    %v2787 = vsub.f32 %v1347, %v2445
    %v2788 = vsub.f32 %v1349, %v2445
    %v2789 = vsub.f32 %v1353, %v2448
    %v2790 = vsub.f32 %v1355, %v2448
    %v2791 = vsub.f32 %v1359, %v2451
    %v2792 = vsub.f32 %v1361, %v2451
    %v2793 = vsub.f32 %v1365, %v2454
    %v2794 = vsub.f32 %v1367, %v2454
    %v2795 = vsub.f32 %v1371, %v2457
    %v2796 = vsub.f32 %v1373, %v2457
    %v2797 = vsub.f32 %v1377, %v2460
    %v2798 = vsub.f32 %v1379, %v2460
    %v2799 = vsub.f32 %v1383, %v2463
    %v2800 = vsub.f32 %v1385, %v2463
    %v2801 = vsub.f32 %v1389, %v2466
    %v2802 = vsub.f32 %v1391, %v2466
    %v2803 = vsub.f32 %v1395, %v2469
    %v2804 = vsub.f32 %v1397, %v2469
    %v2805 = vsub.f32 %v1401, %v2472
    %v2806 = vsub.f32 %v1403, %v2472
    %v2807 = vsub.f32 %v1407, %v2475
    %v2808 = vsub.f32 %v1409, %v2475
    %v2809 = vsub.f32 %v1413, %v2478
    %v2810 = vsub.f32 %v1415, %v2478
    %v2811 = vsub.f32 %v1419, %v2481
    %v2812 = vsub.f32 %v1421, %v2481
    %v2813 = vsub.f32 %v1425, %v2484
    %v2814 = vsub.f32 %v1427, %v2484
    %v2815 = vsub.f32 %v1431, %v2487
    %v2816 = vsub.f32 %v1433, %v2487
    %v2817 = vsub.f32 %v1437, %v2490
    %v2818 = vsub.f32 %v1439, %v2490
    %v2819 = vsub.f32 %v1443, %v2493
    %v2820 = vsub.f32 %v1445, %v2493
    %v2821 = vsub.f32 %v1449, %v2496
    %v2822 = vsub.f32 %v1451, %v2496
    %v2823 = vsub.f32 %v1455, %v2499
    %v2824 = vsub.f32 %v1457, %v2499
    %v2825 = vsub.f32 %v1461, %v2502
    %v2826 = vsub.f32 %v1463, %v2502
    %v2827 = vsub.f32 %v1467, %v2505
    %v2828 = vsub.f32 %v1469, %v2505
    %v2829 = vsub.f32 %v1473, %v2508
    %v2830 = vsub.f32 %v1475, %v2508
    %v2831 = vsub.f32 %v1479, %v2511
    %v2832 = vsub.f32 %v1481, %v2511
    %v2833 = vsub.f32 %v1485, %v2514
    %v2834 = vsub.f32 %v1487, %v2514
    %v2835 = vsub.f32 %v1716, %v2517
    %v2836 = vsub.f32 %v1718, %v2517
    %v2837 = vsub.f32 %v1722, %v2520
    %v2838 = vsub.f32 %v1724, %v2520
    %v2839 = vsub.f32 %v1728, %v2523
    %v2840 = vsub.f32 %v1730, %v2523
    %v2841 = vsub.f32 %v1734, %v2526
    %v2842 = vsub.f32 %v1736, %v2526
    %v2843 = vsub.f32 %v1740, %v2529
    %v2844 = vsub.f32 %v1742, %v2529
    %v2845 = vsub.f32 %v1746, %v2532
    %v2846 = vsub.f32 %v1748, %v2532
    %v2847 = vsub.f32 %v1752, %v2535
    %v2848 = vsub.f32 %v1754, %v2535
    %v2849 = vsub.f32 %v1758, %v2538
    %v2850 = vsub.f32 %v1760, %v2538
    %v2851 = vsub.f32 %v1764, %v2541
    %v2852 = vsub.f32 %v1766, %v2541
    %v2853 = vsub.f32 %v1770, %v2544
    %v2854 = vsub.f32 %v1772, %v2544
    %v2855 = vsub.f32 %v1776, %v2547
    %v2856 = vsub.f32 %v1778, %v2547
    %v2857 = vsub.f32 %v1782, %v2550
    %v2858 = vsub.f32 %v1784, %v2550
    %v2859 = vsub.f32 %v1788, %v2553
    %v2860 = vsub.f32 %v1790, %v2553
    %v2861 = vsub.f32 %v1794, %v2556
    %v2862 = vsub.f32 %v1796, %v2556
    %v2863 = vsub.f32 %v1800, %v2559
    %v2864 = vsub.f32 %v1802, %v2559
    %v2865 = vsub.f32 %v1806, %v2562
    %v2866 = vsub.f32 %v1808, %v2562
    %v2867 = vsub.f32 %v1812, %v2565
    %v2868 = vsub.f32 %v1814, %v2565
    %v2869 = vsub.f32 %v1818, %v2568
    %v2870 = vsub.f32 %v1820, %v2568
    %v2871 = vsub.f32 %v1824, %v2571
    %v2872 = vsub.f32 %v1826, %v2571
    %v2873 = vsub.f32 %v1830, %v2574
    %v2874 = vsub.f32 %v1832, %v2574
    %v2875 = vsub.f32 %v1836, %v2577
    %v2876 = vsub.f32 %v1838, %v2577
    %v2877 = vsub.f32 %v1842, %v2580
    %v2878 = vsub.f32 %v1844, %v2580
    %v2879 = vsub.f32 %v1848, %v2583
    %v2880 = vsub.f32 %v1850, %v2583
    %v2881 = vsub.f32 %v1854, %v2586
    %v2882 = vsub.f32 %v1856, %v2586
    %v2883 = vsub.f32 %v1860, %v2589
    %v2884 = vsub.f32 %v1862, %v2589
    %v2885 = vsub.f32 %v1866, %v2592
    %v2886 = vsub.f32 %v1868, %v2592
    %v2887 = vsub.f32 %v1872, %v2595
    %v2888 = vsub.f32 %v1874, %v2595
    %v2889 = vsub.f32 %v1878, %v2598
    %v2890 = vsub.f32 %v1880, %v2598
    %v2891 = vsub.f32 %v1884, %v2601
    %v2892 = vsub.f32 %v1886, %v2601
    %v2893 = vsub.f32 %v1890, %v2604
    %v2894 = vsub.f32 %v1892, %v2604
    %v2895 = vsub.f32 %v1896, %v2607
    %v2896 = vsub.f32 %v1898, %v2607
    %v2897 = vsub.f32 %v1902, %v2610
    %v2898 = vsub.f32 %v1904, %v2610
    %v2899 = vsub.f32 %v2133, %v2613
    %v2900 = vsub.f32 %v2135, %v2613
    %v2901 = vsub.f32 %v2139, %v2616
    %v2902 = vsub.f32 %v2141, %v2616
    %v2903 = vsub.f32 %v2145, %v2619
    %v2904 = vsub.f32 %v2147, %v2619
    %v2905 = vsub.f32 %v2151, %v2622
    %v2906 = vsub.f32 %v2153, %v2622
    %v2907 = vsub.f32 %v2157, %v2625
    %v2908 = vsub.f32 %v2159, %v2625
    %v2909 = vsub.f32 %v2163, %v2628
    %v2910 = vsub.f32 %v2165, %v2628
    %v2911 = vsub.f32 %v2169, %v2631
    %v2912 = vsub.f32 %v2171, %v2631
    %v2913 = vsub.f32 %v2175, %v2634
    %v2914 = vsub.f32 %v2177, %v2634
    %v2915 = vsub.f32 %v2181, %v2637
    %v2916 = vsub.f32 %v2183, %v2637
    %v2917 = vsub.f32 %v2187, %v2640
    %v2918 = vsub.f32 %v2189, %v2640
    %v2919 = vsub.f32 %v2193, %v2643
    %v2920 = vsub.f32 %v2195, %v2643
    %v2921 = vsub.f32 %v2199, %v2646
    %v2922 = vsub.f32 %v2201, %v2646
    %v2923 = vsub.f32 %v2205, %v2649
    %v2924 = vsub.f32 %v2207, %v2649
    %v2925 = vsub.f32 %v2211, %v2652
    %v2926 = vsub.f32 %v2213, %v2652
    %v2927 = vsub.f32 %v2217, %v2655
    %v2928 = vsub.f32 %v2219, %v2655
    %v2929 = vsub.f32 %v2223, %v2658
    %v2930 = vsub.f32 %v2225, %v2658
    %v2931 = vsub.f32 %v2229, %v2661
    %v2932 = vsub.f32 %v2231, %v2661
    %v2933 = vsub.f32 %v2235, %v2664
    %v2934 = vsub.f32 %v2237, %v2664
    %v2935 = vsub.f32 %v2241, %v2667
    %v2936 = vsub.f32 %v2243, %v2667
    %v2937 = vsub.f32 %v2247, %v2670
    %v2938 = vsub.f32 %v2249, %v2670
    %v2939 = vsub.f32 %v2253, %v2673
    %v2940 = vsub.f32 %v2255, %v2673
    %v2941 = vsub.f32 %v2259, %v2676
    %v2942 = vsub.f32 %v2261, %v2676
    %v2943 = vsub.f32 %v2265, %v2679
    %v2944 = vsub.f32 %v2267, %v2679
    %v2945 = vsub.f32 %v2271, %v2682
    %v2946 = vsub.f32 %v2273, %v2682
    %v2947 = vsub.f32 %v2277, %v2685
    %v2948 = vsub.f32 %v2279, %v2685
    %v2949 = vsub.f32 %v2283, %v2688
    %v2950 = vsub.f32 %v2285, %v2688
    %v2951 = vsub.f32 %v2289, %v2691
    %v2952 = vsub.f32 %v2291, %v2691
    %v2953 = vsub.f32 %v2295, %v2694
    %v2954 = vsub.f32 %v2297, %v2694
    %v2955 = vsub.f32 %v2301, %v2697
    %v2956 = vsub.f32 %v2303, %v2697
    %v2957 = vsub.f32 %v2307, %v2700
    %v2958 = vsub.f32 %v2309, %v2700
    %v2959 = vsub.f32 %v2313, %v2703
    %v2960 = vsub.f32 %v2315, %v2703
    %v2961 = vsub.f32 %v2319, %v2706
    %v2962 = vsub.f32 %v2321, %v2706
    %v2963 = vmul.f32 %v2707, 1.442695
    %v2964 = vpow.pop %v2963
    %v2965 = vmul.f32 %v2708, 1.442695
    %v2966 = vpow.pop %v2965
    %v2967 = vmul.f32 %v2709, 1.442695
    %v2968 = vpow.pop %v2967
    %v2969 = vmul.f32 %v2710, 1.442695
    %v2970 = vpow.pop %v2969
    %v2971 = vmul.f32 %v2711, 1.442695
    %v2972 = vpow.pop %v2971
    %v2973 = vmul.f32 %v2712, 1.442695
    %v2974 = vpow.pop %v2973
    %v2975 = vmul.f32 %v2713, 1.442695
    %v2976 = vpow.pop %v2975
    %v2977 = vmul.f32 %v2714, 1.442695
    %v2978 = vpow.pop %v2977
    %v2979 = vmul.f32 %v2715, 1.442695
    %v2980 = vpow.pop %v2979
    %v2981 = vmul.f32 %v2716, 1.442695
    %v2982 = vpow.pop %v2981
    %v2983 = vmul.f32 %v2717, 1.442695
    %v2984 = vpow.pop %v2983
    %v2985 = vmul.f32 %v2718, 1.442695
    %v2986 = vpow.pop %v2985
    %v2987 = vmul.f32 %v2719, 1.442695
    %v2988 = vpow.pop %v2987
    %v2989 = vmul.f32 %v2720, 1.442695
    %v2990 = vpow.pop %v2989
    %v2991 = vmul.f32 %v2721, 1.442695
    %v2992 = vpow.pop %v2991
    %v2993 = vmul.f32 %v2722, 1.442695
    %v2994 = vpow.pop %v2993
    %v2995 = vmul.f32 %v2723, 1.442695
    %v2996 = vpow.pop %v2995
    %v2997 = vmul.f32 %v2724, 1.442695
    %v2998 = vpow.pop %v2997
    %v2999 = vmul.f32 %v2725, 1.442695
    %v3000 = vpow.pop %v2999
    %v3001 = vmul.f32 %v2726, 1.442695
    %v3002 = vpow.pop %v3001
    %v3003 = vmul.f32 %v2727, 1.442695
    %v3004 = vpow.pop %v3003
    %v3005 = vmul.f32 %v2728, 1.442695
    %v3006 = vpow.pop %v3005
    %v3007 = vmul.f32 %v2729, 1.442695
    %v3008 = vpow.pop %v3007
    %v3009 = vmul.f32 %v2730, 1.442695
    %v3010 = vpow.pop %v3009
    %v3011 = vmul.f32 %v2731, 1.442695
    %v3012 = vpow.pop %v3011
    %v3013 = vmul.f32 %v2732, 1.442695
    %v3014 = vpow.pop %v3013
    %v3015 = vmul.f32 %v2733, 1.442695
    %v3016 = vpow.pop %v3015
    %v3017 = vmul.f32 %v2734, 1.442695
    %v3018 = vpow.pop %v3017
    %v3019 = vmul.f32 %v2735, 1.442695
    %v3020 = vpow.pop %v3019
    %v3021 = vmul.f32 %v2736, 1.442695
    %v3022 = vpow.pop %v3021
    %v3023 = vmul.f32 %v2737, 1.442695
    %v3024 = vpow.pop %v3023
    %v3025 = vmul.f32 %v2738, 1.442695
    %v3026 = vpow.pop %v3025
    %v3027 = vmul.f32 %v2739, 1.442695
    %v3028 = vpow.pop %v3027
    %v3029 = vmul.f32 %v2740, 1.442695
    %v3030 = vpow.pop %v3029
    %v3031 = vmul.f32 %v2741, 1.442695
    %v3032 = vpow.pop %v3031
    %v3033 = vmul.f32 %v2742, 1.442695
    %v3034 = vpow.pop %v3033
    %v3035 = vmul.f32 %v2743, 1.442695
    %v3036 = vpow.pop %v3035
    %v3037 = vmul.f32 %v2744, 1.442695
    %v3038 = vpow.pop %v3037
    %v3039 = vmul.f32 %v2745, 1.442695
    %v3040 = vpow.pop %v3039
    %v3041 = vmul.f32 %v2746, 1.442695
    %v3042 = vpow.pop %v3041
    %v3043 = vmul.f32 %v2747, 1.442695
    %v3044 = vpow.pop %v3043
    %v3045 = vmul.f32 %v2748, 1.442695
    %v3046 = vpow.pop %v3045
    %v3047 = vmul.f32 %v2749, 1.442695
    %v3048 = vpow.pop %v3047
    %v3049 = vmul.f32 %v2750, 1.442695
    %v3050 = vpow.pop %v3049
    %v3051 = vmul.f32 %v2751, 1.442695
    %v3052 = vpow.pop %v3051
    %v3053 = vmul.f32 %v2752, 1.442695
    %v3054 = vpow.pop %v3053
    %v3055 = vmul.f32 %v2753, 1.442695
    %v3056 = vpow.pop %v3055
    %v3057 = vmul.f32 %v2754, 1.442695
    %v3058 = vpow.pop %v3057
    %v3059 = vmul.f32 %v2755, 1.442695
    %v3060 = vpow.pop %v3059
    %v3061 = vmul.f32 %v2756, 1.442695
    %v3062 = vpow.pop %v3061
    %v3063 = vmul.f32 %v2757, 1.442695
    %v3064 = vpow.pop %v3063
    %v3065 = vmul.f32 %v2758, 1.442695
    %v3066 = vpow.pop %v3065
    %v3067 = vmul.f32 %v2759, 1.442695
    %v3068 = vpow.pop %v3067
    %v3069 = vmul.f32 %v2760, 1.442695
    %v3070 = vpow.pop %v3069
    %v3071 = vmul.f32 %v2761, 1.442695
    %v3072 = vpow.pop %v3071
    %v3073 = vmul.f32 %v2762, 1.442695
    %v3074 = vpow.pop %v3073
    %v3075 = vmul.f32 %v2763, 1.442695
    %v3076 = vpow.pop %v3075
    %v3077 = vmul.f32 %v2764, 1.442695
    %v3078 = vpow.pop %v3077
    %v3079 = vmul.f32 %v2765, 1.442695
    %v3080 = vpow.pop %v3079
    %v3081 = vmul.f32 %v2766, 1.442695
    %v3082 = vpow.pop %v3081
    %v3083 = vmul.f32 %v2767, 1.442695
    %v3084 = vpow.pop %v3083
    %v3085 = vmul.f32 %v2768, 1.442695
    %v3086 = vpow.pop %v3085
    %v3087 = vmul.f32 %v2769, 1.442695
    %v3088 = vpow.pop %v3087
    %v3089 = vmul.f32 %v2770, 1.442695
    %v3090 = vpow.pop %v3089
    %v3091 = vmul.f32 %v2771, 1.442695
    %v3092 = vpow.pop %v3091
    %v3093 = vmul.f32 %v2772, 1.442695
    %v3094 = vpow.pop %v3093
    %v3095 = vmul.f32 %v2773, 1.442695
    %v3096 = vpow.pop %v3095
    %v3097 = vmul.f32 %v2774, 1.442695
    %v3098 = vpow.pop %v3097
    %v3099 = vmul.f32 %v2775, 1.442695
    %v3100 = vpow.pop %v3099
    %v3101 = vmul.f32 %v2776, 1.442695
    %v3102 = vpow.pop %v3101
    %v3103 = vmul.f32 %v2777, 1.442695
    %v3104 = vpow.pop %v3103
    %v3105 = vmul.f32 %v2778, 1.442695
    %v3106 = vpow.pop %v3105
    %v3107 = vmul.f32 %v2779, 1.442695
    %v3108 = vpow.pop %v3107
    %v3109 = vmul.f32 %v2780, 1.442695
    %v3110 = vpow.pop %v3109
    %v3111 = vmul.f32 %v2781, 1.442695
    %v3112 = vpow.pop %v3111
    %v3113 = vmul.f32 %v2782, 1.442695
    %v3114 = vpow.pop %v3113
    %v3115 = vmul.f32 %v2783, 1.442695
    %v3116 = vpow.pop %v3115
    %v3117 = vmul.f32 %v2784, 1.442695
    %v3118 = vpow.pop %v3117
    %v3119 = vmul.f32 %v2785, 1.442695
    %v3120 = vpow.pop %v3119
    %v3121 = vmul.f32 %v2786, 1.442695
    %v3122 = vpow.pop %v3121
    %v3123 = vmul.f32 %v2787, 1.442695
    %v3124 = vpow.pop %v3123
    %v3125 = vmul.f32 %v2788, 1.442695
    %v3126 = vpow.pop %v3125
    %v3127 = vmul.f32 %v2789, 1.442695
    %v3128 = vpow.pop %v3127
    %v3129 = vmul.f32 %v2790, 1.442695
    %v3130 = vpow.pop %v3129
    %v3131 = vmul.f32 %v2791, 1.442695
    %v3132 = vpow.pop %v3131
    %v3133 = vmul.f32 %v2792, 1.442695
    %v3134 = vpow.pop %v3133
    %v3135 = vmul.f32 %v2793, 1.442695
    %v3136 = vpow.pop %v3135
    %v3137 = vmul.f32 %v2794, 1.442695
    %v3138 = vpow.pop %v3137
    %v3139 = vmul.f32 %v2795, 1.442695
    %v3140 = vpow.pop %v3139
    %v3141 = vmul.f32 %v2796, 1.442695
    %v3142 = vpow.pop %v3141
    %v3143 = vmul.f32 %v2797, 1.442695
    %v3144 = vpow.pop %v3143
    %v3145 = vmul.f32 %v2798, 1.442695
    %v3146 = vpow.pop %v3145
    %v3147 = vmul.f32 %v2799, 1.442695
    %v3148 = vpow.pop %v3147
    %v3149 = vmul.f32 %v2800, 1.442695
    %v3150 = vpow.pop %v3149
    %v3151 = vmul.f32 %v2801, 1.442695
    %v3152 = vpow.pop %v3151
    %v3153 = vmul.f32 %v2802, 1.442695
    %v3154 = vpow.pop %v3153
    %v3155 = vmul.f32 %v2803, 1.442695
    %v3156 = vpow.pop %v3155
    %v3157 = vmul.f32 %v2804, 1.442695
    %v3158 = vpow.pop %v3157
    %v3159 = vmul.f32 %v2805, 1.442695
    %v3160 = vpow.pop %v3159
    %v3161 = vmul.f32 %v2806, 1.442695
    %v3162 = vpow.pop %v3161
    %v3163 = vmul.f32 %v2807, 1.442695
    %v3164 = vpow.pop %v3163
    %v3165 = vmul.f32 %v2808, 1.442695
    %v3166 = vpow.pop %v3165
    %v3167 = vmul.f32 %v2809, 1.442695
    %v3168 = vpow.pop %v3167
    %v3169 = vmul.f32 %v2810, 1.442695
    %v3170 = vpow.pop %v3169
    %v3171 = vmul.f32 %v2811, 1.442695
    %v3172 = vpow.pop %v3171
    %v3173 = vmul.f32 %v2812, 1.442695
    %v3174 = vpow.pop %v3173
    %v3175 = vmul.f32 %v2813, 1.442695
    %v3176 = vpow.pop %v3175
    %v3177 = vmul.f32 %v2814, 1.442695
    %v3178 = vpow.pop %v3177
    %v3179 = vmul.f32 %v2815, 1.442695
    %v3180 = vpow.pop %v3179
    %v3181 = vmul.f32 %v2816, 1.442695
    %v3182 = vpow.pop %v3181
    %v3183 = vmul.f32 %v2817, 1.442695
    %v3184 = vpow.pop %v3183
    %v3185 = vmul.f32 %v2818, 1.442695
    %v3186 = vpow.pop %v3185
    %v3187 = vmul.f32 %v2819, 1.442695
    %v3188 = vpow.pop %v3187
    %v3189 = vmul.f32 %v2820, 1.442695
    %v3190 = vpow.pop %v3189
    %v3191 = vmul.f32 %v2821, 1.442695
    %v3192 = vpow.pop %v3191
    %v3193 = vmul.f32 %v2822, 1.442695
    %v3194 = vpow.pop %v3193
    %v3195 = vmul.f32 %v2823, 1.442695
    %v3196 = vpow.pop %v3195
    %v3197 = vmul.f32 %v2824, 1.442695
    %v3198 = vpow.pop %v3197
    %v3199 = vmul.f32 %v2825, 1.442695
    %v3200 = vpow.pop %v3199
    %v3201 = vmul.f32 %v2826, 1.442695
    %v3202 = vpow.pop %v3201
    %v3203 = vmul.f32 %v2827, 1.442695
    %v3204 = vpow.pop %v3203
    %v3205 = vmul.f32 %v2828, 1.442695
    %v3206 = vpow.pop %v3205
    %v3207 = vmul.f32 %v2829, 1.442695
    %v3208 = vpow.pop %v3207
    %v3209 = vmul.f32 %v2830, 1.442695
    %v3210 = vpow.pop %v3209
    %v3211 = vmul.f32 %v2831, 1.442695
    %v3212 = vpow.pop %v3211
    %v3213 = vmul.f32 %v2832, 1.442695
    %v3214 = vpow.pop %v3213
    %v3215 = vmul.f32 %v2833, 1.442695
    %v3216 = vpow.pop %v3215
    %v3217 = vmul.f32 %v2834, 1.442695
    %v3218 = vpow.pop %v3217
    %v3219 = vmul.f32 %v2835, 1.442695
    %v3220 = vpow.pop %v3219
    %v3221 = vmul.f32 %v2836, 1.442695
    %v3222 = vpow.pop %v3221
    %v3223 = vmul.f32 %v2837, 1.442695
    %v3224 = vpow.pop %v3223
    %v3225 = vmul.f32 %v2838, 1.442695
    %v3226 = vpow.pop %v3225
    %v3227 = vmul.f32 %v2839, 1.442695
    %v3228 = vpow.pop %v3227
    %v3229 = vmul.f32 %v2840, 1.442695
    %v3230 = vpow.pop %v3229
    %v3231 = vmul.f32 %v2841, 1.442695
    %v3232 = vpow.pop %v3231
    %v3233 = vmul.f32 %v2842, 1.442695
    %v3234 = vpow.pop %v3233
    %v3235 = vmul.f32 %v2843, 1.442695
    %v3236 = vpow.pop %v3235
    %v3237 = vmul.f32 %v2844, 1.442695
    %v3238 = vpow.pop %v3237
    %v3239 = vmul.f32 %v2845, 1.442695
    %v3240 = vpow.pop %v3239
    %v3241 = vmul.f32 %v2846, 1.442695
    %v3242 = vpow.pop %v3241
    %v3243 = vmul.f32 %v2847, 1.442695
    %v3244 = vpow.pop %v3243
    %v3245 = vmul.f32 %v2848, 1.442695
    %v3246 = vpow.pop %v3245
    %v3247 = vmul.f32 %v2849, 1.442695
    %v3248 = vpow.pop %v3247
    %v3249 = vmul.f32 %v2850, 1.442695
    %v3250 = vpow.pop %v3249
    %v3251 = vmul.f32 %v2851, 1.442695
    %v3252 = vpow.pop %v3251
    %v3253 = vmul.f32 %v2852, 1.442695
    %v3254 = vpow.pop %v3253
    %v3255 = vmul.f32 %v2853, 1.442695
    %v3256 = vpow.pop %v3255
    %v3257 = vmul.f32 %v2854, 1.442695
    %v3258 = vpow.pop %v3257
    %v3259 = vmul.f32 %v2855, 1.442695
    %v3260 = vpow.pop %v3259
    %v3261 = vmul.f32 %v2856, 1.442695
    %v3262 = vpow.pop %v3261
    %v3263 = vmul.f32 %v2857, 1.442695
    %v3264 = vpow.pop %v3263
    %v3265 = vmul.f32 %v2858, 1.442695
    %v3266 = vpow.pop %v3265
    %v3267 = vmul.f32 %v2859, 1.442695
    %v3268 = vpow.pop %v3267
    %v3269 = vmul.f32 %v2860, 1.442695
    %v3270 = vpow.pop %v3269
    %v3271 = vmul.f32 %v2861, 1.442695
    %v3272 = vpow.pop %v3271
    %v3273 = vmul.f32 %v2862, 1.442695
    %v3274 = vpow.pop %v3273
    %v3275 = vmul.f32 %v2863, 1.442695
    %v3276 = vpow.pop %v3275
    %v3277 = vmul.f32 %v2864, 1.442695
    %v3278 = vpow.pop %v3277
    %v3279 = vmul.f32 %v2865, 1.442695
    %v3280 = vpow.pop %v3279
    %v3281 = vmul.f32 %v2866, 1.442695
    %v3282 = vpow.pop %v3281
    %v3283 = vmul.f32 %v2867, 1.442695
    %v3284 = vpow.pop %v3283
    %v3285 = vmul.f32 %v2868, 1.442695
    %v3286 = vpow.pop %v3285
    %v3287 = vmul.f32 %v2869, 1.442695
    %v3288 = vpow.pop %v3287
    %v3289 = vmul.f32 %v2870, 1.442695
    %v3290 = vpow.pop %v3289
    %v3291 = vmul.f32 %v2871, 1.442695
    %v3292 = vpow.pop %v3291
    %v3293 = vmul.f32 %v2872, 1.442695
    %v3294 = vpow.pop %v3293
    %v3295 = vmul.f32 %v2873, 1.442695
    %v3296 = vpow.pop %v3295
    %v3297 = vmul.f32 %v2874, 1.442695
    %v3298 = vpow.pop %v3297
    %v3299 = vmul.f32 %v2875, 1.442695
    %v3300 = vpow.pop %v3299
    %v3301 = vmul.f32 %v2876, 1.442695
    %v3302 = vpow.pop %v3301
    %v3303 = vmul.f32 %v2877, 1.442695
    %v3304 = vpow.pop %v3303
    %v3305 = vmul.f32 %v2878, 1.442695
    %v3306 = vpow.pop %v3305
    %v3307 = vmul.f32 %v2879, 1.442695
    %v3308 = vpow.pop %v3307
    %v3309 = vmul.f32 %v2880, 1.442695
    %v3310 = vpow.pop %v3309
    %v3311 = vmul.f32 %v2881, 1.442695
    %v3312 = vpow.pop %v3311
    %v3313 = vmul.f32 %v2882, 1.442695
    %v3314 = vpow.pop %v3313
    %v3315 = vmul.f32 %v2883, 1.442695
    %v3316 = vpow.pop %v3315
    %v3317 = vmul.f32 %v2884, 1.442695
    %v3318 = vpow.pop %v3317
    %v3319 = vmul.f32 %v2885, 1.442695
    %v3320 = vpow.pop %v3319
    %v3321 = vmul.f32 %v2886, 1.442695
    %v3322 = vpow.pop %v3321
    %v3323 = vmul.f32 %v2887, 1.442695
    %v3324 = vpow.pop %v3323
    %v3325 = vmul.f32 %v2888, 1.442695
    %v3326 = vpow.pop %v3325
    %v3327 = vmul.f32 %v2889, 1.442695
    %v3328 = vpow.pop %v3327
    %v3329 = vmul.f32 %v2890, 1.442695
    %v3330 = vpow.pop %v3329
    %v3331 = vmul.f32 %v2891, 1.442695
    %v3332 = vpow.pop %v3331
    %v3333 = vmul.f32 %v2892, 1.442695
    %v3334 = vpow.pop %v3333
    %v3335 = vmul.f32 %v2893, 1.442695
    %v3336 = vpow.pop %v3335
    %v3337 = vmul.f32 %v2894, 1.442695
    %v3338 = vpow.pop %v3337
    %v3339 = vmul.f32 %v2895, 1.442695
    %v3340 = vpow.pop %v3339
    %v3341 = vmul.f32 %v2896, 1.442695
    %v3342 = vpow.pop %v3341
    %v3343 = vmul.f32 %v2897, 1.442695
    %v3344 = vpow.pop %v3343
    %v3345 = vmul.f32 %v2898, 1.442695
    %v3346 = vpow.pop %v3345
    %v3347 = vmul.f32 %v2899, 1.442695
    %v3348 = vpow.pop %v3347
    %v3349 = vmul.f32 %v2900, 1.442695
    %v3350 = vpow.pop %v3349
    %v3351 = vmul.f32 %v2901, 1.442695
    %v3352 = vpow.pop %v3351
    %v3353 = vmul.f32 %v2902, 1.442695
    %v3354 = vpow.pop %v3353
    %v3355 = vmul.f32 %v2903, 1.442695
    %v3356 = vpow.pop %v3355
    %v3357 = vmul.f32 %v2904, 1.442695
    %v3358 = vpow.pop %v3357
    %v3359 = vmul.f32 %v2905, 1.442695
    %v3360 = vpow.pop %v3359
    %v3361 = vmul.f32 %v2906, 1.442695
    %v3362 = vpow.pop %v3361
    %v3363 = vmul.f32 %v2907, 1.442695
    %v3364 = vpow.pop %v3363
    %v3365 = vmul.f32 %v2908, 1.442695
    %v3366 = vpow.pop %v3365
    %v3367 = vmul.f32 %v2909, 1.442695
    %v3368 = vpow.pop %v3367
    %v3369 = vmul.f32 %v2910, 1.442695
    %v3370 = vpow.pop %v3369
    %v3371 = vmul.f32 %v2911, 1.442695
    %v3372 = vpow.pop %v3371
    %v3373 = vmul.f32 %v2912, 1.442695
    %v3374 = vpow.pop %v3373
    %v3375 = vmul.f32 %v2913, 1.442695
    %v3376 = vpow.pop %v3375
    %v3377 = vmul.f32 %v2914, 1.442695
    %v3378 = vpow.pop %v3377
    %v3379 = vmul.f32 %v2915, 1.442695
    %v3380 = vpow.pop %v3379
    %v3381 = vmul.f32 %v2916, 1.442695
    %v3382 = vpow.pop %v3381
    %v3383 = vmul.f32 %v2917, 1.442695
    %v3384 = vpow.pop %v3383
    %v3385 = vmul.f32 %v2918, 1.442695
    %v3386 = vpow.pop %v3385
    %v3387 = vmul.f32 %v2919, 1.442695
    %v3388 = vpow.pop %v3387
    %v3389 = vmul.f32 %v2920, 1.442695
    %v3390 = vpow.pop %v3389
    %v3391 = vmul.f32 %v2921, 1.442695
    %v3392 = vpow.pop %v3391
    %v3393 = vmul.f32 %v2922, 1.442695
    %v3394 = vpow.pop %v3393
    %v3395 = vmul.f32 %v2923, 1.442695
    %v3396 = vpow.pop %v3395
    %v3397 = vmul.f32 %v2924, 1.442695
    %v3398 = vpow.pop %v3397
    %v3399 = vmul.f32 %v2925, 1.442695
    %v3400 = vpow.pop %v3399
    %v3401 = vmul.f32 %v2926, 1.442695
    %v3402 = vpow.pop %v3401
    %v3403 = vmul.f32 %v2927, 1.442695
    %v3404 = vpow.pop %v3403
    %v3405 = vmul.f32 %v2928, 1.442695
    %v3406 = vpow.pop %v3405
    %v3407 = vmul.f32 %v2929, 1.442695
    %v3408 = vpow.pop %v3407
    %v3409 = vmul.f32 %v2930, 1.442695
    %v3410 = vpow.pop %v3409
    %v3411 = vmul.f32 %v2931, 1.442695
    %v3412 = vpow.pop %v3411
    %v3413 = vmul.f32 %v2932, 1.442695
    %v3414 = vpow.pop %v3413
    %v3415 = vmul.f32 %v2933, 1.442695
    %v3416 = vpow.pop %v3415
    %v3417 = vmul.f32 %v2934, 1.442695
    %v3418 = vpow.pop %v3417
    %v3419 = vmul.f32 %v2935, 1.442695
    %v3420 = vpow.pop %v3419
    %v3421 = vmul.f32 %v2936, 1.442695
    %v3422 = vpow.pop %v3421
    %v3423 = vmul.f32 %v2937, 1.442695
    %v3424 = vpow.pop %v3423
    %v3425 = vmul.f32 %v2938, 1.442695
    %v3426 = vpow.pop %v3425
    %v3427 = vmul.f32 %v2939, 1.442695
    %v3428 = vpow.pop %v3427
    %v3429 = vmul.f32 %v2940, 1.442695
    %v3430 = vpow.pop %v3429
    %v3431 = vmul.f32 %v2941, 1.442695
    %v3432 = vpow.pop %v3431
    %v3433 = vmul.f32 %v2942, 1.442695
    %v3434 = vpow.pop %v3433
    %v3435 = vmul.f32 %v2943, 1.442695
    %v3436 = vpow.pop %v3435
    %v3437 = vmul.f32 %v2944, 1.442695
    %v3438 = vpow.pop %v3437
    %v3439 = vmul.f32 %v2945, 1.442695
    %v3440 = vpow.pop %v3439
    %v3441 = vmul.f32 %v2946, 1.442695
    %v3442 = vpow.pop %v3441
    %v3443 = vmul.f32 %v2947, 1.442695
    %v3444 = vpow.pop %v3443
    %v3445 = vmul.f32 %v2948, 1.442695
    %v3446 = vpow.pop %v3445
    %v3447 = vmul.f32 %v2949, 1.442695
    %v3448 = vpow.pop %v3447
    %v3449 = vmul.f32 %v2950, 1.442695
    %v3450 = vpow.pop %v3449
    %v3451 = vmul.f32 %v2951, 1.442695
    %v3452 = vpow.pop %v3451
    %v3453 = vmul.f32 %v2952, 1.442695
    %v3454 = vpow.pop %v3453
    %v3455 = vmul.f32 %v2953, 1.442695
    %v3456 = vpow.pop %v3455
    %v3457 = vmul.f32 %v2954, 1.442695
    %v3458 = vpow.pop %v3457
    %v3459 = vmul.f32 %v2955, 1.442695
    %v3460 = vpow.pop %v3459
    %v3461 = vmul.f32 %v2956, 1.442695
    %v3462 = vpow.pop %v3461
    %v3463 = vmul.f32 %v2957, 1.442695
    %v3464 = vpow.pop %v3463
    %v3465 = vmul.f32 %v2958, 1.442695
    %v3466 = vpow.pop %v3465
    %v3467 = vmul.f32 %v2959, 1.442695
    %v3468 = vpow.pop %v3467
    %v3469 = vmul.f32 %v2960, 1.442695
    %v3470 = vpow.pop %v3469
    %v3471 = vmul.f32 %v2961, 1.442695
    %v3472 = vpow.pop %v3471
    %v3473 = vmul.f32 %v2962, 1.442695
    %v3474 = vpow.pop %v3473
    %v3475 = vpack.c.bf16 %v2968, %v2964
    %v3476 = vpack.c.bf16 %v2970, %v2966
    %v3477 = vpack.c.bf16 %v2976, %v2972
    %v3478 = vpack.c.bf16 %v2978, %v2974
    %v3479 = vpack.c.bf16 %v2984, %v2980
    %v3480 = vpack.c.bf16 %v2986, %v2982
    %v3481 = vpack.c.bf16 %v2992, %v2988
    %v3482 = vpack.c.bf16 %v2994, %v2990
    %v3483 = vpack.c.bf16 %v3000, %v2996
    %v3484 = vpack.c.bf16 %v3002, %v2998
    %v3485 = vpack.c.bf16 %v3008, %v3004
    %v3486 = vpack.c.bf16 %v3010, %v3006
    %v3487 = vpack.c.bf16 %v3016, %v3012
    %v3488 = vpack.c.bf16 %v3018, %v3014
    %v3489 = vpack.c.bf16 %v3024, %v3020
    %v3490 = vpack.c.bf16 %v3026, %v3022
    %v3491 = vpack.c.bf16 %v3032, %v3028
    %v3492 = vpack.c.bf16 %v3034, %v3030
    %v3493 = vpack.c.bf16 %v3040, %v3036
    %v3494 = vpack.c.bf16 %v3042, %v3038
    %v3495 = vpack.c.bf16 %v3048, %v3044
    %v3496 = vpack.c.bf16 %v3050, %v3046
    %v3497 = vpack.c.bf16 %v3056, %v3052
    %v3498 = vpack.c.bf16 %v3058, %v3054
    %v3499 = vpack.c.bf16 %v3064, %v3060
    %v3500 = vpack.c.bf16 %v3066, %v3062
    %v3501 = vpack.c.bf16 %v3072, %v3068
    %v3502 = vpack.c.bf16 %v3074, %v3070
    %v3503 = vpack.c.bf16 %v3080, %v3076
    %v3504 = vpack.c.bf16 %v3082, %v3078
    %v3505 = vpack.c.bf16 %v3088, %v3084
    %v3506 = vpack.c.bf16 %v3090, %v3086
    %v3507 = vpack.c.bf16 %v3096, %v3092
    %v3508 = vpack.c.bf16 %v3098, %v3094
    %v3509 = vpack.c.bf16 %v3104, %v3100
    %v3510 = vpack.c.bf16 %v3106, %v3102
    %v3511 = vpack.c.bf16 %v3112, %v3108
    %v3512 = vpack.c.bf16 %v3114, %v3110
    %v3513 = vpack.c.bf16 %v3120, %v3116
    %v3514 = vpack.c.bf16 %v3122, %v3118
    %v3515 = vpack.c.bf16 %v3128, %v3124
    %v3516 = vpack.c.bf16 %v3130, %v3126
    %v3517 = vpack.c.bf16 %v3136, %v3132
    %v3518 = vpack.c.bf16 %v3138, %v3134
    %v3519 = vpack.c.bf16 %v3144, %v3140
    %v3520 = vpack.c.bf16 %v3146, %v3142
    %v3521 = vpack.c.bf16 %v3152, %v3148
    %v3522 = vpack.c.bf16 %v3154, %v3150
    %v3523 = vpack.c.bf16 %v3160, %v3156
    %v3524 = vpack.c.bf16 %v3162, %v3158
    %v3525 = vpack.c.bf16 %v3168, %v3164
    %v3526 = vpack.c.bf16 %v3170, %v3166
    %v3527 = vpack.c.bf16 %v3176, %v3172
    %v3528 = vpack.c.bf16 %v3178, %v3174
    %v3529 = vpack.c.bf16 %v3184, %v3180
    %v3530 = vpack.c.bf16 %v3186, %v3182
    %v3531 = vpack.c.bf16 %v3192, %v3188
    %v3532 = vpack.c.bf16 %v3194, %v3190
    %v3533 = vpack.c.bf16 %v3200, %v3196
    %v3534 = vpack.c.bf16 %v3202, %v3198
    %v3535 = vpack.c.bf16 %v3208, %v3204
    %v3536 = vpack.c.bf16 %v3210, %v3206
    %v3537 = vpack.c.bf16 %v3216, %v3212
    %v3538 = vpack.c.bf16 %v3218, %v3214
    %v3539 = vpack.c.bf16 %v3224, %v3220
    %v3540 = vpack.c.bf16 %v3226, %v3222
    %v3541 = vpack.c.bf16 %v3232, %v3228
    %v3542 = vpack.c.bf16 %v3234, %v3230
    %v3543 = vpack.c.bf16 %v3240, %v3236
    %v3544 = vpack.c.bf16 %v3242, %v3238
    %v3545 = vpack.c.bf16 %v3248, %v3244
    %v3546 = vpack.c.bf16 %v3250, %v3246
    %v3547 = vpack.c.bf16 %v3256, %v3252
    %v3548 = vpack.c.bf16 %v3258, %v3254
    %v3549 = vpack.c.bf16 %v3264, %v3260
    %v3550 = vpack.c.bf16 %v3266, %v3262
    %v3551 = vpack.c.bf16 %v3272, %v3268
    %v3552 = vpack.c.bf16 %v3274, %v3270
    %v3553 = vpack.c.bf16 %v3280, %v3276
    %v3554 = vpack.c.bf16 %v3282, %v3278
    %v3555 = vpack.c.bf16 %v3288, %v3284
    %v3556 = vpack.c.bf16 %v3290, %v3286
    %v3557 = vpack.c.bf16 %v3296, %v3292
    %v3558 = vpack.c.bf16 %v3298, %v3294
    %v3559 = vpack.c.bf16 %v3304, %v3300
    %v3560 = vpack.c.bf16 %v3306, %v3302
    %v3561 = vpack.c.bf16 %v3312, %v3308
    %v3562 = vpack.c.bf16 %v3314, %v3310
    %v3563 = vpack.c.bf16 %v3320, %v3316
    %v3564 = vpack.c.bf16 %v3322, %v3318
    %v3565 = vpack.c.bf16 %v3328, %v3324
    %v3566 = vpack.c.bf16 %v3330, %v3326
    %v3567 = vpack.c.bf16 %v3336, %v3332
    %v3568 = vpack.c.bf16 %v3338, %v3334
    %v3569 = vpack.c.bf16 %v3344, %v3340
    %v3570 = vpack.c.bf16 %v3346, %v3342
    %v3571 = vpack.c.bf16 %v3352, %v3348
    %v3572 = vpack.c.bf16 %v3354, %v3350
    %v3573 = vpack.c.bf16 %v3360, %v3356
    %v3574 = vpack.c.bf16 %v3362, %v3358
    %v3575 = vpack.c.bf16 %v3368, %v3364
    %v3576 = vpack.c.bf16 %v3370, %v3366
    %v3577 = vpack.c.bf16 %v3376, %v3372
    %v3578 = vpack.c.bf16 %v3378, %v3374
    %v3579 = vpack.c.bf16 %v3384, %v3380
    %v3580 = vpack.c.bf16 %v3386, %v3382
    %v3581 = vpack.c.bf16 %v3392, %v3388
    %v3582 = vpack.c.bf16 %v3394, %v3390
    %v3583 = vpack.c.bf16 %v3400, %v3396
    %v3584 = vpack.c.bf16 %v3402, %v3398
    %v3585 = vpack.c.bf16 %v3408, %v3404
    %v3586 = vpack.c.bf16 %v3410, %v3406
    %v3587 = vpack.c.bf16 %v3416, %v3412
    %v3588 = vpack.c.bf16 %v3418, %v3414
    %v3589 = vpack.c.bf16 %v3424, %v3420
    %v3590 = vpack.c.bf16 %v3426, %v3422
    %v3591 = vpack.c.bf16 %v3432, %v3428
    %v3592 = vpack.c.bf16 %v3434, %v3430
    %v3593 = vpack.c.bf16 %v3440, %v3436
    %v3594 = vpack.c.bf16 %v3442, %v3438
    %v3595 = vpack.c.bf16 %v3448, %v3444
    %v3596 = vpack.c.bf16 %v3450, %v3446
    %v3597 = vpack.c.bf16 %v3456, %v3452
    %v3598 = vpack.c.bf16 %v3458, %v3454
    %v3599 = vpack.c.bf16 %v3464, %v3460
    %v3600 = vpack.c.bf16 %v3466, %v3462
    %v3601 = vpack.c.bf16 %v3472, %v3468
    %v3602 = vpack.c.bf16 %v3474, %v3470
    %v3603 = vpack.c.bf16 %v566, %v560
    %v3604 = vpack.c.bf16 %v568, %v562
    %v3605 = vpack.c.bf16 %v578, %v572
    %v3606 = vpack.c.bf16 %v580, %v574
    %v3607 = vpack.c.bf16 %v590, %v584
    %v3608 = vpack.c.bf16 %v592, %v586
    %v3609 = vpack.c.bf16 %v602, %v596
    %v3610 = vpack.c.bf16 %v604, %v598
    %v3611 = vpack.c.bf16 %v614, %v608
    %v3612 = vpack.c.bf16 %v616, %v610
    %v3613 = vpack.c.bf16 %v626, %v620
    %v3614 = vpack.c.bf16 %v628, %v622
    %v3615 = vpack.c.bf16 %v638, %v632
    %v3616 = vpack.c.bf16 %v640, %v634
    %v3617 = vpack.c.bf16 %v650, %v644
    %v3618 = vpack.c.bf16 %v652, %v646
    %3619 = vmatprep.subr.bf16.mxu0 %v3476
    %3620 = vmatpush1.bf16.xpose.msra.mxu0 %v3475
    %3621 = vmatprep.subr.bf16.mxu0 %v3478
    %3622 = vmatpush1.bf16.xpose.msra.mxu0 %v3477
    %3623 = vmatprep.subr.bf16.mxu0 %v3480
    %3624 = vmatpush1.bf16.xpose.msra.mxu0 %v3479
    %3625 = vmatprep.subr.bf16.mxu0 %v3482
    %3626 = vmatpush1.bf16.xpose.msra.mxu0 %v3481
    %3627 = vmatprep.subr.bf16.mxu0 %v3484
    %3628 = vmatpush1.bf16.xpose.msra.mxu0 %v3483
    %3629 = vmatprep.subr.bf16.mxu0 %v3486
    %3630 = vmatpush1.bf16.xpose.msra.mxu0 %v3485
    %3631 = vmatprep.subr.bf16.mxu0 %v3488
    %3632 = vmatpush1.bf16.xpose.msra.mxu0 %v3487
    %3633 = vmatprep.subr.bf16.mxu0 %v3490
    %3634 = vmatpush1.bf16.xpose.msra.mxu0 %v3489
    %3635 = vmatprep.subr.bf16.mxu0 %v3492
    %3636 = vmatpush1.bf16.xpose.msra.mxu0 %v3491
    %3637 = vmatprep.subr.bf16.mxu0 %v3494
    %3638 = vmatpush1.bf16.xpose.msra.mxu0 %v3493
    %3639 = vmatprep.subr.bf16.mxu0 %v3496
    %3640 = vmatpush1.bf16.xpose.msra.mxu0 %v3495
    %3641 = vmatprep.subr.bf16.mxu0 %v3498
    %3642 = vmatpush1.bf16.xpose.msra.mxu0 %v3497
    %3643 = vmatprep.subr.bf16.mxu0 %v3500
    %3644 = vmatpush1.bf16.xpose.msra.mxu0 %v3499
    %3645 = vmatprep.subr.bf16.mxu0 %v3502
    %3646 = vmatpush1.bf16.xpose.msra.mxu0 %v3501
    %3647 = vmatprep.subr.bf16.mxu0 %v3504
    %3648 = vmatpush1.bf16.xpose.msra.mxu0 %v3503
    %3649 = vmatprep.subr.bf16.mxu0 %v3506
    %3650 = vmatpush1.bf16.xpose.msra.mxu0 %v3505
    %3651 = vmatprep.mubr.bf16.mxu0 %v3604
    %3652 = vmatmul.mubr.bf16.gmra.mrb[0].mxu0 %v3603
    %v3653 = vpop.f32.mrb[0].mxu0
    %v3654 = vadd.f32 0.0, %v3653
    %v3655 = vpop.f32.mrb[0].mxu0
    %v3656 = vadd.f32 0.0, %v3655
    %v3657 = vpop.f32.mrb[0].mxu0
    %v3658 = vadd.f32 0.0, %v3657
    %v3659 = vpop.f32.mrb[0].mxu0
    %v3660 = vadd.f32 0.0, %v3659
    %3661 = vmatprep.mubr.bf16.mxu0 %v3606
    %3662 = vmatmul.mubr.bf16.gmra.mrb[0].mxu0 %v3605
    %v3663 = vpop.f32.mrb[0].mxu0
    %v3664 = vadd.f32 0.0, %v3663
    %v3665 = vpop.f32.mrb[0].mxu0
    %v3666 = vadd.f32 0.0, %v3665
    %v3667 = vpop.f32.mrb[0].mxu0
    %v3668 = vadd.f32 0.0, %v3667
    %v3669 = vpop.f32.mrb[0].mxu0
    %v3670 = vadd.f32 0.0, %v3669
    %3671 = vmatprep.mubr.bf16.mxu0 1065369472
    %3672 = vmatmul.mubr.bf16.gmra.mrb[0].mxu0 1065369472
    %v3673 = vpop.f32.mrb[0].mxu0
    %v3674 = vadd.f32 0.0, %v3673
    %v3675 = vpop.f32.mrb[0].mxu0
    %v3676 = vadd.f32 0.0, %v3675
    %v3677 = vpop.f32.mrb[0].mxu0
    %v3678 = vpop.f32.mrb[0].mxu0
    %3679 = vdwg.mxu0
    %3680 = vmatprep.subr.bf16.mxu0 %v3508
    %3681 = vmatpush1.bf16.xpose.msra.mxu0 %v3507
    %3682 = vmatprep.subr.bf16.mxu0 %v3510
    %3683 = vmatpush1.bf16.xpose.msra.mxu0 %v3509
    %3684 = vmatprep.subr.bf16.mxu0 %v3512
    %3685 = vmatpush1.bf16.xpose.msra.mxu0 %v3511
    %3686 = vmatprep.subr.bf16.mxu0 %v3514
    %3687 = vmatpush1.bf16.xpose.msra.mxu0 %v3513
    %3688 = vmatprep.subr.bf16.mxu0 %v3516
    %3689 = vmatpush1.bf16.xpose.msra.mxu0 %v3515
    %3690 = vmatprep.subr.bf16.mxu0 %v3518
    %3691 = vmatpush1.bf16.xpose.msra.mxu0 %v3517
    %3692 = vmatprep.subr.bf16.mxu0 %v3520
    %3693 = vmatpush1.bf16.xpose.msra.mxu0 %v3519
    %3694 = vmatprep.subr.bf16.mxu0 %v3522
    %3695 = vmatpush1.bf16.xpose.msra.mxu0 %v3521
    %3696 = vmatprep.subr.bf16.mxu0 %v3524
    %3697 = vmatpush1.bf16.xpose.msra.mxu0 %v3523
    %3698 = vmatprep.subr.bf16.mxu0 %v3526
    %3699 = vmatpush1.bf16.xpose.msra.mxu0 %v3525
    %3700 = vmatprep.subr.bf16.mxu0 %v3528
    %3701 = vmatpush1.bf16.xpose.msra.mxu0 %v3527
    %3702 = vmatprep.subr.bf16.mxu0 %v3530
    %3703 = vmatpush1.bf16.xpose.msra.mxu0 %v3529
    %3704 = vmatprep.subr.bf16.mxu0 %v3532
    %3705 = vmatpush1.bf16.xpose.msra.mxu0 %v3531
    %3706 = vmatprep.subr.bf16.mxu0 %v3534
    %3707 = vmatpush1.bf16.xpose.msra.mxu0 %v3533
    %3708 = vmatprep.subr.bf16.mxu0 %v3536
    %3709 = vmatpush1.bf16.xpose.msra.mxu0 %v3535
    %3710 = vmatprep.subr.bf16.mxu0 %v3538
    %3711 = vmatpush1.bf16.xpose.msra.mxu0 %v3537
    %3712 = vmatprep.mubr.bf16.mxu0 %v3608
    %3713 = vmatmul.mubr.bf16.gmra.mrb[0].mxu0 %v3607
    %v3714 = vpop.f32.mrb[0].mxu0
    %v3715 = vadd.f32 0.0, %v3714
    %v3716 = vpop.f32.mrb[0].mxu0
    %v3717 = vadd.f32 0.0, %v3716
    %v3718 = vpop.f32.mrb[0].mxu0
    %v3719 = vadd.f32 0.0, %v3718
    %v3720 = vpop.f32.mrb[0].mxu0
    %v3721 = vadd.f32 0.0, %v3720
    %3722 = vmatprep.mubr.bf16.mxu0 %v3610
    %3723 = vmatmul.mubr.bf16.gmra.mrb[0].mxu0 %v3609
    %v3724 = vpop.f32.mrb[0].mxu0
    %v3725 = vadd.f32 0.0, %v3724
    %v3726 = vpop.f32.mrb[0].mxu0
    %v3727 = vadd.f32 0.0, %v3726
    %v3728 = vpop.f32.mrb[0].mxu0
    %v3729 = vadd.f32 0.0, %v3728
    %v3730 = vpop.f32.mrb[0].mxu0
    %v3731 = vadd.f32 0.0, %v3730
    %3732 = vmatprep.mubr.bf16.mxu0 1065369472
    %3733 = vmatmul.mubr.bf16.gmra.mrb[0].mxu0 1065369472
    %v3734 = vpop.f32.mrb[0].mxu0
    %v3735 = vadd.f32 0.0, %v3734
    %v3736 = vpop.f32.mrb[0].mxu0
    %v3737 = vadd.f32 0.0, %v3736
    %v3738 = vpop.f32.mrb[0].mxu0
    %v3739 = vpop.f32.mrb[0].mxu0
    %3740 = vdwg.mxu0
    %3741 = vmatprep.subr.bf16.mxu0 %v3540
    %3742 = vmatpush1.bf16.xpose.msra.mxu0 %v3539
    %3743 = vmatprep.subr.bf16.mxu0 %v3542
    %3744 = vmatpush1.bf16.xpose.msra.mxu0 %v3541
    %3745 = vmatprep.subr.bf16.mxu0 %v3544
    %3746 = vmatpush1.bf16.xpose.msra.mxu0 %v3543
    %3747 = vmatprep.subr.bf16.mxu0 %v3546
    %3748 = vmatpush1.bf16.xpose.msra.mxu0 %v3545
    %3749 = vmatprep.subr.bf16.mxu0 %v3548
    %3750 = vmatpush1.bf16.xpose.msra.mxu0 %v3547
    %3751 = vmatprep.subr.bf16.mxu0 %v3550
    %3752 = vmatpush1.bf16.xpose.msra.mxu0 %v3549
    %3753 = vmatprep.subr.bf16.mxu0 %v3552
    %3754 = vmatpush1.bf16.xpose.msra.mxu0 %v3551
    %3755 = vmatprep.subr.bf16.mxu0 %v3554
    %3756 = vmatpush1.bf16.xpose.msra.mxu0 %v3553
    %3757 = vmatprep.subr.bf16.mxu0 %v3556
    %3758 = vmatpush1.bf16.xpose.msra.mxu0 %v3555
    %3759 = vmatprep.subr.bf16.mxu0 %v3558
    %3760 = vmatpush1.bf16.xpose.msra.mxu0 %v3557
    %3761 = vmatprep.subr.bf16.mxu0 %v3560
    %3762 = vmatpush1.bf16.xpose.msra.mxu0 %v3559
    %3763 = vmatprep.subr.bf16.mxu0 %v3562
    %3764 = vmatpush1.bf16.xpose.msra.mxu0 %v3561
    %3765 = vmatprep.subr.bf16.mxu0 %v3564
    %3766 = vmatpush1.bf16.xpose.msra.mxu0 %v3563
    %3767 = vmatprep.subr.bf16.mxu0 %v3566
    %3768 = vmatpush1.bf16.xpose.msra.mxu0 %v3565
    %3769 = vmatprep.subr.bf16.mxu0 %v3568
    %3770 = vmatpush1.bf16.xpose.msra.mxu0 %v3567
    %3771 = vmatprep.subr.bf16.mxu0 %v3570
    %3772 = vmatpush1.bf16.xpose.msra.mxu0 %v3569
    %3773 = vmatprep.mubr.bf16.mxu0 %v3612
    %3774 = vmatmul.mubr.bf16.gmra.mrb[0].mxu0 %v3611
    %v3775 = vpop.f32.mrb[0].mxu0
    %v3776 = vadd.f32 0.0, %v3775
    %v3777 = vpop.f32.mrb[0].mxu0
    %v3778 = vadd.f32 0.0, %v3777
    %v3779 = vpop.f32.mrb[0].mxu0
    %v3780 = vadd.f32 0.0, %v3779
    %v3781 = vpop.f32.mrb[0].mxu0
    %v3782 = vadd.f32 0.0, %v3781
    %3783 = vmatprep.mubr.bf16.mxu0 %v3614
    %3784 = vmatmul.mubr.bf16.gmra.mrb[0].mxu0 %v3613
    %v3785 = vpop.f32.mrb[0].mxu0
    %v3786 = vadd.f32 0.0, %v3785
    %v3787 = vpop.f32.mrb[0].mxu0
    %v3788 = vadd.f32 0.0, %v3787
    %v3789 = vpop.f32.mrb[0].mxu0
    %v3790 = vadd.f32 0.0, %v3789
    %v3791 = vpop.f32.mrb[0].mxu0
    %v3792 = vadd.f32 0.0, %v3791
    %3793 = vmatprep.mubr.bf16.mxu0 1065369472
    %3794 = vmatmul.mubr.bf16.gmra.mrb[0].mxu0 1065369472
    %v3795 = vpop.f32.mrb[0].mxu0
    %v3796 = vadd.f32 0.0, %v3795
    %v3797 = vpop.f32.mrb[0].mxu0
    %v3798 = vadd.f32 0.0, %v3797
    %v3799 = vpop.f32.mrb[0].mxu0
    %v3800 = vpop.f32.mrb[0].mxu0
    %3801 = vdwg.mxu0
    %3802 = vmatprep.subr.bf16.mxu0 %v3572
    %3803 = vmatpush1.bf16.xpose.msra.mxu0 %v3571
    %3804 = vmatprep.subr.bf16.mxu0 %v3574
    %3805 = vmatpush1.bf16.xpose.msra.mxu0 %v3573
    %3806 = vmatprep.subr.bf16.mxu0 %v3576
    %3807 = vmatpush1.bf16.xpose.msra.mxu0 %v3575
    %3808 = vmatprep.subr.bf16.mxu0 %v3578
    %3809 = vmatpush1.bf16.xpose.msra.mxu0 %v3577
    %3810 = vmatprep.subr.bf16.mxu0 %v3580
    %3811 = vmatpush1.bf16.xpose.msra.mxu0 %v3579
    %3812 = vmatprep.subr.bf16.mxu0 %v3582
    %3813 = vmatpush1.bf16.xpose.msra.mxu0 %v3581
    %3814 = vmatprep.subr.bf16.mxu0 %v3584
    %3815 = vmatpush1.bf16.xpose.msra.mxu0 %v3583
    %3816 = vmatprep.subr.bf16.mxu0 %v3586
    %3817 = vmatpush1.bf16.xpose.msra.mxu0 %v3585
    %3818 = vmatprep.subr.bf16.mxu0 %v3588
    %3819 = vmatpush1.bf16.xpose.msra.mxu0 %v3587
    %3820 = vmatprep.subr.bf16.mxu0 %v3590
    %3821 = vmatpush1.bf16.xpose.msra.mxu0 %v3589
    %3822 = vmatprep.subr.bf16.mxu0 %v3592
    %3823 = vmatpush1.bf16.xpose.msra.mxu0 %v3591
    %3824 = vmatprep.subr.bf16.mxu0 %v3594
    %3825 = vmatpush1.bf16.xpose.msra.mxu0 %v3593
    %3826 = vmatprep.subr.bf16.mxu0 %v3596
    %3827 = vmatpush1.bf16.xpose.msra.mxu0 %v3595
    %3828 = vmatprep.subr.bf16.mxu0 %v3598
    %3829 = vmatpush1.bf16.xpose.msra.mxu0 %v3597
    %3830 = vmatprep.subr.bf16.mxu0 %v3600
    %3831 = vmatpush1.bf16.xpose.msra.mxu0 %v3599
    %3832 = vmatprep.subr.bf16.mxu0 %v3602
    %3833 = vmatpush1.bf16.xpose.msra.mxu0 %v3601
    %3834 = vmatprep.mubr.bf16.mxu0 %v3616
    %3835 = vmatmul.mubr.bf16.gmra.mrb[0].mxu0 %v3615
    %v3836 = vpop.f32.mrb[0].mxu0
    %v3837 = vadd.f32 0.0, %v3836
    %v3838 = vpop.f32.mrb[0].mxu0
    %v3839 = vadd.f32 0.0, %v3838
    %v3840 = vpop.f32.mrb[0].mxu0
    %v3841 = vadd.f32 0.0, %v3840
    %v3842 = vpop.f32.mrb[0].mxu0
    %v3843 = vadd.f32 0.0, %v3842
    %3844 = vmatprep.mubr.bf16.mxu0 %v3618
    %3845 = vmatmul.mubr.bf16.gmra.mrb[0].mxu0 %v3617
    %v3846 = vpop.f32.mrb[0].mxu0
    %v3847 = vadd.f32 0.0, %v3846
    %v3848 = vpop.f32.mrb[0].mxu0
    %v3849 = vadd.f32 0.0, %v3848
    %v3850 = vpop.f32.mrb[0].mxu0
    %v3851 = vadd.f32 0.0, %v3850
    %v3852 = vpop.f32.mrb[0].mxu0
    %v3853 = vadd.f32 0.0, %v3852
    %3854 = vmatprep.mubr.bf16.mxu0 1065369472
    %3855 = vmatmul.mubr.bf16.gmra.mrb[0].mxu0 1065369472
    %v3856 = vpop.f32.mrb[0].mxu0
    %v3857 = vadd.f32 0.0, %v3856
    %v3858 = vpop.f32.mrb[0].mxu0
    %v3859 = vadd.f32 0.0, %v3858
    %v3860 = vpop.f32.mrb[0].mxu0
    %v3861 = vpop.f32.mrb[0].mxu0
    %3862 = vdwg.mxu0
    %v3863 = vrcp.pop %v3674
    %v3864 = vrcp.pop %v3676
    %v3865 = vrcp.pop %v3735
    %v3866 = vrcp.pop %v3737
    %v3867 = vrcp.pop %v3796
    %v3868 = vrcp.pop %v3798
    %v3869 = vrcp.pop %v3857
    %v3870 = vrcp.pop %v3859
    %v3871 = vlaneseq
    %v3872 = vshrl.u32 %v3871, 7
    %v3873 = vsub.s32 0, %v3872
    %v3874 = vrot.slane %v3863, %v3873
    %v3875 = vlaneseq
    %v3876 = vshrl.u32 %v3875, 7
    %v3877 = vsub.s32 0, %v3876
    %v3878 = vrot.slane %v3864, %v3877
    %v3879 = vlaneseq
    %v3880 = vshrl.u32 %v3879, 7
    %v3881 = vsub.s32 0, %v3880
    %v3882 = vrot.slane %v3865, %v3881
    %v3883 = vlaneseq
    %v3884 = vshrl.u32 %v3883, 7
    %v3885 = vsub.s32 0, %v3884
    %v3886 = vrot.slane %v3866, %v3885
    %v3887 = vlaneseq
    %v3888 = vshrl.u32 %v3887, 7
    %v3889 = vsub.s32 0, %v3888
    %v3890 = vrot.slane %v3867, %v3889
    %v3891 = vlaneseq
    %v3892 = vshrl.u32 %v3891, 7
    %v3893 = vsub.s32 0, %v3892
    %v3894 = vrot.slane %v3868, %v3893
    %v3895 = vlaneseq
    %v3896 = vshrl.u32 %v3895, 7
    %v3897 = vsub.s32 0, %v3896
    %v3898 = vrot.slane %v3869, %v3897
    %v3899 = vlaneseq
    %v3900 = vshrl.u32 %v3899, 7
    %v3901 = vsub.s32 0, %v3900
    %v3902 = vrot.slane %v3870, %v3901
    %v3903 = vmul.f32 %v3654, %v3874
    %v3904 = vmul.f32 %v3656, %v3878
    %v3905 = vmul.f32 %v3658, %v3874
    %v3906 = vmul.f32 %v3660, %v3878
    %v3907 = vmul.f32 %v3664, %v3874
    %v3908 = vmul.f32 %v3666, %v3878
    %v3909 = vmul.f32 %v3668, %v3874
    %v3910 = vmul.f32 %v3670, %v3878
    %v3911 = vmul.f32 %v3715, %v3882
    %v3912 = vmul.f32 %v3717, %v3886
    %v3913 = vmul.f32 %v3719, %v3882
    %v3914 = vmul.f32 %v3721, %v3886
    %v3915 = vmul.f32 %v3725, %v3882
    %v3916 = vmul.f32 %v3727, %v3886
    %v3917 = vmul.f32 %v3729, %v3882
    %v3918 = vmul.f32 %v3731, %v3886
    %v3919 = vmul.f32 %v3776, %v3890
    %v3920 = vmul.f32 %v3778, %v3894
    %v3921 = vmul.f32 %v3780, %v3890
    %v3922 = vmul.f32 %v3782, %v3894
    %v3923 = vmul.f32 %v3786, %v3890
    %v3924 = vmul.f32 %v3788, %v3894
    %v3925 = vmul.f32 %v3790, %v3890
    %v3926 = vmul.f32 %v3792, %v3894
    %v3927 = vmul.f32 %v3837, %v3898
    %v3928 = vmul.f32 %v3839, %v3902
    %v3929 = vmul.f32 %v3841, %v3898
    %v3930 = vmul.f32 %v3843, %v3902
    %v3931 = vmul.f32 %v3847, %v3898
    %v3932 = vmul.f32 %v3849, %v3902
    %v3933 = vmul.f32 %v3851, %v3898
    %v3934 = vmul.f32 %v3853, %v3902
    %3936 = vset.pattern.permute.xlu0 0
    %3937 = vperm.xlu0 %3936, %v48
    %v3938 = vpop.permute.xlu0 %3937
    %3940 = vmatprep.subr.mxu0 %v3904
    %3941 = vmatpush1.msra.mxu0 %v3903
    %3942 = vmatprep.subr.mxu0 %v3906
    %3943 = vmatpush1.msra.mxu0 %v3905
    %3944 = vmatprep.subr.mxu0 %v3908
    %3945 = vmatpush1.msra.mxu0 %v3907
    %3946 = vmatprep.subr.mxu0 %v3910
    %3947 = vmatpush1.msra.mxu0 %v3909
    %3948 = vmatprep.subr.mxu0 %v3912
    %3949 = vmatpush1.msra.mxu0 %v3911
    %3950 = vmatprep.subr.mxu0 %v3914
    %3951 = vmatpush1.msra.mxu0 %v3913
    %3952 = vmatprep.subr.mxu0 %v3916
    %3953 = vmatpush1.msra.mxu0 %v3915
    %3954 = vmatprep.subr.mxu0 %v3918
    %3955 = vmatpush1.msra.mxu0 %v3917
    %3956 = vmatprep.subr.mxu0 %v3920
    %3957 = vmatpush1.msra.mxu0 %v3919
    %3958 = vmatprep.subr.mxu0 %v3922
    %3959 = vmatpush1.msra.mxu0 %v3921
    %3960 = vmatprep.subr.mxu0 %v3924
    %3961 = vmatpush1.msra.mxu0 %v3923
    %3962 = vmatprep.subr.mxu0 %v3926
    %3963 = vmatpush1.msra.mxu0 %v3925
    %3964 = vmatprep.subr.mxu0 %v3928
    %3965 = vmatpush1.msra.mxu0 %v3927
    %3966 = vmatprep.subr.mxu0 %v3930
    %3967 = vmatpush1.msra.mxu0 %v3929
    %3968 = vmatprep.subr.mxu0 %v3932
    %3969 = vmatpush1.msra.mxu0 %v3931
    %3970 = vmatprep.subr.mxu0 %v3934
    %3971 = vmatpush1.msra.mxu0 %v3933
    %3972 = vmatprep.subr.mxu0 0.0
    %3973 = vmatpush1.msra.mxu0 0.0
    %3974 = vmatprep.subr.mxu0 0.0
    %3975 = vmatpush1.msra.mxu0 0.0
    %3976 = vmatprep.subr.mxu0 0.0
    %3977 = vmatpush1.msra.mxu0 0.0
    %3978 = vmatprep.subr.mxu0 0.0
    %3979 = vmatpush1.msra.mxu0 0.0
    %3980 = vmatprep.subr.mxu0 0.0
    %3981 = vmatpush1.msra.mxu0 0.0
    %3982 = vmatprep.subr.mxu0 0.0
    %3983 = vmatpush1.msra.mxu0 0.0
    %3984 = vmatprep.subr.mxu0 0.0
    %3985 = vmatpush1.msra.mxu0 0.0
    %3986 = vmatprep.subr.mxu0 0.0
    %3987 = vmatpush1.msra.mxu0 0.0
    %3988 = vmatprep.subr.mxu0 0.0
    %3989 = vmatpush1.msra.mxu0 0.0
    %3990 = vmatprep.subr.mxu0 0.0
    %3991 = vmatpush1.msra.mxu0 0.0
    %3992 = vmatprep.subr.mxu0 0.0
    %3993 = vmatpush1.msra.mxu0 0.0
    %3994 = vmatprep.subr.mxu0 0.0
    %3995 = vmatpush1.msra.mxu0 0.0
    %3996 = vmatprep.subr.mxu0 0.0
    %3997 = vmatpush1.msra.mxu0 0.0
    %3998 = vmatprep.subr.mxu0 0.0
    %3999 = vmatpush1.msra.mxu0 0.0
    %4000 = vmatprep.subr.mxu0 0.0
    %4001 = vmatpush1.msra.mxu0 0.0
    %4002 = vmatprep.subr.mxu0 0.0
    %4003 = vmatpush1.msra.mxu0 0.0
    %4004 = vmatprep.mubr.f32.mxu0 0.0
    %4005 = vmatmul.mubr.f32.gmra.mrb[0].mxu0 %v47
    %v4006 = vpop.f32.mrb[0].mxu0
    %v4007 = vadd.f32 %v3938, %v4006
    %v4008 = vpop.f32.mrb[0].mxu0
    %v4009 = vadd.f32 %v3938, %v4008
    %4010 = vdwg.mxu0
    %v4013 = vcombine.low %v4007, %v4009
    %4015 = vst [vmem:[#allocation7] sm:$0xff] %v4013
    %s4016 = scalar_lea.vmem [#allocation2], 8
    %v4017 = vld [vmem:[%s4016] sm:$0xff]
    %v4019 = vcombine.high %v4017, %v4017
    %v4020 = vsel %vm296, %v4017, 0
    %v4022 = vsel %vm296, %v4019, 0
    %4024 = vmatprep.subr.mxu0 %v4022
    %4025 = vmatpush1.msra.mxu0 %v4020
    %4026 = vmatprep.subr.mxu0 0.0
    %4027 = vmatpush1.msra.mxu0 0.0
    %4028 = vmatprep.subr.mxu0 0.0
    %4029 = vmatpush1.msra.mxu0 0.0
    %4030 = vmatprep.subr.mxu0 0.0
    %4031 = vmatpush1.msra.mxu0 0.0
    %4032 = vmatprep.subr.mxu0 0.0
    %4033 = vmatpush1.msra.mxu0 0.0
    %4034 = vmatprep.subr.mxu0 0.0
    %4035 = vmatpush1.msra.mxu0 0.0
    %4036 = vmatprep.subr.mxu0 0.0
    %4037 = vmatpush1.msra.mxu0 0.0
    %4038 = vmatprep.subr.mxu0 0.0
    %4039 = vmatpush1.msra.mxu0 0.0
    %4040 = vmatprep.subr.mxu0 0.0
    %4041 = vmatpush1.msra.mxu0 0.0
    %4042 = vmatprep.subr.mxu0 0.0
    %4043 = vmatpush1.msra.mxu0 0.0
    %4044 = vmatprep.subr.mxu0 0.0
    %4045 = vmatpush1.msra.mxu0 0.0
    %4046 = vmatprep.subr.mxu0 0.0
    %4047 = vmatpush1.msra.mxu0 0.0
    %4048 = vmatprep.subr.mxu0 0.0
    %4049 = vmatpush1.msra.mxu0 0.0
    %4050 = vmatprep.subr.mxu0 0.0
    %4051 = vmatpush1.msra.mxu0 0.0
    %4052 = vmatprep.subr.mxu0 0.0
    %4053 = vmatpush1.msra.mxu0 0.0
    %4054 = vmatprep.subr.mxu0 0.0
    %4055 = vmatpush1.msra.mxu0 0.0
    %4056 = vmatprep.subr.mxu0 0.0
    %4057 = vmatpush1.msra.mxu0 0.0
    %4058 = vmatprep.subr.mxu0 0.0
    %4059 = vmatpush1.msra.mxu0 0.0
    %4060 = vmatprep.subr.mxu0 0.0
    %4061 = vmatpush1.msra.mxu0 0.0
    %4062 = vmatprep.subr.mxu0 0.0
    %4063 = vmatpush1.msra.mxu0 0.0
    %4064 = vmatprep.subr.mxu0 0.0
    %4065 = vmatpush1.msra.mxu0 0.0
    %4066 = vmatprep.subr.mxu0 0.0
    %4067 = vmatpush1.msra.mxu0 0.0
    %4068 = vmatprep.subr.mxu0 0.0
    %4069 = vmatpush1.msra.mxu0 0.0
    %4070 = vmatprep.subr.mxu0 0.0
    %4071 = vmatpush1.msra.mxu0 0.0
    %4072 = vmatprep.subr.mxu0 0.0
    %4073 = vmatpush1.msra.mxu0 0.0
    %4074 = vmatprep.subr.mxu0 0.0
    %4075 = vmatpush1.msra.mxu0 0.0
    %4076 = vmatprep.subr.mxu0 0.0
    %4077 = vmatpush1.msra.mxu0 0.0
    %4078 = vmatprep.subr.mxu0 0.0
    %4079 = vmatpush1.msra.mxu0 0.0
    %4080 = vmatprep.subr.mxu0 0.0
    %4081 = vmatpush1.msra.mxu0 0.0
    %4082 = vmatprep.subr.mxu0 0.0
    %4083 = vmatpush1.msra.mxu0 0.0
    %4084 = vmatprep.subr.mxu0 0.0
    %4085 = vmatpush1.msra.mxu0 0.0
    %4086 = vmatprep.subr.mxu0 0.0
    %4087 = vmatpush1.msra.mxu0 0.0
    %4088 = vmatprep.mubr.f32.mxu0 0.0
    %4089 = vmatmul.mubr.f32.gmra.mrb[0].mxu0 %v153
    %v4090 = vpop.f32.mrb[0].mxu0
    %v4091 = vadd.f32 0.0, %v4090
    %v4092 = vpop.f32.mrb[0].mxu0
    %v4093 = vadd.f32 0.0, %v4092
    %4094 = vmatprep.mubr.f32.mxu0 0.0
    %4095 = vmatmul.mubr.f32.gmra.mrb[0].mxu0 %v156
    %v4096 = vpop.f32.mrb[0].mxu0
    %v4097 = vadd.f32 0.0, %v4096
    %v4098 = vpop.f32.mrb[0].mxu0
    %v4099 = vadd.f32 0.0, %v4098
    %4100 = vmatprep.mubr.f32.mxu0 0.0
    %4101 = vmatmul.mubr.f32.gmra.mrb[0].mxu0 %v159
    %v4102 = vpop.f32.mrb[0].mxu0
    %v4103 = vadd.f32 0.0, %v4102
    %v4104 = vpop.f32.mrb[0].mxu0
    %v4105 = vadd.f32 0.0, %v4104
    %4106 = vmatprep.mubr.f32.mxu0 0.0
    %4107 = vmatmul.mubr.f32.gmra.mrb[0].mxu0 %v162
    %v4108 = vpop.f32.mrb[0].mxu0
    %v4109 = vadd.f32 0.0, %v4108
    %v4110 = vpop.f32.mrb[0].mxu0
    %v4111 = vadd.f32 0.0, %v4110
    %4112 = vmatprep.mubr.f32.mxu0 0.0
    %4113 = vmatmul.mubr.f32.gmra.mrb[0].mxu0 %v165
    %v4114 = vpop.f32.mrb[0].mxu0
    %v4115 = vadd.f32 0.0, %v4114
    %v4116 = vpop.f32.mrb[0].mxu0
    %v4117 = vadd.f32 0.0, %v4116
    %4118 = vmatprep.mubr.f32.mxu0 0.0
    %4119 = vmatmul.mubr.f32.gmra.mrb[0].mxu0 %v168
    %v4120 = vpop.f32.mrb[0].mxu0
    %v4121 = vadd.f32 0.0, %v4120
    %v4122 = vpop.f32.mrb[0].mxu0
    %v4123 = vadd.f32 0.0, %v4122
    %4124 = vmatprep.mubr.f32.mxu0 0.0
    %4125 = vmatmul.mubr.f32.gmra.mrb[0].mxu0 %v171
    %v4126 = vpop.f32.mrb[0].mxu0
    %v4127 = vadd.f32 0.0, %v4126
    %v4128 = vpop.f32.mrb[0].mxu0
    %v4129 = vadd.f32 0.0, %v4128
    %4130 = vmatprep.mubr.f32.mxu0 0.0
    %4131 = vmatmul.mubr.f32.gmra.mrb[0].mxu0 %v174
    %v4132 = vpop.f32.mrb[0].mxu0
    %v4133 = vadd.f32 0.0, %v4132
    %v4134 = vpop.f32.mrb[0].mxu0
    %v4135 = vadd.f32 0.0, %v4134
    %4136 = vmatprep.mubr.f32.mxu0 0.0
    %4137 = vmatmul.mubr.f32.gmra.mrb[0].mxu0 %v177
    %v4138 = vpop.f32.mrb[0].mxu0
    %v4139 = vadd.f32 0.0, %v4138
    %v4140 = vpop.f32.mrb[0].mxu0
    %v4141 = vadd.f32 0.0, %v4140
    %4142 = vmatprep.mubr.f32.mxu0 0.0
    %4143 = vmatmul.mubr.f32.gmra.mrb[0].mxu0 %v180
    %v4144 = vpop.f32.mrb[0].mxu0
    %v4145 = vadd.f32 0.0, %v4144
    %v4146 = vpop.f32.mrb[0].mxu0
    %v4147 = vadd.f32 0.0, %v4146
    %4148 = vmatprep.mubr.f32.mxu0 0.0
    %4149 = vmatmul.mubr.f32.gmra.mrb[0].mxu0 %v183
    %v4150 = vpop.f32.mrb[0].mxu0
    %v4151 = vadd.f32 0.0, %v4150
    %v4152 = vpop.f32.mrb[0].mxu0
    %v4153 = vadd.f32 0.0, %v4152
    %4154 = vmatprep.mubr.f32.mxu0 0.0
    %4155 = vmatmul.mubr.f32.gmra.mrb[0].mxu0 %v186
    %v4156 = vpop.f32.mrb[0].mxu0
    %v4157 = vadd.f32 0.0, %v4156
    %v4158 = vpop.f32.mrb[0].mxu0
    %v4159 = vadd.f32 0.0, %v4158
    %4160 = vmatprep.mubr.f32.mxu0 0.0
    %4161 = vmatmul.mubr.f32.gmra.mrb[0].mxu0 %v189
    %v4162 = vpop.f32.mrb[0].mxu0
    %v4163 = vadd.f32 0.0, %v4162
    %v4164 = vpop.f32.mrb[0].mxu0
    %v4165 = vadd.f32 0.0, %v4164
    %4166 = vmatprep.mubr.f32.mxu0 0.0
    %4167 = vmatmul.mubr.f32.gmra.mrb[0].mxu0 %v192
    %v4168 = vpop.f32.mrb[0].mxu0
    %v4169 = vadd.f32 0.0, %v4168
    %v4170 = vpop.f32.mrb[0].mxu0
    %v4171 = vadd.f32 0.0, %v4170
    %4172 = vmatprep.mubr.f32.mxu0 0.0
    %4173 = vmatmul.mubr.f32.gmra.mrb[0].mxu0 %v195
    %v4174 = vpop.f32.mrb[0].mxu0
    %v4175 = vadd.f32 0.0, %v4174
    %v4176 = vpop.f32.mrb[0].mxu0
    %v4177 = vadd.f32 0.0, %v4176
    %4178 = vmatprep.mubr.f32.mxu0 0.0
    %4179 = vmatmul.mubr.f32.gmra.mrb[0].mxu0 %v198
    %v4180 = vpop.f32.mrb[0].mxu0
    %v4181 = vadd.f32 0.0, %v4180
    %v4182 = vpop.f32.mrb[0].mxu0
    %v4183 = vadd.f32 0.0, %v4182
    %4184 = vmatprep.mubr.f32.mxu0 0.0
    %4185 = vmatmul.mubr.f32.gmra.mrb[0].mxu0 %v201
    %v4186 = vpop.f32.mrb[0].mxu0
    %v4187 = vadd.f32 0.0, %v4186
    %v4188 = vpop.f32.mrb[0].mxu0
    %v4189 = vadd.f32 0.0, %v4188
    %4190 = vmatprep.mubr.f32.mxu0 0.0
    %4191 = vmatmul.mubr.f32.gmra.mrb[0].mxu0 %v204
    %v4192 = vpop.f32.mrb[0].mxu0
    %v4193 = vadd.f32 0.0, %v4192
    %v4194 = vpop.f32.mrb[0].mxu0
    %v4195 = vadd.f32 0.0, %v4194
    %4196 = vmatprep.mubr.f32.mxu0 0.0
    %4197 = vmatmul.mubr.f32.gmra.mrb[0].mxu0 %v207
    %v4198 = vpop.f32.mrb[0].mxu0
    %v4199 = vadd.f32 0.0, %v4198
    %v4200 = vpop.f32.mrb[0].mxu0
    %v4201 = vadd.f32 0.0, %v4200
    %4202 = vmatprep.mubr.f32.mxu0 0.0
    %4203 = vmatmul.mubr.f32.gmra.mrb[0].mxu0 %v210
    %v4204 = vpop.f32.mrb[0].mxu0
    %v4205 = vadd.f32 0.0, %v4204
    %v4206 = vpop.f32.mrb[0].mxu0
    %v4207 = vadd.f32 0.0, %v4206
    %4208 = vmatprep.mubr.f32.mxu0 0.0
    %4209 = vmatmul.mubr.f32.gmra.mrb[0].mxu0 %v213
    %v4210 = vpop.f32.mrb[0].mxu0
    %v4211 = vadd.f32 0.0, %v4210
    %v4212 = vpop.f32.mrb[0].mxu0
    %v4213 = vadd.f32 0.0, %v4212
    %4214 = vmatprep.mubr.f32.mxu0 0.0
    %4215 = vmatmul.mubr.f32.gmra.mrb[0].mxu0 %v216
    %v4216 = vpop.f32.mrb[0].mxu0
    %v4217 = vadd.f32 0.0, %v4216
    %v4218 = vpop.f32.mrb[0].mxu0
    %v4219 = vadd.f32 0.0, %v4218
    %4220 = vmatprep.mubr.f32.mxu0 0.0
    %4221 = vmatmul.mubr.f32.gmra.mrb[0].mxu0 %v219
    %v4222 = vpop.f32.mrb[0].mxu0
    %v4223 = vadd.f32 0.0, %v4222
    %v4224 = vpop.f32.mrb[0].mxu0
    %v4225 = vadd.f32 0.0, %v4224
    %4226 = vmatprep.mubr.f32.mxu0 0.0
    %4227 = vmatmul.mubr.f32.gmra.mrb[0].mxu0 %v222
    %v4228 = vpop.f32.mrb[0].mxu0
    %v4229 = vadd.f32 0.0, %v4228
    %v4230 = vpop.f32.mrb[0].mxu0
    %v4231 = vadd.f32 0.0, %v4230
    %4232 = vmatprep.mubr.f32.mxu0 0.0
    %4233 = vmatmul.mubr.f32.gmra.mrb[0].mxu0 %v225
    %v4234 = vpop.f32.mrb[0].mxu0
    %v4235 = vadd.f32 0.0, %v4234
    %v4236 = vpop.f32.mrb[0].mxu0
    %v4237 = vadd.f32 0.0, %v4236
    %4238 = vmatprep.mubr.f32.mxu0 0.0
    %4239 = vmatmul.mubr.f32.gmra.mrb[0].mxu0 %v228
    %v4240 = vpop.f32.mrb[0].mxu0
    %v4241 = vadd.f32 0.0, %v4240
    %v4242 = vpop.f32.mrb[0].mxu0
    %v4243 = vadd.f32 0.0, %v4242
    %4244 = vmatprep.mubr.f32.mxu0 0.0
    %4245 = vmatmul.mubr.f32.gmra.mrb[0].mxu0 %v231
    %v4246 = vpop.f32.mrb[0].mxu0
    %v4247 = vadd.f32 0.0, %v4246
    %v4248 = vpop.f32.mrb[0].mxu0
    %v4249 = vadd.f32 0.0, %v4248
    %4250 = vmatprep.mubr.f32.mxu0 0.0
    %4251 = vmatmul.mubr.f32.gmra.mrb[0].mxu0 %v234
    %v4252 = vpop.f32.mrb[0].mxu0
    %v4253 = vadd.f32 0.0, %v4252
    %v4254 = vpop.f32.mrb[0].mxu0
    %v4255 = vadd.f32 0.0, %v4254
    %4256 = vmatprep.mubr.f32.mxu0 0.0
    %4257 = vmatmul.mubr.f32.gmra.mrb[0].mxu0 %v237
    %v4258 = vpop.f32.mrb[0].mxu0
    %v4259 = vadd.f32 0.0, %v4258
    %v4260 = vpop.f32.mrb[0].mxu0
    %v4261 = vadd.f32 0.0, %v4260
    %4262 = vmatprep.mubr.f32.mxu0 0.0
    %4263 = vmatmul.mubr.f32.gmra.mrb[0].mxu0 %v240
    %v4264 = vpop.f32.mrb[0].mxu0
    %v4265 = vadd.f32 0.0, %v4264
    %v4266 = vpop.f32.mrb[0].mxu0
    %v4267 = vadd.f32 0.0, %v4266
    %4268 = vmatprep.mubr.f32.mxu0 0.0
    %4269 = vmatmul.mubr.f32.gmra.mrb[0].mxu0 %v243
    %v4270 = vpop.f32.mrb[0].mxu0
    %v4271 = vadd.f32 0.0, %v4270
    %v4272 = vpop.f32.mrb[0].mxu0
    %v4273 = vadd.f32 0.0, %v4272
    %4274 = vmatprep.mubr.f32.mxu0 0.0
    %4275 = vmatmul.mubr.f32.gmra.mrb[0].mxu0 %v246
    %v4276 = vpop.f32.mrb[0].mxu0
    %v4277 = vadd.f32 0.0, %v4276
    %v4278 = vpop.f32.mrb[0].mxu0
    %v4279 = vadd.f32 0.0, %v4278
    %4280 = vmatprep.mubr.f32.mxu0 0.0
    %4281 = vmatmul.mubr.f32.gmra.mrb[0].mxu0 %v249
    %v4282 = vpop.f32.mrb[0].mxu0
    %v4283 = vadd.f32 0.0, %v4282
    %v4284 = vpop.f32.mrb[0].mxu0
    %v4285 = vadd.f32 0.0, %v4284
    %4286 = vmatprep.mubr.f32.mxu0 0.0
    %4287 = vmatmul.mubr.f32.gmra.mrb[0].mxu0 %v252
    %v4288 = vpop.f32.mrb[0].mxu0
    %v4289 = vadd.f32 0.0, %v4288
    %v4290 = vpop.f32.mrb[0].mxu0
    %v4291 = vadd.f32 0.0, %v4290
    %4292 = vmatprep.mubr.f32.mxu0 0.0
    %4293 = vmatmul.mubr.f32.gmra.mrb[0].mxu0 %v255
    %v4294 = vpop.f32.mrb[0].mxu0
    %v4295 = vadd.f32 0.0, %v4294
    %v4296 = vpop.f32.mrb[0].mxu0
    %v4297 = vadd.f32 0.0, %v4296
    %4298 = vmatprep.mubr.f32.mxu0 0.0
    %4299 = vmatmul.mubr.f32.gmra.mrb[0].mxu0 %v258
    %v4300 = vpop.f32.mrb[0].mxu0
    %v4301 = vadd.f32 0.0, %v4300
    %v4302 = vpop.f32.mrb[0].mxu0
    %v4303 = vadd.f32 0.0, %v4302
    %4304 = vmatprep.mubr.f32.mxu0 0.0
    %4305 = vmatmul.mubr.f32.gmra.mrb[0].mxu0 %v261
    %v4306 = vpop.f32.mrb[0].mxu0
    %v4307 = vadd.f32 0.0, %v4306
    %v4308 = vpop.f32.mrb[0].mxu0
    %v4309 = vadd.f32 0.0, %v4308
    %4310 = vmatprep.mubr.f32.mxu0 0.0
    %4311 = vmatmul.mubr.f32.gmra.mrb[0].mxu0 %v264
    %v4312 = vpop.f32.mrb[0].mxu0
    %v4313 = vadd.f32 0.0, %v4312
    %v4314 = vpop.f32.mrb[0].mxu0
    %v4315 = vadd.f32 0.0, %v4314
    %4316 = vmatprep.mubr.f32.mxu0 0.0
    %4317 = vmatmul.mubr.f32.gmra.mrb[0].mxu0 %v267
    %v4318 = vpop.f32.mrb[0].mxu0
    %v4319 = vadd.f32 0.0, %v4318
    %v4320 = vpop.f32.mrb[0].mxu0
    %v4321 = vadd.f32 0.0, %v4320
    %4322 = vmatprep.mubr.f32.mxu0 0.0
    %4323 = vmatmul.mubr.f32.gmra.mrb[0].mxu0 %v270
    %v4324 = vpop.f32.mrb[0].mxu0
    %v4325 = vadd.f32 0.0, %v4324
    %v4326 = vpop.f32.mrb[0].mxu0
    %v4327 = vadd.f32 0.0, %v4326
    %4328 = vmatprep.mubr.f32.mxu0 0.0
    %4329 = vmatmul.mubr.f32.gmra.mrb[0].mxu0 %v273
    %v4330 = vpop.f32.mrb[0].mxu0
    %v4331 = vadd.f32 0.0, %v4330
    %v4332 = vpop.f32.mrb[0].mxu0
    %v4333 = vadd.f32 0.0, %v4332
    %4334 = vmatprep.mubr.f32.mxu0 0.0
    %4335 = vmatmul.mubr.f32.gmra.mrb[0].mxu0 %v276
    %v4336 = vpop.f32.mrb[0].mxu0
    %v4337 = vadd.f32 0.0, %v4336
    %v4338 = vpop.f32.mrb[0].mxu0
    %v4339 = vadd.f32 0.0, %v4338
    %4340 = vmatprep.mubr.f32.mxu0 0.0
    %4341 = vmatmul.mubr.f32.gmra.mrb[0].mxu0 %v279
    %v4342 = vpop.f32.mrb[0].mxu0
    %v4343 = vadd.f32 0.0, %v4342
    %v4344 = vpop.f32.mrb[0].mxu0
    %v4345 = vadd.f32 0.0, %v4344
    %4346 = vmatprep.mubr.f32.mxu0 0.0
    %4347 = vmatmul.mubr.f32.gmra.mrb[0].mxu0 %v282
    %v4348 = vpop.f32.mrb[0].mxu0
    %v4349 = vadd.f32 0.0, %v4348
    %v4350 = vpop.f32.mrb[0].mxu0
    %v4351 = vadd.f32 0.0, %v4350
    %4352 = vmatprep.mubr.f32.mxu0 0.0
    %4353 = vmatmul.mubr.f32.gmra.mrb[0].mxu0 %v285
    %v4354 = vpop.f32.mrb[0].mxu0
    %v4355 = vadd.f32 0.0, %v4354
    %v4356 = vpop.f32.mrb[0].mxu0
    %v4357 = vadd.f32 0.0, %v4356
    %4358 = vmatprep.mubr.f32.mxu0 0.0
    %4359 = vmatmul.mubr.f32.gmra.mrb[0].mxu0 %v288
    %v4360 = vpop.f32.mrb[0].mxu0
    %v4361 = vadd.f32 0.0, %v4360
    %v4362 = vpop.f32.mrb[0].mxu0
    %v4363 = vadd.f32 0.0, %v4362
    %4364 = vmatprep.mubr.f32.mxu0 0.0
    %4365 = vmatmul.mubr.f32.gmra.mrb[0].mxu0 %v291
    %v4366 = vpop.f32.mrb[0].mxu0
    %v4367 = vadd.f32 0.0, %v4366
    %v4368 = vpop.f32.mrb[0].mxu0
    %v4369 = vadd.f32 0.0, %v4368
    %4370 = vmatprep.mubr.f32.mxu0 0.0
    %4371 = vmatmul.mubr.f32.gmra.mrb[0].mxu0 %v294
    %v4372 = vpop.f32.mrb[0].mxu0
    %v4373 = vadd.f32 0.0, %v4372
    %v4374 = vpop.f32.mrb[0].mxu0
    %v4375 = vadd.f32 0.0, %v4374
    %4376 = vdwg.mxu0
    %4377 = vxpose.xlu0.b32.start [1/16] %v4091, 128
    %4378 = vxpose.xlu0.b32.cont [2/16] %v4097, 128
    %4379 = vxpose.xlu0.b32.cont [3/16] %v4103, 128
    %4380 = vxpose.xlu0.b32.cont [4/16] %v4109, 128
    %4381 = vxpose.xlu0.b32.cont [5/16] 0.0, 128
    %4382 = vxpose.xlu0.b32.cont [6/16] 0.0, 128
    %4383 = vxpose.xlu0.b32.cont [7/16] 0.0, 128
    %4384 = vxpose.xlu0.b32.cont [8/16] 0.0, 128
    %4385 = vxpose.xlu0.b32.cont [9/16] 0.0, 128
    %4386 = vxpose.xlu0.b32.cont [10/16] 0.0, 128
    %4387 = vxpose.xlu0.b32.cont [11/16] 0.0, 128
    %4388 = vxpose.xlu0.b32.cont [12/16] 0.0, 128
    %4389 = vxpose.xlu0.b32.cont [13/16] 0.0, 128
    %4390 = vxpose.xlu0.b32.cont [14/16] 0.0, 128
    %4391 = vxpose.xlu0.b32.cont [15/16] 0.0, 128
    %4392 = vxpose.xlu0.b32.end [16/16] 0.0, 128
    %v4393 = vpop.trf.xlu0
    %v4394 = vpop.trf.xlu0
    %v4395 = vpop.trf.xlu0
    %v4396 = vpop.trf.xlu0
    %v4397 = vpop.trf.xlu0
    %v4398 = vpop.trf.xlu0
    %v4399 = vpop.trf.xlu0
    %v4400 = vpop.trf.xlu0
    %v4401 = vpop.trf.xlu0
    %v4402 = vpop.trf.xlu0
    %v4403 = vpop.trf.xlu0
    %v4404 = vpop.trf.xlu0
    %v4405 = vpop.trf.xlu0
    %v4406 = vpop.trf.xlu0
    %v4407 = vpop.trf.xlu0
    %v4408 = vpop.trf.xlu0
    %4409 = vxpose.xlu0.b32.start [1/16] %v4093, 128
    %4410 = vxpose.xlu0.b32.cont [2/16] %v4099, 128
    %4411 = vxpose.xlu0.b32.cont [3/16] %v4105, 128
    %4412 = vxpose.xlu0.b32.cont [4/16] %v4111, 128
    %4413 = vxpose.xlu0.b32.cont [5/16] 0.0, 128
    %4414 = vxpose.xlu0.b32.cont [6/16] 0.0, 128
    %4415 = vxpose.xlu0.b32.cont [7/16] 0.0, 128
    %4416 = vxpose.xlu0.b32.cont [8/16] 0.0, 128
    %4417 = vxpose.xlu0.b32.cont [9/16] 0.0, 128
    %4418 = vxpose.xlu0.b32.cont [10/16] 0.0, 128
    %4419 = vxpose.xlu0.b32.cont [11/16] 0.0, 128
    %4420 = vxpose.xlu0.b32.cont [12/16] 0.0, 128
    %4421 = vxpose.xlu0.b32.cont [13/16] 0.0, 128
    %4422 = vxpose.xlu0.b32.cont [14/16] 0.0, 128
    %4423 = vxpose.xlu0.b32.cont [15/16] 0.0, 128
    %4424 = vxpose.xlu0.b32.end [16/16] 0.0, 128
    %v4425 = vpop.trf.xlu0
    %v4426 = vpop.trf.xlu0
    %v4427 = vpop.trf.xlu0
    %v4428 = vpop.trf.xlu0
    %v4429 = vpop.trf.xlu0
    %v4430 = vpop.trf.xlu0
    %v4431 = vpop.trf.xlu0
    %v4432 = vpop.trf.xlu0
    %v4433 = vpop.trf.xlu0
    %v4434 = vpop.trf.xlu0
    %v4435 = vpop.trf.xlu0
    %v4436 = vpop.trf.xlu0
    %v4437 = vpop.trf.xlu0
    %v4438 = vpop.trf.xlu0
    %v4439 = vpop.trf.xlu0
    %v4440 = vpop.trf.xlu0
    %v4442 = vsel %vm718, %v4393, 0
    %v4445 = vsel %vm718, %v4394, 0
    %v4448 = vsel %vm718, %v4395, 0
    %v4451 = vsel %vm718, %v4396, 0
    %v4454 = vsel %vm718, %v4397, 0
    %v4457 = vsel %vm718, %v4398, 0
    %v4460 = vsel %vm718, %v4399, 0
    %v4463 = vsel %vm718, %v4400, 0
    %v4466 = vsel %vm718, %v4401, 0
    %v4469 = vsel %vm718, %v4402, 0
    %v4472 = vsel %vm718, %v4403, 0
    %v4475 = vsel %vm718, %v4404, 0
    %v4478 = vsel %vm718, %v4405, 0
    %v4481 = vsel %vm718, %v4406, 0
    %v4484 = vsel %vm718, %v4407, 0
    %v4487 = vsel %vm718, %v4408, 0
    %v4490 = vsel %vm718, %v4425, 0
    %v4493 = vsel %vm718, %v4426, 0
    %v4496 = vsel %vm718, %v4427, 0
    %v4499 = vsel %vm718, %v4428, 0
    %v4502 = vsel %vm718, %v4429, 0
    %v4505 = vsel %vm718, %v4430, 0
    %v4508 = vsel %vm718, %v4431, 0
    %v4511 = vsel %vm718, %v4432, 0
    %v4514 = vsel %vm718, %v4433, 0
    %v4517 = vsel %vm718, %v4434, 0
    %v4520 = vsel %vm718, %v4435, 0
    %v4523 = vsel %vm718, %v4436, 0
    %v4526 = vsel %vm718, %v4437, 0
    %v4529 = vsel %vm718, %v4438, 0
    %v4532 = vsel %vm718, %v4439, 0
    %v4535 = vsel %vm718, %v4440, 0
    %4537 = vmatprep.subr.mxu0 %v4189
    %4538 = vmatpush1.msra.mxu0 %v4187
    %4539 = vmatprep.subr.mxu0 %v4195
    %4540 = vmatpush1.msra.mxu0 %v4193
    %4541 = vmatprep.subr.mxu0 %v4201
    %4542 = vmatpush1.msra.mxu0 %v4199
    %4543 = vmatprep.subr.mxu0 %v4207
    %4544 = vmatpush1.msra.mxu0 %v4205
    %4545 = vmatprep.subr.mxu0 0.0
    %4546 = vmatpush1.msra.mxu0 0.0
    %4547 = vmatprep.subr.mxu0 0.0
    %4548 = vmatpush1.msra.mxu0 0.0
    %4549 = vmatprep.subr.mxu0 0.0
    %4550 = vmatpush1.msra.mxu0 0.0
    %4551 = vmatprep.subr.mxu0 0.0
    %4552 = vmatpush1.msra.mxu0 0.0
    %4553 = vmatprep.subr.mxu0 0.0
    %4554 = vmatpush1.msra.mxu0 0.0
    %4555 = vmatprep.subr.mxu0 0.0
    %4556 = vmatpush1.msra.mxu0 0.0
    %4557 = vmatprep.subr.mxu0 0.0
    %4558 = vmatpush1.msra.mxu0 0.0
    %4559 = vmatprep.subr.mxu0 0.0
    %4560 = vmatpush1.msra.mxu0 0.0
    %4561 = vmatprep.subr.mxu0 0.0
    %4562 = vmatpush1.msra.mxu0 0.0
    %4563 = vmatprep.subr.mxu0 0.0
    %4564 = vmatpush1.msra.mxu0 0.0
    %4565 = vmatprep.subr.mxu0 0.0
    %4566 = vmatpush1.msra.mxu0 0.0
    %4567 = vmatprep.subr.mxu0 0.0
    %4568 = vmatpush1.msra.mxu0 0.0
    %4569 = vmatprep.subr.mxu0 0.0
    %4570 = vmatpush1.msra.mxu0 0.0
    %4571 = vmatprep.subr.mxu0 0.0
    %4572 = vmatpush1.msra.mxu0 0.0
    %4573 = vmatprep.subr.mxu0 0.0
    %4574 = vmatpush1.msra.mxu0 0.0
    %4575 = vmatprep.subr.mxu0 0.0
    %4576 = vmatpush1.msra.mxu0 0.0
    %4577 = vmatprep.subr.mxu0 0.0
    %4578 = vmatpush1.msra.mxu0 0.0
    %4579 = vmatprep.subr.mxu0 0.0
    %4580 = vmatpush1.msra.mxu0 0.0
    %4581 = vmatprep.subr.mxu0 0.0
    %4582 = vmatpush1.msra.mxu0 0.0
    %4583 = vmatprep.subr.mxu0 0.0
    %4584 = vmatpush1.msra.mxu0 0.0
    %4585 = vmatprep.subr.mxu0 0.0
    %4586 = vmatpush1.msra.mxu0 0.0
    %4587 = vmatprep.subr.mxu0 0.0
    %4588 = vmatpush1.msra.mxu0 0.0
    %4589 = vmatprep.subr.mxu0 0.0
    %4590 = vmatpush1.msra.mxu0 0.0
    %4591 = vmatprep.subr.mxu0 0.0
    %4592 = vmatpush1.msra.mxu0 0.0
    %4593 = vmatprep.subr.mxu0 0.0
    %4594 = vmatpush1.msra.mxu0 0.0
    %4595 = vmatprep.subr.mxu0 0.0
    %4596 = vmatpush1.msra.mxu0 0.0
    %4597 = vmatprep.subr.mxu0 0.0
    %4598 = vmatpush1.msra.mxu0 0.0
    %4599 = vmatprep.subr.mxu0 0.0
    %4600 = vmatpush1.msra.mxu0 0.0
    %4601 = vmatprep.mubr.f32.mxu0 0.0
    %4602 = vmatmul.mubr.f32.gmra.mrb[0].mxu0 %v4442
    %v4603 = vpop.f32.mrb[0].mxu0
    %v4604 = vadd.f32 0.0, %v4603
    %v4605 = vpop.f32.mrb[0].mxu0
    %v4606 = vadd.f32 0.0, %v4605
    %4607 = vmatprep.mubr.f32.mxu0 0.0
    %4608 = vmatmul.mubr.f32.gmra.mrb[0].mxu0 %v4445
    %v4609 = vpop.f32.mrb[0].mxu0
    %v4610 = vadd.f32 0.0, %v4609
    %v4611 = vpop.f32.mrb[0].mxu0
    %v4612 = vadd.f32 0.0, %v4611
    %4613 = vmatprep.mubr.f32.mxu0 0.0
    %4614 = vmatmul.mubr.f32.gmra.mrb[0].mxu0 %v4448
    %v4615 = vpop.f32.mrb[0].mxu0
    %v4616 = vadd.f32 0.0, %v4615
    %v4617 = vpop.f32.mrb[0].mxu0
    %v4618 = vadd.f32 0.0, %v4617
    %4619 = vmatprep.mubr.f32.mxu0 0.0
    %4620 = vmatmul.mubr.f32.gmra.mrb[0].mxu0 %v4451
    %v4621 = vpop.f32.mrb[0].mxu0
    %v4622 = vadd.f32 0.0, %v4621
    %v4623 = vpop.f32.mrb[0].mxu0
    %v4624 = vadd.f32 0.0, %v4623
    %4625 = vmatprep.mubr.f32.mxu0 0.0
    %4626 = vmatmul.mubr.f32.gmra.mrb[0].mxu0 %v4454
    %v4627 = vpop.f32.mrb[0].mxu0
    %v4628 = vadd.f32 0.0, %v4627
    %v4629 = vpop.f32.mrb[0].mxu0
    %v4630 = vadd.f32 0.0, %v4629
    %4631 = vmatprep.mubr.f32.mxu0 0.0
    %4632 = vmatmul.mubr.f32.gmra.mrb[0].mxu0 %v4457
    %v4633 = vpop.f32.mrb[0].mxu0
    %v4634 = vadd.f32 0.0, %v4633
    %v4635 = vpop.f32.mrb[0].mxu0
    %v4636 = vadd.f32 0.0, %v4635
    %4637 = vmatprep.mubr.f32.mxu0 0.0
    %4638 = vmatmul.mubr.f32.gmra.mrb[0].mxu0 %v4460
    %v4639 = vpop.f32.mrb[0].mxu0
    %v4640 = vadd.f32 0.0, %v4639
    %v4641 = vpop.f32.mrb[0].mxu0
    %v4642 = vadd.f32 0.0, %v4641
    %4643 = vmatprep.mubr.f32.mxu0 0.0
    %4644 = vmatmul.mubr.f32.gmra.mrb[0].mxu0 %v4463
    %v4645 = vpop.f32.mrb[0].mxu0
    %v4646 = vadd.f32 0.0, %v4645
    %v4647 = vpop.f32.mrb[0].mxu0
    %v4648 = vadd.f32 0.0, %v4647
    %4649 = vmatprep.mubr.f32.mxu0 0.0
    %4650 = vmatmul.mubr.f32.gmra.mrb[0].mxu0 %v4466
    %v4651 = vpop.f32.mrb[0].mxu0
    %v4652 = vadd.f32 0.0, %v4651
    %v4653 = vpop.f32.mrb[0].mxu0
    %v4654 = vadd.f32 0.0, %v4653
    %4655 = vmatprep.mubr.f32.mxu0 0.0
    %4656 = vmatmul.mubr.f32.gmra.mrb[0].mxu0 %v4469
    %v4657 = vpop.f32.mrb[0].mxu0
    %v4658 = vadd.f32 0.0, %v4657
    %v4659 = vpop.f32.mrb[0].mxu0
    %v4660 = vadd.f32 0.0, %v4659
    %4661 = vmatprep.mubr.f32.mxu0 0.0
    %4662 = vmatmul.mubr.f32.gmra.mrb[0].mxu0 %v4472
    %v4663 = vpop.f32.mrb[0].mxu0
    %v4664 = vadd.f32 0.0, %v4663
    %v4665 = vpop.f32.mrb[0].mxu0
    %v4666 = vadd.f32 0.0, %v4665
    %4667 = vmatprep.mubr.f32.mxu0 0.0
    %4668 = vmatmul.mubr.f32.gmra.mrb[0].mxu0 %v4475
    %v4669 = vpop.f32.mrb[0].mxu0
    %v4670 = vadd.f32 0.0, %v4669
    %v4671 = vpop.f32.mrb[0].mxu0
    %v4672 = vadd.f32 0.0, %v4671
    %4673 = vmatprep.mubr.f32.mxu0 0.0
    %4674 = vmatmul.mubr.f32.gmra.mrb[0].mxu0 %v4478
    %v4675 = vpop.f32.mrb[0].mxu0
    %v4676 = vadd.f32 0.0, %v4675
    %v4677 = vpop.f32.mrb[0].mxu0
    %v4678 = vadd.f32 0.0, %v4677
    %4679 = vmatprep.mubr.f32.mxu0 0.0
    %4680 = vmatmul.mubr.f32.gmra.mrb[0].mxu0 %v4481
    %v4681 = vpop.f32.mrb[0].mxu0
    %v4682 = vadd.f32 0.0, %v4681
    %v4683 = vpop.f32.mrb[0].mxu0
    %v4684 = vadd.f32 0.0, %v4683
    %4685 = vmatprep.mubr.f32.mxu0 0.0
    %4686 = vmatmul.mubr.f32.gmra.mrb[0].mxu0 %v4484
    %v4687 = vpop.f32.mrb[0].mxu0
    %v4688 = vadd.f32 0.0, %v4687
    %v4689 = vpop.f32.mrb[0].mxu0
    %v4690 = vadd.f32 0.0, %v4689
    %4691 = vmatprep.mubr.f32.mxu0 0.0
    %4692 = vmatmul.mubr.f32.gmra.mrb[0].mxu0 %v4487
    %v4693 = vpop.f32.mrb[0].mxu0
    %v4694 = vadd.f32 0.0, %v4693
    %v4695 = vpop.f32.mrb[0].mxu0
    %v4696 = vadd.f32 0.0, %v4695
    %4697 = vmatprep.mubr.f32.mxu0 0.0
    %4698 = vmatmul.mubr.f32.gmra.mrb[0].mxu0 %v4490
    %v4699 = vpop.f32.mrb[0].mxu0
    %v4700 = vadd.f32 0.0, %v4699
    %v4701 = vpop.f32.mrb[0].mxu0
    %v4702 = vadd.f32 0.0, %v4701
    %4703 = vmatprep.mubr.f32.mxu0 0.0
    %4704 = vmatmul.mubr.f32.gmra.mrb[0].mxu0 %v4493
    %v4705 = vpop.f32.mrb[0].mxu0
    %v4706 = vadd.f32 0.0, %v4705
    %v4707 = vpop.f32.mrb[0].mxu0
    %v4708 = vadd.f32 0.0, %v4707
    %4709 = vmatprep.mubr.f32.mxu0 0.0
    %4710 = vmatmul.mubr.f32.gmra.mrb[0].mxu0 %v4496
    %v4711 = vpop.f32.mrb[0].mxu0
    %v4712 = vadd.f32 0.0, %v4711
    %v4713 = vpop.f32.mrb[0].mxu0
    %v4714 = vadd.f32 0.0, %v4713
    %4715 = vmatprep.mubr.f32.mxu0 0.0
    %4716 = vmatmul.mubr.f32.gmra.mrb[0].mxu0 %v4499
    %v4717 = vpop.f32.mrb[0].mxu0
    %v4718 = vadd.f32 0.0, %v4717
    %v4719 = vpop.f32.mrb[0].mxu0
    %v4720 = vadd.f32 0.0, %v4719
    %4721 = vmatprep.mubr.f32.mxu0 0.0
    %4722 = vmatmul.mubr.f32.gmra.mrb[0].mxu0 %v4502
    %v4723 = vpop.f32.mrb[0].mxu0
    %v4724 = vadd.f32 0.0, %v4723
    %v4725 = vpop.f32.mrb[0].mxu0
    %v4726 = vadd.f32 0.0, %v4725
    %4727 = vmatprep.mubr.f32.mxu0 0.0
    %4728 = vmatmul.mubr.f32.gmra.mrb[0].mxu0 %v4505
    %v4729 = vpop.f32.mrb[0].mxu0
    %v4730 = vadd.f32 0.0, %v4729
    %v4731 = vpop.f32.mrb[0].mxu0
    %v4732 = vadd.f32 0.0, %v4731
    %4733 = vmatprep.mubr.f32.mxu0 0.0
    %4734 = vmatmul.mubr.f32.gmra.mrb[0].mxu0 %v4508
    %v4735 = vpop.f32.mrb[0].mxu0
    %v4736 = vadd.f32 0.0, %v4735
    %v4737 = vpop.f32.mrb[0].mxu0
    %v4738 = vadd.f32 0.0, %v4737
    %4739 = vmatprep.mubr.f32.mxu0 0.0
    %4740 = vmatmul.mubr.f32.gmra.mrb[0].mxu0 %v4511
    %v4741 = vpop.f32.mrb[0].mxu0
    %v4742 = vadd.f32 0.0, %v4741
    %v4743 = vpop.f32.mrb[0].mxu0
    %v4744 = vadd.f32 0.0, %v4743
    %4745 = vmatprep.mubr.f32.mxu0 0.0
    %4746 = vmatmul.mubr.f32.gmra.mrb[0].mxu0 %v4514
    %v4747 = vpop.f32.mrb[0].mxu0
    %v4748 = vadd.f32 0.0, %v4747
    %v4749 = vpop.f32.mrb[0].mxu0
    %v4750 = vadd.f32 0.0, %v4749
    %4751 = vmatprep.mubr.f32.mxu0 0.0
    %4752 = vmatmul.mubr.f32.gmra.mrb[0].mxu0 %v4517
    %v4753 = vpop.f32.mrb[0].mxu0
    %v4754 = vadd.f32 0.0, %v4753
    %v4755 = vpop.f32.mrb[0].mxu0
    %v4756 = vadd.f32 0.0, %v4755
    %4757 = vmatprep.mubr.f32.mxu0 0.0
    %4758 = vmatmul.mubr.f32.gmra.mrb[0].mxu0 %v4520
    %v4759 = vpop.f32.mrb[0].mxu0
    %v4760 = vadd.f32 0.0, %v4759
    %v4761 = vpop.f32.mrb[0].mxu0
    %v4762 = vadd.f32 0.0, %v4761
    %4763 = vmatprep.mubr.f32.mxu0 0.0
    %4764 = vmatmul.mubr.f32.gmra.mrb[0].mxu0 %v4523
    %v4765 = vpop.f32.mrb[0].mxu0
    %v4766 = vadd.f32 0.0, %v4765
    %v4767 = vpop.f32.mrb[0].mxu0
    %v4768 = vadd.f32 0.0, %v4767
    %4769 = vmatprep.mubr.f32.mxu0 0.0
    %4770 = vmatmul.mubr.f32.gmra.mrb[0].mxu0 %v4526
    %v4771 = vpop.f32.mrb[0].mxu0
    %v4772 = vadd.f32 0.0, %v4771
    %v4773 = vpop.f32.mrb[0].mxu0
    %v4774 = vadd.f32 0.0, %v4773
    %4775 = vmatprep.mubr.f32.mxu0 0.0
    %4776 = vmatmul.mubr.f32.gmra.mrb[0].mxu0 %v4529
    %v4777 = vpop.f32.mrb[0].mxu0
    %v4778 = vadd.f32 0.0, %v4777
    %v4779 = vpop.f32.mrb[0].mxu0
    %v4780 = vadd.f32 0.0, %v4779
    %4781 = vmatprep.mubr.f32.mxu0 0.0
    %4782 = vmatmul.mubr.f32.gmra.mrb[0].mxu0 %v4532
    %v4783 = vpop.f32.mrb[0].mxu0
    %v4784 = vadd.f32 0.0, %v4783
    %v4785 = vpop.f32.mrb[0].mxu0
    %v4786 = vadd.f32 0.0, %v4785
    %4787 = vmatprep.mubr.f32.mxu0 0.0
    %4788 = vmatmul.mubr.f32.gmra.mrb[0].mxu0 %v4535
    %v4789 = vpop.f32.mrb[0].mxu0
    %v4790 = vadd.f32 0.0, %v4789
    %v4791 = vpop.f32.mrb[0].mxu0
    %v4792 = vadd.f32 0.0, %v4791
    %4793 = vdwg.mxu0
    %4794 = vxpose.xlu0.b32.start [1/16] %v4115, 128
    %4795 = vxpose.xlu0.b32.cont [2/16] %v4121, 128
    %4796 = vxpose.xlu0.b32.cont [3/16] %v4127, 128
    %4797 = vxpose.xlu0.b32.cont [4/16] %v4133, 128
    %4798 = vxpose.xlu0.b32.cont [5/16] 0.0, 128
    %4799 = vxpose.xlu0.b32.cont [6/16] 0.0, 128
    %4800 = vxpose.xlu0.b32.cont [7/16] 0.0, 128
    %4801 = vxpose.xlu0.b32.cont [8/16] 0.0, 128
    %4802 = vxpose.xlu0.b32.cont [9/16] 0.0, 128
    %4803 = vxpose.xlu0.b32.cont [10/16] 0.0, 128
    %4804 = vxpose.xlu0.b32.cont [11/16] 0.0, 128
    %4805 = vxpose.xlu0.b32.cont [12/16] 0.0, 128
    %4806 = vxpose.xlu0.b32.cont [13/16] 0.0, 128
    %4807 = vxpose.xlu0.b32.cont [14/16] 0.0, 128
    %4808 = vxpose.xlu0.b32.cont [15/16] 0.0, 128
    %4809 = vxpose.xlu0.b32.end [16/16] 0.0, 128
    %v4810 = vpop.trf.xlu0
    %v4811 = vpop.trf.xlu0
    %v4812 = vpop.trf.xlu0
    %v4813 = vpop.trf.xlu0
    %v4814 = vpop.trf.xlu0
    %v4815 = vpop.trf.xlu0
    %v4816 = vpop.trf.xlu0
    %v4817 = vpop.trf.xlu0
    %v4818 = vpop.trf.xlu0
    %v4819 = vpop.trf.xlu0
    %v4820 = vpop.trf.xlu0
    %v4821 = vpop.trf.xlu0
    %v4822 = vpop.trf.xlu0
    %v4823 = vpop.trf.xlu0
    %v4824 = vpop.trf.xlu0
    %v4825 = vpop.trf.xlu0
    %4826 = vxpose.xlu0.b32.start [1/16] %v4117, 128
    %4827 = vxpose.xlu0.b32.cont [2/16] %v4123, 128
    %4828 = vxpose.xlu0.b32.cont [3/16] %v4129, 128
    %4829 = vxpose.xlu0.b32.cont [4/16] %v4135, 128
    %4830 = vxpose.xlu0.b32.cont [5/16] 0.0, 128
    %4831 = vxpose.xlu0.b32.cont [6/16] 0.0, 128
    %4832 = vxpose.xlu0.b32.cont [7/16] 0.0, 128
    %4833 = vxpose.xlu0.b32.cont [8/16] 0.0, 128
    %4834 = vxpose.xlu0.b32.cont [9/16] 0.0, 128
    %4835 = vxpose.xlu0.b32.cont [10/16] 0.0, 128
    %4836 = vxpose.xlu0.b32.cont [11/16] 0.0, 128
    %4837 = vxpose.xlu0.b32.cont [12/16] 0.0, 128
    %4838 = vxpose.xlu0.b32.cont [13/16] 0.0, 128
    %4839 = vxpose.xlu0.b32.cont [14/16] 0.0, 128
    %4840 = vxpose.xlu0.b32.cont [15/16] 0.0, 128
    %4841 = vxpose.xlu0.b32.end [16/16] 0.0, 128
    %v4842 = vpop.trf.xlu0
    %v4843 = vpop.trf.xlu0
    %v4844 = vpop.trf.xlu0
    %v4845 = vpop.trf.xlu0
    %v4846 = vpop.trf.xlu0
    %v4847 = vpop.trf.xlu0
    %v4848 = vpop.trf.xlu0
    %v4849 = vpop.trf.xlu0
    %v4850 = vpop.trf.xlu0
    %v4851 = vpop.trf.xlu0
    %v4852 = vpop.trf.xlu0
    %v4853 = vpop.trf.xlu0
    %v4854 = vpop.trf.xlu0
    %v4855 = vpop.trf.xlu0
    %v4856 = vpop.trf.xlu0
    %v4857 = vpop.trf.xlu0
    %v4859 = vsel %vm718, %v4810, 0
    %v4862 = vsel %vm718, %v4811, 0
    %v4865 = vsel %vm718, %v4812, 0
    %v4868 = vsel %vm718, %v4813, 0
    %v4871 = vsel %vm718, %v4814, 0
    %v4874 = vsel %vm718, %v4815, 0
    %v4877 = vsel %vm718, %v4816, 0
    %v4880 = vsel %vm718, %v4817, 0
    %v4883 = vsel %vm718, %v4818, 0
    %v4886 = vsel %vm718, %v4819, 0
    %v4889 = vsel %vm718, %v4820, 0
    %v4892 = vsel %vm718, %v4821, 0
    %v4895 = vsel %vm718, %v4822, 0
    %v4898 = vsel %vm718, %v4823, 0
    %v4901 = vsel %vm718, %v4824, 0
    %v4904 = vsel %vm718, %v4825, 0
    %v4907 = vsel %vm718, %v4842, 0
    %v4910 = vsel %vm718, %v4843, 0
    %v4913 = vsel %vm718, %v4844, 0
    %v4916 = vsel %vm718, %v4845, 0
    %v4919 = vsel %vm718, %v4846, 0
    %v4922 = vsel %vm718, %v4847, 0
    %v4925 = vsel %vm718, %v4848, 0
    %v4928 = vsel %vm718, %v4849, 0
    %v4931 = vsel %vm718, %v4850, 0
    %v4934 = vsel %vm718, %v4851, 0
    %v4937 = vsel %vm718, %v4852, 0
    %v4940 = vsel %vm718, %v4853, 0
    %v4943 = vsel %vm718, %v4854, 0
    %v4946 = vsel %vm718, %v4855, 0
    %v4949 = vsel %vm718, %v4856, 0
    %v4952 = vsel %vm718, %v4857, 0
    %4954 = vmatprep.subr.mxu0 %v4213
    %4955 = vmatpush1.msra.mxu0 %v4211
    %4956 = vmatprep.subr.mxu0 %v4219
    %4957 = vmatpush1.msra.mxu0 %v4217
    %4958 = vmatprep.subr.mxu0 %v4225
    %4959 = vmatpush1.msra.mxu0 %v4223
    %4960 = vmatprep.subr.mxu0 %v4231
    %4961 = vmatpush1.msra.mxu0 %v4229
    %4962 = vmatprep.subr.mxu0 0.0
    %4963 = vmatpush1.msra.mxu0 0.0
    %4964 = vmatprep.subr.mxu0 0.0
    %4965 = vmatpush1.msra.mxu0 0.0
    %4966 = vmatprep.subr.mxu0 0.0
    %4967 = vmatpush1.msra.mxu0 0.0
    %4968 = vmatprep.subr.mxu0 0.0
    %4969 = vmatpush1.msra.mxu0 0.0
    %4970 = vmatprep.subr.mxu0 0.0
    %4971 = vmatpush1.msra.mxu0 0.0
    %4972 = vmatprep.subr.mxu0 0.0
    %4973 = vmatpush1.msra.mxu0 0.0
    %4974 = vmatprep.subr.mxu0 0.0
    %4975 = vmatpush1.msra.mxu0 0.0
    %4976 = vmatprep.subr.mxu0 0.0
    %4977 = vmatpush1.msra.mxu0 0.0
    %4978 = vmatprep.subr.mxu0 0.0
    %4979 = vmatpush1.msra.mxu0 0.0
    %4980 = vmatprep.subr.mxu0 0.0
    %4981 = vmatpush1.msra.mxu0 0.0
    %4982 = vmatprep.subr.mxu0 0.0
    %4983 = vmatpush1.msra.mxu0 0.0
    %4984 = vmatprep.subr.mxu0 0.0
    %4985 = vmatpush1.msra.mxu0 0.0
    %4986 = vmatprep.subr.mxu0 0.0
    %4987 = vmatpush1.msra.mxu0 0.0
    %4988 = vmatprep.subr.mxu0 0.0
    %4989 = vmatpush1.msra.mxu0 0.0
    %4990 = vmatprep.subr.mxu0 0.0
    %4991 = vmatpush1.msra.mxu0 0.0
    %4992 = vmatprep.subr.mxu0 0.0
    %4993 = vmatpush1.msra.mxu0 0.0
    %4994 = vmatprep.subr.mxu0 0.0
    %4995 = vmatpush1.msra.mxu0 0.0
    %4996 = vmatprep.subr.mxu0 0.0
    %4997 = vmatpush1.msra.mxu0 0.0
    %4998 = vmatprep.subr.mxu0 0.0
    %4999 = vmatpush1.msra.mxu0 0.0
    %5000 = vmatprep.subr.mxu0 0.0
    %5001 = vmatpush1.msra.mxu0 0.0
    %5002 = vmatprep.subr.mxu0 0.0
    %5003 = vmatpush1.msra.mxu0 0.0
    %5004 = vmatprep.subr.mxu0 0.0
    %5005 = vmatpush1.msra.mxu0 0.0
    %5006 = vmatprep.subr.mxu0 0.0
    %5007 = vmatpush1.msra.mxu0 0.0
    %5008 = vmatprep.subr.mxu0 0.0
    %5009 = vmatpush1.msra.mxu0 0.0
    %5010 = vmatprep.subr.mxu0 0.0
    %5011 = vmatpush1.msra.mxu0 0.0
    %5012 = vmatprep.subr.mxu0 0.0
    %5013 = vmatpush1.msra.mxu0 0.0
    %5014 = vmatprep.subr.mxu0 0.0
    %5015 = vmatpush1.msra.mxu0 0.0
    %5016 = vmatprep.subr.mxu0 0.0
    %5017 = vmatpush1.msra.mxu0 0.0
    %5018 = vmatprep.mubr.f32.mxu0 0.0
    %5019 = vmatmul.mubr.f32.gmra.mrb[0].mxu0 %v4859
    %v5020 = vpop.f32.mrb[0].mxu0
    %v5021 = vadd.f32 0.0, %v5020
    %v5022 = vpop.f32.mrb[0].mxu0
    %v5023 = vadd.f32 0.0, %v5022
    %5024 = vmatprep.mubr.f32.mxu0 0.0
    %5025 = vmatmul.mubr.f32.gmra.mrb[0].mxu0 %v4862
    %v5026 = vpop.f32.mrb[0].mxu0
    %v5027 = vadd.f32 0.0, %v5026
    %v5028 = vpop.f32.mrb[0].mxu0
    %v5029 = vadd.f32 0.0, %v5028
    %5030 = vmatprep.mubr.f32.mxu0 0.0
    %5031 = vmatmul.mubr.f32.gmra.mrb[0].mxu0 %v4865
    %v5032 = vpop.f32.mrb[0].mxu0
    %v5033 = vadd.f32 0.0, %v5032
    %v5034 = vpop.f32.mrb[0].mxu0
    %v5035 = vadd.f32 0.0, %v5034
    %5036 = vmatprep.mubr.f32.mxu0 0.0
    %5037 = vmatmul.mubr.f32.gmra.mrb[0].mxu0 %v4868
    %v5038 = vpop.f32.mrb[0].mxu0
    %v5039 = vadd.f32 0.0, %v5038
    %v5040 = vpop.f32.mrb[0].mxu0
    %v5041 = vadd.f32 0.0, %v5040
    %5042 = vmatprep.mubr.f32.mxu0 0.0
    %5043 = vmatmul.mubr.f32.gmra.mrb[0].mxu0 %v4871
    %v5044 = vpop.f32.mrb[0].mxu0
    %v5045 = vadd.f32 0.0, %v5044
    %v5046 = vpop.f32.mrb[0].mxu0
    %v5047 = vadd.f32 0.0, %v5046
    %5048 = vmatprep.mubr.f32.mxu0 0.0
    %5049 = vmatmul.mubr.f32.gmra.mrb[0].mxu0 %v4874
    %v5050 = vpop.f32.mrb[0].mxu0
    %v5051 = vadd.f32 0.0, %v5050
    %v5052 = vpop.f32.mrb[0].mxu0
    %v5053 = vadd.f32 0.0, %v5052
    %5054 = vmatprep.mubr.f32.mxu0 0.0
    %5055 = vmatmul.mubr.f32.gmra.mrb[0].mxu0 %v4877
    %v5056 = vpop.f32.mrb[0].mxu0
    %v5057 = vadd.f32 0.0, %v5056
    %v5058 = vpop.f32.mrb[0].mxu0
    %v5059 = vadd.f32 0.0, %v5058
    %5060 = vmatprep.mubr.f32.mxu0 0.0
    %5061 = vmatmul.mubr.f32.gmra.mrb[0].mxu0 %v4880
    %v5062 = vpop.f32.mrb[0].mxu0
    %v5063 = vadd.f32 0.0, %v5062
    %v5064 = vpop.f32.mrb[0].mxu0
    %v5065 = vadd.f32 0.0, %v5064
    %5066 = vmatprep.mubr.f32.mxu0 0.0
    %5067 = vmatmul.mubr.f32.gmra.mrb[0].mxu0 %v4883
    %v5068 = vpop.f32.mrb[0].mxu0
    %v5069 = vadd.f32 0.0, %v5068
    %v5070 = vpop.f32.mrb[0].mxu0
    %v5071 = vadd.f32 0.0, %v5070
    %5072 = vmatprep.mubr.f32.mxu0 0.0
    %5073 = vmatmul.mubr.f32.gmra.mrb[0].mxu0 %v4886
    %v5074 = vpop.f32.mrb[0].mxu0
    %v5075 = vadd.f32 0.0, %v5074
    %v5076 = vpop.f32.mrb[0].mxu0
    %v5077 = vadd.f32 0.0, %v5076
    %5078 = vmatprep.mubr.f32.mxu0 0.0
    %5079 = vmatmul.mubr.f32.gmra.mrb[0].mxu0 %v4889
    %v5080 = vpop.f32.mrb[0].mxu0
    %v5081 = vadd.f32 0.0, %v5080
    %v5082 = vpop.f32.mrb[0].mxu0
    %v5083 = vadd.f32 0.0, %v5082
    %5084 = vmatprep.mubr.f32.mxu0 0.0
    %5085 = vmatmul.mubr.f32.gmra.mrb[0].mxu0 %v4892
    %v5086 = vpop.f32.mrb[0].mxu0
    %v5087 = vadd.f32 0.0, %v5086
    %v5088 = vpop.f32.mrb[0].mxu0
    %v5089 = vadd.f32 0.0, %v5088
    %5090 = vmatprep.mubr.f32.mxu0 0.0
    %5091 = vmatmul.mubr.f32.gmra.mrb[0].mxu0 %v4895
    %v5092 = vpop.f32.mrb[0].mxu0
    %v5093 = vadd.f32 0.0, %v5092
    %v5094 = vpop.f32.mrb[0].mxu0
    %v5095 = vadd.f32 0.0, %v5094
    %5096 = vmatprep.mubr.f32.mxu0 0.0
    %5097 = vmatmul.mubr.f32.gmra.mrb[0].mxu0 %v4898
    %v5098 = vpop.f32.mrb[0].mxu0
    %v5099 = vadd.f32 0.0, %v5098
    %v5100 = vpop.f32.mrb[0].mxu0
    %v5101 = vadd.f32 0.0, %v5100
    %5102 = vmatprep.mubr.f32.mxu0 0.0
    %5103 = vmatmul.mubr.f32.gmra.mrb[0].mxu0 %v4901
    %v5104 = vpop.f32.mrb[0].mxu0
    %v5105 = vadd.f32 0.0, %v5104
    %v5106 = vpop.f32.mrb[0].mxu0
    %v5107 = vadd.f32 0.0, %v5106
    %5108 = vmatprep.mubr.f32.mxu0 0.0
    %5109 = vmatmul.mubr.f32.gmra.mrb[0].mxu0 %v4904
    %v5110 = vpop.f32.mrb[0].mxu0
    %v5111 = vadd.f32 0.0, %v5110
    %v5112 = vpop.f32.mrb[0].mxu0
    %v5113 = vadd.f32 0.0, %v5112
    %5114 = vmatprep.mubr.f32.mxu0 0.0
    %5115 = vmatmul.mubr.f32.gmra.mrb[0].mxu0 %v4907
    %v5116 = vpop.f32.mrb[0].mxu0
    %v5117 = vadd.f32 0.0, %v5116
    %v5118 = vpop.f32.mrb[0].mxu0
    %v5119 = vadd.f32 0.0, %v5118
    %5120 = vmatprep.mubr.f32.mxu0 0.0
    %5121 = vmatmul.mubr.f32.gmra.mrb[0].mxu0 %v4910
    %v5122 = vpop.f32.mrb[0].mxu0
    %v5123 = vadd.f32 0.0, %v5122
    %v5124 = vpop.f32.mrb[0].mxu0
    %v5125 = vadd.f32 0.0, %v5124
    %5126 = vmatprep.mubr.f32.mxu0 0.0
    %5127 = vmatmul.mubr.f32.gmra.mrb[0].mxu0 %v4913
    %v5128 = vpop.f32.mrb[0].mxu0
    %v5129 = vadd.f32 0.0, %v5128
    %v5130 = vpop.f32.mrb[0].mxu0
    %v5131 = vadd.f32 0.0, %v5130
    %5132 = vmatprep.mubr.f32.mxu0 0.0
    %5133 = vmatmul.mubr.f32.gmra.mrb[0].mxu0 %v4916
    %v5134 = vpop.f32.mrb[0].mxu0
    %v5135 = vadd.f32 0.0, %v5134
    %v5136 = vpop.f32.mrb[0].mxu0
    %v5137 = vadd.f32 0.0, %v5136
    %5138 = vmatprep.mubr.f32.mxu0 0.0
    %5139 = vmatmul.mubr.f32.gmra.mrb[0].mxu0 %v4919
    %v5140 = vpop.f32.mrb[0].mxu0
    %v5141 = vadd.f32 0.0, %v5140
    %v5142 = vpop.f32.mrb[0].mxu0
    %v5143 = vadd.f32 0.0, %v5142
    %5144 = vmatprep.mubr.f32.mxu0 0.0
    %5145 = vmatmul.mubr.f32.gmra.mrb[0].mxu0 %v4922
    %v5146 = vpop.f32.mrb[0].mxu0
    %v5147 = vadd.f32 0.0, %v5146
    %v5148 = vpop.f32.mrb[0].mxu0
    %v5149 = vadd.f32 0.0, %v5148
    %5150 = vmatprep.mubr.f32.mxu0 0.0
    %5151 = vmatmul.mubr.f32.gmra.mrb[0].mxu0 %v4925
    %v5152 = vpop.f32.mrb[0].mxu0
    %v5153 = vadd.f32 0.0, %v5152
    %v5154 = vpop.f32.mrb[0].mxu0
    %v5155 = vadd.f32 0.0, %v5154
    %5156 = vmatprep.mubr.f32.mxu0 0.0
    %5157 = vmatmul.mubr.f32.gmra.mrb[0].mxu0 %v4928
    %v5158 = vpop.f32.mrb[0].mxu0
    %v5159 = vadd.f32 0.0, %v5158
    %v5160 = vpop.f32.mrb[0].mxu0
    %v5161 = vadd.f32 0.0, %v5160
    %5162 = vmatprep.mubr.f32.mxu0 0.0
    %5163 = vmatmul.mubr.f32.gmra.mrb[0].mxu0 %v4931
    %v5164 = vpop.f32.mrb[0].mxu0
    %v5165 = vadd.f32 0.0, %v5164
    %v5166 = vpop.f32.mrb[0].mxu0
    %v5167 = vadd.f32 0.0, %v5166
    %5168 = vmatprep.mubr.f32.mxu0 0.0
    %5169 = vmatmul.mubr.f32.gmra.mrb[0].mxu0 %v4934
    %v5170 = vpop.f32.mrb[0].mxu0
    %v5171 = vadd.f32 0.0, %v5170
    %v5172 = vpop.f32.mrb[0].mxu0
    %v5173 = vadd.f32 0.0, %v5172
    %5174 = vmatprep.mubr.f32.mxu0 0.0
    %5175 = vmatmul.mubr.f32.gmra.mrb[0].mxu0 %v4937
    %v5176 = vpop.f32.mrb[0].mxu0
    %v5177 = vadd.f32 0.0, %v5176
    %v5178 = vpop.f32.mrb[0].mxu0
    %v5179 = vadd.f32 0.0, %v5178
    %5180 = vmatprep.mubr.f32.mxu0 0.0
    %5181 = vmatmul.mubr.f32.gmra.mrb[0].mxu0 %v4940
    %v5182 = vpop.f32.mrb[0].mxu0
    %v5183 = vadd.f32 0.0, %v5182
    %v5184 = vpop.f32.mrb[0].mxu0
    %v5185 = vadd.f32 0.0, %v5184
    %5186 = vmatprep.mubr.f32.mxu0 0.0
    %5187 = vmatmul.mubr.f32.gmra.mrb[0].mxu0 %v4943
    %v5188 = vpop.f32.mrb[0].mxu0
    %v5189 = vadd.f32 0.0, %v5188
    %v5190 = vpop.f32.mrb[0].mxu0
    %v5191 = vadd.f32 0.0, %v5190
    %5192 = vmatprep.mubr.f32.mxu0 0.0
    %5193 = vmatmul.mubr.f32.gmra.mrb[0].mxu0 %v4946
    %v5194 = vpop.f32.mrb[0].mxu0
    %v5195 = vadd.f32 0.0, %v5194
    %v5196 = vpop.f32.mrb[0].mxu0
    %v5197 = vadd.f32 0.0, %v5196
    %5198 = vmatprep.mubr.f32.mxu0 0.0
    %5199 = vmatmul.mubr.f32.gmra.mrb[0].mxu0 %v4949
    %v5200 = vpop.f32.mrb[0].mxu0
    %v5201 = vadd.f32 0.0, %v5200
    %v5202 = vpop.f32.mrb[0].mxu0
    %v5203 = vadd.f32 0.0, %v5202
    %5204 = vmatprep.mubr.f32.mxu0 0.0
    %5205 = vmatmul.mubr.f32.gmra.mrb[0].mxu0 %v4952
    %v5206 = vpop.f32.mrb[0].mxu0
    %v5207 = vadd.f32 0.0, %v5206
    %v5208 = vpop.f32.mrb[0].mxu0
    %v5209 = vadd.f32 0.0, %v5208
    %5210 = vdwg.mxu0
    %5211 = vxpose.xlu0.b32.start [1/16] %v4139, 128
    %5212 = vxpose.xlu0.b32.cont [2/16] %v4145, 128
    %5213 = vxpose.xlu0.b32.cont [3/16] %v4151, 128
    %5214 = vxpose.xlu0.b32.cont [4/16] %v4157, 128
    %5215 = vxpose.xlu0.b32.cont [5/16] 0.0, 128
    %5216 = vxpose.xlu0.b32.cont [6/16] 0.0, 128
    %5217 = vxpose.xlu0.b32.cont [7/16] 0.0, 128
    %5218 = vxpose.xlu0.b32.cont [8/16] 0.0, 128
    %5219 = vxpose.xlu0.b32.cont [9/16] 0.0, 128
    %5220 = vxpose.xlu0.b32.cont [10/16] 0.0, 128
    %5221 = vxpose.xlu0.b32.cont [11/16] 0.0, 128
    %5222 = vxpose.xlu0.b32.cont [12/16] 0.0, 128
    %5223 = vxpose.xlu0.b32.cont [13/16] 0.0, 128
    %5224 = vxpose.xlu0.b32.cont [14/16] 0.0, 128
    %5225 = vxpose.xlu0.b32.cont [15/16] 0.0, 128
    %5226 = vxpose.xlu0.b32.end [16/16] 0.0, 128
    %v5227 = vpop.trf.xlu0
    %v5228 = vpop.trf.xlu0
    %v5229 = vpop.trf.xlu0
    %v5230 = vpop.trf.xlu0
    %v5231 = vpop.trf.xlu0
    %v5232 = vpop.trf.xlu0
    %v5233 = vpop.trf.xlu0
    %v5234 = vpop.trf.xlu0
    %v5235 = vpop.trf.xlu0
    %v5236 = vpop.trf.xlu0
    %v5237 = vpop.trf.xlu0
    %v5238 = vpop.trf.xlu0
    %v5239 = vpop.trf.xlu0
    %v5240 = vpop.trf.xlu0
    %v5241 = vpop.trf.xlu0
    %v5242 = vpop.trf.xlu0
    %5243 = vxpose.xlu0.b32.start [1/16] %v4141, 128
    %5244 = vxpose.xlu0.b32.cont [2/16] %v4147, 128
    %5245 = vxpose.xlu0.b32.cont [3/16] %v4153, 128
    %5246 = vxpose.xlu0.b32.cont [4/16] %v4159, 128
    %5247 = vxpose.xlu0.b32.cont [5/16] 0.0, 128
    %5248 = vxpose.xlu0.b32.cont [6/16] 0.0, 128
    %5249 = vxpose.xlu0.b32.cont [7/16] 0.0, 128
    %5250 = vxpose.xlu0.b32.cont [8/16] 0.0, 128
    %5251 = vxpose.xlu0.b32.cont [9/16] 0.0, 128
    %5252 = vxpose.xlu0.b32.cont [10/16] 0.0, 128
    %5253 = vxpose.xlu0.b32.cont [11/16] 0.0, 128
    %5254 = vxpose.xlu0.b32.cont [12/16] 0.0, 128
    %5255 = vxpose.xlu0.b32.cont [13/16] 0.0, 128
    %5256 = vxpose.xlu0.b32.cont [14/16] 0.0, 128
    %5257 = vxpose.xlu0.b32.cont [15/16] 0.0, 128
    %5258 = vxpose.xlu0.b32.end [16/16] 0.0, 128
    %v5259 = vpop.trf.xlu0
    %v5260 = vpop.trf.xlu0
    %v5261 = vpop.trf.xlu0
    %v5262 = vpop.trf.xlu0
    %v5263 = vpop.trf.xlu0
    %v5264 = vpop.trf.xlu0
    %v5265 = vpop.trf.xlu0
    %v5266 = vpop.trf.xlu0
    %v5267 = vpop.trf.xlu0
    %v5268 = vpop.trf.xlu0
    %v5269 = vpop.trf.xlu0
    %v5270 = vpop.trf.xlu0
    %v5271 = vpop.trf.xlu0
    %v5272 = vpop.trf.xlu0
    %v5273 = vpop.trf.xlu0
    %v5274 = vpop.trf.xlu0
    %v5276 = vsel %vm718, %v5227, 0
    %v5279 = vsel %vm718, %v5228, 0
    %v5282 = vsel %vm718, %v5229, 0
    %v5285 = vsel %vm718, %v5230, 0
    %v5288 = vsel %vm718, %v5231, 0
    %v5291 = vsel %vm718, %v5232, 0
    %v5294 = vsel %vm718, %v5233, 0
    %v5297 = vsel %vm718, %v5234, 0
    %v5300 = vsel %vm718, %v5235, 0
    %v5303 = vsel %vm718, %v5236, 0
    %v5306 = vsel %vm718, %v5237, 0
    %v5309 = vsel %vm718, %v5238, 0
    %v5312 = vsel %vm718, %v5239, 0
    %v5315 = vsel %vm718, %v5240, 0
    %v5318 = vsel %vm718, %v5241, 0
    %v5321 = vsel %vm718, %v5242, 0
    %v5324 = vsel %vm718, %v5259, 0
    %v5327 = vsel %vm718, %v5260, 0
    %v5330 = vsel %vm718, %v5261, 0
    %v5333 = vsel %vm718, %v5262, 0
    %v5336 = vsel %vm718, %v5263, 0
    %v5339 = vsel %vm718, %v5264, 0
    %v5342 = vsel %vm718, %v5265, 0
    %v5345 = vsel %vm718, %v5266, 0
    %v5348 = vsel %vm718, %v5267, 0
    %v5351 = vsel %vm718, %v5268, 0
    %v5354 = vsel %vm718, %v5269, 0
    %v5357 = vsel %vm718, %v5270, 0
    %v5360 = vsel %vm718, %v5271, 0
    %v5363 = vsel %vm718, %v5272, 0
    %v5366 = vsel %vm718, %v5273, 0
    %v5369 = vsel %vm718, %v5274, 0
    %5371 = vmatprep.subr.mxu0 %v4237
    %5372 = vmatpush1.msra.mxu0 %v4235
    %5373 = vmatprep.subr.mxu0 %v4243
    %5374 = vmatpush1.msra.mxu0 %v4241
    %5375 = vmatprep.subr.mxu0 %v4249
    %5376 = vmatpush1.msra.mxu0 %v4247
    %5377 = vmatprep.subr.mxu0 %v4255
    %5378 = vmatpush1.msra.mxu0 %v4253
    %5379 = vmatprep.subr.mxu0 0.0
    %5380 = vmatpush1.msra.mxu0 0.0
    %5381 = vmatprep.subr.mxu0 0.0
    %5382 = vmatpush1.msra.mxu0 0.0
    %5383 = vmatprep.subr.mxu0 0.0
    %5384 = vmatpush1.msra.mxu0 0.0
    %5385 = vmatprep.subr.mxu0 0.0
    %5386 = vmatpush1.msra.mxu0 0.0
    %5387 = vmatprep.subr.mxu0 0.0
    %5388 = vmatpush1.msra.mxu0 0.0
    %5389 = vmatprep.subr.mxu0 0.0
    %5390 = vmatpush1.msra.mxu0 0.0
    %5391 = vmatprep.subr.mxu0 0.0
    %5392 = vmatpush1.msra.mxu0 0.0
    %5393 = vmatprep.subr.mxu0 0.0
    %5394 = vmatpush1.msra.mxu0 0.0
    %5395 = vmatprep.subr.mxu0 0.0
    %5396 = vmatpush1.msra.mxu0 0.0
    %5397 = vmatprep.subr.mxu0 0.0
    %5398 = vmatpush1.msra.mxu0 0.0
    %5399 = vmatprep.subr.mxu0 0.0
    %5400 = vmatpush1.msra.mxu0 0.0
    %5401 = vmatprep.subr.mxu0 0.0
    %5402 = vmatpush1.msra.mxu0 0.0
    %5403 = vmatprep.subr.mxu0 0.0
    %5404 = vmatpush1.msra.mxu0 0.0
    %5405 = vmatprep.subr.mxu0 0.0
    %5406 = vmatpush1.msra.mxu0 0.0
    %5407 = vmatprep.subr.mxu0 0.0
    %5408 = vmatpush1.msra.mxu0 0.0
    %5409 = vmatprep.subr.mxu0 0.0
    %5410 = vmatpush1.msra.mxu0 0.0
    %5411 = vmatprep.subr.mxu0 0.0
    %5412 = vmatpush1.msra.mxu0 0.0
    %5413 = vmatprep.subr.mxu0 0.0
    %5414 = vmatpush1.msra.mxu0 0.0
    %5415 = vmatprep.subr.mxu0 0.0
    %5416 = vmatpush1.msra.mxu0 0.0
    %5417 = vmatprep.subr.mxu0 0.0
    %5418 = vmatpush1.msra.mxu0 0.0
    %5419 = vmatprep.subr.mxu0 0.0
    %5420 = vmatpush1.msra.mxu0 0.0
    %5421 = vmatprep.subr.mxu0 0.0
    %5422 = vmatpush1.msra.mxu0 0.0
    %5423 = vmatprep.subr.mxu0 0.0
    %5424 = vmatpush1.msra.mxu0 0.0
    %5425 = vmatprep.subr.mxu0 0.0
    %5426 = vmatpush1.msra.mxu0 0.0
    %5427 = vmatprep.subr.mxu0 0.0
    %5428 = vmatpush1.msra.mxu0 0.0
    %5429 = vmatprep.subr.mxu0 0.0
    %5430 = vmatpush1.msra.mxu0 0.0
    %5431 = vmatprep.subr.mxu0 0.0
    %5432 = vmatpush1.msra.mxu0 0.0
    %5433 = vmatprep.subr.mxu0 0.0
    %5434 = vmatpush1.msra.mxu0 0.0
    %5435 = vmatprep.mubr.f32.mxu0 0.0
    %5436 = vmatmul.mubr.f32.gmra.mrb[0].mxu0 %v5276
    %v5437 = vpop.f32.mrb[0].mxu0
    %v5438 = vadd.f32 0.0, %v5437
    %v5439 = vpop.f32.mrb[0].mxu0
    %v5440 = vadd.f32 0.0, %v5439
    %5441 = vmatprep.mubr.f32.mxu0 0.0
    %5442 = vmatmul.mubr.f32.gmra.mrb[0].mxu0 %v5279
    %v5443 = vpop.f32.mrb[0].mxu0
    %v5444 = vadd.f32 0.0, %v5443
    %v5445 = vpop.f32.mrb[0].mxu0
    %v5446 = vadd.f32 0.0, %v5445
    %5447 = vmatprep.mubr.f32.mxu0 0.0
    %5448 = vmatmul.mubr.f32.gmra.mrb[0].mxu0 %v5282
    %v5449 = vpop.f32.mrb[0].mxu0
    %v5450 = vadd.f32 0.0, %v5449
    %v5451 = vpop.f32.mrb[0].mxu0
    %v5452 = vadd.f32 0.0, %v5451
    %5453 = vmatprep.mubr.f32.mxu0 0.0
    %5454 = vmatmul.mubr.f32.gmra.mrb[0].mxu0 %v5285
    %v5455 = vpop.f32.mrb[0].mxu0
    %v5456 = vadd.f32 0.0, %v5455
    %v5457 = vpop.f32.mrb[0].mxu0
    %v5458 = vadd.f32 0.0, %v5457
    %5459 = vmatprep.mubr.f32.mxu0 0.0
    %5460 = vmatmul.mubr.f32.gmra.mrb[0].mxu0 %v5288
    %v5461 = vpop.f32.mrb[0].mxu0
    %v5462 = vadd.f32 0.0, %v5461
    %v5463 = vpop.f32.mrb[0].mxu0
    %v5464 = vadd.f32 0.0, %v5463
    %5465 = vmatprep.mubr.f32.mxu0 0.0
    %5466 = vmatmul.mubr.f32.gmra.mrb[0].mxu0 %v5291
    %v5467 = vpop.f32.mrb[0].mxu0
    %v5468 = vadd.f32 0.0, %v5467
    %v5469 = vpop.f32.mrb[0].mxu0
    %v5470 = vadd.f32 0.0, %v5469
    %5471 = vmatprep.mubr.f32.mxu0 0.0
    %5472 = vmatmul.mubr.f32.gmra.mrb[0].mxu0 %v5294
    %v5473 = vpop.f32.mrb[0].mxu0
    %v5474 = vadd.f32 0.0, %v5473
    %v5475 = vpop.f32.mrb[0].mxu0
    %v5476 = vadd.f32 0.0, %v5475
    %5477 = vmatprep.mubr.f32.mxu0 0.0
    %5478 = vmatmul.mubr.f32.gmra.mrb[0].mxu0 %v5297
    %v5479 = vpop.f32.mrb[0].mxu0
    %v5480 = vadd.f32 0.0, %v5479
    %v5481 = vpop.f32.mrb[0].mxu0
    %v5482 = vadd.f32 0.0, %v5481
    %5483 = vmatprep.mubr.f32.mxu0 0.0
    %5484 = vmatmul.mubr.f32.gmra.mrb[0].mxu0 %v5300
    %v5485 = vpop.f32.mrb[0].mxu0
    %v5486 = vadd.f32 0.0, %v5485
    %v5487 = vpop.f32.mrb[0].mxu0
    %v5488 = vadd.f32 0.0, %v5487
    %5489 = vmatprep.mubr.f32.mxu0 0.0
    %5490 = vmatmul.mubr.f32.gmra.mrb[0].mxu0 %v5303
    %v5491 = vpop.f32.mrb[0].mxu0
    %v5492 = vadd.f32 0.0, %v5491
    %v5493 = vpop.f32.mrb[0].mxu0
    %v5494 = vadd.f32 0.0, %v5493
    %5495 = vmatprep.mubr.f32.mxu0 0.0
    %5496 = vmatmul.mubr.f32.gmra.mrb[0].mxu0 %v5306
    %v5497 = vpop.f32.mrb[0].mxu0
    %v5498 = vadd.f32 0.0, %v5497
    %v5499 = vpop.f32.mrb[0].mxu0
    %v5500 = vadd.f32 0.0, %v5499
    %5501 = vmatprep.mubr.f32.mxu0 0.0
    %5502 = vmatmul.mubr.f32.gmra.mrb[0].mxu0 %v5309
    %v5503 = vpop.f32.mrb[0].mxu0
    %v5504 = vadd.f32 0.0, %v5503
    %v5505 = vpop.f32.mrb[0].mxu0
    %v5506 = vadd.f32 0.0, %v5505
    %5507 = vmatprep.mubr.f32.mxu0 0.0
    %5508 = vmatmul.mubr.f32.gmra.mrb[0].mxu0 %v5312
    %v5509 = vpop.f32.mrb[0].mxu0
    %v5510 = vadd.f32 0.0, %v5509
    %v5511 = vpop.f32.mrb[0].mxu0
    %v5512 = vadd.f32 0.0, %v5511
    %5513 = vmatprep.mubr.f32.mxu0 0.0
    %5514 = vmatmul.mubr.f32.gmra.mrb[0].mxu0 %v5315
    %v5515 = vpop.f32.mrb[0].mxu0
    %v5516 = vadd.f32 0.0, %v5515
    %v5517 = vpop.f32.mrb[0].mxu0
    %v5518 = vadd.f32 0.0, %v5517
    %5519 = vmatprep.mubr.f32.mxu0 0.0
    %5520 = vmatmul.mubr.f32.gmra.mrb[0].mxu0 %v5318
    %v5521 = vpop.f32.mrb[0].mxu0
    %v5522 = vadd.f32 0.0, %v5521
    %v5523 = vpop.f32.mrb[0].mxu0
    %v5524 = vadd.f32 0.0, %v5523
    %5525 = vmatprep.mubr.f32.mxu0 0.0
    %5526 = vmatmul.mubr.f32.gmra.mrb[0].mxu0 %v5321
    %v5527 = vpop.f32.mrb[0].mxu0
    %v5528 = vadd.f32 0.0, %v5527
    %v5529 = vpop.f32.mrb[0].mxu0
    %v5530 = vadd.f32 0.0, %v5529
    %5531 = vmatprep.mubr.f32.mxu0 0.0
    %5532 = vmatmul.mubr.f32.gmra.mrb[0].mxu0 %v5324
    %v5533 = vpop.f32.mrb[0].mxu0
    %v5534 = vadd.f32 0.0, %v5533
    %v5535 = vpop.f32.mrb[0].mxu0
    %v5536 = vadd.f32 0.0, %v5535
    %5537 = vmatprep.mubr.f32.mxu0 0.0
    %5538 = vmatmul.mubr.f32.gmra.mrb[0].mxu0 %v5327
    %v5539 = vpop.f32.mrb[0].mxu0
    %v5540 = vadd.f32 0.0, %v5539
    %v5541 = vpop.f32.mrb[0].mxu0
    %v5542 = vadd.f32 0.0, %v5541
    %5543 = vmatprep.mubr.f32.mxu0 0.0
    %5544 = vmatmul.mubr.f32.gmra.mrb[0].mxu0 %v5330
    %v5545 = vpop.f32.mrb[0].mxu0
    %v5546 = vadd.f32 0.0, %v5545
    %v5547 = vpop.f32.mrb[0].mxu0
    %v5548 = vadd.f32 0.0, %v5547
    %5549 = vmatprep.mubr.f32.mxu0 0.0
    %5550 = vmatmul.mubr.f32.gmra.mrb[0].mxu0 %v5333
    %v5551 = vpop.f32.mrb[0].mxu0
    %v5552 = vadd.f32 0.0, %v5551
    %v5553 = vpop.f32.mrb[0].mxu0
    %v5554 = vadd.f32 0.0, %v5553
    %5555 = vmatprep.mubr.f32.mxu0 0.0
    %5556 = vmatmul.mubr.f32.gmra.mrb[0].mxu0 %v5336
    %v5557 = vpop.f32.mrb[0].mxu0
    %v5558 = vadd.f32 0.0, %v5557
    %v5559 = vpop.f32.mrb[0].mxu0
    %v5560 = vadd.f32 0.0, %v5559
    %5561 = vmatprep.mubr.f32.mxu0 0.0
    %5562 = vmatmul.mubr.f32.gmra.mrb[0].mxu0 %v5339
    %v5563 = vpop.f32.mrb[0].mxu0
    %v5564 = vadd.f32 0.0, %v5563
    %v5565 = vpop.f32.mrb[0].mxu0
    %v5566 = vadd.f32 0.0, %v5565
    %5567 = vmatprep.mubr.f32.mxu0 0.0
    %5568 = vmatmul.mubr.f32.gmra.mrb[0].mxu0 %v5342
    %v5569 = vpop.f32.mrb[0].mxu0
    %v5570 = vadd.f32 0.0, %v5569
    %v5571 = vpop.f32.mrb[0].mxu0
    %v5572 = vadd.f32 0.0, %v5571
    %5573 = vmatprep.mubr.f32.mxu0 0.0
    %5574 = vmatmul.mubr.f32.gmra.mrb[0].mxu0 %v5345
    %v5575 = vpop.f32.mrb[0].mxu0
    %v5576 = vadd.f32 0.0, %v5575
    %v5577 = vpop.f32.mrb[0].mxu0
    %v5578 = vadd.f32 0.0, %v5577
    %5579 = vmatprep.mubr.f32.mxu0 0.0
    %5580 = vmatmul.mubr.f32.gmra.mrb[0].mxu0 %v5348
    %v5581 = vpop.f32.mrb[0].mxu0
    %v5582 = vadd.f32 0.0, %v5581
    %v5583 = vpop.f32.mrb[0].mxu0
    %v5584 = vadd.f32 0.0, %v5583
    %5585 = vmatprep.mubr.f32.mxu0 0.0
    %5586 = vmatmul.mubr.f32.gmra.mrb[0].mxu0 %v5351
    %v5587 = vpop.f32.mrb[0].mxu0
    %v5588 = vadd.f32 0.0, %v5587
    %v5589 = vpop.f32.mrb[0].mxu0
    %v5590 = vadd.f32 0.0, %v5589
    %5591 = vmatprep.mubr.f32.mxu0 0.0
    %5592 = vmatmul.mubr.f32.gmra.mrb[0].mxu0 %v5354
    %v5593 = vpop.f32.mrb[0].mxu0
    %v5594 = vadd.f32 0.0, %v5593
    %v5595 = vpop.f32.mrb[0].mxu0
    %v5596 = vadd.f32 0.0, %v5595
    %5597 = vmatprep.mubr.f32.mxu0 0.0
    %5598 = vmatmul.mubr.f32.gmra.mrb[0].mxu0 %v5357
    %v5599 = vpop.f32.mrb[0].mxu0
    %v5600 = vadd.f32 0.0, %v5599
    %v5601 = vpop.f32.mrb[0].mxu0
    %v5602 = vadd.f32 0.0, %v5601
    %5603 = vmatprep.mubr.f32.mxu0 0.0
    %5604 = vmatmul.mubr.f32.gmra.mrb[0].mxu0 %v5360
    %v5605 = vpop.f32.mrb[0].mxu0
    %v5606 = vadd.f32 0.0, %v5605
    %v5607 = vpop.f32.mrb[0].mxu0
    %v5608 = vadd.f32 0.0, %v5607
    %5609 = vmatprep.mubr.f32.mxu0 0.0
    %5610 = vmatmul.mubr.f32.gmra.mrb[0].mxu0 %v5363
    %v5611 = vpop.f32.mrb[0].mxu0
    %v5612 = vadd.f32 0.0, %v5611
    %v5613 = vpop.f32.mrb[0].mxu0
    %v5614 = vadd.f32 0.0, %v5613
    %5615 = vmatprep.mubr.f32.mxu0 0.0
    %5616 = vmatmul.mubr.f32.gmra.mrb[0].mxu0 %v5366
    %v5617 = vpop.f32.mrb[0].mxu0
    %v5618 = vadd.f32 0.0, %v5617
    %v5619 = vpop.f32.mrb[0].mxu0
    %v5620 = vadd.f32 0.0, %v5619
    %5621 = vmatprep.mubr.f32.mxu0 0.0
    %5622 = vmatmul.mubr.f32.gmra.mrb[0].mxu0 %v5369
    %v5623 = vpop.f32.mrb[0].mxu0
    %v5624 = vadd.f32 0.0, %v5623
    %v5625 = vpop.f32.mrb[0].mxu0
    %v5626 = vadd.f32 0.0, %v5625
    %5627 = vdwg.mxu0
    %5628 = vxpose.xlu0.b32.start [1/16] %v4163, 128
    %5629 = vxpose.xlu0.b32.cont [2/16] %v4169, 128
    %5630 = vxpose.xlu0.b32.cont [3/16] %v4175, 128
    %5631 = vxpose.xlu0.b32.cont [4/16] %v4181, 128
    %5632 = vxpose.xlu0.b32.cont [5/16] 0.0, 128
    %5633 = vxpose.xlu0.b32.cont [6/16] 0.0, 128
    %5634 = vxpose.xlu0.b32.cont [7/16] 0.0, 128
    %5635 = vxpose.xlu0.b32.cont [8/16] 0.0, 128
    %5636 = vxpose.xlu0.b32.cont [9/16] 0.0, 128
    %5637 = vxpose.xlu0.b32.cont [10/16] 0.0, 128
    %5638 = vxpose.xlu0.b32.cont [11/16] 0.0, 128
    %5639 = vxpose.xlu0.b32.cont [12/16] 0.0, 128
    %5640 = vxpose.xlu0.b32.cont [13/16] 0.0, 128
    %5641 = vxpose.xlu0.b32.cont [14/16] 0.0, 128
    %5642 = vxpose.xlu0.b32.cont [15/16] 0.0, 128
    %5643 = vxpose.xlu0.b32.end [16/16] 0.0, 128
    %v5644 = vpop.trf.xlu0
    %v5645 = vpop.trf.xlu0
    %v5646 = vpop.trf.xlu0
    %v5647 = vpop.trf.xlu0
    %v5648 = vpop.trf.xlu0
    %v5649 = vpop.trf.xlu0
    %v5650 = vpop.trf.xlu0
    %v5651 = vpop.trf.xlu0
    %v5652 = vpop.trf.xlu0
    %v5653 = vpop.trf.xlu0
    %v5654 = vpop.trf.xlu0
    %v5655 = vpop.trf.xlu0
    %v5656 = vpop.trf.xlu0
    %v5657 = vpop.trf.xlu0
    %v5658 = vpop.trf.xlu0
    %v5659 = vpop.trf.xlu0
    %5660 = vxpose.xlu0.b32.start [1/16] %v4165, 128
    %5661 = vxpose.xlu0.b32.cont [2/16] %v4171, 128
    %5662 = vxpose.xlu0.b32.cont [3/16] %v4177, 128
    %5663 = vxpose.xlu0.b32.cont [4/16] %v4183, 128
    %5664 = vxpose.xlu0.b32.cont [5/16] 0.0, 128
    %5665 = vxpose.xlu0.b32.cont [6/16] 0.0, 128
    %5666 = vxpose.xlu0.b32.cont [7/16] 0.0, 128
    %5667 = vxpose.xlu0.b32.cont [8/16] 0.0, 128
    %5668 = vxpose.xlu0.b32.cont [9/16] 0.0, 128
    %5669 = vxpose.xlu0.b32.cont [10/16] 0.0, 128
    %5670 = vxpose.xlu0.b32.cont [11/16] 0.0, 128
    %5671 = vxpose.xlu0.b32.cont [12/16] 0.0, 128
    %5672 = vxpose.xlu0.b32.cont [13/16] 0.0, 128
    %5673 = vxpose.xlu0.b32.cont [14/16] 0.0, 128
    %5674 = vxpose.xlu0.b32.cont [15/16] 0.0, 128
    %5675 = vxpose.xlu0.b32.end [16/16] 0.0, 128
    %v5676 = vpop.trf.xlu0
    %v5677 = vpop.trf.xlu0
    %v5678 = vpop.trf.xlu0
    %v5679 = vpop.trf.xlu0
    %v5680 = vpop.trf.xlu0
    %v5681 = vpop.trf.xlu0
    %v5682 = vpop.trf.xlu0
    %v5683 = vpop.trf.xlu0
    %v5684 = vpop.trf.xlu0
    %v5685 = vpop.trf.xlu0
    %v5686 = vpop.trf.xlu0
    %v5687 = vpop.trf.xlu0
    %v5688 = vpop.trf.xlu0
    %v5689 = vpop.trf.xlu0
    %v5690 = vpop.trf.xlu0
    %v5691 = vpop.trf.xlu0
    %v5693 = vsel %vm718, %v5644, 0
    %v5696 = vsel %vm718, %v5645, 0
    %v5699 = vsel %vm718, %v5646, 0
    %v5702 = vsel %vm718, %v5647, 0
    %v5705 = vsel %vm718, %v5648, 0
    %v5708 = vsel %vm718, %v5649, 0
    %v5711 = vsel %vm718, %v5650, 0
    %v5714 = vsel %vm718, %v5651, 0
    %v5717 = vsel %vm718, %v5652, 0
    %v5720 = vsel %vm718, %v5653, 0
    %v5723 = vsel %vm718, %v5654, 0
    %v5726 = vsel %vm718, %v5655, 0
    %v5729 = vsel %vm718, %v5656, 0
    %v5732 = vsel %vm718, %v5657, 0
    %v5735 = vsel %vm718, %v5658, 0
    %v5738 = vsel %vm718, %v5659, 0
    %v5741 = vsel %vm718, %v5676, 0
    %v5744 = vsel %vm718, %v5677, 0
    %v5747 = vsel %vm718, %v5678, 0
    %v5750 = vsel %vm718, %v5679, 0
    %v5753 = vsel %vm718, %v5680, 0
    %v5756 = vsel %vm718, %v5681, 0
    %v5759 = vsel %vm718, %v5682, 0
    %v5762 = vsel %vm718, %v5683, 0
    %v5765 = vsel %vm718, %v5684, 0
    %v5768 = vsel %vm718, %v5685, 0
    %v5771 = vsel %vm718, %v5686, 0
    %v5774 = vsel %vm718, %v5687, 0
    %v5777 = vsel %vm718, %v5688, 0
    %v5780 = vsel %vm718, %v5689, 0
    %v5783 = vsel %vm718, %v5690, 0
    %v5786 = vsel %vm718, %v5691, 0
    %5788 = vmatprep.subr.mxu0 %v4261
    %5789 = vmatpush1.msra.mxu0 %v4259
    %5790 = vmatprep.subr.mxu0 %v4267
    %5791 = vmatpush1.msra.mxu0 %v4265
    %5792 = vmatprep.subr.mxu0 %v4273
    %5793 = vmatpush1.msra.mxu0 %v4271
    %5794 = vmatprep.subr.mxu0 %v4279
    %5795 = vmatpush1.msra.mxu0 %v4277
    %5796 = vmatprep.subr.mxu0 0.0
    %5797 = vmatpush1.msra.mxu0 0.0
    %5798 = vmatprep.subr.mxu0 0.0
    %5799 = vmatpush1.msra.mxu0 0.0
    %5800 = vmatprep.subr.mxu0 0.0
    %5801 = vmatpush1.msra.mxu0 0.0
    %5802 = vmatprep.subr.mxu0 0.0
    %5803 = vmatpush1.msra.mxu0 0.0
    %5804 = vmatprep.subr.mxu0 0.0
    %5805 = vmatpush1.msra.mxu0 0.0
    %5806 = vmatprep.subr.mxu0 0.0
    %5807 = vmatpush1.msra.mxu0 0.0
    %5808 = vmatprep.subr.mxu0 0.0
    %5809 = vmatpush1.msra.mxu0 0.0
    %5810 = vmatprep.subr.mxu0 0.0
    %5811 = vmatpush1.msra.mxu0 0.0
    %5812 = vmatprep.subr.mxu0 0.0
    %5813 = vmatpush1.msra.mxu0 0.0
    %5814 = vmatprep.subr.mxu0 0.0
    %5815 = vmatpush1.msra.mxu0 0.0
    %5816 = vmatprep.subr.mxu0 0.0
    %5817 = vmatpush1.msra.mxu0 0.0
    %5818 = vmatprep.subr.mxu0 0.0
    %5819 = vmatpush1.msra.mxu0 0.0
    %5820 = vmatprep.subr.mxu0 0.0
    %5821 = vmatpush1.msra.mxu0 0.0
    %5822 = vmatprep.subr.mxu0 0.0
    %5823 = vmatpush1.msra.mxu0 0.0
    %5824 = vmatprep.subr.mxu0 0.0
    %5825 = vmatpush1.msra.mxu0 0.0
    %5826 = vmatprep.subr.mxu0 0.0
    %5827 = vmatpush1.msra.mxu0 0.0
    %5828 = vmatprep.subr.mxu0 0.0
    %5829 = vmatpush1.msra.mxu0 0.0
    %5830 = vmatprep.subr.mxu0 0.0
    %5831 = vmatpush1.msra.mxu0 0.0
    %5832 = vmatprep.subr.mxu0 0.0
    %5833 = vmatpush1.msra.mxu0 0.0
    %5834 = vmatprep.subr.mxu0 0.0
    %5835 = vmatpush1.msra.mxu0 0.0
    %5836 = vmatprep.subr.mxu0 0.0
    %5837 = vmatpush1.msra.mxu0 0.0
    %5838 = vmatprep.subr.mxu0 0.0
    %5839 = vmatpush1.msra.mxu0 0.0
    %5840 = vmatprep.subr.mxu0 0.0
    %5841 = vmatpush1.msra.mxu0 0.0
    %5842 = vmatprep.subr.mxu0 0.0
    %5843 = vmatpush1.msra.mxu0 0.0
    %5844 = vmatprep.subr.mxu0 0.0
    %5845 = vmatpush1.msra.mxu0 0.0
    %5846 = vmatprep.subr.mxu0 0.0
    %5847 = vmatpush1.msra.mxu0 0.0
    %5848 = vmatprep.subr.mxu0 0.0
    %5849 = vmatpush1.msra.mxu0 0.0
    %5850 = vmatprep.subr.mxu0 0.0
    %5851 = vmatpush1.msra.mxu0 0.0
    %5852 = vmatprep.mubr.f32.mxu0 0.0
    %5853 = vmatmul.mubr.f32.gmra.mrb[0].mxu0 %v5693
    %v5854 = vpop.f32.mrb[0].mxu0
    %v5855 = vadd.f32 0.0, %v5854
    %v5856 = vpop.f32.mrb[0].mxu0
    %v5857 = vadd.f32 0.0, %v5856
    %5858 = vmatprep.mubr.f32.mxu0 0.0
    %5859 = vmatmul.mubr.f32.gmra.mrb[0].mxu0 %v5696
    %v5860 = vpop.f32.mrb[0].mxu0
    %v5861 = vadd.f32 0.0, %v5860
    %v5862 = vpop.f32.mrb[0].mxu0
    %v5863 = vadd.f32 0.0, %v5862
    %5864 = vmatprep.mubr.f32.mxu0 0.0
    %5865 = vmatmul.mubr.f32.gmra.mrb[0].mxu0 %v5699
    %v5866 = vpop.f32.mrb[0].mxu0
    %v5867 = vadd.f32 0.0, %v5866
    %v5868 = vpop.f32.mrb[0].mxu0
    %v5869 = vadd.f32 0.0, %v5868
    %5870 = vmatprep.mubr.f32.mxu0 0.0
    %5871 = vmatmul.mubr.f32.gmra.mrb[0].mxu0 %v5702
    %v5872 = vpop.f32.mrb[0].mxu0
    %v5873 = vadd.f32 0.0, %v5872
    %v5874 = vpop.f32.mrb[0].mxu0
    %v5875 = vadd.f32 0.0, %v5874
    %5876 = vmatprep.mubr.f32.mxu0 0.0
    %5877 = vmatmul.mubr.f32.gmra.mrb[0].mxu0 %v5705
    %v5878 = vpop.f32.mrb[0].mxu0
    %v5879 = vadd.f32 0.0, %v5878
    %v5880 = vpop.f32.mrb[0].mxu0
    %v5881 = vadd.f32 0.0, %v5880
    %5882 = vmatprep.mubr.f32.mxu0 0.0
    %5883 = vmatmul.mubr.f32.gmra.mrb[0].mxu0 %v5708
    %v5884 = vpop.f32.mrb[0].mxu0
    %v5885 = vadd.f32 0.0, %v5884
    %v5886 = vpop.f32.mrb[0].mxu0
    %v5887 = vadd.f32 0.0, %v5886
    %5888 = vmatprep.mubr.f32.mxu0 0.0
    %5889 = vmatmul.mubr.f32.gmra.mrb[0].mxu0 %v5711
    %v5890 = vpop.f32.mrb[0].mxu0
    %v5891 = vadd.f32 0.0, %v5890
    %v5892 = vpop.f32.mrb[0].mxu0
    %v5893 = vadd.f32 0.0, %v5892
    %5894 = vmatprep.mubr.f32.mxu0 0.0
    %5895 = vmatmul.mubr.f32.gmra.mrb[0].mxu0 %v5714
    %v5896 = vpop.f32.mrb[0].mxu0
    %v5897 = vadd.f32 0.0, %v5896
    %v5898 = vpop.f32.mrb[0].mxu0
    %v5899 = vadd.f32 0.0, %v5898
    %5900 = vmatprep.mubr.f32.mxu0 0.0
    %5901 = vmatmul.mubr.f32.gmra.mrb[0].mxu0 %v5717
    %v5902 = vpop.f32.mrb[0].mxu0
    %v5903 = vadd.f32 0.0, %v5902
    %v5904 = vpop.f32.mrb[0].mxu0
    %v5905 = vadd.f32 0.0, %v5904
    %5906 = vmatprep.mubr.f32.mxu0 0.0
    %5907 = vmatmul.mubr.f32.gmra.mrb[0].mxu0 %v5720
    %v5908 = vpop.f32.mrb[0].mxu0
    %v5909 = vadd.f32 0.0, %v5908
    %v5910 = vpop.f32.mrb[0].mxu0
    %v5911 = vadd.f32 0.0, %v5910
    %5912 = vmatprep.mubr.f32.mxu0 0.0
    %5913 = vmatmul.mubr.f32.gmra.mrb[0].mxu0 %v5723
    %v5914 = vpop.f32.mrb[0].mxu0
    %v5915 = vadd.f32 0.0, %v5914
    %v5916 = vpop.f32.mrb[0].mxu0
    %v5917 = vadd.f32 0.0, %v5916
    %5918 = vmatprep.mubr.f32.mxu0 0.0
    %5919 = vmatmul.mubr.f32.gmra.mrb[0].mxu0 %v5726
    %v5920 = vpop.f32.mrb[0].mxu0
    %v5921 = vadd.f32 0.0, %v5920
    %v5922 = vpop.f32.mrb[0].mxu0
    %v5923 = vadd.f32 0.0, %v5922
    %5924 = vmatprep.mubr.f32.mxu0 0.0
    %5925 = vmatmul.mubr.f32.gmra.mrb[0].mxu0 %v5729
    %v5926 = vpop.f32.mrb[0].mxu0
    %v5927 = vadd.f32 0.0, %v5926
    %v5928 = vpop.f32.mrb[0].mxu0
    %v5929 = vadd.f32 0.0, %v5928
    %5930 = vmatprep.mubr.f32.mxu0 0.0
    %5931 = vmatmul.mubr.f32.gmra.mrb[0].mxu0 %v5732
    %v5932 = vpop.f32.mrb[0].mxu0
    %v5933 = vadd.f32 0.0, %v5932
    %v5934 = vpop.f32.mrb[0].mxu0
    %v5935 = vadd.f32 0.0, %v5934
    %5936 = vmatprep.mubr.f32.mxu0 0.0
    %5937 = vmatmul.mubr.f32.gmra.mrb[0].mxu0 %v5735
    %v5938 = vpop.f32.mrb[0].mxu0
    %v5939 = vadd.f32 0.0, %v5938
    %v5940 = vpop.f32.mrb[0].mxu0
    %v5941 = vadd.f32 0.0, %v5940
    %5942 = vmatprep.mubr.f32.mxu0 0.0
    %5943 = vmatmul.mubr.f32.gmra.mrb[0].mxu0 %v5738
    %v5944 = vpop.f32.mrb[0].mxu0
    %v5945 = vadd.f32 0.0, %v5944
    %v5946 = vpop.f32.mrb[0].mxu0
    %v5947 = vadd.f32 0.0, %v5946
    %5948 = vmatprep.mubr.f32.mxu0 0.0
    %5949 = vmatmul.mubr.f32.gmra.mrb[0].mxu0 %v5741
    %v5950 = vpop.f32.mrb[0].mxu0
    %v5951 = vadd.f32 0.0, %v5950
    %v5952 = vpop.f32.mrb[0].mxu0
    %v5953 = vadd.f32 0.0, %v5952
    %5954 = vmatprep.mubr.f32.mxu0 0.0
    %5955 = vmatmul.mubr.f32.gmra.mrb[0].mxu0 %v5744
    %v5956 = vpop.f32.mrb[0].mxu0
    %v5957 = vadd.f32 0.0, %v5956
    %v5958 = vpop.f32.mrb[0].mxu0
    %v5959 = vadd.f32 0.0, %v5958
    %5960 = vmatprep.mubr.f32.mxu0 0.0
    %5961 = vmatmul.mubr.f32.gmra.mrb[0].mxu0 %v5747
    %v5962 = vpop.f32.mrb[0].mxu0
    %v5963 = vadd.f32 0.0, %v5962
    %v5964 = vpop.f32.mrb[0].mxu0
    %v5965 = vadd.f32 0.0, %v5964
    %5966 = vmatprep.mubr.f32.mxu0 0.0
    %5967 = vmatmul.mubr.f32.gmra.mrb[0].mxu0 %v5750
    %v5968 = vpop.f32.mrb[0].mxu0
    %v5969 = vadd.f32 0.0, %v5968
    %v5970 = vpop.f32.mrb[0].mxu0
    %v5971 = vadd.f32 0.0, %v5970
    %5972 = vmatprep.mubr.f32.mxu0 0.0
    %5973 = vmatmul.mubr.f32.gmra.mrb[0].mxu0 %v5753
    %v5974 = vpop.f32.mrb[0].mxu0
    %v5975 = vadd.f32 0.0, %v5974
    %v5976 = vpop.f32.mrb[0].mxu0
    %v5977 = vadd.f32 0.0, %v5976
    %5978 = vmatprep.mubr.f32.mxu0 0.0
    %5979 = vmatmul.mubr.f32.gmra.mrb[0].mxu0 %v5756
    %v5980 = vpop.f32.mrb[0].mxu0
    %v5981 = vadd.f32 0.0, %v5980
    %v5982 = vpop.f32.mrb[0].mxu0
    %v5983 = vadd.f32 0.0, %v5982
    %5984 = vmatprep.mubr.f32.mxu0 0.0
    %5985 = vmatmul.mubr.f32.gmra.mrb[0].mxu0 %v5759
    %v5986 = vpop.f32.mrb[0].mxu0
    %v5987 = vadd.f32 0.0, %v5986
    %v5988 = vpop.f32.mrb[0].mxu0
    %v5989 = vadd.f32 0.0, %v5988
    %5990 = vmatprep.mubr.f32.mxu0 0.0
    %5991 = vmatmul.mubr.f32.gmra.mrb[0].mxu0 %v5762
    %v5992 = vpop.f32.mrb[0].mxu0
    %v5993 = vadd.f32 0.0, %v5992
    %v5994 = vpop.f32.mrb[0].mxu0
    %v5995 = vadd.f32 0.0, %v5994
    %5996 = vmatprep.mubr.f32.mxu0 0.0
    %5997 = vmatmul.mubr.f32.gmra.mrb[0].mxu0 %v5765
    %v5998 = vpop.f32.mrb[0].mxu0
    %v5999 = vadd.f32 0.0, %v5998
    %v6000 = vpop.f32.mrb[0].mxu0
    %v6001 = vadd.f32 0.0, %v6000
    %6002 = vmatprep.mubr.f32.mxu0 0.0
    %6003 = vmatmul.mubr.f32.gmra.mrb[0].mxu0 %v5768
    %v6004 = vpop.f32.mrb[0].mxu0
    %v6005 = vadd.f32 0.0, %v6004
    %v6006 = vpop.f32.mrb[0].mxu0
    %v6007 = vadd.f32 0.0, %v6006
    %6008 = vmatprep.mubr.f32.mxu0 0.0
    %6009 = vmatmul.mubr.f32.gmra.mrb[0].mxu0 %v5771
    %v6010 = vpop.f32.mrb[0].mxu0
    %v6011 = vadd.f32 0.0, %v6010
    %v6012 = vpop.f32.mrb[0].mxu0
    %v6013 = vadd.f32 0.0, %v6012
    %6014 = vmatprep.mubr.f32.mxu0 0.0
    %6015 = vmatmul.mubr.f32.gmra.mrb[0].mxu0 %v5774
    %v6016 = vpop.f32.mrb[0].mxu0
    %v6017 = vadd.f32 0.0, %v6016
    %v6018 = vpop.f32.mrb[0].mxu0
    %v6019 = vadd.f32 0.0, %v6018
    %6020 = vmatprep.mubr.f32.mxu0 0.0
    %6021 = vmatmul.mubr.f32.gmra.mrb[0].mxu0 %v5777
    %v6022 = vpop.f32.mrb[0].mxu0
    %v6023 = vadd.f32 0.0, %v6022
    %v6024 = vpop.f32.mrb[0].mxu0
    %v6025 = vadd.f32 0.0, %v6024
    %6026 = vmatprep.mubr.f32.mxu0 0.0
    %6027 = vmatmul.mubr.f32.gmra.mrb[0].mxu0 %v5780
    %v6028 = vpop.f32.mrb[0].mxu0
    %v6029 = vadd.f32 0.0, %v6028
    %v6030 = vpop.f32.mrb[0].mxu0
    %v6031 = vadd.f32 0.0, %v6030
    %6032 = vmatprep.mubr.f32.mxu0 0.0
    %6033 = vmatmul.mubr.f32.gmra.mrb[0].mxu0 %v5783
    %v6034 = vpop.f32.mrb[0].mxu0
    %v6035 = vadd.f32 0.0, %v6034
    %v6036 = vpop.f32.mrb[0].mxu0
    %v6037 = vadd.f32 0.0, %v6036
    %6038 = vmatprep.mubr.f32.mxu0 0.0
    %6039 = vmatmul.mubr.f32.gmra.mrb[0].mxu0 %v5786
    %v6040 = vpop.f32.mrb[0].mxu0
    %v6041 = vadd.f32 0.0, %v6040
    %v6042 = vpop.f32.mrb[0].mxu0
    %v6043 = vadd.f32 0.0, %v6042
    %6044 = vdwg.mxu0
    %v6045 = vmax.f32 %v4604, %v4606
    %6046 = vmax.xlane.f32.xlu0 %v6045
    %v6047 = vpop.xlane.xlu0 %6046
    %v6048 = vmax.f32 %v4610, %v4612
    %6049 = vmax.xlane.f32.xlu0 %v6048
    %v6050 = vpop.xlane.xlu0 %6049
    %v6051 = vmax.f32 %v4616, %v4618
    %6052 = vmax.xlane.f32.xlu0 %v6051
    %v6053 = vpop.xlane.xlu0 %6052
    %v6054 = vmax.f32 %v4622, %v4624
    %6055 = vmax.xlane.f32.xlu0 %v6054
    %v6056 = vpop.xlane.xlu0 %6055
    %v6057 = vmax.f32 %v4628, %v4630
    %6058 = vmax.xlane.f32.xlu0 %v6057
    %v6059 = vpop.xlane.xlu0 %6058
    %v6060 = vmax.f32 %v4634, %v4636
    %6061 = vmax.xlane.f32.xlu0 %v6060
    %v6062 = vpop.xlane.xlu0 %6061
    %v6063 = vmax.f32 %v4640, %v4642
    %6064 = vmax.xlane.f32.xlu0 %v6063
    %v6065 = vpop.xlane.xlu0 %6064
    %v6066 = vmax.f32 %v4646, %v4648
    %6067 = vmax.xlane.f32.xlu0 %v6066
    %v6068 = vpop.xlane.xlu0 %6067
    %v6069 = vmax.f32 %v4652, %v4654
    %6070 = vmax.xlane.f32.xlu0 %v6069
    %v6071 = vpop.xlane.xlu0 %6070
    %v6072 = vmax.f32 %v4658, %v4660
    %6073 = vmax.xlane.f32.xlu0 %v6072
    %v6074 = vpop.xlane.xlu0 %6073
    %v6075 = vmax.f32 %v4664, %v4666
    %6076 = vmax.xlane.f32.xlu0 %v6075
    %v6077 = vpop.xlane.xlu0 %6076
    %v6078 = vmax.f32 %v4670, %v4672
    %6079 = vmax.xlane.f32.xlu0 %v6078
    %v6080 = vpop.xlane.xlu0 %6079
    %v6081 = vmax.f32 %v4676, %v4678
    %6082 = vmax.xlane.f32.xlu0 %v6081
    %v6083 = vpop.xlane.xlu0 %6082
    %v6084 = vmax.f32 %v4682, %v4684
    %6085 = vmax.xlane.f32.xlu0 %v6084
    %v6086 = vpop.xlane.xlu0 %6085
    %v6087 = vmax.f32 %v4688, %v4690
    %6088 = vmax.xlane.f32.xlu0 %v6087
    %v6089 = vpop.xlane.xlu0 %6088
    %v6090 = vmax.f32 %v4694, %v4696
    %6091 = vmax.xlane.f32.xlu0 %v6090
    %v6092 = vpop.xlane.xlu0 %6091
    %v6093 = vmax.f32 %v4700, %v4702
    %6094 = vmax.xlane.f32.xlu0 %v6093
    %v6095 = vpop.xlane.xlu0 %6094
    %v6096 = vmax.f32 %v4706, %v4708
    %6097 = vmax.xlane.f32.xlu0 %v6096
    %v6098 = vpop.xlane.xlu0 %6097
    %v6099 = vmax.f32 %v4712, %v4714
    %6100 = vmax.xlane.f32.xlu0 %v6099
    %v6101 = vpop.xlane.xlu0 %6100
    %v6102 = vmax.f32 %v4718, %v4720
    %6103 = vmax.xlane.f32.xlu0 %v6102
    %v6104 = vpop.xlane.xlu0 %6103
    %v6105 = vmax.f32 %v4724, %v4726
    %6106 = vmax.xlane.f32.xlu0 %v6105
    %v6107 = vpop.xlane.xlu0 %6106
    %v6108 = vmax.f32 %v4730, %v4732
    %6109 = vmax.xlane.f32.xlu0 %v6108
    %v6110 = vpop.xlane.xlu0 %6109
    %v6111 = vmax.f32 %v4736, %v4738
    %6112 = vmax.xlane.f32.xlu0 %v6111
    %v6113 = vpop.xlane.xlu0 %6112
    %v6114 = vmax.f32 %v4742, %v4744
    %6115 = vmax.xlane.f32.xlu0 %v6114
    %v6116 = vpop.xlane.xlu0 %6115
    %v6117 = vmax.f32 %v4748, %v4750
    %6118 = vmax.xlane.f32.xlu0 %v6117
    %v6119 = vpop.xlane.xlu0 %6118
    %v6120 = vmax.f32 %v4754, %v4756
    %6121 = vmax.xlane.f32.xlu0 %v6120
    %v6122 = vpop.xlane.xlu0 %6121
    %v6123 = vmax.f32 %v4760, %v4762
    %6124 = vmax.xlane.f32.xlu0 %v6123
    %v6125 = vpop.xlane.xlu0 %6124
    %v6126 = vmax.f32 %v4766, %v4768
    %6127 = vmax.xlane.f32.xlu0 %v6126
    %v6128 = vpop.xlane.xlu0 %6127
    %v6129 = vmax.f32 %v4772, %v4774
    %6130 = vmax.xlane.f32.xlu0 %v6129
    %v6131 = vpop.xlane.xlu0 %6130
    %v6132 = vmax.f32 %v4778, %v4780
    %6133 = vmax.xlane.f32.xlu0 %v6132
    %v6134 = vpop.xlane.xlu0 %6133
    %v6135 = vmax.f32 %v4784, %v4786
    %6136 = vmax.xlane.f32.xlu0 %v6135
    %v6137 = vpop.xlane.xlu0 %6136
    %v6138 = vmax.f32 %v4790, %v4792
    %6139 = vmax.xlane.f32.xlu0 %v6138
    %v6140 = vpop.xlane.xlu0 %6139
    %v6141 = vmax.f32 %v5021, %v5023
    %6142 = vmax.xlane.f32.xlu0 %v6141
    %v6143 = vpop.xlane.xlu0 %6142
    %v6144 = vmax.f32 %v5027, %v5029
    %6145 = vmax.xlane.f32.xlu0 %v6144
    %v6146 = vpop.xlane.xlu0 %6145
    %v6147 = vmax.f32 %v5033, %v5035
    %6148 = vmax.xlane.f32.xlu0 %v6147
    %v6149 = vpop.xlane.xlu0 %6148
    %v6150 = vmax.f32 %v5039, %v5041
    %6151 = vmax.xlane.f32.xlu0 %v6150
    %v6152 = vpop.xlane.xlu0 %6151
    %v6153 = vmax.f32 %v5045, %v5047
    %6154 = vmax.xlane.f32.xlu0 %v6153
    %v6155 = vpop.xlane.xlu0 %6154
    %v6156 = vmax.f32 %v5051, %v5053
    %6157 = vmax.xlane.f32.xlu0 %v6156
    %v6158 = vpop.xlane.xlu0 %6157
    %v6159 = vmax.f32 %v5057, %v5059
    %6160 = vmax.xlane.f32.xlu0 %v6159
    %v6161 = vpop.xlane.xlu0 %6160
    %v6162 = vmax.f32 %v5063, %v5065
    %6163 = vmax.xlane.f32.xlu0 %v6162
    %v6164 = vpop.xlane.xlu0 %6163
    %v6165 = vmax.f32 %v5069, %v5071
    %6166 = vmax.xlane.f32.xlu0 %v6165
    %v6167 = vpop.xlane.xlu0 %6166
    %v6168 = vmax.f32 %v5075, %v5077
    %6169 = vmax.xlane.f32.xlu0 %v6168
    %v6170 = vpop.xlane.xlu0 %6169
    %v6171 = vmax.f32 %v5081, %v5083
    %6172 = vmax.xlane.f32.xlu0 %v6171
    %v6173 = vpop.xlane.xlu0 %6172
    %v6174 = vmax.f32 %v5087, %v5089
    %6175 = vmax.xlane.f32.xlu0 %v6174
    %v6176 = vpop.xlane.xlu0 %6175
    %v6177 = vmax.f32 %v5093, %v5095
    %6178 = vmax.xlane.f32.xlu0 %v6177
    %v6179 = vpop.xlane.xlu0 %6178
    %v6180 = vmax.f32 %v5099, %v5101
    %6181 = vmax.xlane.f32.xlu0 %v6180
    %v6182 = vpop.xlane.xlu0 %6181
    %v6183 = vmax.f32 %v5105, %v5107
    %6184 = vmax.xlane.f32.xlu0 %v6183
    %v6185 = vpop.xlane.xlu0 %6184
    %v6186 = vmax.f32 %v5111, %v5113
    %6187 = vmax.xlane.f32.xlu0 %v6186
    %v6188 = vpop.xlane.xlu0 %6187
    %v6189 = vmax.f32 %v5117, %v5119
    %6190 = vmax.xlane.f32.xlu0 %v6189
    %v6191 = vpop.xlane.xlu0 %6190
    %v6192 = vmax.f32 %v5123, %v5125
    %6193 = vmax.xlane.f32.xlu0 %v6192
    %v6194 = vpop.xlane.xlu0 %6193
    %v6195 = vmax.f32 %v5129, %v5131
    %6196 = vmax.xlane.f32.xlu0 %v6195
    %v6197 = vpop.xlane.xlu0 %6196
    %v6198 = vmax.f32 %v5135, %v5137
    %6199 = vmax.xlane.f32.xlu0 %v6198
    %v6200 = vpop.xlane.xlu0 %6199
    %v6201 = vmax.f32 %v5141, %v5143
    %6202 = vmax.xlane.f32.xlu0 %v6201
    %v6203 = vpop.xlane.xlu0 %6202
    %v6204 = vmax.f32 %v5147, %v5149
    %6205 = vmax.xlane.f32.xlu0 %v6204
    %v6206 = vpop.xlane.xlu0 %6205
    %v6207 = vmax.f32 %v5153, %v5155
    %6208 = vmax.xlane.f32.xlu0 %v6207
    %v6209 = vpop.xlane.xlu0 %6208
    %v6210 = vmax.f32 %v5159, %v5161
    %6211 = vmax.xlane.f32.xlu0 %v6210
    %v6212 = vpop.xlane.xlu0 %6211
    %v6213 = vmax.f32 %v5165, %v5167
    %6214 = vmax.xlane.f32.xlu0 %v6213
    %v6215 = vpop.xlane.xlu0 %6214
    %v6216 = vmax.f32 %v5171, %v5173
    %6217 = vmax.xlane.f32.xlu0 %v6216
    %v6218 = vpop.xlane.xlu0 %6217
    %v6219 = vmax.f32 %v5177, %v5179
    %6220 = vmax.xlane.f32.xlu0 %v6219
    %v6221 = vpop.xlane.xlu0 %6220
    %v6222 = vmax.f32 %v5183, %v5185
    %6223 = vmax.xlane.f32.xlu0 %v6222
    %v6224 = vpop.xlane.xlu0 %6223
    %v6225 = vmax.f32 %v5189, %v5191
    %6226 = vmax.xlane.f32.xlu0 %v6225
    %v6227 = vpop.xlane.xlu0 %6226
    %v6228 = vmax.f32 %v5195, %v5197
    %6229 = vmax.xlane.f32.xlu0 %v6228
    %v6230 = vpop.xlane.xlu0 %6229
    %v6231 = vmax.f32 %v5201, %v5203
    %6232 = vmax.xlane.f32.xlu0 %v6231
    %v6233 = vpop.xlane.xlu0 %6232
    %v6234 = vmax.f32 %v5207, %v5209
    %6235 = vmax.xlane.f32.xlu0 %v6234
    %v6236 = vpop.xlane.xlu0 %6235
    %v6237 = vmax.f32 %v5438, %v5440
    %6238 = vmax.xlane.f32.xlu0 %v6237
    %v6239 = vpop.xlane.xlu0 %6238
    %v6240 = vmax.f32 %v5444, %v5446
    %6241 = vmax.xlane.f32.xlu0 %v6240
    %v6242 = vpop.xlane.xlu0 %6241
    %v6243 = vmax.f32 %v5450, %v5452
    %6244 = vmax.xlane.f32.xlu0 %v6243
    %v6245 = vpop.xlane.xlu0 %6244
    %v6246 = vmax.f32 %v5456, %v5458
    %6247 = vmax.xlane.f32.xlu0 %v6246
    %v6248 = vpop.xlane.xlu0 %6247
    %v6249 = vmax.f32 %v5462, %v5464
    %6250 = vmax.xlane.f32.xlu0 %v6249
    %v6251 = vpop.xlane.xlu0 %6250
    %v6252 = vmax.f32 %v5468, %v5470
    %6253 = vmax.xlane.f32.xlu0 %v6252
    %v6254 = vpop.xlane.xlu0 %6253
    %v6255 = vmax.f32 %v5474, %v5476
    %6256 = vmax.xlane.f32.xlu0 %v6255
    %v6257 = vpop.xlane.xlu0 %6256
    %v6258 = vmax.f32 %v5480, %v5482
    %6259 = vmax.xlane.f32.xlu0 %v6258
    %v6260 = vpop.xlane.xlu0 %6259
    %v6261 = vmax.f32 %v5486, %v5488
    %6262 = vmax.xlane.f32.xlu0 %v6261
    %v6263 = vpop.xlane.xlu0 %6262
    %v6264 = vmax.f32 %v5492, %v5494
    %6265 = vmax.xlane.f32.xlu0 %v6264
    %v6266 = vpop.xlane.xlu0 %6265
    %v6267 = vmax.f32 %v5498, %v5500
    %6268 = vmax.xlane.f32.xlu0 %v6267
    %v6269 = vpop.xlane.xlu0 %6268
    %v6270 = vmax.f32 %v5504, %v5506
    %6271 = vmax.xlane.f32.xlu0 %v6270
    %v6272 = vpop.xlane.xlu0 %6271
    %v6273 = vmax.f32 %v5510, %v5512
    %6274 = vmax.xlane.f32.xlu0 %v6273
    %v6275 = vpop.xlane.xlu0 %6274
    %v6276 = vmax.f32 %v5516, %v5518
    %6277 = vmax.xlane.f32.xlu0 %v6276
    %v6278 = vpop.xlane.xlu0 %6277
    %v6279 = vmax.f32 %v5522, %v5524
    %6280 = vmax.xlane.f32.xlu0 %v6279
    %v6281 = vpop.xlane.xlu0 %6280
    %v6282 = vmax.f32 %v5528, %v5530
    %6283 = vmax.xlane.f32.xlu0 %v6282
    %v6284 = vpop.xlane.xlu0 %6283
    %v6285 = vmax.f32 %v5534, %v5536
    %6286 = vmax.xlane.f32.xlu0 %v6285
    %v6287 = vpop.xlane.xlu0 %6286
    %v6288 = vmax.f32 %v5540, %v5542
    %6289 = vmax.xlane.f32.xlu0 %v6288
    %v6290 = vpop.xlane.xlu0 %6289
    %v6291 = vmax.f32 %v5546, %v5548
    %6292 = vmax.xlane.f32.xlu0 %v6291
    %v6293 = vpop.xlane.xlu0 %6292
    %v6294 = vmax.f32 %v5552, %v5554
    %6295 = vmax.xlane.f32.xlu0 %v6294
    %v6296 = vpop.xlane.xlu0 %6295
    %v6297 = vmax.f32 %v5558, %v5560
    %6298 = vmax.xlane.f32.xlu0 %v6297
    %v6299 = vpop.xlane.xlu0 %6298
    %v6300 = vmax.f32 %v5564, %v5566
    %6301 = vmax.xlane.f32.xlu0 %v6300
    %v6302 = vpop.xlane.xlu0 %6301
    %v6303 = vmax.f32 %v5570, %v5572
    %6304 = vmax.xlane.f32.xlu0 %v6303
    %v6305 = vpop.xlane.xlu0 %6304
    %v6306 = vmax.f32 %v5576, %v5578
    %6307 = vmax.xlane.f32.xlu0 %v6306
    %v6308 = vpop.xlane.xlu0 %6307
    %v6309 = vmax.f32 %v5582, %v5584
    %6310 = vmax.xlane.f32.xlu0 %v6309
    %v6311 = vpop.xlane.xlu0 %6310
    %v6312 = vmax.f32 %v5588, %v5590
    %6313 = vmax.xlane.f32.xlu0 %v6312
    %v6314 = vpop.xlane.xlu0 %6313
    %v6315 = vmax.f32 %v5594, %v5596
    %6316 = vmax.xlane.f32.xlu0 %v6315
    %v6317 = vpop.xlane.xlu0 %6316
    %v6318 = vmax.f32 %v5600, %v5602
    %6319 = vmax.xlane.f32.xlu0 %v6318
    %v6320 = vpop.xlane.xlu0 %6319
    %v6321 = vmax.f32 %v5606, %v5608
    %6322 = vmax.xlane.f32.xlu0 %v6321
    %v6323 = vpop.xlane.xlu0 %6322
    %v6324 = vmax.f32 %v5612, %v5614
    %6325 = vmax.xlane.f32.xlu0 %v6324
    %v6326 = vpop.xlane.xlu0 %6325
    %v6327 = vmax.f32 %v5618, %v5620
    %6328 = vmax.xlane.f32.xlu0 %v6327
    %v6329 = vpop.xlane.xlu0 %6328
    %v6330 = vmax.f32 %v5624, %v5626
    %6331 = vmax.xlane.f32.xlu0 %v6330
    %v6332 = vpop.xlane.xlu0 %6331
    %v6333 = vmax.f32 %v5855, %v5857
    %6334 = vmax.xlane.f32.xlu0 %v6333
    %v6335 = vpop.xlane.xlu0 %6334
    %v6336 = vmax.f32 %v5861, %v5863
    %6337 = vmax.xlane.f32.xlu0 %v6336
    %v6338 = vpop.xlane.xlu0 %6337
    %v6339 = vmax.f32 %v5867, %v5869
    %6340 = vmax.xlane.f32.xlu0 %v6339
    %v6341 = vpop.xlane.xlu0 %6340
    %v6342 = vmax.f32 %v5873, %v5875
    %6343 = vmax.xlane.f32.xlu0 %v6342
    %v6344 = vpop.xlane.xlu0 %6343
    %v6345 = vmax.f32 %v5879, %v5881
    %6346 = vmax.xlane.f32.xlu0 %v6345
    %v6347 = vpop.xlane.xlu0 %6346
    %v6348 = vmax.f32 %v5885, %v5887
    %6349 = vmax.xlane.f32.xlu0 %v6348
    %v6350 = vpop.xlane.xlu0 %6349
    %v6351 = vmax.f32 %v5891, %v5893
    %6352 = vmax.xlane.f32.xlu0 %v6351
    %v6353 = vpop.xlane.xlu0 %6352
    %v6354 = vmax.f32 %v5897, %v5899
    %6355 = vmax.xlane.f32.xlu0 %v6354
    %v6356 = vpop.xlane.xlu0 %6355
    %v6357 = vmax.f32 %v5903, %v5905
    %6358 = vmax.xlane.f32.xlu0 %v6357
    %v6359 = vpop.xlane.xlu0 %6358
    %v6360 = vmax.f32 %v5909, %v5911
    %6361 = vmax.xlane.f32.xlu0 %v6360
    %v6362 = vpop.xlane.xlu0 %6361
    %v6363 = vmax.f32 %v5915, %v5917
    %6364 = vmax.xlane.f32.xlu0 %v6363
    %v6365 = vpop.xlane.xlu0 %6364
    %v6366 = vmax.f32 %v5921, %v5923
    %6367 = vmax.xlane.f32.xlu0 %v6366
    %v6368 = vpop.xlane.xlu0 %6367
    %v6369 = vmax.f32 %v5927, %v5929
    %6370 = vmax.xlane.f32.xlu0 %v6369
    %v6371 = vpop.xlane.xlu0 %6370
    %v6372 = vmax.f32 %v5933, %v5935
    %6373 = vmax.xlane.f32.xlu0 %v6372
    %v6374 = vpop.xlane.xlu0 %6373
    %v6375 = vmax.f32 %v5939, %v5941
    %6376 = vmax.xlane.f32.xlu0 %v6375
    %v6377 = vpop.xlane.xlu0 %6376
    %v6378 = vmax.f32 %v5945, %v5947
    %6379 = vmax.xlane.f32.xlu0 %v6378
    %v6380 = vpop.xlane.xlu0 %6379
    %v6381 = vmax.f32 %v5951, %v5953
    %6382 = vmax.xlane.f32.xlu0 %v6381
    %v6383 = vpop.xlane.xlu0 %6382
    %v6384 = vmax.f32 %v5957, %v5959
    %6385 = vmax.xlane.f32.xlu0 %v6384
    %v6386 = vpop.xlane.xlu0 %6385
    %v6387 = vmax.f32 %v5963, %v5965
    %6388 = vmax.xlane.f32.xlu0 %v6387
    %v6389 = vpop.xlane.xlu0 %6388
    %v6390 = vmax.f32 %v5969, %v5971
    %6391 = vmax.xlane.f32.xlu0 %v6390
    %v6392 = vpop.xlane.xlu0 %6391
    %v6393 = vmax.f32 %v5975, %v5977
    %6394 = vmax.xlane.f32.xlu0 %v6393
    %v6395 = vpop.xlane.xlu0 %6394
    %v6396 = vmax.f32 %v5981, %v5983
    %6397 = vmax.xlane.f32.xlu0 %v6396
    %v6398 = vpop.xlane.xlu0 %6397
    %v6399 = vmax.f32 %v5987, %v5989
    %6400 = vmax.xlane.f32.xlu0 %v6399
    %v6401 = vpop.xlane.xlu0 %6400
    %v6402 = vmax.f32 %v5993, %v5995
    %6403 = vmax.xlane.f32.xlu0 %v6402
    %v6404 = vpop.xlane.xlu0 %6403
    %v6405 = vmax.f32 %v5999, %v6001
    %6406 = vmax.xlane.f32.xlu0 %v6405
    %v6407 = vpop.xlane.xlu0 %6406
    %v6408 = vmax.f32 %v6005, %v6007
    %6409 = vmax.xlane.f32.xlu0 %v6408
    %v6410 = vpop.xlane.xlu0 %6409
    %v6411 = vmax.f32 %v6011, %v6013
    %6412 = vmax.xlane.f32.xlu0 %v6411
    %v6413 = vpop.xlane.xlu0 %6412
    %v6414 = vmax.f32 %v6017, %v6019
    %6415 = vmax.xlane.f32.xlu0 %v6414
    %v6416 = vpop.xlane.xlu0 %6415
    %v6417 = vmax.f32 %v6023, %v6025
    %6418 = vmax.xlane.f32.xlu0 %v6417
    %v6419 = vpop.xlane.xlu0 %6418
    %v6420 = vmax.f32 %v6029, %v6031
    %6421 = vmax.xlane.f32.xlu0 %v6420
    %v6422 = vpop.xlane.xlu0 %6421
    %v6423 = vmax.f32 %v6035, %v6037
    %6424 = vmax.xlane.f32.xlu0 %v6423
    %v6425 = vpop.xlane.xlu0 %6424
    %v6426 = vmax.f32 %v6041, %v6043
    %6427 = vmax.xlane.f32.xlu0 %v6426
    %v6428 = vpop.xlane.xlu0 %6427
    %v6429 = vsub.f32 %v4604, %v6047
    %v6430 = vsub.f32 %v4606, %v6047
    %v6431 = vsub.f32 %v4610, %v6050
    %v6432 = vsub.f32 %v4612, %v6050
    %v6433 = vsub.f32 %v4616, %v6053
    %v6434 = vsub.f32 %v4618, %v6053
    %v6435 = vsub.f32 %v4622, %v6056
    %v6436 = vsub.f32 %v4624, %v6056
    %v6437 = vsub.f32 %v4628, %v6059
    %v6438 = vsub.f32 %v4630, %v6059
    %v6439 = vsub.f32 %v4634, %v6062
    %v6440 = vsub.f32 %v4636, %v6062
    %v6441 = vsub.f32 %v4640, %v6065
    %v6442 = vsub.f32 %v4642, %v6065
    %v6443 = vsub.f32 %v4646, %v6068
    %v6444 = vsub.f32 %v4648, %v6068
    %v6445 = vsub.f32 %v4652, %v6071
    %v6446 = vsub.f32 %v4654, %v6071
    %v6447 = vsub.f32 %v4658, %v6074
    %v6448 = vsub.f32 %v4660, %v6074
    %v6449 = vsub.f32 %v4664, %v6077
    %v6450 = vsub.f32 %v4666, %v6077
    %v6451 = vsub.f32 %v4670, %v6080
    %v6452 = vsub.f32 %v4672, %v6080
    %v6453 = vsub.f32 %v4676, %v6083
    %v6454 = vsub.f32 %v4678, %v6083
    %v6455 = vsub.f32 %v4682, %v6086
    %v6456 = vsub.f32 %v4684, %v6086
    %v6457 = vsub.f32 %v4688, %v6089
    %v6458 = vsub.f32 %v4690, %v6089
    %v6459 = vsub.f32 %v4694, %v6092
    %v6460 = vsub.f32 %v4696, %v6092
    %v6461 = vsub.f32 %v4700, %v6095
    %v6462 = vsub.f32 %v4702, %v6095
    %v6463 = vsub.f32 %v4706, %v6098
    %v6464 = vsub.f32 %v4708, %v6098
    %v6465 = vsub.f32 %v4712, %v6101
    %v6466 = vsub.f32 %v4714, %v6101
    %v6467 = vsub.f32 %v4718, %v6104
    %v6468 = vsub.f32 %v4720, %v6104
    %v6469 = vsub.f32 %v4724, %v6107
    %v6470 = vsub.f32 %v4726, %v6107
    %v6471 = vsub.f32 %v4730, %v6110
    %v6472 = vsub.f32 %v4732, %v6110
    %v6473 = vsub.f32 %v4736, %v6113
    %v6474 = vsub.f32 %v4738, %v6113
    %v6475 = vsub.f32 %v4742, %v6116
    %v6476 = vsub.f32 %v4744, %v6116
    %v6477 = vsub.f32 %v4748, %v6119
    %v6478 = vsub.f32 %v4750, %v6119
    %v6479 = vsub.f32 %v4754, %v6122
    %v6480 = vsub.f32 %v4756, %v6122
    %v6481 = vsub.f32 %v4760, %v6125
    %v6482 = vsub.f32 %v4762, %v6125
    %v6483 = vsub.f32 %v4766, %v6128
    %v6484 = vsub.f32 %v4768, %v6128
    %v6485 = vsub.f32 %v4772, %v6131
    %v6486 = vsub.f32 %v4774, %v6131
    %v6487 = vsub.f32 %v4778, %v6134
    %v6488 = vsub.f32 %v4780, %v6134
    %v6489 = vsub.f32 %v4784, %v6137
    %v6490 = vsub.f32 %v4786, %v6137
    %v6491 = vsub.f32 %v4790, %v6140
    %v6492 = vsub.f32 %v4792, %v6140
    %v6493 = vsub.f32 %v5021, %v6143
    %v6494 = vsub.f32 %v5023, %v6143
    %v6495 = vsub.f32 %v5027, %v6146
    %v6496 = vsub.f32 %v5029, %v6146
    %v6497 = vsub.f32 %v5033, %v6149
    %v6498 = vsub.f32 %v5035, %v6149
    %v6499 = vsub.f32 %v5039, %v6152
    %v6500 = vsub.f32 %v5041, %v6152
    %v6501 = vsub.f32 %v5045, %v6155
    %v6502 = vsub.f32 %v5047, %v6155
    %v6503 = vsub.f32 %v5051, %v6158
    %v6504 = vsub.f32 %v5053, %v6158
    %v6505 = vsub.f32 %v5057, %v6161
    %v6506 = vsub.f32 %v5059, %v6161
    %v6507 = vsub.f32 %v5063, %v6164
    %v6508 = vsub.f32 %v5065, %v6164
    %v6509 = vsub.f32 %v5069, %v6167
    %v6510 = vsub.f32 %v5071, %v6167
    %v6511 = vsub.f32 %v5075, %v6170
    %v6512 = vsub.f32 %v5077, %v6170
    %v6513 = vsub.f32 %v5081, %v6173
    %v6514 = vsub.f32 %v5083, %v6173
    %v6515 = vsub.f32 %v5087, %v6176
    %v6516 = vsub.f32 %v5089, %v6176
    %v6517 = vsub.f32 %v5093, %v6179
    %v6518 = vsub.f32 %v5095, %v6179
    %v6519 = vsub.f32 %v5099, %v6182
    %v6520 = vsub.f32 %v5101, %v6182
    %v6521 = vsub.f32 %v5105, %v6185
    %v6522 = vsub.f32 %v5107, %v6185
    %v6523 = vsub.f32 %v5111, %v6188
    %v6524 = vsub.f32 %v5113, %v6188
    %v6525 = vsub.f32 %v5117, %v6191
    %v6526 = vsub.f32 %v5119, %v6191
    %v6527 = vsub.f32 %v5123, %v6194
    %v6528 = vsub.f32 %v5125, %v6194
    %v6529 = vsub.f32 %v5129, %v6197
    %v6530 = vsub.f32 %v5131, %v6197
    %v6531 = vsub.f32 %v5135, %v6200
    %v6532 = vsub.f32 %v5137, %v6200
    %v6533 = vsub.f32 %v5141, %v6203
    %v6534 = vsub.f32 %v5143, %v6203
    %v6535 = vsub.f32 %v5147, %v6206
    %v6536 = vsub.f32 %v5149, %v6206
    %v6537 = vsub.f32 %v5153, %v6209
    %v6538 = vsub.f32 %v5155, %v6209
    %v6539 = vsub.f32 %v5159, %v6212
    %v6540 = vsub.f32 %v5161, %v6212
    %v6541 = vsub.f32 %v5165, %v6215
    %v6542 = vsub.f32 %v5167, %v6215
    %v6543 = vsub.f32 %v5171, %v6218
    %v6544 = vsub.f32 %v5173, %v6218
    %v6545 = vsub.f32 %v5177, %v6221
    %v6546 = vsub.f32 %v5179, %v6221
    %v6547 = vsub.f32 %v5183, %v6224
    %v6548 = vsub.f32 %v5185, %v6224
    %v6549 = vsub.f32 %v5189, %v6227
    %v6550 = vsub.f32 %v5191, %v6227
    %v6551 = vsub.f32 %v5195, %v6230
    %v6552 = vsub.f32 %v5197, %v6230
    %v6553 = vsub.f32 %v5201, %v6233
    %v6554 = vsub.f32 %v5203, %v6233
    %v6555 = vsub.f32 %v5207, %v6236
    %v6556 = vsub.f32 %v5209, %v6236
    %v6557 = vsub.f32 %v5438, %v6239
    %v6558 = vsub.f32 %v5440, %v6239
    %v6559 = vsub.f32 %v5444, %v6242
    %v6560 = vsub.f32 %v5446, %v6242
    %v6561 = vsub.f32 %v5450, %v6245
    %v6562 = vsub.f32 %v5452, %v6245
    %v6563 = vsub.f32 %v5456, %v6248
    %v6564 = vsub.f32 %v5458, %v6248
    %v6565 = vsub.f32 %v5462, %v6251
    %v6566 = vsub.f32 %v5464, %v6251
    %v6567 = vsub.f32 %v5468, %v6254
    %v6568 = vsub.f32 %v5470, %v6254
    %v6569 = vsub.f32 %v5474, %v6257
    %v6570 = vsub.f32 %v5476, %v6257
    %v6571 = vsub.f32 %v5480, %v6260
    %v6572 = vsub.f32 %v5482, %v6260
    %v6573 = vsub.f32 %v5486, %v6263
    %v6574 = vsub.f32 %v5488, %v6263
    %v6575 = vsub.f32 %v5492, %v6266
    %v6576 = vsub.f32 %v5494, %v6266
    %v6577 = vsub.f32 %v5498, %v6269
    %v6578 = vsub.f32 %v5500, %v6269
    %v6579 = vsub.f32 %v5504, %v6272
    %v6580 = vsub.f32 %v5506, %v6272
    %v6581 = vsub.f32 %v5510, %v6275
    %v6582 = vsub.f32 %v5512, %v6275
    %v6583 = vsub.f32 %v5516, %v6278
    %v6584 = vsub.f32 %v5518, %v6278
    %v6585 = vsub.f32 %v5522, %v6281
    %v6586 = vsub.f32 %v5524, %v6281
    %v6587 = vsub.f32 %v5528, %v6284
    %v6588 = vsub.f32 %v5530, %v6284
    %v6589 = vsub.f32 %v5534, %v6287
    %v6590 = vsub.f32 %v5536, %v6287
    %v6591 = vsub.f32 %v5540, %v6290
    %v6592 = vsub.f32 %v5542, %v6290
    %v6593 = vsub.f32 %v5546, %v6293
    %v6594 = vsub.f32 %v5548, %v6293
    %v6595 = vsub.f32 %v5552, %v6296
    %v6596 = vsub.f32 %v5554, %v6296
    %v6597 = vsub.f32 %v5558, %v6299
    %v6598 = vsub.f32 %v5560, %v6299
    %v6599 = vsub.f32 %v5564, %v6302
    %v6600 = vsub.f32 %v5566, %v6302
    %v6601 = vsub.f32 %v5570, %v6305
    %v6602 = vsub.f32 %v5572, %v6305
    %v6603 = vsub.f32 %v5576, %v6308
    %v6604 = vsub.f32 %v5578, %v6308
    %v6605 = vsub.f32 %v5582, %v6311
    %v6606 = vsub.f32 %v5584, %v6311
    %v6607 = vsub.f32 %v5588, %v6314
    %v6608 = vsub.f32 %v5590, %v6314
    %v6609 = vsub.f32 %v5594, %v6317
    %v6610 = vsub.f32 %v5596, %v6317
    %v6611 = vsub.f32 %v5600, %v6320
    %v6612 = vsub.f32 %v5602, %v6320
    %v6613 = vsub.f32 %v5606, %v6323
    %v6614 = vsub.f32 %v5608, %v6323
    %v6615 = vsub.f32 %v5612, %v6326
    %v6616 = vsub.f32 %v5614, %v6326
    %v6617 = vsub.f32 %v5618, %v6329
    %v6618 = vsub.f32 %v5620, %v6329
    %v6619 = vsub.f32 %v5624, %v6332
    %v6620 = vsub.f32 %v5626, %v6332
    %v6621 = vsub.f32 %v5855, %v6335
    %v6622 = vsub.f32 %v5857, %v6335
    %v6623 = vsub.f32 %v5861, %v6338
    %v6624 = vsub.f32 %v5863, %v6338
    %v6625 = vsub.f32 %v5867, %v6341
    %v6626 = vsub.f32 %v5869, %v6341
    %v6627 = vsub.f32 %v5873, %v6344
    %v6628 = vsub.f32 %v5875, %v6344
    %v6629 = vsub.f32 %v5879, %v6347
    %v6630 = vsub.f32 %v5881, %v6347
    %v6631 = vsub.f32 %v5885, %v6350
    %v6632 = vsub.f32 %v5887, %v6350
    %v6633 = vsub.f32 %v5891, %v6353
    %v6634 = vsub.f32 %v5893, %v6353
    %v6635 = vsub.f32 %v5897, %v6356
    %v6636 = vsub.f32 %v5899, %v6356
    %v6637 = vsub.f32 %v5903, %v6359
    %v6638 = vsub.f32 %v5905, %v6359
    %v6639 = vsub.f32 %v5909, %v6362
    %v6640 = vsub.f32 %v5911, %v6362
    %v6641 = vsub.f32 %v5915, %v6365
    %v6642 = vsub.f32 %v5917, %v6365
    %v6643 = vsub.f32 %v5921, %v6368
    %v6644 = vsub.f32 %v5923, %v6368
    %v6645 = vsub.f32 %v5927, %v6371
    %v6646 = vsub.f32 %v5929, %v6371
    %v6647 = vsub.f32 %v5933, %v6374
    %v6648 = vsub.f32 %v5935, %v6374
    %v6649 = vsub.f32 %v5939, %v6377
    %v6650 = vsub.f32 %v5941, %v6377
    %v6651 = vsub.f32 %v5945, %v6380
    %v6652 = vsub.f32 %v5947, %v6380
    %v6653 = vsub.f32 %v5951, %v6383
    %v6654 = vsub.f32 %v5953, %v6383
    %v6655 = vsub.f32 %v5957, %v6386
    %v6656 = vsub.f32 %v5959, %v6386
    %v6657 = vsub.f32 %v5963, %v6389
    %v6658 = vsub.f32 %v5965, %v6389
    %v6659 = vsub.f32 %v5969, %v6392
    %v6660 = vsub.f32 %v5971, %v6392
    %v6661 = vsub.f32 %v5975, %v6395
    %v6662 = vsub.f32 %v5977, %v6395
    %v6663 = vsub.f32 %v5981, %v6398
    %v6664 = vsub.f32 %v5983, %v6398
    %v6665 = vsub.f32 %v5987, %v6401
    %v6666 = vsub.f32 %v5989, %v6401
    %v6667 = vsub.f32 %v5993, %v6404
    %v6668 = vsub.f32 %v5995, %v6404
    %v6669 = vsub.f32 %v5999, %v6407
    %v6670 = vsub.f32 %v6001, %v6407
    %v6671 = vsub.f32 %v6005, %v6410
    %v6672 = vsub.f32 %v6007, %v6410
    %v6673 = vsub.f32 %v6011, %v6413
    %v6674 = vsub.f32 %v6013, %v6413
    %v6675 = vsub.f32 %v6017, %v6416
    %v6676 = vsub.f32 %v6019, %v6416
    %v6677 = vsub.f32 %v6023, %v6419
    %v6678 = vsub.f32 %v6025, %v6419
    %v6679 = vsub.f32 %v6029, %v6422
    %v6680 = vsub.f32 %v6031, %v6422
    %v6681 = vsub.f32 %v6035, %v6425
    %v6682 = vsub.f32 %v6037, %v6425
    %v6683 = vsub.f32 %v6041, %v6428
    %v6684 = vsub.f32 %v6043, %v6428
    %v6685 = vmul.f32 %v6429, 1.442695
    %v6686 = vpow.pop %v6685
    %v6687 = vmul.f32 %v6430, 1.442695
    %v6688 = vpow.pop %v6687
    %v6689 = vmul.f32 %v6431, 1.442695
    %v6690 = vpow.pop %v6689
    %v6691 = vmul.f32 %v6432, 1.442695
    %v6692 = vpow.pop %v6691
    %v6693 = vmul.f32 %v6433, 1.442695
    %v6694 = vpow.pop %v6693
    %v6695 = vmul.f32 %v6434, 1.442695
    %v6696 = vpow.pop %v6695
    %v6697 = vmul.f32 %v6435, 1.442695
    %v6698 = vpow.pop %v6697
    %v6699 = vmul.f32 %v6436, 1.442695
    %v6700 = vpow.pop %v6699
    %v6701 = vmul.f32 %v6437, 1.442695
    %v6702 = vpow.pop %v6701
    %v6703 = vmul.f32 %v6438, 1.442695
    %v6704 = vpow.pop %v6703
    %v6705 = vmul.f32 %v6439, 1.442695
    %v6706 = vpow.pop %v6705
    %v6707 = vmul.f32 %v6440, 1.442695
    %v6708 = vpow.pop %v6707
    %v6709 = vmul.f32 %v6441, 1.442695
    %v6710 = vpow.pop %v6709
    %v6711 = vmul.f32 %v6442, 1.442695
    %v6712 = vpow.pop %v6711
    %v6713 = vmul.f32 %v6443, 1.442695
    %v6714 = vpow.pop %v6713
    %v6715 = vmul.f32 %v6444, 1.442695
    %v6716 = vpow.pop %v6715
    %v6717 = vmul.f32 %v6445, 1.442695
    %v6718 = vpow.pop %v6717
    %v6719 = vmul.f32 %v6446, 1.442695
    %v6720 = vpow.pop %v6719
    %v6721 = vmul.f32 %v6447, 1.442695
    %v6722 = vpow.pop %v6721
    %v6723 = vmul.f32 %v6448, 1.442695
    %v6724 = vpow.pop %v6723
    %v6725 = vmul.f32 %v6449, 1.442695
    %v6726 = vpow.pop %v6725
    %v6727 = vmul.f32 %v6450, 1.442695
    %v6728 = vpow.pop %v6727
    %v6729 = vmul.f32 %v6451, 1.442695
    %v6730 = vpow.pop %v6729
    %v6731 = vmul.f32 %v6452, 1.442695
    %v6732 = vpow.pop %v6731
    %v6733 = vmul.f32 %v6453, 1.442695
    %v6734 = vpow.pop %v6733
    %v6735 = vmul.f32 %v6454, 1.442695
    %v6736 = vpow.pop %v6735
    %v6737 = vmul.f32 %v6455, 1.442695
    %v6738 = vpow.pop %v6737
    %v6739 = vmul.f32 %v6456, 1.442695
    %v6740 = vpow.pop %v6739
    %v6741 = vmul.f32 %v6457, 1.442695
    %v6742 = vpow.pop %v6741
    %v6743 = vmul.f32 %v6458, 1.442695
    %v6744 = vpow.pop %v6743
    %v6745 = vmul.f32 %v6459, 1.442695
    %v6746 = vpow.pop %v6745
    %v6747 = vmul.f32 %v6460, 1.442695
    %v6748 = vpow.pop %v6747
    %v6749 = vmul.f32 %v6461, 1.442695
    %v6750 = vpow.pop %v6749
    %v6751 = vmul.f32 %v6462, 1.442695
    %v6752 = vpow.pop %v6751
    %v6753 = vmul.f32 %v6463, 1.442695
    %v6754 = vpow.pop %v6753
    %v6755 = vmul.f32 %v6464, 1.442695
    %v6756 = vpow.pop %v6755
    %v6757 = vmul.f32 %v6465, 1.442695
    %v6758 = vpow.pop %v6757
    %v6759 = vmul.f32 %v6466, 1.442695
    %v6760 = vpow.pop %v6759
    %v6761 = vmul.f32 %v6467, 1.442695
    %v6762 = vpow.pop %v6761
    %v6763 = vmul.f32 %v6468, 1.442695
    %v6764 = vpow.pop %v6763
    %v6765 = vmul.f32 %v6469, 1.442695
    %v6766 = vpow.pop %v6765
    %v6767 = vmul.f32 %v6470, 1.442695
    %v6768 = vpow.pop %v6767
    %v6769 = vmul.f32 %v6471, 1.442695
    %v6770 = vpow.pop %v6769
    %v6771 = vmul.f32 %v6472, 1.442695
    %v6772 = vpow.pop %v6771
    %v6773 = vmul.f32 %v6473, 1.442695
    %v6774 = vpow.pop %v6773
    %v6775 = vmul.f32 %v6474, 1.442695
    %v6776 = vpow.pop %v6775
    %v6777 = vmul.f32 %v6475, 1.442695
    %v6778 = vpow.pop %v6777
    %v6779 = vmul.f32 %v6476, 1.442695
    %v6780 = vpow.pop %v6779
    %v6781 = vmul.f32 %v6477, 1.442695
    %v6782 = vpow.pop %v6781
    %v6783 = vmul.f32 %v6478, 1.442695
    %v6784 = vpow.pop %v6783
    %v6785 = vmul.f32 %v6479, 1.442695
    %v6786 = vpow.pop %v6785
    %v6787 = vmul.f32 %v6480, 1.442695
    %v6788 = vpow.pop %v6787
    %v6789 = vmul.f32 %v6481, 1.442695
    %v6790 = vpow.pop %v6789
    %v6791 = vmul.f32 %v6482, 1.442695
    %v6792 = vpow.pop %v6791
    %v6793 = vmul.f32 %v6483, 1.442695
    %v6794 = vpow.pop %v6793
    %v6795 = vmul.f32 %v6484, 1.442695
    %v6796 = vpow.pop %v6795
    %v6797 = vmul.f32 %v6485, 1.442695
    %v6798 = vpow.pop %v6797
    %v6799 = vmul.f32 %v6486, 1.442695
    %v6800 = vpow.pop %v6799
    %v6801 = vmul.f32 %v6487, 1.442695
    %v6802 = vpow.pop %v6801
    %v6803 = vmul.f32 %v6488, 1.442695
    %v6804 = vpow.pop %v6803
    %v6805 = vmul.f32 %v6489, 1.442695
    %v6806 = vpow.pop %v6805
    %v6807 = vmul.f32 %v6490, 1.442695
    %v6808 = vpow.pop %v6807
    %v6809 = vmul.f32 %v6491, 1.442695
    %v6810 = vpow.pop %v6809
    %v6811 = vmul.f32 %v6492, 1.442695
    %v6812 = vpow.pop %v6811
    %v6813 = vmul.f32 %v6493, 1.442695
    %v6814 = vpow.pop %v6813
    %v6815 = vmul.f32 %v6494, 1.442695
    %v6816 = vpow.pop %v6815
    %v6817 = vmul.f32 %v6495, 1.442695
    %v6818 = vpow.pop %v6817
    %v6819 = vmul.f32 %v6496, 1.442695
    %v6820 = vpow.pop %v6819
    %v6821 = vmul.f32 %v6497, 1.442695
    %v6822 = vpow.pop %v6821
    %v6823 = vmul.f32 %v6498, 1.442695
    %v6824 = vpow.pop %v6823
    %v6825 = vmul.f32 %v6499, 1.442695
    %v6826 = vpow.pop %v6825
    %v6827 = vmul.f32 %v6500, 1.442695
    %v6828 = vpow.pop %v6827
    %v6829 = vmul.f32 %v6501, 1.442695
    %v6830 = vpow.pop %v6829
    %v6831 = vmul.f32 %v6502, 1.442695
    %v6832 = vpow.pop %v6831
    %v6833 = vmul.f32 %v6503, 1.442695
    %v6834 = vpow.pop %v6833
    %v6835 = vmul.f32 %v6504, 1.442695
    %v6836 = vpow.pop %v6835
    %v6837 = vmul.f32 %v6505, 1.442695
    %v6838 = vpow.pop %v6837
    %v6839 = vmul.f32 %v6506, 1.442695
    %v6840 = vpow.pop %v6839
    %v6841 = vmul.f32 %v6507, 1.442695
    %v6842 = vpow.pop %v6841
    %v6843 = vmul.f32 %v6508, 1.442695
    %v6844 = vpow.pop %v6843
    %v6845 = vmul.f32 %v6509, 1.442695
    %v6846 = vpow.pop %v6845
    %v6847 = vmul.f32 %v6510, 1.442695
    %v6848 = vpow.pop %v6847
    %v6849 = vmul.f32 %v6511, 1.442695
    %v6850 = vpow.pop %v6849
    %v6851 = vmul.f32 %v6512, 1.442695
    %v6852 = vpow.pop %v6851
    %v6853 = vmul.f32 %v6513, 1.442695
    %v6854 = vpow.pop %v6853
    %v6855 = vmul.f32 %v6514, 1.442695
    %v6856 = vpow.pop %v6855
    %v6857 = vmul.f32 %v6515, 1.442695
    %v6858 = vpow.pop %v6857
    %v6859 = vmul.f32 %v6516, 1.442695
    %v6860 = vpow.pop %v6859
    %v6861 = vmul.f32 %v6517, 1.442695
    %v6862 = vpow.pop %v6861
    %v6863 = vmul.f32 %v6518, 1.442695
    %v6864 = vpow.pop %v6863
    %v6865 = vmul.f32 %v6519, 1.442695
    %v6866 = vpow.pop %v6865
    %v6867 = vmul.f32 %v6520, 1.442695
    %v6868 = vpow.pop %v6867
    %v6869 = vmul.f32 %v6521, 1.442695
    %v6870 = vpow.pop %v6869
    %v6871 = vmul.f32 %v6522, 1.442695
    %v6872 = vpow.pop %v6871
    %v6873 = vmul.f32 %v6523, 1.442695
    %v6874 = vpow.pop %v6873
    %v6875 = vmul.f32 %v6524, 1.442695
    %v6876 = vpow.pop %v6875
    %v6877 = vmul.f32 %v6525, 1.442695
    %v6878 = vpow.pop %v6877
    %v6879 = vmul.f32 %v6526, 1.442695
    %v6880 = vpow.pop %v6879
    %v6881 = vmul.f32 %v6527, 1.442695
    %v6882 = vpow.pop %v6881
    %v6883 = vmul.f32 %v6528, 1.442695
    %v6884 = vpow.pop %v6883
    %v6885 = vmul.f32 %v6529, 1.442695
    %v6886 = vpow.pop %v6885
    %v6887 = vmul.f32 %v6530, 1.442695
    %v6888 = vpow.pop %v6887
    %v6889 = vmul.f32 %v6531, 1.442695
    %v6890 = vpow.pop %v6889
    %v6891 = vmul.f32 %v6532, 1.442695
    %v6892 = vpow.pop %v6891
    %v6893 = vmul.f32 %v6533, 1.442695
    %v6894 = vpow.pop %v6893
    %v6895 = vmul.f32 %v6534, 1.442695
    %v6896 = vpow.pop %v6895
    %v6897 = vmul.f32 %v6535, 1.442695
    %v6898 = vpow.pop %v6897
    %v6899 = vmul.f32 %v6536, 1.442695
    %v6900 = vpow.pop %v6899
    %v6901 = vmul.f32 %v6537, 1.442695
    %v6902 = vpow.pop %v6901
    %v6903 = vmul.f32 %v6538, 1.442695
    %v6904 = vpow.pop %v6903
    %v6905 = vmul.f32 %v6539, 1.442695
    %v6906 = vpow.pop %v6905
    %v6907 = vmul.f32 %v6540, 1.442695
    %v6908 = vpow.pop %v6907
    %v6909 = vmul.f32 %v6541, 1.442695
    %v6910 = vpow.pop %v6909
    %v6911 = vmul.f32 %v6542, 1.442695
    %v6912 = vpow.pop %v6911
    %v6913 = vmul.f32 %v6543, 1.442695
    %v6914 = vpow.pop %v6913
    %v6915 = vmul.f32 %v6544, 1.442695
    %v6916 = vpow.pop %v6915
    %v6917 = vmul.f32 %v6545, 1.442695
    %v6918 = vpow.pop %v6917
    %v6919 = vmul.f32 %v6546, 1.442695
    %v6920 = vpow.pop %v6919
    %v6921 = vmul.f32 %v6547, 1.442695
    %v6922 = vpow.pop %v6921
    %v6923 = vmul.f32 %v6548, 1.442695
    %v6924 = vpow.pop %v6923
    %v6925 = vmul.f32 %v6549, 1.442695
    %v6926 = vpow.pop %v6925
    %v6927 = vmul.f32 %v6550, 1.442695
    %v6928 = vpow.pop %v6927
    %v6929 = vmul.f32 %v6551, 1.442695
    %v6930 = vpow.pop %v6929
    %v6931 = vmul.f32 %v6552, 1.442695
    %v6932 = vpow.pop %v6931
    %v6933 = vmul.f32 %v6553, 1.442695
    %v6934 = vpow.pop %v6933
    %v6935 = vmul.f32 %v6554, 1.442695
    %v6936 = vpow.pop %v6935
    %v6937 = vmul.f32 %v6555, 1.442695
    %v6938 = vpow.pop %v6937
    %v6939 = vmul.f32 %v6556, 1.442695
    %v6940 = vpow.pop %v6939
    %v6941 = vmul.f32 %v6557, 1.442695
    %v6942 = vpow.pop %v6941
    %v6943 = vmul.f32 %v6558, 1.442695
    %v6944 = vpow.pop %v6943
    %v6945 = vmul.f32 %v6559, 1.442695
    %v6946 = vpow.pop %v6945
    %v6947 = vmul.f32 %v6560, 1.442695
    %v6948 = vpow.pop %v6947
    %v6949 = vmul.f32 %v6561, 1.442695
    %v6950 = vpow.pop %v6949
    %v6951 = vmul.f32 %v6562, 1.442695
    %v6952 = vpow.pop %v6951
    %v6953 = vmul.f32 %v6563, 1.442695
    %v6954 = vpow.pop %v6953
    %v6955 = vmul.f32 %v6564, 1.442695
    %v6956 = vpow.pop %v6955
    %v6957 = vmul.f32 %v6565, 1.442695
    %v6958 = vpow.pop %v6957
    %v6959 = vmul.f32 %v6566, 1.442695
    %v6960 = vpow.pop %v6959
    %v6961 = vmul.f32 %v6567, 1.442695
    %v6962 = vpow.pop %v6961
    %v6963 = vmul.f32 %v6568, 1.442695
    %v6964 = vpow.pop %v6963
    %v6965 = vmul.f32 %v6569, 1.442695
    %v6966 = vpow.pop %v6965
    %v6967 = vmul.f32 %v6570, 1.442695
    %v6968 = vpow.pop %v6967
    %v6969 = vmul.f32 %v6571, 1.442695
    %v6970 = vpow.pop %v6969
    %v6971 = vmul.f32 %v6572, 1.442695
    %v6972 = vpow.pop %v6971
    %v6973 = vmul.f32 %v6573, 1.442695
    %v6974 = vpow.pop %v6973
    %v6975 = vmul.f32 %v6574, 1.442695
    %v6976 = vpow.pop %v6975
    %v6977 = vmul.f32 %v6575, 1.442695
    %v6978 = vpow.pop %v6977
    %v6979 = vmul.f32 %v6576, 1.442695
    %v6980 = vpow.pop %v6979
    %v6981 = vmul.f32 %v6577, 1.442695
    %v6982 = vpow.pop %v6981
    %v6983 = vmul.f32 %v6578, 1.442695
    %v6984 = vpow.pop %v6983
    %v6985 = vmul.f32 %v6579, 1.442695
    %v6986 = vpow.pop %v6985
    %v6987 = vmul.f32 %v6580, 1.442695
    %v6988 = vpow.pop %v6987
    %v6989 = vmul.f32 %v6581, 1.442695
    %v6990 = vpow.pop %v6989
    %v6991 = vmul.f32 %v6582, 1.442695
    %v6992 = vpow.pop %v6991
    %v6993 = vmul.f32 %v6583, 1.442695
    %v6994 = vpow.pop %v6993
    %v6995 = vmul.f32 %v6584, 1.442695
    %v6996 = vpow.pop %v6995
    %v6997 = vmul.f32 %v6585, 1.442695
    %v6998 = vpow.pop %v6997
    %v6999 = vmul.f32 %v6586, 1.442695
    %v7000 = vpow.pop %v6999
    %v7001 = vmul.f32 %v6587, 1.442695
    %v7002 = vpow.pop %v7001
    %v7003 = vmul.f32 %v6588, 1.442695
    %v7004 = vpow.pop %v7003
    %v7005 = vmul.f32 %v6589, 1.442695
    %v7006 = vpow.pop %v7005
    %v7007 = vmul.f32 %v6590, 1.442695
    %v7008 = vpow.pop %v7007
    %v7009 = vmul.f32 %v6591, 1.442695
    %v7010 = vpow.pop %v7009
    %v7011 = vmul.f32 %v6592, 1.442695
    %v7012 = vpow.pop %v7011
    %v7013 = vmul.f32 %v6593, 1.442695
    %v7014 = vpow.pop %v7013
    %v7015 = vmul.f32 %v6594, 1.442695
    %v7016 = vpow.pop %v7015
    %v7017 = vmul.f32 %v6595, 1.442695
    %v7018 = vpow.pop %v7017
    %v7019 = vmul.f32 %v6596, 1.442695
    %v7020 = vpow.pop %v7019
    %v7021 = vmul.f32 %v6597, 1.442695
    %v7022 = vpow.pop %v7021
    %v7023 = vmul.f32 %v6598, 1.442695
    %v7024 = vpow.pop %v7023
    %v7025 = vmul.f32 %v6599, 1.442695
    %v7026 = vpow.pop %v7025
    %v7027 = vmul.f32 %v6600, 1.442695
    %v7028 = vpow.pop %v7027
    %v7029 = vmul.f32 %v6601, 1.442695
    %v7030 = vpow.pop %v7029
    %v7031 = vmul.f32 %v6602, 1.442695
    %v7032 = vpow.pop %v7031
    %v7033 = vmul.f32 %v6603, 1.442695
    %v7034 = vpow.pop %v7033
    %v7035 = vmul.f32 %v6604, 1.442695
    %v7036 = vpow.pop %v7035
    %v7037 = vmul.f32 %v6605, 1.442695
    %v7038 = vpow.pop %v7037
    %v7039 = vmul.f32 %v6606, 1.442695
    %v7040 = vpow.pop %v7039
    %v7041 = vmul.f32 %v6607, 1.442695
    %v7042 = vpow.pop %v7041
    %v7043 = vmul.f32 %v6608, 1.442695
    %v7044 = vpow.pop %v7043
    %v7045 = vmul.f32 %v6609, 1.442695
    %v7046 = vpow.pop %v7045
    %v7047 = vmul.f32 %v6610, 1.442695
    %v7048 = vpow.pop %v7047
    %v7049 = vmul.f32 %v6611, 1.442695
    %v7050 = vpow.pop %v7049
    %v7051 = vmul.f32 %v6612, 1.442695
    %v7052 = vpow.pop %v7051
    %v7053 = vmul.f32 %v6613, 1.442695
    %v7054 = vpow.pop %v7053
    %v7055 = vmul.f32 %v6614, 1.442695
    %v7056 = vpow.pop %v7055
    %v7057 = vmul.f32 %v6615, 1.442695
    %v7058 = vpow.pop %v7057
    %v7059 = vmul.f32 %v6616, 1.442695
    %v7060 = vpow.pop %v7059
    %v7061 = vmul.f32 %v6617, 1.442695
    %v7062 = vpow.pop %v7061
    %v7063 = vmul.f32 %v6618, 1.442695
    %v7064 = vpow.pop %v7063
    %v7065 = vmul.f32 %v6619, 1.442695
    %v7066 = vpow.pop %v7065
    %v7067 = vmul.f32 %v6620, 1.442695
    %v7068 = vpow.pop %v7067
    %v7069 = vmul.f32 %v6621, 1.442695
    %v7070 = vpow.pop %v7069
    %v7071 = vmul.f32 %v6622, 1.442695
    %v7072 = vpow.pop %v7071
    %v7073 = vmul.f32 %v6623, 1.442695
    %v7074 = vpow.pop %v7073
    %v7075 = vmul.f32 %v6624, 1.442695
    %v7076 = vpow.pop %v7075
    %v7077 = vmul.f32 %v6625, 1.442695
    %v7078 = vpow.pop %v7077
    %v7079 = vmul.f32 %v6626, 1.442695
    %v7080 = vpow.pop %v7079
    %v7081 = vmul.f32 %v6627, 1.442695
    %v7082 = vpow.pop %v7081
    %v7083 = vmul.f32 %v6628, 1.442695
    %v7084 = vpow.pop %v7083
    %v7085 = vmul.f32 %v6629, 1.442695
    %v7086 = vpow.pop %v7085
    %v7087 = vmul.f32 %v6630, 1.442695
    %v7088 = vpow.pop %v7087
    %v7089 = vmul.f32 %v6631, 1.442695
    %v7090 = vpow.pop %v7089
    %v7091 = vmul.f32 %v6632, 1.442695
    %v7092 = vpow.pop %v7091
    %v7093 = vmul.f32 %v6633, 1.442695
    %v7094 = vpow.pop %v7093
    %v7095 = vmul.f32 %v6634, 1.442695
    %v7096 = vpow.pop %v7095
    %v7097 = vmul.f32 %v6635, 1.442695
    %v7098 = vpow.pop %v7097
    %v7099 = vmul.f32 %v6636, 1.442695
    %v7100 = vpow.pop %v7099
    %v7101 = vmul.f32 %v6637, 1.442695
    %v7102 = vpow.pop %v7101
    %v7103 = vmul.f32 %v6638, 1.442695
    %v7104 = vpow.pop %v7103
    %v7105 = vmul.f32 %v6639, 1.442695
    %v7106 = vpow.pop %v7105
    %v7107 = vmul.f32 %v6640, 1.442695
    %v7108 = vpow.pop %v7107
    %v7109 = vmul.f32 %v6641, 1.442695
    %v7110 = vpow.pop %v7109
    %v7111 = vmul.f32 %v6642, 1.442695
    %v7112 = vpow.pop %v7111
    %v7113 = vmul.f32 %v6643, 1.442695
    %v7114 = vpow.pop %v7113
    %v7115 = vmul.f32 %v6644, 1.442695
    %v7116 = vpow.pop %v7115
    %v7117 = vmul.f32 %v6645, 1.442695
    %v7118 = vpow.pop %v7117
    %v7119 = vmul.f32 %v6646, 1.442695
    %v7120 = vpow.pop %v7119
    %v7121 = vmul.f32 %v6647, 1.442695
    %v7122 = vpow.pop %v7121
    %v7123 = vmul.f32 %v6648, 1.442695
    %v7124 = vpow.pop %v7123
    %v7125 = vmul.f32 %v6649, 1.442695
    %v7126 = vpow.pop %v7125
    %v7127 = vmul.f32 %v6650, 1.442695
    %v7128 = vpow.pop %v7127
    %v7129 = vmul.f32 %v6651, 1.442695
    %v7130 = vpow.pop %v7129
    %v7131 = vmul.f32 %v6652, 1.442695
    %v7132 = vpow.pop %v7131
    %v7133 = vmul.f32 %v6653, 1.442695
    %v7134 = vpow.pop %v7133
    %v7135 = vmul.f32 %v6654, 1.442695
    %v7136 = vpow.pop %v7135
    %v7137 = vmul.f32 %v6655, 1.442695
    %v7138 = vpow.pop %v7137
    %v7139 = vmul.f32 %v6656, 1.442695
    %v7140 = vpow.pop %v7139
    %v7141 = vmul.f32 %v6657, 1.442695
    %v7142 = vpow.pop %v7141
    %v7143 = vmul.f32 %v6658, 1.442695
    %v7144 = vpow.pop %v7143
    %v7145 = vmul.f32 %v6659, 1.442695
    %v7146 = vpow.pop %v7145
    %v7147 = vmul.f32 %v6660, 1.442695
    %v7148 = vpow.pop %v7147
    %v7149 = vmul.f32 %v6661, 1.442695
    %v7150 = vpow.pop %v7149
    %v7151 = vmul.f32 %v6662, 1.442695
    %v7152 = vpow.pop %v7151
    %v7153 = vmul.f32 %v6663, 1.442695
    %v7154 = vpow.pop %v7153
    %v7155 = vmul.f32 %v6664, 1.442695
    %v7156 = vpow.pop %v7155
    %v7157 = vmul.f32 %v6665, 1.442695
    %v7158 = vpow.pop %v7157
    %v7159 = vmul.f32 %v6666, 1.442695
    %v7160 = vpow.pop %v7159
    %v7161 = vmul.f32 %v6667, 1.442695
    %v7162 = vpow.pop %v7161
    %v7163 = vmul.f32 %v6668, 1.442695
    %v7164 = vpow.pop %v7163
    %v7165 = vmul.f32 %v6669, 1.442695
    %v7166 = vpow.pop %v7165
    %v7167 = vmul.f32 %v6670, 1.442695
    %v7168 = vpow.pop %v7167
    %v7169 = vmul.f32 %v6671, 1.442695
    %v7170 = vpow.pop %v7169
    %v7171 = vmul.f32 %v6672, 1.442695
    %v7172 = vpow.pop %v7171
    %v7173 = vmul.f32 %v6673, 1.442695
    %v7174 = vpow.pop %v7173
    %v7175 = vmul.f32 %v6674, 1.442695
    %v7176 = vpow.pop %v7175
    %v7177 = vmul.f32 %v6675, 1.442695
    %v7178 = vpow.pop %v7177
    %v7179 = vmul.f32 %v6676, 1.442695
    %v7180 = vpow.pop %v7179
    %v7181 = vmul.f32 %v6677, 1.442695
    %v7182 = vpow.pop %v7181
    %v7183 = vmul.f32 %v6678, 1.442695
    %v7184 = vpow.pop %v7183
    %v7185 = vmul.f32 %v6679, 1.442695
    %v7186 = vpow.pop %v7185
    %v7187 = vmul.f32 %v6680, 1.442695
    %v7188 = vpow.pop %v7187
    %v7189 = vmul.f32 %v6681, 1.442695
    %v7190 = vpow.pop %v7189
    %v7191 = vmul.f32 %v6682, 1.442695
    %v7192 = vpow.pop %v7191
    %v7193 = vmul.f32 %v6683, 1.442695
    %v7194 = vpow.pop %v7193
    %v7195 = vmul.f32 %v6684, 1.442695
    %v7196 = vpow.pop %v7195
    %v7197 = vpack.c.bf16 %v6690, %v6686
    %v7198 = vpack.c.bf16 %v6692, %v6688
    %v7199 = vpack.c.bf16 %v6698, %v6694
    %v7200 = vpack.c.bf16 %v6700, %v6696
    %v7201 = vpack.c.bf16 %v6706, %v6702
    %v7202 = vpack.c.bf16 %v6708, %v6704
    %v7203 = vpack.c.bf16 %v6714, %v6710
    %v7204 = vpack.c.bf16 %v6716, %v6712
    %v7205 = vpack.c.bf16 %v6722, %v6718
    %v7206 = vpack.c.bf16 %v6724, %v6720
    %v7207 = vpack.c.bf16 %v6730, %v6726
    %v7208 = vpack.c.bf16 %v6732, %v6728
    %v7209 = vpack.c.bf16 %v6738, %v6734
    %v7210 = vpack.c.bf16 %v6740, %v6736
    %v7211 = vpack.c.bf16 %v6746, %v6742
    %v7212 = vpack.c.bf16 %v6748, %v6744
    %v7213 = vpack.c.bf16 %v6754, %v6750
    %v7214 = vpack.c.bf16 %v6756, %v6752
    %v7215 = vpack.c.bf16 %v6762, %v6758
    %v7216 = vpack.c.bf16 %v6764, %v6760
    %v7217 = vpack.c.bf16 %v6770, %v6766
    %v7218 = vpack.c.bf16 %v6772, %v6768
    %v7219 = vpack.c.bf16 %v6778, %v6774
    %v7220 = vpack.c.bf16 %v6780, %v6776
    %v7221 = vpack.c.bf16 %v6786, %v6782
    %v7222 = vpack.c.bf16 %v6788, %v6784
    %v7223 = vpack.c.bf16 %v6794, %v6790
    %v7224 = vpack.c.bf16 %v6796, %v6792
    %v7225 = vpack.c.bf16 %v6802, %v6798
    %v7226 = vpack.c.bf16 %v6804, %v6800
    %v7227 = vpack.c.bf16 %v6810, %v6806
    %v7228 = vpack.c.bf16 %v6812, %v6808
    %v7229 = vpack.c.bf16 %v6818, %v6814
    %v7230 = vpack.c.bf16 %v6820, %v6816
    %v7231 = vpack.c.bf16 %v6826, %v6822
    %v7232 = vpack.c.bf16 %v6828, %v6824
    %v7233 = vpack.c.bf16 %v6834, %v6830
    %v7234 = vpack.c.bf16 %v6836, %v6832
    %v7235 = vpack.c.bf16 %v6842, %v6838
    %v7236 = vpack.c.bf16 %v6844, %v6840
    %v7237 = vpack.c.bf16 %v6850, %v6846
    %v7238 = vpack.c.bf16 %v6852, %v6848
    %v7239 = vpack.c.bf16 %v6858, %v6854
    %v7240 = vpack.c.bf16 %v6860, %v6856
    %v7241 = vpack.c.bf16 %v6866, %v6862
    %v7242 = vpack.c.bf16 %v6868, %v6864
    %v7243 = vpack.c.bf16 %v6874, %v6870
    %v7244 = vpack.c.bf16 %v6876, %v6872
    %v7245 = vpack.c.bf16 %v6882, %v6878
    %v7246 = vpack.c.bf16 %v6884, %v6880
    %v7247 = vpack.c.bf16 %v6890, %v6886
    %v7248 = vpack.c.bf16 %v6892, %v6888
    %v7249 = vpack.c.bf16 %v6898, %v6894
    %v7250 = vpack.c.bf16 %v6900, %v6896
    %v7251 = vpack.c.bf16 %v6906, %v6902
    %v7252 = vpack.c.bf16 %v6908, %v6904
    %v7253 = vpack.c.bf16 %v6914, %v6910
    %v7254 = vpack.c.bf16 %v6916, %v6912
    %v7255 = vpack.c.bf16 %v6922, %v6918
    %v7256 = vpack.c.bf16 %v6924, %v6920
    %v7257 = vpack.c.bf16 %v6930, %v6926
    %v7258 = vpack.c.bf16 %v6932, %v6928
    %v7259 = vpack.c.bf16 %v6938, %v6934
    %v7260 = vpack.c.bf16 %v6940, %v6936
    %v7261 = vpack.c.bf16 %v6946, %v6942
    %v7262 = vpack.c.bf16 %v6948, %v6944
    %v7263 = vpack.c.bf16 %v6954, %v6950
    %v7264 = vpack.c.bf16 %v6956, %v6952
    %v7265 = vpack.c.bf16 %v6962, %v6958
    %v7266 = vpack.c.bf16 %v6964, %v6960
    %v7267 = vpack.c.bf16 %v6970, %v6966
    %v7268 = vpack.c.bf16 %v6972, %v6968
    %v7269 = vpack.c.bf16 %v6978, %v6974
    %v7270 = vpack.c.bf16 %v6980, %v6976
    %v7271 = vpack.c.bf16 %v6986, %v6982
    %v7272 = vpack.c.bf16 %v6988, %v6984
    %v7273 = vpack.c.bf16 %v6994, %v6990
    %v7274 = vpack.c.bf16 %v6996, %v6992
    %v7275 = vpack.c.bf16 %v7002, %v6998
    %v7276 = vpack.c.bf16 %v7004, %v7000
    %v7277 = vpack.c.bf16 %v7010, %v7006
    %v7278 = vpack.c.bf16 %v7012, %v7008
    %v7279 = vpack.c.bf16 %v7018, %v7014
    %v7280 = vpack.c.bf16 %v7020, %v7016
    %v7281 = vpack.c.bf16 %v7026, %v7022
    %v7282 = vpack.c.bf16 %v7028, %v7024
    %v7283 = vpack.c.bf16 %v7034, %v7030
    %v7284 = vpack.c.bf16 %v7036, %v7032
    %v7285 = vpack.c.bf16 %v7042, %v7038
    %v7286 = vpack.c.bf16 %v7044, %v7040
    %v7287 = vpack.c.bf16 %v7050, %v7046
    %v7288 = vpack.c.bf16 %v7052, %v7048
    %v7289 = vpack.c.bf16 %v7058, %v7054
    %v7290 = vpack.c.bf16 %v7060, %v7056
    %v7291 = vpack.c.bf16 %v7066, %v7062
    %v7292 = vpack.c.bf16 %v7068, %v7064
    %v7293 = vpack.c.bf16 %v7074, %v7070
    %v7294 = vpack.c.bf16 %v7076, %v7072
    %v7295 = vpack.c.bf16 %v7082, %v7078
    %v7296 = vpack.c.bf16 %v7084, %v7080
    %v7297 = vpack.c.bf16 %v7090, %v7086
    %v7298 = vpack.c.bf16 %v7092, %v7088
    %v7299 = vpack.c.bf16 %v7098, %v7094
    %v7300 = vpack.c.bf16 %v7100, %v7096
    %v7301 = vpack.c.bf16 %v7106, %v7102
    %v7302 = vpack.c.bf16 %v7108, %v7104
    %v7303 = vpack.c.bf16 %v7114, %v7110
    %v7304 = vpack.c.bf16 %v7116, %v7112
    %v7305 = vpack.c.bf16 %v7122, %v7118
    %v7306 = vpack.c.bf16 %v7124, %v7120
    %v7307 = vpack.c.bf16 %v7130, %v7126
    %v7308 = vpack.c.bf16 %v7132, %v7128
    %v7309 = vpack.c.bf16 %v7138, %v7134
    %v7310 = vpack.c.bf16 %v7140, %v7136
    %v7311 = vpack.c.bf16 %v7146, %v7142
    %v7312 = vpack.c.bf16 %v7148, %v7144
    %v7313 = vpack.c.bf16 %v7154, %v7150
    %v7314 = vpack.c.bf16 %v7156, %v7152
    %v7315 = vpack.c.bf16 %v7162, %v7158
    %v7316 = vpack.c.bf16 %v7164, %v7160
    %v7317 = vpack.c.bf16 %v7170, %v7166
    %v7318 = vpack.c.bf16 %v7172, %v7168
    %v7319 = vpack.c.bf16 %v7178, %v7174
    %v7320 = vpack.c.bf16 %v7180, %v7176
    %v7321 = vpack.c.bf16 %v7186, %v7182
    %v7322 = vpack.c.bf16 %v7188, %v7184
    %v7323 = vpack.c.bf16 %v7194, %v7190
    %v7324 = vpack.c.bf16 %v7196, %v7192
    %v7325 = vpack.c.bf16 %v4289, %v4283
    %v7326 = vpack.c.bf16 %v4291, %v4285
    %v7327 = vpack.c.bf16 %v4301, %v4295
    %v7328 = vpack.c.bf16 %v4303, %v4297
    %v7329 = vpack.c.bf16 %v4313, %v4307
    %v7330 = vpack.c.bf16 %v4315, %v4309
    %v7331 = vpack.c.bf16 %v4325, %v4319
    %v7332 = vpack.c.bf16 %v4327, %v4321
    %v7333 = vpack.c.bf16 %v4337, %v4331
    %v7334 = vpack.c.bf16 %v4339, %v4333
    %v7335 = vpack.c.bf16 %v4349, %v4343
    %v7336 = vpack.c.bf16 %v4351, %v4345
    %v7337 = vpack.c.bf16 %v4361, %v4355
    %v7338 = vpack.c.bf16 %v4363, %v4357
    %v7339 = vpack.c.bf16 %v4373, %v4367
    %v7340 = vpack.c.bf16 %v4375, %v4369
    %7341 = vmatprep.subr.bf16.mxu0 %v7198
    %7342 = vmatpush1.bf16.xpose.msra.mxu0 %v7197
    %7343 = vmatprep.subr.bf16.mxu0 %v7200
    %7344 = vmatpush1.bf16.xpose.msra.mxu0 %v7199
    %7345 = vmatprep.subr.bf16.mxu0 %v7202
    %7346 = vmatpush1.bf16.xpose.msra.mxu0 %v7201
    %7347 = vmatprep.subr.bf16.mxu0 %v7204
    %7348 = vmatpush1.bf16.xpose.msra.mxu0 %v7203
    %7349 = vmatprep.subr.bf16.mxu0 %v7206
    %7350 = vmatpush1.bf16.xpose.msra.mxu0 %v7205
    %7351 = vmatprep.subr.bf16.mxu0 %v7208
    %7352 = vmatpush1.bf16.xpose.msra.mxu0 %v7207
    %7353 = vmatprep.subr.bf16.mxu0 %v7210
    %7354 = vmatpush1.bf16.xpose.msra.mxu0 %v7209
    %7355 = vmatprep.subr.bf16.mxu0 %v7212
    %7356 = vmatpush1.bf16.xpose.msra.mxu0 %v7211
    %7357 = vmatprep.subr.bf16.mxu0 %v7214
    %7358 = vmatpush1.bf16.xpose.msra.mxu0 %v7213
    %7359 = vmatprep.subr.bf16.mxu0 %v7216
    %7360 = vmatpush1.bf16.xpose.msra.mxu0 %v7215
    %7361 = vmatprep.subr.bf16.mxu0 %v7218
    %7362 = vmatpush1.bf16.xpose.msra.mxu0 %v7217
    %7363 = vmatprep.subr.bf16.mxu0 %v7220
    %7364 = vmatpush1.bf16.xpose.msra.mxu0 %v7219
    %7365 = vmatprep.subr.bf16.mxu0 %v7222
    %7366 = vmatpush1.bf16.xpose.msra.mxu0 %v7221
    %7367 = vmatprep.subr.bf16.mxu0 %v7224
    %7368 = vmatpush1.bf16.xpose.msra.mxu0 %v7223
    %7369 = vmatprep.subr.bf16.mxu0 %v7226
    %7370 = vmatpush1.bf16.xpose.msra.mxu0 %v7225
    %7371 = vmatprep.subr.bf16.mxu0 %v7228
    %7372 = vmatpush1.bf16.xpose.msra.mxu0 %v7227
    %7373 = vmatprep.mubr.bf16.mxu0 %v7326
    %7374 = vmatmul.mubr.bf16.gmra.mrb[0].mxu0 %v7325
    %v7375 = vpop.f32.mrb[0].mxu0
    %v7376 = vadd.f32 0.0, %v7375
    %v7377 = vpop.f32.mrb[0].mxu0
    %v7378 = vadd.f32 0.0, %v7377
    %v7379 = vpop.f32.mrb[0].mxu0
    %v7380 = vadd.f32 0.0, %v7379
    %v7381 = vpop.f32.mrb[0].mxu0
    %v7382 = vadd.f32 0.0, %v7381
    %7383 = vmatprep.mubr.bf16.mxu0 %v7328
    %7384 = vmatmul.mubr.bf16.gmra.mrb[0].mxu0 %v7327
    %v7385 = vpop.f32.mrb[0].mxu0
    %v7386 = vadd.f32 0.0, %v7385
    %v7387 = vpop.f32.mrb[0].mxu0
    %v7388 = vadd.f32 0.0, %v7387
    %v7389 = vpop.f32.mrb[0].mxu0
    %v7390 = vadd.f32 0.0, %v7389
    %v7391 = vpop.f32.mrb[0].mxu0
    %v7392 = vadd.f32 0.0, %v7391
    %7393 = vmatprep.mubr.bf16.mxu0 1065369472
    %7394 = vmatmul.mubr.bf16.gmra.mrb[0].mxu0 1065369472
    %v7395 = vpop.f32.mrb[0].mxu0
    %v7396 = vadd.f32 0.0, %v7395
    %v7397 = vpop.f32.mrb[0].mxu0
    %v7398 = vadd.f32 0.0, %v7397
    %v7399 = vpop.f32.mrb[0].mxu0
    %v7400 = vpop.f32.mrb[0].mxu0
    %7401 = vdwg.mxu0
    %7402 = vmatprep.subr.bf16.mxu0 %v7230
    %7403 = vmatpush1.bf16.xpose.msra.mxu0 %v7229
    %7404 = vmatprep.subr.bf16.mxu0 %v7232
    %7405 = vmatpush1.bf16.xpose.msra.mxu0 %v7231
    %7406 = vmatprep.subr.bf16.mxu0 %v7234
    %7407 = vmatpush1.bf16.xpose.msra.mxu0 %v7233
    %7408 = vmatprep.subr.bf16.mxu0 %v7236
    %7409 = vmatpush1.bf16.xpose.msra.mxu0 %v7235
    %7410 = vmatprep.subr.bf16.mxu0 %v7238
    %7411 = vmatpush1.bf16.xpose.msra.mxu0 %v7237
    %7412 = vmatprep.subr.bf16.mxu0 %v7240
    %7413 = vmatpush1.bf16.xpose.msra.mxu0 %v7239
    %7414 = vmatprep.subr.bf16.mxu0 %v7242
    %7415 = vmatpush1.bf16.xpose.msra.mxu0 %v7241
    %7416 = vmatprep.subr.bf16.mxu0 %v7244
    %7417 = vmatpush1.bf16.xpose.msra.mxu0 %v7243
    %7418 = vmatprep.subr.bf16.mxu0 %v7246
    %7419 = vmatpush1.bf16.xpose.msra.mxu0 %v7245
    %7420 = vmatprep.subr.bf16.mxu0 %v7248
    %7421 = vmatpush1.bf16.xpose.msra.mxu0 %v7247
    %7422 = vmatprep.subr.bf16.mxu0 %v7250
    %7423 = vmatpush1.bf16.xpose.msra.mxu0 %v7249
    %7424 = vmatprep.subr.bf16.mxu0 %v7252
    %7425 = vmatpush1.bf16.xpose.msra.mxu0 %v7251
    %7426 = vmatprep.subr.bf16.mxu0 %v7254
    %7427 = vmatpush1.bf16.xpose.msra.mxu0 %v7253
    %7428 = vmatprep.subr.bf16.mxu0 %v7256
    %7429 = vmatpush1.bf16.xpose.msra.mxu0 %v7255
    %7430 = vmatprep.subr.bf16.mxu0 %v7258
    %7431 = vmatpush1.bf16.xpose.msra.mxu0 %v7257
    %7432 = vmatprep.subr.bf16.mxu0 %v7260
    %7433 = vmatpush1.bf16.xpose.msra.mxu0 %v7259
    %7434 = vmatprep.mubr.bf16.mxu0 %v7330
    %7435 = vmatmul.mubr.bf16.gmra.mrb[0].mxu0 %v7329
    %v7436 = vpop.f32.mrb[0].mxu0
    %v7437 = vadd.f32 0.0, %v7436
    %v7438 = vpop.f32.mrb[0].mxu0
    %v7439 = vadd.f32 0.0, %v7438
    %v7440 = vpop.f32.mrb[0].mxu0
    %v7441 = vadd.f32 0.0, %v7440
    %v7442 = vpop.f32.mrb[0].mxu0
    %v7443 = vadd.f32 0.0, %v7442
    %7444 = vmatprep.mubr.bf16.mxu0 %v7332
    %7445 = vmatmul.mubr.bf16.gmra.mrb[0].mxu0 %v7331
    %v7446 = vpop.f32.mrb[0].mxu0
    %v7447 = vadd.f32 0.0, %v7446
    %v7448 = vpop.f32.mrb[0].mxu0
    %v7449 = vadd.f32 0.0, %v7448
    %v7450 = vpop.f32.mrb[0].mxu0
    %v7451 = vadd.f32 0.0, %v7450
    %v7452 = vpop.f32.mrb[0].mxu0
    %v7453 = vadd.f32 0.0, %v7452
    %7454 = vmatprep.mubr.bf16.mxu0 1065369472
    %7455 = vmatmul.mubr.bf16.gmra.mrb[0].mxu0 1065369472
    %v7456 = vpop.f32.mrb[0].mxu0
    %v7457 = vadd.f32 0.0, %v7456
    %v7458 = vpop.f32.mrb[0].mxu0
    %v7459 = vadd.f32 0.0, %v7458
    %v7460 = vpop.f32.mrb[0].mxu0
    %v7461 = vpop.f32.mrb[0].mxu0
    %7462 = vdwg.mxu0
    %7463 = vmatprep.subr.bf16.mxu0 %v7262
    %7464 = vmatpush1.bf16.xpose.msra.mxu0 %v7261
    %7465 = vmatprep.subr.bf16.mxu0 %v7264
    %7466 = vmatpush1.bf16.xpose.msra.mxu0 %v7263
    %7467 = vmatprep.subr.bf16.mxu0 %v7266
    %7468 = vmatpush1.bf16.xpose.msra.mxu0 %v7265
    %7469 = vmatprep.subr.bf16.mxu0 %v7268
    %7470 = vmatpush1.bf16.xpose.msra.mxu0 %v7267
    %7471 = vmatprep.subr.bf16.mxu0 %v7270
    %7472 = vmatpush1.bf16.xpose.msra.mxu0 %v7269
    %7473 = vmatprep.subr.bf16.mxu0 %v7272
    %7474 = vmatpush1.bf16.xpose.msra.mxu0 %v7271
    %7475 = vmatprep.subr.bf16.mxu0 %v7274
    %7476 = vmatpush1.bf16.xpose.msra.mxu0 %v7273
    %7477 = vmatprep.subr.bf16.mxu0 %v7276
    %7478 = vmatpush1.bf16.xpose.msra.mxu0 %v7275
    %7479 = vmatprep.subr.bf16.mxu0 %v7278
    %7480 = vmatpush1.bf16.xpose.msra.mxu0 %v7277
    %7481 = vmatprep.subr.bf16.mxu0 %v7280
    %7482 = vmatpush1.bf16.xpose.msra.mxu0 %v7279
    %7483 = vmatprep.subr.bf16.mxu0 %v7282
    %7484 = vmatpush1.bf16.xpose.msra.mxu0 %v7281
    %7485 = vmatprep.subr.bf16.mxu0 %v7284
    %7486 = vmatpush1.bf16.xpose.msra.mxu0 %v7283
    %7487 = vmatprep.subr.bf16.mxu0 %v7286
    %7488 = vmatpush1.bf16.xpose.msra.mxu0 %v7285
    %7489 = vmatprep.subr.bf16.mxu0 %v7288
    %7490 = vmatpush1.bf16.xpose.msra.mxu0 %v7287
    %7491 = vmatprep.subr.bf16.mxu0 %v7290
    %7492 = vmatpush1.bf16.xpose.msra.mxu0 %v7289
    %7493 = vmatprep.subr.bf16.mxu0 %v7292
    %7494 = vmatpush1.bf16.xpose.msra.mxu0 %v7291
    %7495 = vmatprep.mubr.bf16.mxu0 %v7334
    %7496 = vmatmul.mubr.bf16.gmra.mrb[0].mxu0 %v7333
    %v7497 = vpop.f32.mrb[0].mxu0
    %v7498 = vadd.f32 0.0, %v7497
    %v7499 = vpop.f32.mrb[0].mxu0
    %v7500 = vadd.f32 0.0, %v7499
    %v7501 = vpop.f32.mrb[0].mxu0
    %v7502 = vadd.f32 0.0, %v7501
    %v7503 = vpop.f32.mrb[0].mxu0
    %v7504 = vadd.f32 0.0, %v7503
    %7505 = vmatprep.mubr.bf16.mxu0 %v7336
    %7506 = vmatmul.mubr.bf16.gmra.mrb[0].mxu0 %v7335
    %v7507 = vpop.f32.mrb[0].mxu0
    %v7508 = vadd.f32 0.0, %v7507
    %v7509 = vpop.f32.mrb[0].mxu0
    %v7510 = vadd.f32 0.0, %v7509
    %v7511 = vpop.f32.mrb[0].mxu0
    %v7512 = vadd.f32 0.0, %v7511
    %v7513 = vpop.f32.mrb[0].mxu0
    %v7514 = vadd.f32 0.0, %v7513
    %7515 = vmatprep.mubr.bf16.mxu0 1065369472
    %7516 = vmatmul.mubr.bf16.gmra.mrb[0].mxu0 1065369472
    %v7517 = vpop.f32.mrb[0].mxu0
    %v7518 = vadd.f32 0.0, %v7517
    %v7519 = vpop.f32.mrb[0].mxu0
    %v7520 = vadd.f32 0.0, %v7519
    %v7521 = vpop.f32.mrb[0].mxu0
    %v7522 = vpop.f32.mrb[0].mxu0
    %7523 = vdwg.mxu0
    %7524 = vmatprep.subr.bf16.mxu0 %v7294
    %7525 = vmatpush1.bf16.xpose.msra.mxu0 %v7293
    %7526 = vmatprep.subr.bf16.mxu0 %v7296
    %7527 = vmatpush1.bf16.xpose.msra.mxu0 %v7295
    %7528 = vmatprep.subr.bf16.mxu0 %v7298
    %7529 = vmatpush1.bf16.xpose.msra.mxu0 %v7297
    %7530 = vmatprep.subr.bf16.mxu0 %v7300
    %7531 = vmatpush1.bf16.xpose.msra.mxu0 %v7299
    %7532 = vmatprep.subr.bf16.mxu0 %v7302
    %7533 = vmatpush1.bf16.xpose.msra.mxu0 %v7301
    %7534 = vmatprep.subr.bf16.mxu0 %v7304
    %7535 = vmatpush1.bf16.xpose.msra.mxu0 %v7303
    %7536 = vmatprep.subr.bf16.mxu0 %v7306
    %7537 = vmatpush1.bf16.xpose.msra.mxu0 %v7305
    %7538 = vmatprep.subr.bf16.mxu0 %v7308
    %7539 = vmatpush1.bf16.xpose.msra.mxu0 %v7307
    %7540 = vmatprep.subr.bf16.mxu0 %v7310
    %7541 = vmatpush1.bf16.xpose.msra.mxu0 %v7309
    %7542 = vmatprep.subr.bf16.mxu0 %v7312
    %7543 = vmatpush1.bf16.xpose.msra.mxu0 %v7311
    %7544 = vmatprep.subr.bf16.mxu0 %v7314
    %7545 = vmatpush1.bf16.xpose.msra.mxu0 %v7313
    %7546 = vmatprep.subr.bf16.mxu0 %v7316
    %7547 = vmatpush1.bf16.xpose.msra.mxu0 %v7315
    %7548 = vmatprep.subr.bf16.mxu0 %v7318
    %7549 = vmatpush1.bf16.xpose.msra.mxu0 %v7317
    %7550 = vmatprep.subr.bf16.mxu0 %v7320
    %7551 = vmatpush1.bf16.xpose.msra.mxu0 %v7319
    %7552 = vmatprep.subr.bf16.mxu0 %v7322
    %7553 = vmatpush1.bf16.xpose.msra.mxu0 %v7321
    %7554 = vmatprep.subr.bf16.mxu0 %v7324
    %7555 = vmatpush1.bf16.xpose.msra.mxu0 %v7323
    %7556 = vmatprep.mubr.bf16.mxu0 %v7338
    %7557 = vmatmul.mubr.bf16.gmra.mrb[0].mxu0 %v7337
    %v7558 = vpop.f32.mrb[0].mxu0
    %v7559 = vadd.f32 0.0, %v7558
    %v7560 = vpop.f32.mrb[0].mxu0
    %v7561 = vadd.f32 0.0, %v7560
    %v7562 = vpop.f32.mrb[0].mxu0
    %v7563 = vadd.f32 0.0, %v7562
    %v7564 = vpop.f32.mrb[0].mxu0
    %v7565 = vadd.f32 0.0, %v7564
    %7566 = vmatprep.mubr.bf16.mxu0 %v7340
    %7567 = vmatmul.mubr.bf16.gmra.mrb[0].mxu0 %v7339
    %v7568 = vpop.f32.mrb[0].mxu0
    %v7569 = vadd.f32 0.0, %v7568
    %v7570 = vpop.f32.mrb[0].mxu0
    %v7571 = vadd.f32 0.0, %v7570
    %v7572 = vpop.f32.mrb[0].mxu0
    %v7573 = vadd.f32 0.0, %v7572
    %v7574 = vpop.f32.mrb[0].mxu0
    %v7575 = vadd.f32 0.0, %v7574
    %7576 = vmatprep.mubr.bf16.mxu0 1065369472
    %7577 = vmatmul.mubr.bf16.gmra.mrb[0].mxu0 1065369472
    %v7578 = vpop.f32.mrb[0].mxu0
    %v7579 = vadd.f32 0.0, %v7578
    %v7580 = vpop.f32.mrb[0].mxu0
    %v7581 = vadd.f32 0.0, %v7580
    %v7582 = vpop.f32.mrb[0].mxu0
    %v7583 = vpop.f32.mrb[0].mxu0
    %7584 = vdwg.mxu0
    %v7585 = vrcp.pop %v7396
    %v7586 = vrcp.pop %v7398
    %v7587 = vrcp.pop %v7457
    %v7588 = vrcp.pop %v7459
    %v7589 = vrcp.pop %v7518
    %v7590 = vrcp.pop %v7520
    %v7591 = vrcp.pop %v7579
    %v7592 = vrcp.pop %v7581
    %v7593 = vlaneseq
    %v7594 = vshrl.u32 %v7593, 7
    %v7595 = vsub.s32 0, %v7594
    %v7596 = vrot.slane %v7585, %v7595
    %v7597 = vlaneseq
    %v7598 = vshrl.u32 %v7597, 7
    %v7599 = vsub.s32 0, %v7598
    %v7600 = vrot.slane %v7586, %v7599
    %v7601 = vlaneseq
    %v7602 = vshrl.u32 %v7601, 7
    %v7603 = vsub.s32 0, %v7602
    %v7604 = vrot.slane %v7587, %v7603
    %v7605 = vlaneseq
    %v7606 = vshrl.u32 %v7605, 7
    %v7607 = vsub.s32 0, %v7606
    %v7608 = vrot.slane %v7588, %v7607
    %v7609 = vlaneseq
    %v7610 = vshrl.u32 %v7609, 7
    %v7611 = vsub.s32 0, %v7610
    %v7612 = vrot.slane %v7589, %v7611
    %v7613 = vlaneseq
    %v7614 = vshrl.u32 %v7613, 7
    %v7615 = vsub.s32 0, %v7614
    %v7616 = vrot.slane %v7590, %v7615
    %v7617 = vlaneseq
    %v7618 = vshrl.u32 %v7617, 7
    %v7619 = vsub.s32 0, %v7618
    %v7620 = vrot.slane %v7591, %v7619
    %v7621 = vlaneseq
    %v7622 = vshrl.u32 %v7621, 7
    %v7623 = vsub.s32 0, %v7622
    %v7624 = vrot.slane %v7592, %v7623
    %v7625 = vmul.f32 %v7376, %v7596
    %v7626 = vmul.f32 %v7378, %v7600
    %v7627 = vmul.f32 %v7380, %v7596
    %v7628 = vmul.f32 %v7382, %v7600
    %v7629 = vmul.f32 %v7386, %v7596
    %v7630 = vmul.f32 %v7388, %v7600
    %v7631 = vmul.f32 %v7390, %v7596
    %v7632 = vmul.f32 %v7392, %v7600
    %v7633 = vmul.f32 %v7437, %v7604
    %v7634 = vmul.f32 %v7439, %v7608
    %v7635 = vmul.f32 %v7441, %v7604
    %v7636 = vmul.f32 %v7443, %v7608
    %v7637 = vmul.f32 %v7447, %v7604
    %v7638 = vmul.f32 %v7449, %v7608
    %v7639 = vmul.f32 %v7451, %v7604
    %v7640 = vmul.f32 %v7453, %v7608
    %v7641 = vmul.f32 %v7498, %v7612
    %v7642 = vmul.f32 %v7500, %v7616
    %v7643 = vmul.f32 %v7502, %v7612
    %v7644 = vmul.f32 %v7504, %v7616
    %v7645 = vmul.f32 %v7508, %v7612
    %v7646 = vmul.f32 %v7510, %v7616
    %v7647 = vmul.f32 %v7512, %v7612
    %v7648 = vmul.f32 %v7514, %v7616
    %v7649 = vmul.f32 %v7559, %v7620
    %v7650 = vmul.f32 %v7561, %v7624
    %v7651 = vmul.f32 %v7563, %v7620
    %v7652 = vmul.f32 %v7565, %v7624
    %v7653 = vmul.f32 %v7569, %v7620
    %v7654 = vmul.f32 %v7571, %v7624
    %v7655 = vmul.f32 %v7573, %v7620
    %v7656 = vmul.f32 %v7575, %v7624
    %7657 = vmatprep.subr.mxu0 %v7626
    %7658 = vmatpush1.msra.mxu0 %v7625
    %7659 = vmatprep.subr.mxu0 %v7628
    %7660 = vmatpush1.msra.mxu0 %v7627
    %7661 = vmatprep.subr.mxu0 %v7630
    %7662 = vmatpush1.msra.mxu0 %v7629
    %7663 = vmatprep.subr.mxu0 %v7632
    %7664 = vmatpush1.msra.mxu0 %v7631
    %7665 = vmatprep.subr.mxu0 %v7634
    %7666 = vmatpush1.msra.mxu0 %v7633
    %7667 = vmatprep.subr.mxu0 %v7636
    %7668 = vmatpush1.msra.mxu0 %v7635
    %7669 = vmatprep.subr.mxu0 %v7638
    %7670 = vmatpush1.msra.mxu0 %v7637
    %7671 = vmatprep.subr.mxu0 %v7640
    %7672 = vmatpush1.msra.mxu0 %v7639
    %7673 = vmatprep.subr.mxu0 %v7642
    %7674 = vmatpush1.msra.mxu0 %v7641
    %7675 = vmatprep.subr.mxu0 %v7644
    %7676 = vmatpush1.msra.mxu0 %v7643
    %7677 = vmatprep.subr.mxu0 %v7646
    %7678 = vmatpush1.msra.mxu0 %v7645
    %7679 = vmatprep.subr.mxu0 %v7648
    %7680 = vmatpush1.msra.mxu0 %v7647
    %7681 = vmatprep.subr.mxu0 %v7650
    %7682 = vmatpush1.msra.mxu0 %v7649
    %7683 = vmatprep.subr.mxu0 %v7652
    %7684 = vmatpush1.msra.mxu0 %v7651
    %7685 = vmatprep.subr.mxu0 %v7654
    %7686 = vmatpush1.msra.mxu0 %v7653
    %7687 = vmatprep.subr.mxu0 %v7656
    %7688 = vmatpush1.msra.mxu0 %v7655
    %7689 = vmatprep.subr.mxu0 0.0
    %7690 = vmatpush1.msra.mxu0 0.0
    %7691 = vmatprep.subr.mxu0 0.0
    %7692 = vmatpush1.msra.mxu0 0.0
    %7693 = vmatprep.subr.mxu0 0.0
    %7694 = vmatpush1.msra.mxu0 0.0
    %7695 = vmatprep.subr.mxu0 0.0
    %7696 = vmatpush1.msra.mxu0 0.0
    %7697 = vmatprep.subr.mxu0 0.0
    %7698 = vmatpush1.msra.mxu0 0.0
    %7699 = vmatprep.subr.mxu0 0.0
    %7700 = vmatpush1.msra.mxu0 0.0
    %7701 = vmatprep.subr.mxu0 0.0
    %7702 = vmatpush1.msra.mxu0 0.0
    %7703 = vmatprep.subr.mxu0 0.0
    %7704 = vmatpush1.msra.mxu0 0.0
    %7705 = vmatprep.subr.mxu0 0.0
    %7706 = vmatpush1.msra.mxu0 0.0
    %7707 = vmatprep.subr.mxu0 0.0
    %7708 = vmatpush1.msra.mxu0 0.0
    %7709 = vmatprep.subr.mxu0 0.0
    %7710 = vmatpush1.msra.mxu0 0.0
    %7711 = vmatprep.subr.mxu0 0.0
    %7712 = vmatpush1.msra.mxu0 0.0
    %7713 = vmatprep.subr.mxu0 0.0
    %7714 = vmatpush1.msra.mxu0 0.0
    %7715 = vmatprep.subr.mxu0 0.0
    %7716 = vmatpush1.msra.mxu0 0.0
    %7717 = vmatprep.subr.mxu0 0.0
    %7718 = vmatpush1.msra.mxu0 0.0
    %7719 = vmatprep.subr.mxu0 0.0
    %7720 = vmatpush1.msra.mxu0 0.0
    %7721 = vmatprep.mubr.f32.mxu0 0.0
    %7722 = vmatmul.mubr.f32.gmra.mrb[0].mxu0 %v47
    %v7723 = vpop.f32.mrb[0].mxu0
    %v7724 = vadd.f32 %v3938, %v7723
    %v7725 = vpop.f32.mrb[0].mxu0
    %v7726 = vadd.f32 %v3938, %v7725
    %7727 = vdwg.mxu0
    %v7730 = vcombine.low %v7724, %v7726
    %s7732 = scalar_lea.vmem [#allocation7], 8
    %7733 = vst [vmem:[%s7732] sm:$0xff] %v7730
    // Predicated region
    $region26: #{tpu_custom_call.1} parent=1 // pred_check
      _
    $region27: #{tpu_custom_call.1} parent=1 // pred_check_branch
      %7735 = sbr.rel (0) target = $region29
    $region28: #{tpu_custom_call.1} parent=1 // pred_region
      %s7737 = ssub.s32 256, 256
      %7738 = vsyncadd [#allocation4], %s7737
      %s7739 = sshll.u32 [#allocation7], 4
      %s7740 = int_to_ptr.vmem [resolvable:$true] %s7739
      %7745 = dma.vmem_to_hbm [thread:$0]  %s7740, 256, %s4, [#allocation4], 128, 128, 8
    $region29: #{tpu_custom_call.1} parent=1 // pred_fallthru
      _
    // Predicated region
    $region30: #{tpu_custom_call.1} parent=1 // pred_check
      _
    $region31: #{tpu_custom_call.1} parent=1 // pred_check_branch
      %7747 = sbr.rel (0) target = $region33
    $region32: #{tpu_custom_call.1} parent=1 // pred_region
      %7748 = dma.done [#allocation4], 256
    $region33: #{tpu_custom_call.1} parent=1 // pred_fallthru
      _
    %7749 = vsyncpa [#allocation3], 1
    %7750 = vsyncpa [#allocation6], 1
    %7751 = vsyncpa [#allocation4], 1

</llo_original>
